<compile_context>
chip_gen: v7x
topology: tpu7x:2x2x1
jax: 0.10.0
libtpu: 0.0.40
codegen_flags: <defaults>
</compile_context>

<pallas_src>
import functools

import numpy as np
import jax
import jax.numpy as jnp
from jax.experimental import pallas as pl
from jax.experimental.pallas import tpu as pltpu


def _space_encoder_kernel(x_ref, wrt_ref, o_ref, *, f_dim, trans_dtype):
    # x_ref   : [TR, M]         rows of positions
    # wrt_ref : [M,  F_dim//2]  Wr transposed (contraction is a plain matmul)
    # o_ref   : [TR, F_dim]     output positional encodings
    half = f_dim // 2
    proj = jnp.dot(x_ref[...], wrt_ref[...],
                   preferred_element_type=jnp.float32)       # [TR, F_dim//2]
    if trans_dtype != jnp.float32:
        proj = proj.astype(trans_dtype)                       # bf16 EUP path
    scale = 1.0 / np.sqrt(f_dim)
    # Write the two halves directly into the output tile (lane offsets 0 and
    # half; full-width unmasked stores when half % 128 == 0).
    o_ref[:, :half] = (scale * jnp.cos(proj)).astype(o_ref.dtype)
    o_ref[:, half:] = (scale * jnp.sin(proj)).astype(o_ref.dtype)


_VMEM_TILE_BUDGET = 20 * 1024 * 1024   # double-buffered in+out tiles, all gens
_ROW_BLOCK_CAP = 8192


def _pick_row_block(R, M, f_dim, in_itemsize, out_itemsize):
    # Per-row bytes of the double-buffered input + output tiles.  The x tile
    # is lane-padded to 128 inside VMEM, so budget with max(M, 128).
    per_row = 2 * (f_dim * out_itemsize + max(M, 128) * in_itemsize)
    cap = min(_ROW_BLOCK_CAP, _VMEM_TILE_BUDGET // per_row)
    cap = max(8, (cap // 8) * 8)
    if R <= cap:
        # Single block: block dim equal to the full array dim is always legal,
        # and per-grid-step overhead (~0.35 us) is avoided for small problems.
        return R
    return cap


def fast_trans_dtype():
    """bf16 transcendentals where the hardware has a bf16 EUP/VPU (v6e/v7x)."""
    try:
        kind = jax.devices()[0].device_kind.lower()
    except Exception:
        return jnp.float32
    if "v6" in kind or "v7" in kind:
        return jnp.bfloat16
    return jnp.float32       # never bf16 transcendentals on v5e / older


def space_encoder_forward(x, wr_weight, f_dim, *, row_block=None,
                          trans_dtype=jnp.float32, out_dtype=None):
    """
    x         : [N, G, M] float32
    wr_weight : [F_dim//2, M] float32   (PyTorch nn.Linear weight layout)
    returns   : [N, G, F_dim] in out_dtype (default: x.dtype)
    """
    N, G, M = x.shape
    R = N * G
    out_dtype = x.dtype if out_dtype is None else out_dtype
    in_itemsize = jnp.dtype(x.dtype).itemsize
    out_itemsize = jnp.dtype(out_dtype).itemsize

    x2d = x.reshape(R, M)
    wrt = wr_weight.T                      # [M, F_dim//2]

    if row_block is None:
        row_block = _pick_row_block(R, M, f_dim, in_itemsize, out_itemsize)

    num_blocks = pl.cdiv(R, row_block)     # ragged tail handled by Pallas clip

    cost = pl.CostEstimate(
        flops=2 * R * M * (f_dim // 2),
        transcendentals=R * f_dim,
        bytes_accessed=(R * M + M * (f_dim // 2)) * in_itemsize
                       + R * f_dim * out_itemsize,
    )

    kernel = functools.partial(_space_encoder_kernel, f_dim=f_dim,
                               trans_dtype=trans_dtype)

    out = pl.pallas_call(
        kernel,
        out_shape=jax.ShapeDtypeStruct((R, f_dim), out_dtype),
        grid_spec=pltpu.PrefetchScalarGridSpec(
            num_scalar_prefetch=0,
            grid=(num_blocks,),
            in_specs=[
                pl.BlockSpec((row_block, M), lambda i: (i, 0)),
                # Grid-invariant Wr^T block: block index (0, 0) every step, so
                # the pipeline does not re-issue its DMA.
                pl.BlockSpec((M, f_dim // 2), lambda i: (0, 0)),
            ],
            out_specs=pl.BlockSpec((row_block, f_dim), lambda i: (i, 0)),
        ),
        compiler_params=pltpu.CompilerParams(
            dimension_semantics=("parallel",),
            # Unlock v5e's 16 MiB scoped default; within v6e/v7x headroom
            # (v7x: 64 MiB physical per TC, 32 MiB scoped default).
            vmem_limit_bytes=32 * 1024 * 1024,
        ),
        cost_estimate=cost,
    )(x2d, wrt)

    return out.reshape(N, G, f_dim)


def _reference_forward(x, wr_weight, f_dim):
    # Pure-JAX reference matching the PyTorch module semantics.
    proj = jnp.einsum("ngm,fm->ngf", x, wr_weight)
    return (1.0 / np.sqrt(f_dim)) * jnp.concatenate(
        [jnp.cos(proj), jnp.sin(proj)], axis=-1)


if __name__ == "__main__":
    # Module hyperparameters (F_dim//2 = 128 -> lane-aligned half stores).
    G, M, F_dim, H_dim, D = 4, 8, 256, 32, 32
    gamma = 1.0
    N = 64                                   # R = N*G = 256 rows -> one block

    key = jax.random.PRNGKey(0)
    k_x, k_wr, k_w1, k_w2 = jax.random.split(key, 4)

    # Deterministic parameter init mirroring __init__ / init_weights().
    wr_weight = (gamma ** -2) * jax.random.normal(
        k_wr, (F_dim // 2, M), dtype=jnp.float32)            # Wr.weight [F/2, M]
    # MLP params (declared in the module but unused by forward()).
    _mlp_w1 = jax.random.normal(k_w1, (H_dim, F_dim), dtype=jnp.float32) * 0.02
    _mlp_b1 = jnp.zeros((H_dim,), dtype=jnp.float32)
    _mlp_w2 = jax.random.normal(k_w2, (D // G, H_dim), dtype=jnp.float32) * 0.02
    _mlp_b2 = jnp.zeros((D // G,), dtype=jnp.float32)

    x = jax.random.normal(k_x, (N, G, M), dtype=jnp.float32)
    ref = _reference_forward(x, wr_weight, F_dim)

    # 1) Bit-tight path: f32 compute, f32 output.
    pe = jax.block_until_ready(
        space_encoder_forward(x, wr_weight, F_dim,
                              trans_dtype=jnp.float32, out_dtype=jnp.float32))
    assert pe.shape == (N, G, F_dim)
    np.testing.assert_allclose(np.asarray(pe), np.asarray(ref),
                               rtol=1e-5, atol=1e-5)

    # 2) Bandwidth-optimized path: bf16 output store halves the dominant
    #    writeback stream (f32 transcendentals kept for accuracy; pass
    #    trans_dtype=fast_trans_dtype() on v6e/v7x if the budget allows).
    pe_bf16 = jax.block_until_ready(
        space_encoder_forward(x, wr_weight, F_dim, out_dtype=jnp.bfloat16))
    np.testing.assert_allclose(np.asarray(pe_bf16, dtype=np.float32),
                               np.asarray(ref), atol=2e-2)

    print("KERNEL_OK")
</pallas_src>

<mosaic_0001>
module attributes {stable_mosaic.version = 11 : i64} {
  func.func @_space_encoder_kernel(%arg0: i32, %arg1: memref<256x8xf32, #tpu.memory_space<vmem>>, %arg2: memref<8x128xf32, #tpu.memory_space<vmem>>, %arg3: memref<256x256xf32, #tpu.memory_space<vmem>>) attributes {dimension_semantics = [#tpu.dimension_semantics<parallel>], iteration_bounds = array<i64: 1>, scalar_prefetch = 0 : i64, scratch_operands = 0 : i64, tpu.core_type = #tpu.core_type<tc>, window_params = [{transform_indices = @transform_0, window_bounds = array<i64: 256, 8>}, {pipeline_mode = #tpu.pipeline_mode<synchronous>, transform_indices = @transform_1, window_bounds = array<i64: 8, 128>}, {transform_indices = @transform_2, window_bounds = array<i64: 256, 256>}]} {
    %c0 = arith.constant 0 : index
    %c0_0 = arith.constant 0 : index
    %0 = vector.load %arg1[%c0, %c0_0] : memref<256x8xf32, #tpu.memory_space<vmem>>, vector<256x8xf32>
    %c0_1 = arith.constant 0 : index
    %c0_2 = arith.constant 0 : index
    %1 = vector.load %arg2[%c0_1, %c0_2] : memref<8x128xf32, #tpu.memory_space<vmem>>, vector<8x128xf32>
    %cst = arith.constant dense<0.000000e+00> : vector<256x128xf32>
    %2 = tpu.matmul %0, %1, %cst {dimension_numbers = #tpu.dot_dimension_numbers<[1], [0], [0], [1], [0, 0, 1, 1], [], []>} : vector<256x8xf32>, vector<8x128xf32>, vector<256x128xf32> -> vector<256x128xf32>
    %3 = math.cos %2 : vector<256x128xf32>
    %cst_3 = arith.constant 6.250000e-02 : f32
    %4 = vector.broadcast %cst_3 : f32 to vector<256x128xf32>
    %5 = arith.mulf %4, %3 : vector<256x128xf32>
    %c0_4 = arith.constant 0 : index
    %c0_5 = arith.constant 0 : index
    %6 = vector.load %arg3[%c0_4, %c0_5] : memref<256x256xf32, #tpu.memory_space<vmem>>, vector<256x128xf32>
    tpu.vector_store %arg3[%c0_4, %c0_5], %5 {strides = array<i32>} : memref<256x256xf32, #tpu.memory_space<vmem>>, vector<256x128xf32>,
    %7 = math.sin %2 : vector<256x128xf32>
    %cst_6 = arith.constant 6.250000e-02 : f32
    %8 = vector.broadcast %cst_6 : f32 to vector<256x128xf32>
    %9 = arith.mulf %8, %7 : vector<256x128xf32>
    %c0_7 = arith.constant 0 : index
    %c128 = arith.constant 128 : index
    %10 = vector.load %arg3[%c0_7, %c128] : memref<256x256xf32, #tpu.memory_space<vmem>>, vector<256x128xf32>
    tpu.vector_store %arg3[%c0_7, %c128], %9 {strides = array<i32>} : memref<256x256xf32, #tpu.memory_space<vmem>>, vector<256x128xf32>,
    return
  }
  func.func @transform_0(%arg0: i32) -> (i32, i32) {
    %c0_i32 = arith.constant 0 : i32
    %c0_i32_0 = arith.constant 0 : i32
    return %arg0, %c0_i32 : i32, i32
  }
  func.func @transform_1(%arg0: i32) -> (i32, i32) {
    %c0_i32 = arith.constant 0 : i32
    %c0_i32_0 = arith.constant 0 : i32
    %c0_i32_1 = arith.constant 0 : i32
    return %c0_i32, %c0_i32_0 : i32, i32
  }
  func.func @transform_2(%arg0: i32) -> (i32, i32) {
    %c0_i32 = arith.constant 0 : i32
    %c0_i32_0 = arith.constant 0 : i32
    return %arg0, %c0_i32 : i32, i32
  }
}

</mosaic_0001>

<llo_original>
// kernel: tpu_custom_call.1
$region0: #{tpu_custom_call.1}
  #allocation0 [shape = 'u32[]', space=smem, size = 0x4, offset = 0x4, fixed_abs, tag = 'smem constant byte address 0x4 - core index']
  #allocation1 [shape = 'u32[144,128]{1,0:T(1,128)}', space=vmem, size = 0x12000, scoped, tag = 'internal scratch']
  %s0 = inlined_call_operand.vmem [shape: f32[256,8], index: 0, kind: input, shape index: {}]
  %s1 = inlined_call_operand.vmem [shape: f32[8,128], index: 1, kind: input, shape index: {}]
  %s2 = inlined_call_operand.hbm [shape: f32[256,256], index: 2, kind: output, shape index: {}]
  %s3 = sld [smem:[#allocation0]]
  $region18: #{tpu_custom_call.1} parent=0
    _
  %s5 = ssub.s32 1, %s3
  %s6 = scalar_select 0, %s5, %s3
  $region1: #{tpu_custom_call.1} parent=0
    #allocation2 [shape = 'u8[262144]{0}', space=vmem, size = 0x40000, scoped, tag = 'output window, operand 0, single buffered']
    #allocation3 [shape = 's32[1]{0}', space=sflag, size = 0x4, scoped, tag = 'scoped memory for tpu_custom_call.1']
    %7 = vsyncpa [#allocation3], 0
    // Predicated region
    $region2: #{tpu_custom_call.1} parent=1 // pred_check
      _
    $region3: #{tpu_custom_call.1} parent=1 // pred_check_branch
      %9 = sbr.rel (0) target = $region5
    $region4: #{tpu_custom_call.1} parent=1 // pred_region
      _
    $region5: #{tpu_custom_call.1} parent=1 // pred_fallthru
      _
    // Predicated region
    $region6: #{tpu_custom_call.1} parent=1 // pred_check
      _
    $region7: #{tpu_custom_call.1} parent=1 // pred_check_branch
      %11 = sbr.rel (0) target = $region9
    $region8: #{tpu_custom_call.1} parent=1 // pred_region
      _
    $region9: #{tpu_custom_call.1} parent=1 // pred_fallthru
      _
    %v12 = vld [vmem:[%s0] sm:$0xff]
    %v13 = vld [vmem:[%s0 + $0x8] sm:$0xff]
    %v14 = vld [vmem:[%s0 + $0x10] sm:$0xff]
    %v15 = vld [vmem:[%s0 + $0x18] sm:$0xff]
    %v16 = vld [vmem:[%s0 + $0x20] sm:$0xff]
    %v17 = vld [vmem:[%s0 + $0x28] sm:$0xff]
    %v18 = vld [vmem:[%s0 + $0x30] sm:$0xff]
    %v19 = vld [vmem:[%s0 + $0x38] sm:$0xff]
    %v20 = vld [vmem:[%s0 + $0x40] sm:$0xff]
    %v21 = vld [vmem:[%s0 + $0x48] sm:$0xff]
    %v22 = vld [vmem:[%s0 + $0x50] sm:$0xff]
    %v23 = vld [vmem:[%s0 + $0x58] sm:$0xff]
    %v24 = vld [vmem:[%s0 + $0x60] sm:$0xff]
    %v25 = vld [vmem:[%s0 + $0x68] sm:$0xff]
    %v26 = vld [vmem:[%s0 + $0x70] sm:$0xff]
    %v27 = vld [vmem:[%s0 + $0x78] sm:$0xff]
    %v28 = vld [vmem:[%s0 + $0x80] sm:$0xff]
    %v29 = vld [vmem:[%s0 + $0x88] sm:$0xff]
    %v30 = vld [vmem:[%s0 + $0x90] sm:$0xff]
    %v31 = vld [vmem:[%s0 + $0x98] sm:$0xff]
    %v32 = vld [vmem:[%s0 + $0xa0] sm:$0xff]
    %v33 = vld [vmem:[%s0 + $0xa8] sm:$0xff]
    %v34 = vld [vmem:[%s0 + $0xb0] sm:$0xff]
    %v35 = vld [vmem:[%s0 + $0xb8] sm:$0xff]
    %v36 = vld [vmem:[%s0 + $0xc0] sm:$0xff]
    %v37 = vld [vmem:[%s0 + $0xc8] sm:$0xff]
    %v38 = vld [vmem:[%s0 + $0xd0] sm:$0xff]
    %v39 = vld [vmem:[%s0 + $0xd8] sm:$0xff]
    %v40 = vld [vmem:[%s0 + $0xe0] sm:$0xff]
    %v41 = vld [vmem:[%s0 + $0xe8] sm:$0xff]
    %v42 = vld [vmem:[%s0 + $0xf0] sm:$0xff]
    %v43 = vld [vmem:[%s0 + $0xf8] sm:$0xff]
    %v44 = vld [vmem:[%s1] sm:$0xff]
    %vm45 = vcmask 64512
    %v47 = vsel %vm45, %v12, 0
    %v50 = vsel %vm45, %v13, 0
    %v53 = vsel %vm45, %v14, 0
    %v56 = vsel %vm45, %v15, 0
    %v59 = vsel %vm45, %v16, 0
    %v62 = vsel %vm45, %v17, 0
    %v65 = vsel %vm45, %v18, 0
    %v68 = vsel %vm45, %v19, 0
    %v71 = vsel %vm45, %v20, 0
    %v74 = vsel %vm45, %v21, 0
    %v77 = vsel %vm45, %v22, 0
    %v80 = vsel %vm45, %v23, 0
    %v83 = vsel %vm45, %v24, 0
    %v86 = vsel %vm45, %v25, 0
    %v89 = vsel %vm45, %v26, 0
    %v92 = vsel %vm45, %v27, 0
    %v95 = vsel %vm45, %v28, 0
    %v98 = vsel %vm45, %v29, 0
    %v101 = vsel %vm45, %v30, 0
    %v104 = vsel %vm45, %v31, 0
    %v107 = vsel %vm45, %v32, 0
    %v110 = vsel %vm45, %v33, 0
    %v113 = vsel %vm45, %v34, 0
    %v116 = vsel %vm45, %v35, 0
    %v119 = vsel %vm45, %v36, 0
    %v122 = vsel %vm45, %v37, 0
    %v125 = vsel %vm45, %v38, 0
    %v128 = vsel %vm45, %v39, 0
    %v131 = vsel %vm45, %v40, 0
    %v134 = vsel %vm45, %v41, 0
    %v137 = vsel %vm45, %v42, 0
    %v140 = vsel %vm45, %v43, 0
    %142 = vmatprep.subr.mxu0 0.0
    %143 = vmatpush1.msra.mxu0 %v44
    %144 = vmatprep.subr.mxu0 0.0
    %145 = vmatpush1.msra.mxu0 0.0
    %146 = vmatprep.subr.mxu0 0.0
    %147 = vmatpush1.msra.mxu0 0.0
    %148 = vmatprep.subr.mxu0 0.0
    %149 = vmatpush1.msra.mxu0 0.0
    %150 = vmatprep.subr.mxu0 0.0
    %151 = vmatpush1.msra.mxu0 0.0
    %152 = vmatprep.subr.mxu0 0.0
    %153 = vmatpush1.msra.mxu0 0.0
    %154 = vmatprep.subr.mxu0 0.0
    %155 = vmatpush1.msra.mxu0 0.0
    %156 = vmatprep.subr.mxu0 0.0
    %157 = vmatpush1.msra.mxu0 0.0
    %158 = vmatprep.subr.mxu0 0.0
    %159 = vmatpush1.msra.mxu0 0.0
    %160 = vmatprep.subr.mxu0 0.0
    %161 = vmatpush1.msra.mxu0 0.0
    %162 = vmatprep.subr.mxu0 0.0
    %163 = vmatpush1.msra.mxu0 0.0
    %164 = vmatprep.subr.mxu0 0.0
    %165 = vmatpush1.msra.mxu0 0.0
    %166 = vmatprep.subr.mxu0 0.0
    %167 = vmatpush1.msra.mxu0 0.0
    %168 = vmatprep.subr.mxu0 0.0
    %169 = vmatpush1.msra.mxu0 0.0
    %170 = vmatprep.subr.mxu0 0.0
    %171 = vmatpush1.msra.mxu0 0.0
    %172 = vmatprep.subr.mxu0 0.0
    %173 = vmatpush1.msra.mxu0 0.0
    %174 = vmatprep.subr.mxu0 0.0
    %175 = vmatpush1.msra.mxu0 0.0
    %176 = vmatprep.subr.mxu0 0.0
    %177 = vmatpush1.msra.mxu0 0.0
    %178 = vmatprep.subr.mxu0 0.0
    %179 = vmatpush1.msra.mxu0 0.0
    %180 = vmatprep.subr.mxu0 0.0
    %181 = vmatpush1.msra.mxu0 0.0
    %182 = vmatprep.subr.mxu0 0.0
    %183 = vmatpush1.msra.mxu0 0.0
    %184 = vmatprep.subr.mxu0 0.0
    %185 = vmatpush1.msra.mxu0 0.0
    %186 = vmatprep.subr.mxu0 0.0
    %187 = vmatpush1.msra.mxu0 0.0
    %188 = vmatprep.subr.mxu0 0.0
    %189 = vmatpush1.msra.mxu0 0.0
    %190 = vmatprep.subr.mxu0 0.0
    %191 = vmatpush1.msra.mxu0 0.0
    %192 = vmatprep.subr.mxu0 0.0
    %193 = vmatpush1.msra.mxu0 0.0
    %194 = vmatprep.subr.mxu0 0.0
    %195 = vmatpush1.msra.mxu0 0.0
    %196 = vmatprep.subr.mxu0 0.0
    %197 = vmatpush1.msra.mxu0 0.0
    %198 = vmatprep.subr.mxu0 0.0
    %199 = vmatpush1.msra.mxu0 0.0
    %200 = vmatprep.subr.mxu0 0.0
    %201 = vmatpush1.msra.mxu0 0.0
    %202 = vmatprep.subr.mxu0 0.0
    %203 = vmatpush1.msra.mxu0 0.0
    %204 = vmatprep.subr.mxu0 0.0
    %205 = vmatpush1.msra.mxu0 0.0
    %206 = vmatprep.mubr.f32.mxu0 0.0
    %207 = vmatmul.mubr.f32.gmra.mrb[0].mxu0 %v47
    %v208 = vpop.f32.mrb[0].mxu0
    %v209 = vadd.f32 0.0, %v208
    %v210 = vpop.f32.mrb[0].mxu0
    %211 = vmatprep.mubr.f32.mxu0 0.0
    %212 = vmatmul.mubr.f32.gmra.mrb[0].mxu0 %v50
    %v213 = vpop.f32.mrb[0].mxu0
    %v214 = vadd.f32 0.0, %v213
    %v215 = vpop.f32.mrb[0].mxu0
    %216 = vmatprep.mubr.f32.mxu0 0.0
    %217 = vmatmul.mubr.f32.gmra.mrb[0].mxu0 %v53
    %v218 = vpop.f32.mrb[0].mxu0
    %v219 = vadd.f32 0.0, %v218
    %v220 = vpop.f32.mrb[0].mxu0
    %221 = vmatprep.mubr.f32.mxu0 0.0
    %222 = vmatmul.mubr.f32.gmra.mrb[0].mxu0 %v56
    %v223 = vpop.f32.mrb[0].mxu0
    %v224 = vadd.f32 0.0, %v223
    %v225 = vpop.f32.mrb[0].mxu0
    %226 = vmatprep.mubr.f32.mxu0 0.0
    %227 = vmatmul.mubr.f32.gmra.mrb[0].mxu0 %v59
    %v228 = vpop.f32.mrb[0].mxu0
    %v229 = vadd.f32 0.0, %v228
    %v230 = vpop.f32.mrb[0].mxu0
    %231 = vmatprep.mubr.f32.mxu0 0.0
    %232 = vmatmul.mubr.f32.gmra.mrb[0].mxu0 %v62
    %v233 = vpop.f32.mrb[0].mxu0
    %v234 = vadd.f32 0.0, %v233
    %v235 = vpop.f32.mrb[0].mxu0
    %236 = vmatprep.mubr.f32.mxu0 0.0
    %237 = vmatmul.mubr.f32.gmra.mrb[0].mxu0 %v65
    %v238 = vpop.f32.mrb[0].mxu0
    %v239 = vadd.f32 0.0, %v238
    %v240 = vpop.f32.mrb[0].mxu0
    %241 = vmatprep.mubr.f32.mxu0 0.0
    %242 = vmatmul.mubr.f32.gmra.mrb[0].mxu0 %v68
    %v243 = vpop.f32.mrb[0].mxu0
    %v244 = vadd.f32 0.0, %v243
    %v245 = vpop.f32.mrb[0].mxu0
    %246 = vmatprep.mubr.f32.mxu0 0.0
    %247 = vmatmul.mubr.f32.gmra.mrb[0].mxu0 %v71
    %v248 = vpop.f32.mrb[0].mxu0
    %v249 = vadd.f32 0.0, %v248
    %v250 = vpop.f32.mrb[0].mxu0
    %251 = vmatprep.mubr.f32.mxu0 0.0
    %252 = vmatmul.mubr.f32.gmra.mrb[0].mxu0 %v74
    %v253 = vpop.f32.mrb[0].mxu0
    %v254 = vadd.f32 0.0, %v253
    %v255 = vpop.f32.mrb[0].mxu0
    %256 = vmatprep.mubr.f32.mxu0 0.0
    %257 = vmatmul.mubr.f32.gmra.mrb[0].mxu0 %v77
    %v258 = vpop.f32.mrb[0].mxu0
    %v259 = vadd.f32 0.0, %v258
    %v260 = vpop.f32.mrb[0].mxu0
    %261 = vmatprep.mubr.f32.mxu0 0.0
    %262 = vmatmul.mubr.f32.gmra.mrb[0].mxu0 %v80
    %v263 = vpop.f32.mrb[0].mxu0
    %v264 = vadd.f32 0.0, %v263
    %v265 = vpop.f32.mrb[0].mxu0
    %266 = vmatprep.mubr.f32.mxu0 0.0
    %267 = vmatmul.mubr.f32.gmra.mrb[0].mxu0 %v83
    %v268 = vpop.f32.mrb[0].mxu0
    %v269 = vadd.f32 0.0, %v268
    %v270 = vpop.f32.mrb[0].mxu0
    %271 = vmatprep.mubr.f32.mxu0 0.0
    %272 = vmatmul.mubr.f32.gmra.mrb[0].mxu0 %v86
    %v273 = vpop.f32.mrb[0].mxu0
    %v274 = vadd.f32 0.0, %v273
    %v275 = vpop.f32.mrb[0].mxu0
    %276 = vmatprep.mubr.f32.mxu0 0.0
    %277 = vmatmul.mubr.f32.gmra.mrb[0].mxu0 %v89
    %v278 = vpop.f32.mrb[0].mxu0
    %v279 = vadd.f32 0.0, %v278
    %v280 = vpop.f32.mrb[0].mxu0
    %281 = vmatprep.mubr.f32.mxu0 0.0
    %282 = vmatmul.mubr.f32.gmra.mrb[0].mxu0 %v92
    %v283 = vpop.f32.mrb[0].mxu0
    %v284 = vadd.f32 0.0, %v283
    %v285 = vpop.f32.mrb[0].mxu0
    %286 = vmatprep.mubr.f32.mxu0 0.0
    %287 = vmatmul.mubr.f32.gmra.mrb[0].mxu0 %v95
    %v288 = vpop.f32.mrb[0].mxu0
    %v289 = vadd.f32 0.0, %v288
    %v290 = vpop.f32.mrb[0].mxu0
    %291 = vmatprep.mubr.f32.mxu0 0.0
    %292 = vmatmul.mubr.f32.gmra.mrb[0].mxu0 %v98
    %v293 = vpop.f32.mrb[0].mxu0
    %v294 = vadd.f32 0.0, %v293
    %v295 = vpop.f32.mrb[0].mxu0
    %296 = vmatprep.mubr.f32.mxu0 0.0
    %297 = vmatmul.mubr.f32.gmra.mrb[0].mxu0 %v101
    %v298 = vpop.f32.mrb[0].mxu0
    %v299 = vadd.f32 0.0, %v298
    %v300 = vpop.f32.mrb[0].mxu0
    %301 = vmatprep.mubr.f32.mxu0 0.0
    %302 = vmatmul.mubr.f32.gmra.mrb[0].mxu0 %v104
    %v303 = vpop.f32.mrb[0].mxu0
    %v304 = vadd.f32 0.0, %v303
    %v305 = vpop.f32.mrb[0].mxu0
    %306 = vmatprep.mubr.f32.mxu0 0.0
    %307 = vmatmul.mubr.f32.gmra.mrb[0].mxu0 %v107
    %v308 = vpop.f32.mrb[0].mxu0
    %v309 = vadd.f32 0.0, %v308
    %v310 = vpop.f32.mrb[0].mxu0
    %311 = vmatprep.mubr.f32.mxu0 0.0
    %312 = vmatmul.mubr.f32.gmra.mrb[0].mxu0 %v110
    %v313 = vpop.f32.mrb[0].mxu0
    %v314 = vadd.f32 0.0, %v313
    %v315 = vpop.f32.mrb[0].mxu0
    %316 = vmatprep.mubr.f32.mxu0 0.0
    %317 = vmatmul.mubr.f32.gmra.mrb[0].mxu0 %v113
    %v318 = vpop.f32.mrb[0].mxu0
    %v319 = vadd.f32 0.0, %v318
    %v320 = vpop.f32.mrb[0].mxu0
    %321 = vmatprep.mubr.f32.mxu0 0.0
    %322 = vmatmul.mubr.f32.gmra.mrb[0].mxu0 %v116
    %v323 = vpop.f32.mrb[0].mxu0
    %v324 = vadd.f32 0.0, %v323
    %v325 = vpop.f32.mrb[0].mxu0
    %326 = vmatprep.mubr.f32.mxu0 0.0
    %327 = vmatmul.mubr.f32.gmra.mrb[0].mxu0 %v119
    %v328 = vpop.f32.mrb[0].mxu0
    %v329 = vadd.f32 0.0, %v328
    %v330 = vpop.f32.mrb[0].mxu0
    %331 = vmatprep.mubr.f32.mxu0 0.0
    %332 = vmatmul.mubr.f32.gmra.mrb[0].mxu0 %v122
    %v333 = vpop.f32.mrb[0].mxu0
    %v334 = vadd.f32 0.0, %v333
    %v335 = vpop.f32.mrb[0].mxu0
    %336 = vmatprep.mubr.f32.mxu0 0.0
    %337 = vmatmul.mubr.f32.gmra.mrb[0].mxu0 %v125
    %v338 = vpop.f32.mrb[0].mxu0
    %v339 = vadd.f32 0.0, %v338
    %v340 = vpop.f32.mrb[0].mxu0
    %341 = vmatprep.mubr.f32.mxu0 0.0
    %342 = vmatmul.mubr.f32.gmra.mrb[0].mxu0 %v128
    %v343 = vpop.f32.mrb[0].mxu0
    %v344 = vadd.f32 0.0, %v343
    %v345 = vpop.f32.mrb[0].mxu0
    %346 = vmatprep.mubr.f32.mxu0 0.0
    %347 = vmatmul.mubr.f32.gmra.mrb[0].mxu0 %v131
    %v348 = vpop.f32.mrb[0].mxu0
    %v349 = vadd.f32 0.0, %v348
    %v350 = vpop.f32.mrb[0].mxu0
    %351 = vmatprep.mubr.f32.mxu0 0.0
    %352 = vmatmul.mubr.f32.gmra.mrb[0].mxu0 %v134
    %v353 = vpop.f32.mrb[0].mxu0
    %v354 = vadd.f32 0.0, %v353
    %v355 = vpop.f32.mrb[0].mxu0
    %356 = vmatprep.mubr.f32.mxu0 0.0
    %357 = vmatmul.mubr.f32.gmra.mrb[0].mxu0 %v137
    %v358 = vpop.f32.mrb[0].mxu0
    %v359 = vadd.f32 0.0, %v358
    %v360 = vpop.f32.mrb[0].mxu0
    %361 = vmatprep.mubr.f32.mxu0 0.0
    %362 = vmatmul.mubr.f32.gmra.mrb[0].mxu0 %v140
    %v363 = vpop.f32.mrb[0].mxu0
    %v364 = vadd.f32 0.0, %v363
    %v365 = vpop.f32.mrb[0].mxu0
    %366 = vdwg.mxu0
    %v367 = vand.u32 2147483647, %v209
    %vm368 = vcmp.le.f32.partialorder %v367, 0.7853982
    %vm369 = vcmp.lt.s32.totalorder %v209, 0
    %v370 = vand.u32 %v209, 2139095040
    %v371 = vshrl.u32 %v370, 23
    %v372 = vsub.s32 %v371, 127
    %v373 = vand.u32 2147483647, %v209
    %v374 = vand.u32 %v373, 8388607
    %v375 = vor.u32 %v374, 8388608
    %v376 = vsub.s32 0, %v375
    %v377 = vadd.s32 %v372, 1
    %vm378 = vcmp.gt.s32.totalorder %v377, 0
    %v379 = vsel %vm378, %v377, 0
    %v380 = vshrl.u32 %v379, 5
    %v381 = vand.u32 %v379, 31
    %v382 = vsub.s32 32, %v381
    %v383 = vshrl.u32 683565275, %v382
    %v384 = vshll.u32 683565275, %v381
    %v385 = vshrl.u32 2475754826, %v382
    %v386 = vor.u32 %v384, %v385
    %v387 = vshll.u32 2475754826, %v381
    %v388 = vshrl.u32 2131351028, %v382
    %v389 = vor.u32 %v387, %v388
    %v390 = vshll.u32 2131351028, %v381
    %v391 = vshrl.u32 2102212464, %v382
    %v392 = vor.u32 %v390, %v391
    %v393 = vshll.u32 2102212464, %v381
    %v394 = vshrl.u32 920167782, %v382
    %v395 = vor.u32 %v393, %v394
    %v396 = vshll.u32 920167782, %v381
    %v397 = vshrl.u32 1326507024, %v382
    %v398 = vor.u32 %v396, %v397
    %vm399 = vcmp.lt.s32.totalorder %v380, 1
    %vm400 = vcmp.lt.s32.totalorder %v380, 2
    %vm401 = vcmp.lt.s32.totalorder %v380, 3
    %vm402 = vcmp.lt.s32.totalorder %v380, 4
    %v403 = vsel %vm399, %v383, %v386
    %v404 = vsel %vm402, %v392, 2102212464
    %v405 = vsel %vm401, %v389, %v404
    %v406 = vsel %vm400, %v403, %v405
    %v407 = vsel %vm399, %v386, %v389
    %v408 = vsel %vm402, %v395, 920167782
    %v409 = vsel %vm401, %v392, %v408
    %v410 = vsel %vm400, %v407, %v409
    %v411 = vsel %vm399, %v389, %v392
    %v412 = vsel %vm402, %v398, 1326507024
    %v413 = vsel %vm401, %v395, %v412
    %v414 = vsel %vm400, %v411, %v413
    %v415 = vshll.u32 %v375, 8
    %v416 = vmul.u32.u64.compose %v415, %v414
    %v417 = vextract.low.u32 %v416
    %v418 = vextract.high.u32 %v416
    %v419 = vmul.u32.u64.compose %v415, %v410
    %v420 = vextract.low.u32 %v419
    %v421 = vextract.high.u32 %v419
    %v422 = vmul.u32 %v415, %v406
    %v423 = vadd.s32 %v418, %v420
    %vm424 = vc.u32 %v418, %v420
    %v425 = vadd.s32 %v421, 1
    %v426 = vsel %vm424, %v425, %v421
    %v427 = vadd.s32 %v422, %v426
    %v428 = vadd.s32 %v427, 536870912
    %v429 = vshrl.u32 %v428, 30
    %v430 = vshll.u32 %v429, 30
    %v431 = vsub.s32 %v427, %v430
    %vm432 = vcmp.lt.s32.totalorder %v431, 0
    %v433 = vsub.s32 0, %v431
    %v434 = vsel %vm432, %v433, %v431
    %v435 = vclz %v434
    %v436 = vsub.s32 %v435, 2
    %vm437 = vcmp.gt.s32.totalorder 0, %v436
    %v438 = vsel %vm437, 0, %v436
    %v439 = vsub.s32 32, %v438
    %v440 = vshll.u32 %v431, %v438
    %v441 = vshrl.u32 %v423, %v439
    %v442 = vor.u32 %v440, %v441
    %v443 = vsub.s32 4294967266, %v438
    %v444 = vadd.s32 %v443, 127
    %v445 = vshll.u32 %v444, 23
    %v446 = vor.u32 4788187, %v445
    %v447 = vand.u32 2147483647, %v446
    %v449 = vcvt.s32.f32 %v442
    %v450 = vmul.f32 %v449, %v447
    %v451 = vxor.u32 %v450, 2147483648
    %v452 = vsel %vm369, %v451, %v450
    %v453 = vsub.s32 4, %v429
    %v454 = vsel %vm369, %v453, %v429
    %v455 = vsel %vm368, %v209, %v452
    %v456 = vsel %vm368, 0, %v454
    %v457 = vcosq.f32.pop %v455
    %v458 = vsinq.f32.pop %v455
    %vm459 = vweird.f32 %v209
    %v460 = vand.u32 %v456, 3
    %vm461 = vcmp.lt.s32.totalorder %v460, 2
    %vm462 = vcmp.eq.s32.totalorder %v460, 0
    %v463 = vxor.u32 %v458, 2147483648
    %v464 = vsel %vm462, %v457, %v463
    %vm465 = vcmp.eq.s32.totalorder %v460, 2
    %v466 = vxor.u32 %v457, 2147483648
    %v467 = vsel %vm465, %v466, %v458
    %v468 = vsel %vm461, %v464, %v467
    %v469 = vsel %vm459, nan, %v468
    %v470 = vand.u32 2147483647, %v214
    %vm471 = vcmp.le.f32.partialorder %v470, 0.7853982
    %vm472 = vcmp.lt.s32.totalorder %v214, 0
    %v473 = vand.u32 %v214, 2139095040
    %v474 = vshrl.u32 %v473, 23
    %v475 = vsub.s32 %v474, 127
    %v476 = vand.u32 2147483647, %v214
    %v477 = vand.u32 %v476, 8388607
    %v478 = vor.u32 %v477, 8388608
    %v479 = vsub.s32 0, %v478
    %v480 = vadd.s32 %v475, 1
    %vm481 = vcmp.gt.s32.totalorder %v480, 0
    %v482 = vsel %vm481, %v480, 0
    %v483 = vshrl.u32 %v482, 5
    %v484 = vand.u32 %v482, 31
    %v485 = vsub.s32 32, %v484
    %v486 = vshrl.u32 683565275, %v485
    %v487 = vshll.u32 683565275, %v484
    %v488 = vshrl.u32 2475754826, %v485
    %v489 = vor.u32 %v487, %v488
    %v490 = vshll.u32 2475754826, %v484
    %v491 = vshrl.u32 2131351028, %v485
    %v492 = vor.u32 %v490, %v491
    %v493 = vshll.u32 2131351028, %v484
    %v494 = vshrl.u32 2102212464, %v485
    %v495 = vor.u32 %v493, %v494
    %v496 = vshll.u32 2102212464, %v484
    %v497 = vshrl.u32 920167782, %v485
    %v498 = vor.u32 %v496, %v497
    %v499 = vshll.u32 920167782, %v484
    %v500 = vshrl.u32 1326507024, %v485
    %v501 = vor.u32 %v499, %v500
    %vm502 = vcmp.lt.s32.totalorder %v483, 1
    %vm503 = vcmp.lt.s32.totalorder %v483, 2
    %vm504 = vcmp.lt.s32.totalorder %v483, 3
    %vm505 = vcmp.lt.s32.totalorder %v483, 4
    %v506 = vsel %vm502, %v486, %v489
    %v507 = vsel %vm505, %v495, 2102212464
    %v508 = vsel %vm504, %v492, %v507
    %v509 = vsel %vm503, %v506, %v508
    %v510 = vsel %vm502, %v489, %v492
    %v511 = vsel %vm505, %v498, 920167782
    %v512 = vsel %vm504, %v495, %v511
    %v513 = vsel %vm503, %v510, %v512
    %v514 = vsel %vm502, %v492, %v495
    %v515 = vsel %vm505, %v501, 1326507024
    %v516 = vsel %vm504, %v498, %v515
    %v517 = vsel %vm503, %v514, %v516
    %v518 = vshll.u32 %v478, 8
    %v519 = vmul.u32.u64.compose %v518, %v517
    %v520 = vextract.low.u32 %v519
    %v521 = vextract.high.u32 %v519
    %v522 = vmul.u32.u64.compose %v518, %v513
    %v523 = vextract.low.u32 %v522
    %v524 = vextract.high.u32 %v522
    %v525 = vmul.u32 %v518, %v509
    %v526 = vadd.s32 %v521, %v523
    %vm527 = vc.u32 %v521, %v523
    %v528 = vadd.s32 %v524, 1
    %v529 = vsel %vm527, %v528, %v524
    %v530 = vadd.s32 %v525, %v529
    %v531 = vadd.s32 %v530, 536870912
    %v532 = vshrl.u32 %v531, 30
    %v533 = vshll.u32 %v532, 30
    %v534 = vsub.s32 %v530, %v533
    %vm535 = vcmp.lt.s32.totalorder %v534, 0
    %v536 = vsub.s32 0, %v534
    %v537 = vsel %vm535, %v536, %v534
    %v538 = vclz %v537
    %v539 = vsub.s32 %v538, 2
    %vm540 = vcmp.gt.s32.totalorder 0, %v539
    %v541 = vsel %vm540, 0, %v539
    %v542 = vsub.s32 32, %v541
    %v543 = vshll.u32 %v534, %v541
    %v544 = vshrl.u32 %v526, %v542
    %v545 = vor.u32 %v543, %v544
    %v546 = vsub.s32 4294967266, %v541
    %v547 = vadd.s32 %v546, 127
    %v548 = vshll.u32 %v547, 23
    %v549 = vor.u32 4788187, %v548
    %v550 = vand.u32 2147483647, %v549
    %v552 = vcvt.s32.f32 %v545
    %v553 = vmul.f32 %v552, %v550
    %v554 = vxor.u32 %v553, 2147483648
    %v555 = vsel %vm472, %v554, %v553
    %v556 = vsub.s32 4, %v532
    %v557 = vsel %vm472, %v556, %v532
    %v558 = vsel %vm471, %v214, %v555
    %v559 = vsel %vm471, 0, %v557
    %v560 = vcosq.f32.pop %v558
    %v561 = vsinq.f32.pop %v558
    %vm562 = vweird.f32 %v214
    %v563 = vand.u32 %v559, 3
    %vm564 = vcmp.lt.s32.totalorder %v563, 2
    %vm565 = vcmp.eq.s32.totalorder %v563, 0
    %v566 = vxor.u32 %v561, 2147483648
    %v567 = vsel %vm565, %v560, %v566
    %vm568 = vcmp.eq.s32.totalorder %v563, 2
    %v569 = vxor.u32 %v560, 2147483648
    %v570 = vsel %vm568, %v569, %v561
    %v571 = vsel %vm564, %v567, %v570
    %v572 = vsel %vm562, nan, %v571
    %v573 = vand.u32 2147483647, %v219
    %vm574 = vcmp.le.f32.partialorder %v573, 0.7853982
    %vm575 = vcmp.lt.s32.totalorder %v219, 0
    %v576 = vand.u32 %v219, 2139095040
    %v577 = vshrl.u32 %v576, 23
    %v578 = vsub.s32 %v577, 127
    %v579 = vand.u32 2147483647, %v219
    %v580 = vand.u32 %v579, 8388607
    %v581 = vor.u32 %v580, 8388608
    %v582 = vsub.s32 0, %v581
    %v583 = vadd.s32 %v578, 1
    %vm584 = vcmp.gt.s32.totalorder %v583, 0
    %v585 = vsel %vm584, %v583, 0
    %v586 = vshrl.u32 %v585, 5
    %v587 = vand.u32 %v585, 31
    %v588 = vsub.s32 32, %v587
    %v589 = vshrl.u32 683565275, %v588
    %v590 = vshll.u32 683565275, %v587
    %v591 = vshrl.u32 2475754826, %v588
    %v592 = vor.u32 %v590, %v591
    %v593 = vshll.u32 2475754826, %v587
    %v594 = vshrl.u32 2131351028, %v588
    %v595 = vor.u32 %v593, %v594
    %v596 = vshll.u32 2131351028, %v587
    %v597 = vshrl.u32 2102212464, %v588
    %v598 = vor.u32 %v596, %v597
    %v599 = vshll.u32 2102212464, %v587
    %v600 = vshrl.u32 920167782, %v588
    %v601 = vor.u32 %v599, %v600
    %v602 = vshll.u32 920167782, %v587
    %v603 = vshrl.u32 1326507024, %v588
    %v604 = vor.u32 %v602, %v603
    %vm605 = vcmp.lt.s32.totalorder %v586, 1
    %vm606 = vcmp.lt.s32.totalorder %v586, 2
    %vm607 = vcmp.lt.s32.totalorder %v586, 3
    %vm608 = vcmp.lt.s32.totalorder %v586, 4
    %v609 = vsel %vm605, %v589, %v592
    %v610 = vsel %vm608, %v598, 2102212464
    %v611 = vsel %vm607, %v595, %v610
    %v612 = vsel %vm606, %v609, %v611
    %v613 = vsel %vm605, %v592, %v595
    %v614 = vsel %vm608, %v601, 920167782
    %v615 = vsel %vm607, %v598, %v614
    %v616 = vsel %vm606, %v613, %v615
    %v617 = vsel %vm605, %v595, %v598
    %v618 = vsel %vm608, %v604, 1326507024
    %v619 = vsel %vm607, %v601, %v618
    %v620 = vsel %vm606, %v617, %v619
    %v621 = vshll.u32 %v581, 8
    %v622 = vmul.u32.u64.compose %v621, %v620
    %v623 = vextract.low.u32 %v622
    %v624 = vextract.high.u32 %v622
    %v625 = vmul.u32.u64.compose %v621, %v616
    %v626 = vextract.low.u32 %v625
    %v627 = vextract.high.u32 %v625
    %v628 = vmul.u32 %v621, %v612
    %v629 = vadd.s32 %v624, %v626
    %vm630 = vc.u32 %v624, %v626
    %v631 = vadd.s32 %v627, 1
    %v632 = vsel %vm630, %v631, %v627
    %v633 = vadd.s32 %v628, %v632
    %v634 = vadd.s32 %v633, 536870912
    %v635 = vshrl.u32 %v634, 30
    %v636 = vshll.u32 %v635, 30
    %v637 = vsub.s32 %v633, %v636
    %vm638 = vcmp.lt.s32.totalorder %v637, 0
    %v639 = vsub.s32 0, %v637
    %v640 = vsel %vm638, %v639, %v637
    %v641 = vclz %v640
    %v642 = vsub.s32 %v641, 2
    %vm643 = vcmp.gt.s32.totalorder 0, %v642
    %v644 = vsel %vm643, 0, %v642
    %v645 = vsub.s32 32, %v644
    %v646 = vshll.u32 %v637, %v644
    %v647 = vshrl.u32 %v629, %v645
    %v648 = vor.u32 %v646, %v647
    %v649 = vsub.s32 4294967266, %v644
    %v650 = vadd.s32 %v649, 127
    %v651 = vshll.u32 %v650, 23
    %v652 = vor.u32 4788187, %v651
    %v653 = vand.u32 2147483647, %v652
    %v655 = vcvt.s32.f32 %v648
    %v656 = vmul.f32 %v655, %v653
    %v657 = vxor.u32 %v656, 2147483648
    %v658 = vsel %vm575, %v657, %v656
    %v659 = vsub.s32 4, %v635
    %v660 = vsel %vm575, %v659, %v635
    %v661 = vsel %vm574, %v219, %v658
    %v662 = vsel %vm574, 0, %v660
    %v663 = vcosq.f32.pop %v661
    %v664 = vsinq.f32.pop %v661
    %vm665 = vweird.f32 %v219
    %v666 = vand.u32 %v662, 3
    %vm667 = vcmp.lt.s32.totalorder %v666, 2
    %vm668 = vcmp.eq.s32.totalorder %v666, 0
    %v669 = vxor.u32 %v664, 2147483648
    %v670 = vsel %vm668, %v663, %v669
    %vm671 = vcmp.eq.s32.totalorder %v666, 2
    %v672 = vxor.u32 %v663, 2147483648
    %v673 = vsel %vm671, %v672, %v664
    %v674 = vsel %vm667, %v670, %v673
    %v675 = vsel %vm665, nan, %v674
    %v676 = vand.u32 2147483647, %v224
    %vm677 = vcmp.le.f32.partialorder %v676, 0.7853982
    %vm678 = vcmp.lt.s32.totalorder %v224, 0
    %v679 = vand.u32 %v224, 2139095040
    %v680 = vshrl.u32 %v679, 23
    %v681 = vsub.s32 %v680, 127
    %v682 = vand.u32 2147483647, %v224
    %v683 = vand.u32 %v682, 8388607
    %v684 = vor.u32 %v683, 8388608
    %v685 = vsub.s32 0, %v684
    %v686 = vadd.s32 %v681, 1
    %vm687 = vcmp.gt.s32.totalorder %v686, 0
    %v688 = vsel %vm687, %v686, 0
    %v689 = vshrl.u32 %v688, 5
    %v690 = vand.u32 %v688, 31
    %v691 = vsub.s32 32, %v690
    %v692 = vshrl.u32 683565275, %v691
    %v693 = vshll.u32 683565275, %v690
    %v694 = vshrl.u32 2475754826, %v691
    %v695 = vor.u32 %v693, %v694
    %v696 = vshll.u32 2475754826, %v690
    %v697 = vshrl.u32 2131351028, %v691
    %v698 = vor.u32 %v696, %v697
    %v699 = vshll.u32 2131351028, %v690
    %v700 = vshrl.u32 2102212464, %v691
    %v701 = vor.u32 %v699, %v700
    %v702 = vshll.u32 2102212464, %v690
    %v703 = vshrl.u32 920167782, %v691
    %v704 = vor.u32 %v702, %v703
    %v705 = vshll.u32 920167782, %v690
    %v706 = vshrl.u32 1326507024, %v691
    %v707 = vor.u32 %v705, %v706
    %vm708 = vcmp.lt.s32.totalorder %v689, 1
    %vm709 = vcmp.lt.s32.totalorder %v689, 2
    %vm710 = vcmp.lt.s32.totalorder %v689, 3
    %vm711 = vcmp.lt.s32.totalorder %v689, 4
    %v712 = vsel %vm708, %v692, %v695
    %v713 = vsel %vm711, %v701, 2102212464
    %v714 = vsel %vm710, %v698, %v713
    %v715 = vsel %vm709, %v712, %v714
    %v716 = vsel %vm708, %v695, %v698
    %v717 = vsel %vm711, %v704, 920167782
    %v718 = vsel %vm710, %v701, %v717
    %v719 = vsel %vm709, %v716, %v718
    %v720 = vsel %vm708, %v698, %v701
    %v721 = vsel %vm711, %v707, 1326507024
    %v722 = vsel %vm710, %v704, %v721
    %v723 = vsel %vm709, %v720, %v722
    %v724 = vshll.u32 %v684, 8
    %v725 = vmul.u32.u64.compose %v724, %v723
    %v726 = vextract.low.u32 %v725
    %v727 = vextract.high.u32 %v725
    %v728 = vmul.u32.u64.compose %v724, %v719
    %v729 = vextract.low.u32 %v728
    %v730 = vextract.high.u32 %v728
    %v731 = vmul.u32 %v724, %v715
    %v732 = vadd.s32 %v727, %v729
    %vm733 = vc.u32 %v727, %v729
    %v734 = vadd.s32 %v730, 1
    %v735 = vsel %vm733, %v734, %v730
    %v736 = vadd.s32 %v731, %v735
    %v737 = vadd.s32 %v736, 536870912
    %v738 = vshrl.u32 %v737, 30
    %v739 = vshll.u32 %v738, 30
    %v740 = vsub.s32 %v736, %v739
    %vm741 = vcmp.lt.s32.totalorder %v740, 0
    %v742 = vsub.s32 0, %v740
    %v743 = vsel %vm741, %v742, %v740
    %v744 = vclz %v743
    %v745 = vsub.s32 %v744, 2
    %vm746 = vcmp.gt.s32.totalorder 0, %v745
    %v747 = vsel %vm746, 0, %v745
    %v748 = vsub.s32 32, %v747
    %v749 = vshll.u32 %v740, %v747
    %v750 = vshrl.u32 %v732, %v748
    %v751 = vor.u32 %v749, %v750
    %v752 = vsub.s32 4294967266, %v747
    %v753 = vadd.s32 %v752, 127
    %v754 = vshll.u32 %v753, 23
    %v755 = vor.u32 4788187, %v754
    %v756 = vand.u32 2147483647, %v755
    %v758 = vcvt.s32.f32 %v751
    %v759 = vmul.f32 %v758, %v756
    %v760 = vxor.u32 %v759, 2147483648
    %v761 = vsel %vm678, %v760, %v759
    %v762 = vsub.s32 4, %v738
    %v763 = vsel %vm678, %v762, %v738
    %v764 = vsel %vm677, %v224, %v761
    %v765 = vsel %vm677, 0, %v763
    %v766 = vcosq.f32.pop %v764
    %v767 = vsinq.f32.pop %v764
    %vm768 = vweird.f32 %v224
    %v769 = vand.u32 %v765, 3
    %vm770 = vcmp.lt.s32.totalorder %v769, 2
    %vm771 = vcmp.eq.s32.totalorder %v769, 0
    %v772 = vxor.u32 %v767, 2147483648
    %v773 = vsel %vm771, %v766, %v772
    %vm774 = vcmp.eq.s32.totalorder %v769, 2
    %v775 = vxor.u32 %v766, 2147483648
    %v776 = vsel %vm774, %v775, %v767
    %v777 = vsel %vm770, %v773, %v776
    %v778 = vsel %vm768, nan, %v777
    %v779 = vand.u32 2147483647, %v229
    %vm780 = vcmp.le.f32.partialorder %v779, 0.7853982
    %vm781 = vcmp.lt.s32.totalorder %v229, 0
    %v782 = vand.u32 %v229, 2139095040
    %v783 = vshrl.u32 %v782, 23
    %v784 = vsub.s32 %v783, 127
    %v785 = vand.u32 2147483647, %v229
    %v786 = vand.u32 %v785, 8388607
    %v787 = vor.u32 %v786, 8388608
    %v788 = vsub.s32 0, %v787
    %v789 = vadd.s32 %v784, 1
    %vm790 = vcmp.gt.s32.totalorder %v789, 0
    %v791 = vsel %vm790, %v789, 0
    %v792 = vshrl.u32 %v791, 5
    %v793 = vand.u32 %v791, 31
    %v794 = vsub.s32 32, %v793
    %v795 = vshrl.u32 683565275, %v794
    %v796 = vshll.u32 683565275, %v793
    %v797 = vshrl.u32 2475754826, %v794
    %v798 = vor.u32 %v796, %v797
    %v799 = vshll.u32 2475754826, %v793
    %v800 = vshrl.u32 2131351028, %v794
    %v801 = vor.u32 %v799, %v800
    %v802 = vshll.u32 2131351028, %v793
    %v803 = vshrl.u32 2102212464, %v794
    %v804 = vor.u32 %v802, %v803
    %v805 = vshll.u32 2102212464, %v793
    %v806 = vshrl.u32 920167782, %v794
    %v807 = vor.u32 %v805, %v806
    %v808 = vshll.u32 920167782, %v793
    %v809 = vshrl.u32 1326507024, %v794
    %v810 = vor.u32 %v808, %v809
    %vm811 = vcmp.lt.s32.totalorder %v792, 1
    %vm812 = vcmp.lt.s32.totalorder %v792, 2
    %vm813 = vcmp.lt.s32.totalorder %v792, 3
    %vm814 = vcmp.lt.s32.totalorder %v792, 4
    %v815 = vsel %vm811, %v795, %v798
    %v816 = vsel %vm814, %v804, 2102212464
    %v817 = vsel %vm813, %v801, %v816
    %v818 = vsel %vm812, %v815, %v817
    %v819 = vsel %vm811, %v798, %v801
    %v820 = vsel %vm814, %v807, 920167782
    %v821 = vsel %vm813, %v804, %v820
    %v822 = vsel %vm812, %v819, %v821
    %v823 = vsel %vm811, %v801, %v804
    %v824 = vsel %vm814, %v810, 1326507024
    %v825 = vsel %vm813, %v807, %v824
    %v826 = vsel %vm812, %v823, %v825
    %v827 = vshll.u32 %v787, 8
    %v828 = vmul.u32.u64.compose %v827, %v826
    %v829 = vextract.low.u32 %v828
    %v830 = vextract.high.u32 %v828
    %v831 = vmul.u32.u64.compose %v827, %v822
    %v832 = vextract.low.u32 %v831
    %v833 = vextract.high.u32 %v831
    %v834 = vmul.u32 %v827, %v818
    %v835 = vadd.s32 %v830, %v832
    %vm836 = vc.u32 %v830, %v832
    %v837 = vadd.s32 %v833, 1
    %v838 = vsel %vm836, %v837, %v833
    %v839 = vadd.s32 %v834, %v838
    %v840 = vadd.s32 %v839, 536870912
    %v841 = vshrl.u32 %v840, 30
    %v842 = vshll.u32 %v841, 30
    %v843 = vsub.s32 %v839, %v842
    %vm844 = vcmp.lt.s32.totalorder %v843, 0
    %v845 = vsub.s32 0, %v843
    %v846 = vsel %vm844, %v845, %v843
    %v847 = vclz %v846
    %v848 = vsub.s32 %v847, 2
    %vm849 = vcmp.gt.s32.totalorder 0, %v848
    %v850 = vsel %vm849, 0, %v848
    %v851 = vsub.s32 32, %v850
    %v852 = vshll.u32 %v843, %v850
    %v853 = vshrl.u32 %v835, %v851
    %v854 = vor.u32 %v852, %v853
    %v855 = vsub.s32 4294967266, %v850
    %v856 = vadd.s32 %v855, 127
    %v857 = vshll.u32 %v856, 23
    %v858 = vor.u32 4788187, %v857
    %v859 = vand.u32 2147483647, %v858
    %v861 = vcvt.s32.f32 %v854
    %v862 = vmul.f32 %v861, %v859
    %v863 = vxor.u32 %v862, 2147483648
    %v864 = vsel %vm781, %v863, %v862
    %v865 = vsub.s32 4, %v841
    %v866 = vsel %vm781, %v865, %v841
    %v867 = vsel %vm780, %v229, %v864
    %v868 = vsel %vm780, 0, %v866
    %v869 = vcosq.f32.pop %v867
    %v870 = vsinq.f32.pop %v867
    %vm871 = vweird.f32 %v229
    %v872 = vand.u32 %v868, 3
    %vm873 = vcmp.lt.s32.totalorder %v872, 2
    %vm874 = vcmp.eq.s32.totalorder %v872, 0
    %v875 = vxor.u32 %v870, 2147483648
    %v876 = vsel %vm874, %v869, %v875
    %vm877 = vcmp.eq.s32.totalorder %v872, 2
    %v878 = vxor.u32 %v869, 2147483648
    %v879 = vsel %vm877, %v878, %v870
    %v880 = vsel %vm873, %v876, %v879
    %v881 = vsel %vm871, nan, %v880
    %v882 = vand.u32 2147483647, %v234
    %vm883 = vcmp.le.f32.partialorder %v882, 0.7853982
    %vm884 = vcmp.lt.s32.totalorder %v234, 0
    %v885 = vand.u32 %v234, 2139095040
    %v886 = vshrl.u32 %v885, 23
    %v887 = vsub.s32 %v886, 127
    %v888 = vand.u32 2147483647, %v234
    %v889 = vand.u32 %v888, 8388607
    %v890 = vor.u32 %v889, 8388608
    %v891 = vsub.s32 0, %v890
    %v892 = vadd.s32 %v887, 1
    %vm893 = vcmp.gt.s32.totalorder %v892, 0
    %v894 = vsel %vm893, %v892, 0
    %v895 = vshrl.u32 %v894, 5
    %v896 = vand.u32 %v894, 31
    %v897 = vsub.s32 32, %v896
    %v898 = vshrl.u32 683565275, %v897
    %v899 = vshll.u32 683565275, %v896
    %v900 = vshrl.u32 2475754826, %v897
    %v901 = vor.u32 %v899, %v900
    %v902 = vshll.u32 2475754826, %v896
    %v903 = vshrl.u32 2131351028, %v897
    %v904 = vor.u32 %v902, %v903
    %v905 = vshll.u32 2131351028, %v896
    %v906 = vshrl.u32 2102212464, %v897
    %v907 = vor.u32 %v905, %v906
    %v908 = vshll.u32 2102212464, %v896
    %v909 = vshrl.u32 920167782, %v897
    %v910 = vor.u32 %v908, %v909
    %v911 = vshll.u32 920167782, %v896
    %v912 = vshrl.u32 1326507024, %v897
    %v913 = vor.u32 %v911, %v912
    %vm914 = vcmp.lt.s32.totalorder %v895, 1
    %vm915 = vcmp.lt.s32.totalorder %v895, 2
    %vm916 = vcmp.lt.s32.totalorder %v895, 3
    %vm917 = vcmp.lt.s32.totalorder %v895, 4
    %v918 = vsel %vm914, %v898, %v901
    %v919 = vsel %vm917, %v907, 2102212464
    %v920 = vsel %vm916, %v904, %v919
    %v921 = vsel %vm915, %v918, %v920
    %v922 = vsel %vm914, %v901, %v904
    %v923 = vsel %vm917, %v910, 920167782
    %v924 = vsel %vm916, %v907, %v923
    %v925 = vsel %vm915, %v922, %v924
    %v926 = vsel %vm914, %v904, %v907
    %v927 = vsel %vm917, %v913, 1326507024
    %v928 = vsel %vm916, %v910, %v927
    %v929 = vsel %vm915, %v926, %v928
    %v930 = vshll.u32 %v890, 8
    %v931 = vmul.u32.u64.compose %v930, %v929
    %v932 = vextract.low.u32 %v931
    %v933 = vextract.high.u32 %v931
    %v934 = vmul.u32.u64.compose %v930, %v925
    %v935 = vextract.low.u32 %v934
    %v936 = vextract.high.u32 %v934
    %v937 = vmul.u32 %v930, %v921
    %v938 = vadd.s32 %v933, %v935
    %vm939 = vc.u32 %v933, %v935
    %v940 = vadd.s32 %v936, 1
    %v941 = vsel %vm939, %v940, %v936
    %v942 = vadd.s32 %v937, %v941
    %v943 = vadd.s32 %v942, 536870912
    %v944 = vshrl.u32 %v943, 30
    %v945 = vshll.u32 %v944, 30
    %v946 = vsub.s32 %v942, %v945
    %vm947 = vcmp.lt.s32.totalorder %v946, 0
    %v948 = vsub.s32 0, %v946
    %v949 = vsel %vm947, %v948, %v946
    %v950 = vclz %v949
    %v951 = vsub.s32 %v950, 2
    %vm952 = vcmp.gt.s32.totalorder 0, %v951
    %v953 = vsel %vm952, 0, %v951
    %v954 = vsub.s32 32, %v953
    %v955 = vshll.u32 %v946, %v953
    %v956 = vshrl.u32 %v938, %v954
    %v957 = vor.u32 %v955, %v956
    %v958 = vsub.s32 4294967266, %v953
    %v959 = vadd.s32 %v958, 127
    %v960 = vshll.u32 %v959, 23
    %v961 = vor.u32 4788187, %v960
    %v962 = vand.u32 2147483647, %v961
    %v964 = vcvt.s32.f32 %v957
    %v965 = vmul.f32 %v964, %v962
    %v966 = vxor.u32 %v965, 2147483648
    %v967 = vsel %vm884, %v966, %v965
    %v968 = vsub.s32 4, %v944
    %v969 = vsel %vm884, %v968, %v944
    %v970 = vsel %vm883, %v234, %v967
    %v971 = vsel %vm883, 0, %v969
    %v972 = vcosq.f32.pop %v970
    %v973 = vsinq.f32.pop %v970
    %vm974 = vweird.f32 %v234
    %v975 = vand.u32 %v971, 3
    %vm976 = vcmp.lt.s32.totalorder %v975, 2
    %vm977 = vcmp.eq.s32.totalorder %v975, 0
    %v978 = vxor.u32 %v973, 2147483648
    %v979 = vsel %vm977, %v972, %v978
    %vm980 = vcmp.eq.s32.totalorder %v975, 2
    %v981 = vxor.u32 %v972, 2147483648
    %v982 = vsel %vm980, %v981, %v973
    %v983 = vsel %vm976, %v979, %v982
    %v984 = vsel %vm974, nan, %v983
    %v985 = vand.u32 2147483647, %v239
    %vm986 = vcmp.le.f32.partialorder %v985, 0.7853982
    %vm987 = vcmp.lt.s32.totalorder %v239, 0
    %v988 = vand.u32 %v239, 2139095040
    %v989 = vshrl.u32 %v988, 23
    %v990 = vsub.s32 %v989, 127
    %v991 = vand.u32 2147483647, %v239
    %v992 = vand.u32 %v991, 8388607
    %v993 = vor.u32 %v992, 8388608
    %v994 = vsub.s32 0, %v993
    %v995 = vadd.s32 %v990, 1
    %vm996 = vcmp.gt.s32.totalorder %v995, 0
    %v997 = vsel %vm996, %v995, 0
    %v998 = vshrl.u32 %v997, 5
    %v999 = vand.u32 %v997, 31
    %v1000 = vsub.s32 32, %v999
    %v1001 = vshrl.u32 683565275, %v1000
    %v1002 = vshll.u32 683565275, %v999
    %v1003 = vshrl.u32 2475754826, %v1000
    %v1004 = vor.u32 %v1002, %v1003
    %v1005 = vshll.u32 2475754826, %v999
    %v1006 = vshrl.u32 2131351028, %v1000
    %v1007 = vor.u32 %v1005, %v1006
    %v1008 = vshll.u32 2131351028, %v999
    %v1009 = vshrl.u32 2102212464, %v1000
    %v1010 = vor.u32 %v1008, %v1009
    %v1011 = vshll.u32 2102212464, %v999
    %v1012 = vshrl.u32 920167782, %v1000
    %v1013 = vor.u32 %v1011, %v1012
    %v1014 = vshll.u32 920167782, %v999
    %v1015 = vshrl.u32 1326507024, %v1000
    %v1016 = vor.u32 %v1014, %v1015
    %vm1017 = vcmp.lt.s32.totalorder %v998, 1
    %vm1018 = vcmp.lt.s32.totalorder %v998, 2
    %vm1019 = vcmp.lt.s32.totalorder %v998, 3
    %vm1020 = vcmp.lt.s32.totalorder %v998, 4
    %v1021 = vsel %vm1017, %v1001, %v1004
    %v1022 = vsel %vm1020, %v1010, 2102212464
    %v1023 = vsel %vm1019, %v1007, %v1022
    %v1024 = vsel %vm1018, %v1021, %v1023
    %v1025 = vsel %vm1017, %v1004, %v1007
    %v1026 = vsel %vm1020, %v1013, 920167782
    %v1027 = vsel %vm1019, %v1010, %v1026
    %v1028 = vsel %vm1018, %v1025, %v1027
    %v1029 = vsel %vm1017, %v1007, %v1010
    %v1030 = vsel %vm1020, %v1016, 1326507024
    %v1031 = vsel %vm1019, %v1013, %v1030
    %v1032 = vsel %vm1018, %v1029, %v1031
    %v1033 = vshll.u32 %v993, 8
    %v1034 = vmul.u32.u64.compose %v1033, %v1032
    %v1035 = vextract.low.u32 %v1034
    %v1036 = vextract.high.u32 %v1034
    %v1037 = vmul.u32.u64.compose %v1033, %v1028
    %v1038 = vextract.low.u32 %v1037
    %v1039 = vextract.high.u32 %v1037
    %v1040 = vmul.u32 %v1033, %v1024
    %v1041 = vadd.s32 %v1036, %v1038
    %vm1042 = vc.u32 %v1036, %v1038
    %v1043 = vadd.s32 %v1039, 1
    %v1044 = vsel %vm1042, %v1043, %v1039
    %v1045 = vadd.s32 %v1040, %v1044
    %v1046 = vadd.s32 %v1045, 536870912
    %v1047 = vshrl.u32 %v1046, 30
    %v1048 = vshll.u32 %v1047, 30
    %v1049 = vsub.s32 %v1045, %v1048
    %vm1050 = vcmp.lt.s32.totalorder %v1049, 0
    %v1051 = vsub.s32 0, %v1049
    %v1052 = vsel %vm1050, %v1051, %v1049
    %v1053 = vclz %v1052
    %v1054 = vsub.s32 %v1053, 2
    %vm1055 = vcmp.gt.s32.totalorder 0, %v1054
    %v1056 = vsel %vm1055, 0, %v1054
    %v1057 = vsub.s32 32, %v1056
    %v1058 = vshll.u32 %v1049, %v1056
    %v1059 = vshrl.u32 %v1041, %v1057
    %v1060 = vor.u32 %v1058, %v1059
    %v1061 = vsub.s32 4294967266, %v1056
    %v1062 = vadd.s32 %v1061, 127
    %v1063 = vshll.u32 %v1062, 23
    %v1064 = vor.u32 4788187, %v1063
    %v1065 = vand.u32 2147483647, %v1064
    %v1067 = vcvt.s32.f32 %v1060
    %v1068 = vmul.f32 %v1067, %v1065
    %v1069 = vxor.u32 %v1068, 2147483648
    %v1070 = vsel %vm987, %v1069, %v1068
    %v1071 = vsub.s32 4, %v1047
    %v1072 = vsel %vm987, %v1071, %v1047
    %v1073 = vsel %vm986, %v239, %v1070
    %v1074 = vsel %vm986, 0, %v1072
    %v1075 = vcosq.f32.pop %v1073
    %v1076 = vsinq.f32.pop %v1073
    %vm1077 = vweird.f32 %v239
    %v1078 = vand.u32 %v1074, 3
    %vm1079 = vcmp.lt.s32.totalorder %v1078, 2
    %vm1080 = vcmp.eq.s32.totalorder %v1078, 0
    %v1081 = vxor.u32 %v1076, 2147483648
    %v1082 = vsel %vm1080, %v1075, %v1081
    %vm1083 = vcmp.eq.s32.totalorder %v1078, 2
    %v1084 = vxor.u32 %v1075, 2147483648
    %v1085 = vsel %vm1083, %v1084, %v1076
    %v1086 = vsel %vm1079, %v1082, %v1085
    %v1087 = vsel %vm1077, nan, %v1086
    %v1088 = vand.u32 2147483647, %v244
    %vm1089 = vcmp.le.f32.partialorder %v1088, 0.7853982
    %vm1090 = vcmp.lt.s32.totalorder %v244, 0
    %v1091 = vand.u32 %v244, 2139095040
    %v1092 = vshrl.u32 %v1091, 23
    %v1093 = vsub.s32 %v1092, 127
    %v1094 = vand.u32 2147483647, %v244
    %v1095 = vand.u32 %v1094, 8388607
    %v1096 = vor.u32 %v1095, 8388608
    %v1097 = vsub.s32 0, %v1096
    %v1098 = vadd.s32 %v1093, 1
    %vm1099 = vcmp.gt.s32.totalorder %v1098, 0
    %v1100 = vsel %vm1099, %v1098, 0
    %v1101 = vshrl.u32 %v1100, 5
    %v1102 = vand.u32 %v1100, 31
    %v1103 = vsub.s32 32, %v1102
    %v1104 = vshrl.u32 683565275, %v1103
    %v1105 = vshll.u32 683565275, %v1102
    %v1106 = vshrl.u32 2475754826, %v1103
    %v1107 = vor.u32 %v1105, %v1106
    %v1108 = vshll.u32 2475754826, %v1102
    %v1109 = vshrl.u32 2131351028, %v1103
    %v1110 = vor.u32 %v1108, %v1109
    %v1111 = vshll.u32 2131351028, %v1102
    %v1112 = vshrl.u32 2102212464, %v1103
    %v1113 = vor.u32 %v1111, %v1112
    %v1114 = vshll.u32 2102212464, %v1102
    %v1115 = vshrl.u32 920167782, %v1103
    %v1116 = vor.u32 %v1114, %v1115
    %v1117 = vshll.u32 920167782, %v1102
    %v1118 = vshrl.u32 1326507024, %v1103
    %v1119 = vor.u32 %v1117, %v1118
    %vm1120 = vcmp.lt.s32.totalorder %v1101, 1
    %vm1121 = vcmp.lt.s32.totalorder %v1101, 2
    %vm1122 = vcmp.lt.s32.totalorder %v1101, 3
    %vm1123 = vcmp.lt.s32.totalorder %v1101, 4
    %v1124 = vsel %vm1120, %v1104, %v1107
    %v1125 = vsel %vm1123, %v1113, 2102212464
    %v1126 = vsel %vm1122, %v1110, %v1125
    %v1127 = vsel %vm1121, %v1124, %v1126
    %v1128 = vsel %vm1120, %v1107, %v1110
    %v1129 = vsel %vm1123, %v1116, 920167782
    %v1130 = vsel %vm1122, %v1113, %v1129
    %v1131 = vsel %vm1121, %v1128, %v1130
    %v1132 = vsel %vm1120, %v1110, %v1113
    %v1133 = vsel %vm1123, %v1119, 1326507024
    %v1134 = vsel %vm1122, %v1116, %v1133
    %v1135 = vsel %vm1121, %v1132, %v1134
    %v1136 = vshll.u32 %v1096, 8
    %v1137 = vmul.u32.u64.compose %v1136, %v1135
    %v1138 = vextract.low.u32 %v1137
    %v1139 = vextract.high.u32 %v1137
    %v1140 = vmul.u32.u64.compose %v1136, %v1131
    %v1141 = vextract.low.u32 %v1140
    %v1142 = vextract.high.u32 %v1140
    %v1143 = vmul.u32 %v1136, %v1127
    %v1144 = vadd.s32 %v1139, %v1141
    %vm1145 = vc.u32 %v1139, %v1141
    %v1146 = vadd.s32 %v1142, 1
    %v1147 = vsel %vm1145, %v1146, %v1142
    %v1148 = vadd.s32 %v1143, %v1147
    %v1149 = vadd.s32 %v1148, 536870912
    %v1150 = vshrl.u32 %v1149, 30
    %v1151 = vshll.u32 %v1150, 30
    %v1152 = vsub.s32 %v1148, %v1151
    %vm1153 = vcmp.lt.s32.totalorder %v1152, 0
    %v1154 = vsub.s32 0, %v1152
    %v1155 = vsel %vm1153, %v1154, %v1152
    %v1156 = vclz %v1155
    %v1157 = vsub.s32 %v1156, 2
    %vm1158 = vcmp.gt.s32.totalorder 0, %v1157
    %v1159 = vsel %vm1158, 0, %v1157
    %v1160 = vsub.s32 32, %v1159
    %v1161 = vshll.u32 %v1152, %v1159
    %v1162 = vshrl.u32 %v1144, %v1160
    %v1163 = vor.u32 %v1161, %v1162
    %v1164 = vsub.s32 4294967266, %v1159
    %v1165 = vadd.s32 %v1164, 127
    %v1166 = vshll.u32 %v1165, 23
    %v1167 = vor.u32 4788187, %v1166
    %v1168 = vand.u32 2147483647, %v1167
    %v1170 = vcvt.s32.f32 %v1163
    %v1171 = vmul.f32 %v1170, %v1168
    %v1172 = vxor.u32 %v1171, 2147483648
    %v1173 = vsel %vm1090, %v1172, %v1171
    %v1174 = vsub.s32 4, %v1150
    %v1175 = vsel %vm1090, %v1174, %v1150
    %v1176 = vsel %vm1089, %v244, %v1173
    %v1177 = vsel %vm1089, 0, %v1175
    %v1178 = vcosq.f32.pop %v1176
    %v1179 = vsinq.f32.pop %v1176
    %vm1180 = vweird.f32 %v244
    %v1181 = vand.u32 %v1177, 3
    %vm1182 = vcmp.lt.s32.totalorder %v1181, 2
    %vm1183 = vcmp.eq.s32.totalorder %v1181, 0
    %v1184 = vxor.u32 %v1179, 2147483648
    %v1185 = vsel %vm1183, %v1178, %v1184
    %vm1186 = vcmp.eq.s32.totalorder %v1181, 2
    %v1187 = vxor.u32 %v1178, 2147483648
    %v1188 = vsel %vm1186, %v1187, %v1179
    %v1189 = vsel %vm1182, %v1185, %v1188
    %v1190 = vsel %vm1180, nan, %v1189
    %v1191 = vand.u32 2147483647, %v249
    %vm1192 = vcmp.le.f32.partialorder %v1191, 0.7853982
    %vm1193 = vcmp.lt.s32.totalorder %v249, 0
    %v1194 = vand.u32 %v249, 2139095040
    %v1195 = vshrl.u32 %v1194, 23
    %v1196 = vsub.s32 %v1195, 127
    %v1197 = vand.u32 2147483647, %v249
    %v1198 = vand.u32 %v1197, 8388607
    %v1199 = vor.u32 %v1198, 8388608
    %v1200 = vsub.s32 0, %v1199
    %v1201 = vadd.s32 %v1196, 1
    %vm1202 = vcmp.gt.s32.totalorder %v1201, 0
    %v1203 = vsel %vm1202, %v1201, 0
    %v1204 = vshrl.u32 %v1203, 5
    %v1205 = vand.u32 %v1203, 31
    %v1206 = vsub.s32 32, %v1205
    %v1207 = vshrl.u32 683565275, %v1206
    %v1208 = vshll.u32 683565275, %v1205
    %v1209 = vshrl.u32 2475754826, %v1206
    %v1210 = vor.u32 %v1208, %v1209
    %v1211 = vshll.u32 2475754826, %v1205
    %v1212 = vshrl.u32 2131351028, %v1206
    %v1213 = vor.u32 %v1211, %v1212
    %v1214 = vshll.u32 2131351028, %v1205
    %v1215 = vshrl.u32 2102212464, %v1206
    %v1216 = vor.u32 %v1214, %v1215
    %v1217 = vshll.u32 2102212464, %v1205
    %v1218 = vshrl.u32 920167782, %v1206
    %v1219 = vor.u32 %v1217, %v1218
    %v1220 = vshll.u32 920167782, %v1205
    %v1221 = vshrl.u32 1326507024, %v1206
    %v1222 = vor.u32 %v1220, %v1221
    %vm1223 = vcmp.lt.s32.totalorder %v1204, 1
    %vm1224 = vcmp.lt.s32.totalorder %v1204, 2
    %vm1225 = vcmp.lt.s32.totalorder %v1204, 3
    %vm1226 = vcmp.lt.s32.totalorder %v1204, 4
    %v1227 = vsel %vm1223, %v1207, %v1210
    %v1228 = vsel %vm1226, %v1216, 2102212464
    %v1229 = vsel %vm1225, %v1213, %v1228
    %v1230 = vsel %vm1224, %v1227, %v1229
    %v1231 = vsel %vm1223, %v1210, %v1213
    %v1232 = vsel %vm1226, %v1219, 920167782
    %v1233 = vsel %vm1225, %v1216, %v1232
    %v1234 = vsel %vm1224, %v1231, %v1233
    %v1235 = vsel %vm1223, %v1213, %v1216
    %v1236 = vsel %vm1226, %v1222, 1326507024
    %v1237 = vsel %vm1225, %v1219, %v1236
    %v1238 = vsel %vm1224, %v1235, %v1237
    %v1239 = vshll.u32 %v1199, 8
    %v1240 = vmul.u32.u64.compose %v1239, %v1238
    %v1241 = vextract.low.u32 %v1240
    %v1242 = vextract.high.u32 %v1240
    %v1243 = vmul.u32.u64.compose %v1239, %v1234
    %v1244 = vextract.low.u32 %v1243
    %v1245 = vextract.high.u32 %v1243
    %v1246 = vmul.u32 %v1239, %v1230
    %v1247 = vadd.s32 %v1242, %v1244
    %vm1248 = vc.u32 %v1242, %v1244
    %v1249 = vadd.s32 %v1245, 1
    %v1250 = vsel %vm1248, %v1249, %v1245
    %v1251 = vadd.s32 %v1246, %v1250
    %v1252 = vadd.s32 %v1251, 536870912
    %v1253 = vshrl.u32 %v1252, 30
    %v1254 = vshll.u32 %v1253, 30
    %v1255 = vsub.s32 %v1251, %v1254
    %vm1256 = vcmp.lt.s32.totalorder %v1255, 0
    %v1257 = vsub.s32 0, %v1255
    %v1258 = vsel %vm1256, %v1257, %v1255
    %v1259 = vclz %v1258
    %v1260 = vsub.s32 %v1259, 2
    %vm1261 = vcmp.gt.s32.totalorder 0, %v1260
    %v1262 = vsel %vm1261, 0, %v1260
    %v1263 = vsub.s32 32, %v1262
    %v1264 = vshll.u32 %v1255, %v1262
    %v1265 = vshrl.u32 %v1247, %v1263
    %v1266 = vor.u32 %v1264, %v1265
    %v1267 = vsub.s32 4294967266, %v1262
    %v1268 = vadd.s32 %v1267, 127
    %v1269 = vshll.u32 %v1268, 23
    %v1270 = vor.u32 4788187, %v1269
    %v1271 = vand.u32 2147483647, %v1270
    %v1273 = vcvt.s32.f32 %v1266
    %v1274 = vmul.f32 %v1273, %v1271
    %v1275 = vxor.u32 %v1274, 2147483648
    %v1276 = vsel %vm1193, %v1275, %v1274
    %v1277 = vsub.s32 4, %v1253
    %v1278 = vsel %vm1193, %v1277, %v1253
    %v1279 = vsel %vm1192, %v249, %v1276
    %v1280 = vsel %vm1192, 0, %v1278
    %v1281 = vcosq.f32.pop %v1279
    %v1282 = vsinq.f32.pop %v1279
    %vm1283 = vweird.f32 %v249
    %v1284 = vand.u32 %v1280, 3
    %vm1285 = vcmp.lt.s32.totalorder %v1284, 2
    %vm1286 = vcmp.eq.s32.totalorder %v1284, 0
    %v1287 = vxor.u32 %v1282, 2147483648
    %v1288 = vsel %vm1286, %v1281, %v1287
    %vm1289 = vcmp.eq.s32.totalorder %v1284, 2
    %v1290 = vxor.u32 %v1281, 2147483648
    %v1291 = vsel %vm1289, %v1290, %v1282
    %v1292 = vsel %vm1285, %v1288, %v1291
    %v1293 = vsel %vm1283, nan, %v1292
    %v1294 = vand.u32 2147483647, %v254
    %vm1295 = vcmp.le.f32.partialorder %v1294, 0.7853982
    %vm1296 = vcmp.lt.s32.totalorder %v254, 0
    %v1297 = vand.u32 %v254, 2139095040
    %v1298 = vshrl.u32 %v1297, 23
    %v1299 = vsub.s32 %v1298, 127
    %v1300 = vand.u32 2147483647, %v254
    %v1301 = vand.u32 %v1300, 8388607
    %v1302 = vor.u32 %v1301, 8388608
    %v1303 = vsub.s32 0, %v1302
    %v1304 = vadd.s32 %v1299, 1
    %vm1305 = vcmp.gt.s32.totalorder %v1304, 0
    %v1306 = vsel %vm1305, %v1304, 0
    %v1307 = vshrl.u32 %v1306, 5
    %v1308 = vand.u32 %v1306, 31
    %v1309 = vsub.s32 32, %v1308
    %v1310 = vshrl.u32 683565275, %v1309
    %v1311 = vshll.u32 683565275, %v1308
    %v1312 = vshrl.u32 2475754826, %v1309
    %v1313 = vor.u32 %v1311, %v1312
    %v1314 = vshll.u32 2475754826, %v1308
    %v1315 = vshrl.u32 2131351028, %v1309
    %v1316 = vor.u32 %v1314, %v1315
    %v1317 = vshll.u32 2131351028, %v1308
    %v1318 = vshrl.u32 2102212464, %v1309
    %v1319 = vor.u32 %v1317, %v1318
    %v1320 = vshll.u32 2102212464, %v1308
    %v1321 = vshrl.u32 920167782, %v1309
    %v1322 = vor.u32 %v1320, %v1321
    %v1323 = vshll.u32 920167782, %v1308
    %v1324 = vshrl.u32 1326507024, %v1309
    %v1325 = vor.u32 %v1323, %v1324
    %vm1326 = vcmp.lt.s32.totalorder %v1307, 1
    %vm1327 = vcmp.lt.s32.totalorder %v1307, 2
    %vm1328 = vcmp.lt.s32.totalorder %v1307, 3
    %vm1329 = vcmp.lt.s32.totalorder %v1307, 4
    %v1330 = vsel %vm1326, %v1310, %v1313
    %v1331 = vsel %vm1329, %v1319, 2102212464
    %v1332 = vsel %vm1328, %v1316, %v1331
    %v1333 = vsel %vm1327, %v1330, %v1332
    %v1334 = vsel %vm1326, %v1313, %v1316
    %v1335 = vsel %vm1329, %v1322, 920167782
    %v1336 = vsel %vm1328, %v1319, %v1335
    %v1337 = vsel %vm1327, %v1334, %v1336
    %v1338 = vsel %vm1326, %v1316, %v1319
    %v1339 = vsel %vm1329, %v1325, 1326507024
    %v1340 = vsel %vm1328, %v1322, %v1339
    %v1341 = vsel %vm1327, %v1338, %v1340
    %v1342 = vshll.u32 %v1302, 8
    %v1343 = vmul.u32.u64.compose %v1342, %v1341
    %v1344 = vextract.low.u32 %v1343
    %v1345 = vextract.high.u32 %v1343
    %v1346 = vmul.u32.u64.compose %v1342, %v1337
    %v1347 = vextract.low.u32 %v1346
    %v1348 = vextract.high.u32 %v1346
    %v1349 = vmul.u32 %v1342, %v1333
    %v1350 = vadd.s32 %v1345, %v1347
    %vm1351 = vc.u32 %v1345, %v1347
    %v1352 = vadd.s32 %v1348, 1
    %v1353 = vsel %vm1351, %v1352, %v1348
    %v1354 = vadd.s32 %v1349, %v1353
    %v1355 = vadd.s32 %v1354, 536870912
    %v1356 = vshrl.u32 %v1355, 30
    %v1357 = vshll.u32 %v1356, 30
    %v1358 = vsub.s32 %v1354, %v1357
    %vm1359 = vcmp.lt.s32.totalorder %v1358, 0
    %v1360 = vsub.s32 0, %v1358
    %v1361 = vsel %vm1359, %v1360, %v1358
    %v1362 = vclz %v1361
    %v1363 = vsub.s32 %v1362, 2
    %vm1364 = vcmp.gt.s32.totalorder 0, %v1363
    %v1365 = vsel %vm1364, 0, %v1363
    %v1366 = vsub.s32 32, %v1365
    %v1367 = vshll.u32 %v1358, %v1365
    %v1368 = vshrl.u32 %v1350, %v1366
    %v1369 = vor.u32 %v1367, %v1368
    %v1370 = vsub.s32 4294967266, %v1365
    %v1371 = vadd.s32 %v1370, 127
    %v1372 = vshll.u32 %v1371, 23
    %v1373 = vor.u32 4788187, %v1372
    %v1374 = vand.u32 2147483647, %v1373
    %v1376 = vcvt.s32.f32 %v1369
    %v1377 = vmul.f32 %v1376, %v1374
    %v1378 = vxor.u32 %v1377, 2147483648
    %v1379 = vsel %vm1296, %v1378, %v1377
    %v1380 = vsub.s32 4, %v1356
    %v1381 = vsel %vm1296, %v1380, %v1356
    %v1382 = vsel %vm1295, %v254, %v1379
    %v1383 = vsel %vm1295, 0, %v1381
    %v1384 = vcosq.f32.pop %v1382
    %v1385 = vsinq.f32.pop %v1382
    %vm1386 = vweird.f32 %v254
    %v1387 = vand.u32 %v1383, 3
    %vm1388 = vcmp.lt.s32.totalorder %v1387, 2
    %vm1389 = vcmp.eq.s32.totalorder %v1387, 0
    %v1390 = vxor.u32 %v1385, 2147483648
    %v1391 = vsel %vm1389, %v1384, %v1390
    %vm1392 = vcmp.eq.s32.totalorder %v1387, 2
    %v1393 = vxor.u32 %v1384, 2147483648
    %v1394 = vsel %vm1392, %v1393, %v1385
    %v1395 = vsel %vm1388, %v1391, %v1394
    %v1396 = vsel %vm1386, nan, %v1395
    %v1397 = vand.u32 2147483647, %v259
    %vm1398 = vcmp.le.f32.partialorder %v1397, 0.7853982
    %vm1399 = vcmp.lt.s32.totalorder %v259, 0
    %v1400 = vand.u32 %v259, 2139095040
    %v1401 = vshrl.u32 %v1400, 23
    %v1402 = vsub.s32 %v1401, 127
    %v1403 = vand.u32 2147483647, %v259
    %v1404 = vand.u32 %v1403, 8388607
    %v1405 = vor.u32 %v1404, 8388608
    %v1406 = vsub.s32 0, %v1405
    %v1407 = vadd.s32 %v1402, 1
    %vm1408 = vcmp.gt.s32.totalorder %v1407, 0
    %v1409 = vsel %vm1408, %v1407, 0
    %v1410 = vshrl.u32 %v1409, 5
    %v1411 = vand.u32 %v1409, 31
    %v1412 = vsub.s32 32, %v1411
    %v1413 = vshrl.u32 683565275, %v1412
    %v1414 = vshll.u32 683565275, %v1411
    %v1415 = vshrl.u32 2475754826, %v1412
    %v1416 = vor.u32 %v1414, %v1415
    %v1417 = vshll.u32 2475754826, %v1411
    %v1418 = vshrl.u32 2131351028, %v1412
    %v1419 = vor.u32 %v1417, %v1418
    %v1420 = vshll.u32 2131351028, %v1411
    %v1421 = vshrl.u32 2102212464, %v1412
    %v1422 = vor.u32 %v1420, %v1421
    %v1423 = vshll.u32 2102212464, %v1411
    %v1424 = vshrl.u32 920167782, %v1412
    %v1425 = vor.u32 %v1423, %v1424
    %v1426 = vshll.u32 920167782, %v1411
    %v1427 = vshrl.u32 1326507024, %v1412
    %v1428 = vor.u32 %v1426, %v1427
    %vm1429 = vcmp.lt.s32.totalorder %v1410, 1
    %vm1430 = vcmp.lt.s32.totalorder %v1410, 2
    %vm1431 = vcmp.lt.s32.totalorder %v1410, 3
    %vm1432 = vcmp.lt.s32.totalorder %v1410, 4
    %v1433 = vsel %vm1429, %v1413, %v1416
    %v1434 = vsel %vm1432, %v1422, 2102212464
    %v1435 = vsel %vm1431, %v1419, %v1434
    %v1436 = vsel %vm1430, %v1433, %v1435
    %v1437 = vsel %vm1429, %v1416, %v1419
    %v1438 = vsel %vm1432, %v1425, 920167782
    %v1439 = vsel %vm1431, %v1422, %v1438
    %v1440 = vsel %vm1430, %v1437, %v1439
    %v1441 = vsel %vm1429, %v1419, %v1422
    %v1442 = vsel %vm1432, %v1428, 1326507024
    %v1443 = vsel %vm1431, %v1425, %v1442
    %v1444 = vsel %vm1430, %v1441, %v1443
    %v1445 = vshll.u32 %v1405, 8
    %v1446 = vmul.u32.u64.compose %v1445, %v1444
    %v1447 = vextract.low.u32 %v1446
    %v1448 = vextract.high.u32 %v1446
    %v1449 = vmul.u32.u64.compose %v1445, %v1440
    %v1450 = vextract.low.u32 %v1449
    %v1451 = vextract.high.u32 %v1449
    %v1452 = vmul.u32 %v1445, %v1436
    %v1453 = vadd.s32 %v1448, %v1450
    %vm1454 = vc.u32 %v1448, %v1450
    %v1455 = vadd.s32 %v1451, 1
    %v1456 = vsel %vm1454, %v1455, %v1451
    %v1457 = vadd.s32 %v1452, %v1456
    %v1458 = vadd.s32 %v1457, 536870912
    %v1459 = vshrl.u32 %v1458, 30
    %v1460 = vshll.u32 %v1459, 30
    %v1461 = vsub.s32 %v1457, %v1460
    %vm1462 = vcmp.lt.s32.totalorder %v1461, 0
    %v1463 = vsub.s32 0, %v1461
    %v1464 = vsel %vm1462, %v1463, %v1461
    %v1465 = vclz %v1464
    %v1466 = vsub.s32 %v1465, 2
    %vm1467 = vcmp.gt.s32.totalorder 0, %v1466
    %v1468 = vsel %vm1467, 0, %v1466
    %v1469 = vsub.s32 32, %v1468
    %v1470 = vshll.u32 %v1461, %v1468
    %v1471 = vshrl.u32 %v1453, %v1469
    %v1472 = vor.u32 %v1470, %v1471
    %v1473 = vsub.s32 4294967266, %v1468
    %v1474 = vadd.s32 %v1473, 127
    %v1475 = vshll.u32 %v1474, 23
    %v1476 = vor.u32 4788187, %v1475
    %v1477 = vand.u32 2147483647, %v1476
    %v1479 = vcvt.s32.f32 %v1472
    %v1480 = vmul.f32 %v1479, %v1477
    %v1481 = vxor.u32 %v1480, 2147483648
    %v1482 = vsel %vm1399, %v1481, %v1480
    %v1483 = vsub.s32 4, %v1459
    %v1484 = vsel %vm1399, %v1483, %v1459
    %v1485 = vsel %vm1398, %v259, %v1482
    %v1486 = vsel %vm1398, 0, %v1484
    %v1487 = vcosq.f32.pop %v1485
    %v1488 = vsinq.f32.pop %v1485
    %vm1489 = vweird.f32 %v259
    %v1490 = vand.u32 %v1486, 3
    %vm1491 = vcmp.lt.s32.totalorder %v1490, 2
    %vm1492 = vcmp.eq.s32.totalorder %v1490, 0
    %v1493 = vxor.u32 %v1488, 2147483648
    %v1494 = vsel %vm1492, %v1487, %v1493
    %vm1495 = vcmp.eq.s32.totalorder %v1490, 2
    %v1496 = vxor.u32 %v1487, 2147483648
    %v1497 = vsel %vm1495, %v1496, %v1488
    %v1498 = vsel %vm1491, %v1494, %v1497
    %v1499 = vsel %vm1489, nan, %v1498
    %v1500 = vand.u32 2147483647, %v264
    %vm1501 = vcmp.le.f32.partialorder %v1500, 0.7853982
    %vm1502 = vcmp.lt.s32.totalorder %v264, 0
    %v1503 = vand.u32 %v264, 2139095040
    %v1504 = vshrl.u32 %v1503, 23
    %v1505 = vsub.s32 %v1504, 127
    %v1506 = vand.u32 2147483647, %v264
    %v1507 = vand.u32 %v1506, 8388607
    %v1508 = vor.u32 %v1507, 8388608
    %v1509 = vsub.s32 0, %v1508
    %v1510 = vadd.s32 %v1505, 1
    %vm1511 = vcmp.gt.s32.totalorder %v1510, 0
    %v1512 = vsel %vm1511, %v1510, 0
    %v1513 = vshrl.u32 %v1512, 5
    %v1514 = vand.u32 %v1512, 31
    %v1515 = vsub.s32 32, %v1514
    %v1516 = vshrl.u32 683565275, %v1515
    %v1517 = vshll.u32 683565275, %v1514
    %v1518 = vshrl.u32 2475754826, %v1515
    %v1519 = vor.u32 %v1517, %v1518
    %v1520 = vshll.u32 2475754826, %v1514
    %v1521 = vshrl.u32 2131351028, %v1515
    %v1522 = vor.u32 %v1520, %v1521
    %v1523 = vshll.u32 2131351028, %v1514
    %v1524 = vshrl.u32 2102212464, %v1515
    %v1525 = vor.u32 %v1523, %v1524
    %v1526 = vshll.u32 2102212464, %v1514
    %v1527 = vshrl.u32 920167782, %v1515
    %v1528 = vor.u32 %v1526, %v1527
    %v1529 = vshll.u32 920167782, %v1514
    %v1530 = vshrl.u32 1326507024, %v1515
    %v1531 = vor.u32 %v1529, %v1530
    %vm1532 = vcmp.lt.s32.totalorder %v1513, 1
    %vm1533 = vcmp.lt.s32.totalorder %v1513, 2
    %vm1534 = vcmp.lt.s32.totalorder %v1513, 3
    %vm1535 = vcmp.lt.s32.totalorder %v1513, 4
    %v1536 = vsel %vm1532, %v1516, %v1519
    %v1537 = vsel %vm1535, %v1525, 2102212464
    %v1538 = vsel %vm1534, %v1522, %v1537
    %v1539 = vsel %vm1533, %v1536, %v1538
    %v1540 = vsel %vm1532, %v1519, %v1522
    %v1541 = vsel %vm1535, %v1528, 920167782
    %v1542 = vsel %vm1534, %v1525, %v1541
    %v1543 = vsel %vm1533, %v1540, %v1542
    %v1544 = vsel %vm1532, %v1522, %v1525
    %v1545 = vsel %vm1535, %v1531, 1326507024
    %v1546 = vsel %vm1534, %v1528, %v1545
    %v1547 = vsel %vm1533, %v1544, %v1546
    %v1548 = vshll.u32 %v1508, 8
    %v1549 = vmul.u32.u64.compose %v1548, %v1547
    %v1550 = vextract.low.u32 %v1549
    %v1551 = vextract.high.u32 %v1549
    %v1552 = vmul.u32.u64.compose %v1548, %v1543
    %v1553 = vextract.low.u32 %v1552
    %v1554 = vextract.high.u32 %v1552
    %v1555 = vmul.u32 %v1548, %v1539
    %v1556 = vadd.s32 %v1551, %v1553
    %vm1557 = vc.u32 %v1551, %v1553
    %v1558 = vadd.s32 %v1554, 1
    %v1559 = vsel %vm1557, %v1558, %v1554
    %v1560 = vadd.s32 %v1555, %v1559
    %v1561 = vadd.s32 %v1560, 536870912
    %v1562 = vshrl.u32 %v1561, 30
    %v1563 = vshll.u32 %v1562, 30
    %v1564 = vsub.s32 %v1560, %v1563
    %vm1565 = vcmp.lt.s32.totalorder %v1564, 0
    %v1566 = vsub.s32 0, %v1564
    %v1567 = vsel %vm1565, %v1566, %v1564
    %v1568 = vclz %v1567
    %v1569 = vsub.s32 %v1568, 2
    %vm1570 = vcmp.gt.s32.totalorder 0, %v1569
    %v1571 = vsel %vm1570, 0, %v1569
    %v1572 = vsub.s32 32, %v1571
    %v1573 = vshll.u32 %v1564, %v1571
    %v1574 = vshrl.u32 %v1556, %v1572
    %v1575 = vor.u32 %v1573, %v1574
    %v1576 = vsub.s32 4294967266, %v1571
    %v1577 = vadd.s32 %v1576, 127
    %v1578 = vshll.u32 %v1577, 23
    %v1579 = vor.u32 4788187, %v1578
    %v1580 = vand.u32 2147483647, %v1579
    %v1582 = vcvt.s32.f32 %v1575
    %v1583 = vmul.f32 %v1582, %v1580
    %v1584 = vxor.u32 %v1583, 2147483648
    %v1585 = vsel %vm1502, %v1584, %v1583
    %v1586 = vsub.s32 4, %v1562
    %v1587 = vsel %vm1502, %v1586, %v1562
    %v1588 = vsel %vm1501, %v264, %v1585
    %v1589 = vsel %vm1501, 0, %v1587
    %v1590 = vcosq.f32.pop %v1588
    %v1591 = vsinq.f32.pop %v1588
    %vm1592 = vweird.f32 %v264
    %v1593 = vand.u32 %v1589, 3
    %vm1594 = vcmp.lt.s32.totalorder %v1593, 2
    %vm1595 = vcmp.eq.s32.totalorder %v1593, 0
    %v1596 = vxor.u32 %v1591, 2147483648
    %v1597 = vsel %vm1595, %v1590, %v1596
    %vm1598 = vcmp.eq.s32.totalorder %v1593, 2
    %v1599 = vxor.u32 %v1590, 2147483648
    %v1600 = vsel %vm1598, %v1599, %v1591
    %v1601 = vsel %vm1594, %v1597, %v1600
    %v1602 = vsel %vm1592, nan, %v1601
    %v1603 = vand.u32 2147483647, %v269
    %vm1604 = vcmp.le.f32.partialorder %v1603, 0.7853982
    %vm1605 = vcmp.lt.s32.totalorder %v269, 0
    %v1606 = vand.u32 %v269, 2139095040
    %v1607 = vshrl.u32 %v1606, 23
    %v1608 = vsub.s32 %v1607, 127
    %v1609 = vand.u32 2147483647, %v269
    %v1610 = vand.u32 %v1609, 8388607
    %v1611 = vor.u32 %v1610, 8388608
    %v1612 = vsub.s32 0, %v1611
    %v1613 = vadd.s32 %v1608, 1
    %vm1614 = vcmp.gt.s32.totalorder %v1613, 0
    %v1615 = vsel %vm1614, %v1613, 0
    %v1616 = vshrl.u32 %v1615, 5
    %v1617 = vand.u32 %v1615, 31
    %v1618 = vsub.s32 32, %v1617
    %v1619 = vshrl.u32 683565275, %v1618
    %v1620 = vshll.u32 683565275, %v1617
    %v1621 = vshrl.u32 2475754826, %v1618
    %v1622 = vor.u32 %v1620, %v1621
    %v1623 = vshll.u32 2475754826, %v1617
    %v1624 = vshrl.u32 2131351028, %v1618
    %v1625 = vor.u32 %v1623, %v1624
    %v1626 = vshll.u32 2131351028, %v1617
    %v1627 = vshrl.u32 2102212464, %v1618
    %v1628 = vor.u32 %v1626, %v1627
    %v1629 = vshll.u32 2102212464, %v1617
    %v1630 = vshrl.u32 920167782, %v1618
    %v1631 = vor.u32 %v1629, %v1630
    %v1632 = vshll.u32 920167782, %v1617
    %v1633 = vshrl.u32 1326507024, %v1618
    %v1634 = vor.u32 %v1632, %v1633
    %vm1635 = vcmp.lt.s32.totalorder %v1616, 1
    %vm1636 = vcmp.lt.s32.totalorder %v1616, 2
    %vm1637 = vcmp.lt.s32.totalorder %v1616, 3
    %vm1638 = vcmp.lt.s32.totalorder %v1616, 4
    %v1639 = vsel %vm1635, %v1619, %v1622
    %v1640 = vsel %vm1638, %v1628, 2102212464
    %v1641 = vsel %vm1637, %v1625, %v1640
    %v1642 = vsel %vm1636, %v1639, %v1641
    %v1643 = vsel %vm1635, %v1622, %v1625
    %v1644 = vsel %vm1638, %v1631, 920167782
    %v1645 = vsel %vm1637, %v1628, %v1644
    %v1646 = vsel %vm1636, %v1643, %v1645
    %v1647 = vsel %vm1635, %v1625, %v1628
    %v1648 = vsel %vm1638, %v1634, 1326507024
    %v1649 = vsel %vm1637, %v1631, %v1648
    %v1650 = vsel %vm1636, %v1647, %v1649
    %v1651 = vshll.u32 %v1611, 8
    %v1652 = vmul.u32.u64.compose %v1651, %v1650
    %v1653 = vextract.low.u32 %v1652
    %v1654 = vextract.high.u32 %v1652
    %v1655 = vmul.u32.u64.compose %v1651, %v1646
    %v1656 = vextract.low.u32 %v1655
    %v1657 = vextract.high.u32 %v1655
    %v1658 = vmul.u32 %v1651, %v1642
    %v1659 = vadd.s32 %v1654, %v1656
    %vm1660 = vc.u32 %v1654, %v1656
    %v1661 = vadd.s32 %v1657, 1
    %v1662 = vsel %vm1660, %v1661, %v1657
    %v1663 = vadd.s32 %v1658, %v1662
    %v1664 = vadd.s32 %v1663, 536870912
    %v1665 = vshrl.u32 %v1664, 30
    %v1666 = vshll.u32 %v1665, 30
    %v1667 = vsub.s32 %v1663, %v1666
    %vm1668 = vcmp.lt.s32.totalorder %v1667, 0
    %v1669 = vsub.s32 0, %v1667
    %v1670 = vsel %vm1668, %v1669, %v1667
    %v1671 = vclz %v1670
    %v1672 = vsub.s32 %v1671, 2
    %vm1673 = vcmp.gt.s32.totalorder 0, %v1672
    %v1674 = vsel %vm1673, 0, %v1672
    %v1675 = vsub.s32 32, %v1674
    %v1676 = vshll.u32 %v1667, %v1674
    %v1677 = vshrl.u32 %v1659, %v1675
    %v1678 = vor.u32 %v1676, %v1677
    %v1679 = vsub.s32 4294967266, %v1674
    %v1680 = vadd.s32 %v1679, 127
    %v1681 = vshll.u32 %v1680, 23
    %v1682 = vor.u32 4788187, %v1681
    %v1683 = vand.u32 2147483647, %v1682
    %v1685 = vcvt.s32.f32 %v1678
    %v1686 = vmul.f32 %v1685, %v1683
    %v1687 = vxor.u32 %v1686, 2147483648
    %v1688 = vsel %vm1605, %v1687, %v1686
    %v1689 = vsub.s32 4, %v1665
    %v1690 = vsel %vm1605, %v1689, %v1665
    %v1691 = vsel %vm1604, %v269, %v1688
    %v1692 = vsel %vm1604, 0, %v1690
    %v1693 = vcosq.f32.pop %v1691
    %v1694 = vsinq.f32.pop %v1691
    %vm1695 = vweird.f32 %v269
    %v1696 = vand.u32 %v1692, 3
    %vm1697 = vcmp.lt.s32.totalorder %v1696, 2
    %vm1698 = vcmp.eq.s32.totalorder %v1696, 0
    %v1699 = vxor.u32 %v1694, 2147483648
    %v1700 = vsel %vm1698, %v1693, %v1699
    %vm1701 = vcmp.eq.s32.totalorder %v1696, 2
    %v1702 = vxor.u32 %v1693, 2147483648
    %v1703 = vsel %vm1701, %v1702, %v1694
    %v1704 = vsel %vm1697, %v1700, %v1703
    %v1705 = vsel %vm1695, nan, %v1704
    %v1706 = vand.u32 2147483647, %v274
    %vm1707 = vcmp.le.f32.partialorder %v1706, 0.7853982
    %vm1708 = vcmp.lt.s32.totalorder %v274, 0
    %v1709 = vand.u32 %v274, 2139095040
    %v1710 = vshrl.u32 %v1709, 23
    %v1711 = vsub.s32 %v1710, 127
    %v1712 = vand.u32 2147483647, %v274
    %v1713 = vand.u32 %v1712, 8388607
    %v1714 = vor.u32 %v1713, 8388608
    %v1715 = vsub.s32 0, %v1714
    %v1716 = vadd.s32 %v1711, 1
    %vm1717 = vcmp.gt.s32.totalorder %v1716, 0
    %v1718 = vsel %vm1717, %v1716, 0
    %v1719 = vshrl.u32 %v1718, 5
    %v1720 = vand.u32 %v1718, 31
    %v1721 = vsub.s32 32, %v1720
    %v1722 = vshrl.u32 683565275, %v1721
    %v1723 = vshll.u32 683565275, %v1720
    %v1724 = vshrl.u32 2475754826, %v1721
    %v1725 = vor.u32 %v1723, %v1724
    %v1726 = vshll.u32 2475754826, %v1720
    %v1727 = vshrl.u32 2131351028, %v1721
    %v1728 = vor.u32 %v1726, %v1727
    %v1729 = vshll.u32 2131351028, %v1720
    %v1730 = vshrl.u32 2102212464, %v1721
    %v1731 = vor.u32 %v1729, %v1730
    %v1732 = vshll.u32 2102212464, %v1720
    %v1733 = vshrl.u32 920167782, %v1721
    %v1734 = vor.u32 %v1732, %v1733
    %v1735 = vshll.u32 920167782, %v1720
    %v1736 = vshrl.u32 1326507024, %v1721
    %v1737 = vor.u32 %v1735, %v1736
    %vm1738 = vcmp.lt.s32.totalorder %v1719, 1
    %vm1739 = vcmp.lt.s32.totalorder %v1719, 2
    %vm1740 = vcmp.lt.s32.totalorder %v1719, 3
    %vm1741 = vcmp.lt.s32.totalorder %v1719, 4
    %v1742 = vsel %vm1738, %v1722, %v1725
    %v1743 = vsel %vm1741, %v1731, 2102212464
    %v1744 = vsel %vm1740, %v1728, %v1743
    %v1745 = vsel %vm1739, %v1742, %v1744
    %v1746 = vsel %vm1738, %v1725, %v1728
    %v1747 = vsel %vm1741, %v1734, 920167782
    %v1748 = vsel %vm1740, %v1731, %v1747
    %v1749 = vsel %vm1739, %v1746, %v1748
    %v1750 = vsel %vm1738, %v1728, %v1731
    %v1751 = vsel %vm1741, %v1737, 1326507024
    %v1752 = vsel %vm1740, %v1734, %v1751
    %v1753 = vsel %vm1739, %v1750, %v1752
    %v1754 = vshll.u32 %v1714, 8
    %v1755 = vmul.u32.u64.compose %v1754, %v1753
    %v1756 = vextract.low.u32 %v1755
    %v1757 = vextract.high.u32 %v1755
    %v1758 = vmul.u32.u64.compose %v1754, %v1749
    %v1759 = vextract.low.u32 %v1758
    %v1760 = vextract.high.u32 %v1758
    %v1761 = vmul.u32 %v1754, %v1745
    %v1762 = vadd.s32 %v1757, %v1759
    %vm1763 = vc.u32 %v1757, %v1759
    %v1764 = vadd.s32 %v1760, 1
    %v1765 = vsel %vm1763, %v1764, %v1760
    %v1766 = vadd.s32 %v1761, %v1765
    %v1767 = vadd.s32 %v1766, 536870912
    %v1768 = vshrl.u32 %v1767, 30
    %v1769 = vshll.u32 %v1768, 30
    %v1770 = vsub.s32 %v1766, %v1769
    %vm1771 = vcmp.lt.s32.totalorder %v1770, 0
    %v1772 = vsub.s32 0, %v1770
    %v1773 = vsel %vm1771, %v1772, %v1770
    %v1774 = vclz %v1773
    %v1775 = vsub.s32 %v1774, 2
    %vm1776 = vcmp.gt.s32.totalorder 0, %v1775
    %v1777 = vsel %vm1776, 0, %v1775
    %v1778 = vsub.s32 32, %v1777
    %v1779 = vshll.u32 %v1770, %v1777
    %v1780 = vshrl.u32 %v1762, %v1778
    %v1781 = vor.u32 %v1779, %v1780
    %v1782 = vsub.s32 4294967266, %v1777
    %v1783 = vadd.s32 %v1782, 127
    %v1784 = vshll.u32 %v1783, 23
    %v1785 = vor.u32 4788187, %v1784
    %v1786 = vand.u32 2147483647, %v1785
    %v1788 = vcvt.s32.f32 %v1781
    %v1789 = vmul.f32 %v1788, %v1786
    %v1790 = vxor.u32 %v1789, 2147483648
    %v1791 = vsel %vm1708, %v1790, %v1789
    %v1792 = vsub.s32 4, %v1768
    %v1793 = vsel %vm1708, %v1792, %v1768
    %v1794 = vsel %vm1707, %v274, %v1791
    %v1795 = vsel %vm1707, 0, %v1793
    %v1796 = vcosq.f32.pop %v1794
    %v1797 = vsinq.f32.pop %v1794
    %vm1798 = vweird.f32 %v274
    %v1799 = vand.u32 %v1795, 3
    %vm1800 = vcmp.lt.s32.totalorder %v1799, 2
    %vm1801 = vcmp.eq.s32.totalorder %v1799, 0
    %v1802 = vxor.u32 %v1797, 2147483648
    %v1803 = vsel %vm1801, %v1796, %v1802
    %vm1804 = vcmp.eq.s32.totalorder %v1799, 2
    %v1805 = vxor.u32 %v1796, 2147483648
    %v1806 = vsel %vm1804, %v1805, %v1797
    %v1807 = vsel %vm1800, %v1803, %v1806
    %v1808 = vsel %vm1798, nan, %v1807
    %v1809 = vand.u32 2147483647, %v279
    %vm1810 = vcmp.le.f32.partialorder %v1809, 0.7853982
    %vm1811 = vcmp.lt.s32.totalorder %v279, 0
    %v1812 = vand.u32 %v279, 2139095040
    %v1813 = vshrl.u32 %v1812, 23
    %v1814 = vsub.s32 %v1813, 127
    %v1815 = vand.u32 2147483647, %v279
    %v1816 = vand.u32 %v1815, 8388607
    %v1817 = vor.u32 %v1816, 8388608
    %v1818 = vsub.s32 0, %v1817
    %v1819 = vadd.s32 %v1814, 1
    %vm1820 = vcmp.gt.s32.totalorder %v1819, 0
    %v1821 = vsel %vm1820, %v1819, 0
    %v1822 = vshrl.u32 %v1821, 5
    %v1823 = vand.u32 %v1821, 31
    %v1824 = vsub.s32 32, %v1823
    %v1825 = vshrl.u32 683565275, %v1824
    %v1826 = vshll.u32 683565275, %v1823
    %v1827 = vshrl.u32 2475754826, %v1824
    %v1828 = vor.u32 %v1826, %v1827
    %v1829 = vshll.u32 2475754826, %v1823
    %v1830 = vshrl.u32 2131351028, %v1824
    %v1831 = vor.u32 %v1829, %v1830
    %v1832 = vshll.u32 2131351028, %v1823
    %v1833 = vshrl.u32 2102212464, %v1824
    %v1834 = vor.u32 %v1832, %v1833
    %v1835 = vshll.u32 2102212464, %v1823
    %v1836 = vshrl.u32 920167782, %v1824
    %v1837 = vor.u32 %v1835, %v1836
    %v1838 = vshll.u32 920167782, %v1823
    %v1839 = vshrl.u32 1326507024, %v1824
    %v1840 = vor.u32 %v1838, %v1839
    %vm1841 = vcmp.lt.s32.totalorder %v1822, 1
    %vm1842 = vcmp.lt.s32.totalorder %v1822, 2
    %vm1843 = vcmp.lt.s32.totalorder %v1822, 3
    %vm1844 = vcmp.lt.s32.totalorder %v1822, 4
    %v1845 = vsel %vm1841, %v1825, %v1828
    %v1846 = vsel %vm1844, %v1834, 2102212464
    %v1847 = vsel %vm1843, %v1831, %v1846
    %v1848 = vsel %vm1842, %v1845, %v1847
    %v1849 = vsel %vm1841, %v1828, %v1831
    %v1850 = vsel %vm1844, %v1837, 920167782
    %v1851 = vsel %vm1843, %v1834, %v1850
    %v1852 = vsel %vm1842, %v1849, %v1851
    %v1853 = vsel %vm1841, %v1831, %v1834
    %v1854 = vsel %vm1844, %v1840, 1326507024
    %v1855 = vsel %vm1843, %v1837, %v1854
    %v1856 = vsel %vm1842, %v1853, %v1855
    %v1857 = vshll.u32 %v1817, 8
    %v1858 = vmul.u32.u64.compose %v1857, %v1856
    %v1859 = vextract.low.u32 %v1858
    %v1860 = vextract.high.u32 %v1858
    %v1861 = vmul.u32.u64.compose %v1857, %v1852
    %v1862 = vextract.low.u32 %v1861
    %v1863 = vextract.high.u32 %v1861
    %v1864 = vmul.u32 %v1857, %v1848
    %v1865 = vadd.s32 %v1860, %v1862
    %vm1866 = vc.u32 %v1860, %v1862
    %v1867 = vadd.s32 %v1863, 1
    %v1868 = vsel %vm1866, %v1867, %v1863
    %v1869 = vadd.s32 %v1864, %v1868
    %v1870 = vadd.s32 %v1869, 536870912
    %v1871 = vshrl.u32 %v1870, 30
    %v1872 = vshll.u32 %v1871, 30
    %v1873 = vsub.s32 %v1869, %v1872
    %vm1874 = vcmp.lt.s32.totalorder %v1873, 0
    %v1875 = vsub.s32 0, %v1873
    %v1876 = vsel %vm1874, %v1875, %v1873
    %v1877 = vclz %v1876
    %v1878 = vsub.s32 %v1877, 2
    %vm1879 = vcmp.gt.s32.totalorder 0, %v1878
    %v1880 = vsel %vm1879, 0, %v1878
    %v1881 = vsub.s32 32, %v1880
    %v1882 = vshll.u32 %v1873, %v1880
    %v1883 = vshrl.u32 %v1865, %v1881
    %v1884 = vor.u32 %v1882, %v1883
    %v1885 = vsub.s32 4294967266, %v1880
    %v1886 = vadd.s32 %v1885, 127
    %v1887 = vshll.u32 %v1886, 23
    %v1888 = vor.u32 4788187, %v1887
    %v1889 = vand.u32 2147483647, %v1888
    %v1891 = vcvt.s32.f32 %v1884
    %v1892 = vmul.f32 %v1891, %v1889
    %v1893 = vxor.u32 %v1892, 2147483648
    %v1894 = vsel %vm1811, %v1893, %v1892
    %v1895 = vsub.s32 4, %v1871
    %v1896 = vsel %vm1811, %v1895, %v1871
    %v1897 = vsel %vm1810, %v279, %v1894
    %v1898 = vsel %vm1810, 0, %v1896
    %v1899 = vcosq.f32.pop %v1897
    %v1900 = vsinq.f32.pop %v1897
    %vm1901 = vweird.f32 %v279
    %v1902 = vand.u32 %v1898, 3
    %vm1903 = vcmp.lt.s32.totalorder %v1902, 2
    %vm1904 = vcmp.eq.s32.totalorder %v1902, 0
    %v1905 = vxor.u32 %v1900, 2147483648
    %v1906 = vsel %vm1904, %v1899, %v1905
    %vm1907 = vcmp.eq.s32.totalorder %v1902, 2
    %v1908 = vxor.u32 %v1899, 2147483648
    %v1909 = vsel %vm1907, %v1908, %v1900
    %v1910 = vsel %vm1903, %v1906, %v1909
    %v1911 = vsel %vm1901, nan, %v1910
    %v1912 = vand.u32 2147483647, %v284
    %vm1913 = vcmp.le.f32.partialorder %v1912, 0.7853982
    %vm1914 = vcmp.lt.s32.totalorder %v284, 0
    %v1915 = vand.u32 %v284, 2139095040
    %v1916 = vshrl.u32 %v1915, 23
    %v1917 = vsub.s32 %v1916, 127
    %v1918 = vand.u32 2147483647, %v284
    %v1919 = vand.u32 %v1918, 8388607
    %v1920 = vor.u32 %v1919, 8388608
    %v1921 = vsub.s32 0, %v1920
    %v1922 = vadd.s32 %v1917, 1
    %vm1923 = vcmp.gt.s32.totalorder %v1922, 0
    %v1924 = vsel %vm1923, %v1922, 0
    %v1925 = vshrl.u32 %v1924, 5
    %v1926 = vand.u32 %v1924, 31
    %v1927 = vsub.s32 32, %v1926
    %v1928 = vshrl.u32 683565275, %v1927
    %v1929 = vshll.u32 683565275, %v1926
    %v1930 = vshrl.u32 2475754826, %v1927
    %v1931 = vor.u32 %v1929, %v1930
    %v1932 = vshll.u32 2475754826, %v1926
    %v1933 = vshrl.u32 2131351028, %v1927
    %v1934 = vor.u32 %v1932, %v1933
    %v1935 = vshll.u32 2131351028, %v1926
    %v1936 = vshrl.u32 2102212464, %v1927
    %v1937 = vor.u32 %v1935, %v1936
    %v1938 = vshll.u32 2102212464, %v1926
    %v1939 = vshrl.u32 920167782, %v1927
    %v1940 = vor.u32 %v1938, %v1939
    %v1941 = vshll.u32 920167782, %v1926
    %v1942 = vshrl.u32 1326507024, %v1927
    %v1943 = vor.u32 %v1941, %v1942
    %vm1944 = vcmp.lt.s32.totalorder %v1925, 1
    %vm1945 = vcmp.lt.s32.totalorder %v1925, 2
    %vm1946 = vcmp.lt.s32.totalorder %v1925, 3
    %vm1947 = vcmp.lt.s32.totalorder %v1925, 4
    %v1948 = vsel %vm1944, %v1928, %v1931
    %v1949 = vsel %vm1947, %v1937, 2102212464
    %v1950 = vsel %vm1946, %v1934, %v1949
    %v1951 = vsel %vm1945, %v1948, %v1950
    %v1952 = vsel %vm1944, %v1931, %v1934
    %v1953 = vsel %vm1947, %v1940, 920167782
    %v1954 = vsel %vm1946, %v1937, %v1953
    %v1955 = vsel %vm1945, %v1952, %v1954
    %v1956 = vsel %vm1944, %v1934, %v1937
    %v1957 = vsel %vm1947, %v1943, 1326507024
    %v1958 = vsel %vm1946, %v1940, %v1957
    %v1959 = vsel %vm1945, %v1956, %v1958
    %v1960 = vshll.u32 %v1920, 8
    %v1961 = vmul.u32.u64.compose %v1960, %v1959
    %v1962 = vextract.low.u32 %v1961
    %v1963 = vextract.high.u32 %v1961
    %v1964 = vmul.u32.u64.compose %v1960, %v1955
    %v1965 = vextract.low.u32 %v1964
    %v1966 = vextract.high.u32 %v1964
    %v1967 = vmul.u32 %v1960, %v1951
    %v1968 = vadd.s32 %v1963, %v1965
    %vm1969 = vc.u32 %v1963, %v1965
    %v1970 = vadd.s32 %v1966, 1
    %v1971 = vsel %vm1969, %v1970, %v1966
    %v1972 = vadd.s32 %v1967, %v1971
    %v1973 = vadd.s32 %v1972, 536870912
    %v1974 = vshrl.u32 %v1973, 30
    %v1975 = vshll.u32 %v1974, 30
    %v1976 = vsub.s32 %v1972, %v1975
    %vm1977 = vcmp.lt.s32.totalorder %v1976, 0
    %v1978 = vsub.s32 0, %v1976
    %v1979 = vsel %vm1977, %v1978, %v1976
    %v1980 = vclz %v1979
    %v1981 = vsub.s32 %v1980, 2
    %vm1982 = vcmp.gt.s32.totalorder 0, %v1981
    %v1983 = vsel %vm1982, 0, %v1981
    %v1984 = vsub.s32 32, %v1983
    %v1985 = vshll.u32 %v1976, %v1983
    %v1986 = vshrl.u32 %v1968, %v1984
    %v1987 = vor.u32 %v1985, %v1986
    %v1988 = vsub.s32 4294967266, %v1983
    %v1989 = vadd.s32 %v1988, 127
    %v1990 = vshll.u32 %v1989, 23
    %v1991 = vor.u32 4788187, %v1990
    %v1992 = vand.u32 2147483647, %v1991
    %v1994 = vcvt.s32.f32 %v1987
    %v1995 = vmul.f32 %v1994, %v1992
    %v1996 = vxor.u32 %v1995, 2147483648
    %v1997 = vsel %vm1914, %v1996, %v1995
    %v1998 = vsub.s32 4, %v1974
    %v1999 = vsel %vm1914, %v1998, %v1974
    %v2000 = vsel %vm1913, %v284, %v1997
    %v2001 = vsel %vm1913, 0, %v1999
    %v2002 = vcosq.f32.pop %v2000
    %v2003 = vsinq.f32.pop %v2000
    %vm2004 = vweird.f32 %v284
    %v2005 = vand.u32 %v2001, 3
    %vm2006 = vcmp.lt.s32.totalorder %v2005, 2
    %vm2007 = vcmp.eq.s32.totalorder %v2005, 0
    %v2008 = vxor.u32 %v2003, 2147483648
    %v2009 = vsel %vm2007, %v2002, %v2008
    %vm2010 = vcmp.eq.s32.totalorder %v2005, 2
    %v2011 = vxor.u32 %v2002, 2147483648
    %v2012 = vsel %vm2010, %v2011, %v2003
    %v2013 = vsel %vm2006, %v2009, %v2012
    %v2014 = vsel %vm2004, nan, %v2013
    %v2015 = vand.u32 2147483647, %v289
    %vm2016 = vcmp.le.f32.partialorder %v2015, 0.7853982
    %vm2017 = vcmp.lt.s32.totalorder %v289, 0
    %v2018 = vand.u32 %v289, 2139095040
    %v2019 = vshrl.u32 %v2018, 23
    %v2020 = vsub.s32 %v2019, 127
    %v2021 = vand.u32 2147483647, %v289
    %v2022 = vand.u32 %v2021, 8388607
    %v2023 = vor.u32 %v2022, 8388608
    %v2024 = vsub.s32 0, %v2023
    %v2025 = vadd.s32 %v2020, 1
    %vm2026 = vcmp.gt.s32.totalorder %v2025, 0
    %v2027 = vsel %vm2026, %v2025, 0
    %v2028 = vshrl.u32 %v2027, 5
    %v2029 = vand.u32 %v2027, 31
    %v2030 = vsub.s32 32, %v2029
    %v2031 = vshrl.u32 683565275, %v2030
    %v2032 = vshll.u32 683565275, %v2029
    %v2033 = vshrl.u32 2475754826, %v2030
    %v2034 = vor.u32 %v2032, %v2033
    %v2035 = vshll.u32 2475754826, %v2029
    %v2036 = vshrl.u32 2131351028, %v2030
    %v2037 = vor.u32 %v2035, %v2036
    %v2038 = vshll.u32 2131351028, %v2029
    %v2039 = vshrl.u32 2102212464, %v2030
    %v2040 = vor.u32 %v2038, %v2039
    %v2041 = vshll.u32 2102212464, %v2029
    %v2042 = vshrl.u32 920167782, %v2030
    %v2043 = vor.u32 %v2041, %v2042
    %v2044 = vshll.u32 920167782, %v2029
    %v2045 = vshrl.u32 1326507024, %v2030
    %v2046 = vor.u32 %v2044, %v2045
    %vm2047 = vcmp.lt.s32.totalorder %v2028, 1
    %vm2048 = vcmp.lt.s32.totalorder %v2028, 2
    %vm2049 = vcmp.lt.s32.totalorder %v2028, 3
    %vm2050 = vcmp.lt.s32.totalorder %v2028, 4
    %v2051 = vsel %vm2047, %v2031, %v2034
    %v2052 = vsel %vm2050, %v2040, 2102212464
    %v2053 = vsel %vm2049, %v2037, %v2052
    %v2054 = vsel %vm2048, %v2051, %v2053
    %v2055 = vsel %vm2047, %v2034, %v2037
    %v2056 = vsel %vm2050, %v2043, 920167782
    %v2057 = vsel %vm2049, %v2040, %v2056
    %v2058 = vsel %vm2048, %v2055, %v2057
    %v2059 = vsel %vm2047, %v2037, %v2040
    %v2060 = vsel %vm2050, %v2046, 1326507024
    %v2061 = vsel %vm2049, %v2043, %v2060
    %v2062 = vsel %vm2048, %v2059, %v2061
    %v2063 = vshll.u32 %v2023, 8
    %v2064 = vmul.u32.u64.compose %v2063, %v2062
    %v2065 = vextract.low.u32 %v2064
    %v2066 = vextract.high.u32 %v2064
    %v2067 = vmul.u32.u64.compose %v2063, %v2058
    %v2068 = vextract.low.u32 %v2067
    %v2069 = vextract.high.u32 %v2067
    %v2070 = vmul.u32 %v2063, %v2054
    %v2071 = vadd.s32 %v2066, %v2068
    %vm2072 = vc.u32 %v2066, %v2068
    %v2073 = vadd.s32 %v2069, 1
    %v2074 = vsel %vm2072, %v2073, %v2069
    %v2075 = vadd.s32 %v2070, %v2074
    %v2076 = vadd.s32 %v2075, 536870912
    %v2077 = vshrl.u32 %v2076, 30
    %v2078 = vshll.u32 %v2077, 30
    %v2079 = vsub.s32 %v2075, %v2078
    %vm2080 = vcmp.lt.s32.totalorder %v2079, 0
    %v2081 = vsub.s32 0, %v2079
    %v2082 = vsel %vm2080, %v2081, %v2079
    %v2083 = vclz %v2082
    %v2084 = vsub.s32 %v2083, 2
    %vm2085 = vcmp.gt.s32.totalorder 0, %v2084
    %v2086 = vsel %vm2085, 0, %v2084
    %v2087 = vsub.s32 32, %v2086
    %v2088 = vshll.u32 %v2079, %v2086
    %v2089 = vshrl.u32 %v2071, %v2087
    %v2090 = vor.u32 %v2088, %v2089
    %v2091 = vsub.s32 4294967266, %v2086
    %v2092 = vadd.s32 %v2091, 127
    %v2093 = vshll.u32 %v2092, 23
    %v2094 = vor.u32 4788187, %v2093
    %v2095 = vand.u32 2147483647, %v2094
    %v2097 = vcvt.s32.f32 %v2090
    %v2098 = vmul.f32 %v2097, %v2095
    %v2099 = vxor.u32 %v2098, 2147483648
    %v2100 = vsel %vm2017, %v2099, %v2098
    %v2101 = vsub.s32 4, %v2077
    %v2102 = vsel %vm2017, %v2101, %v2077
    %v2103 = vsel %vm2016, %v289, %v2100
    %v2104 = vsel %vm2016, 0, %v2102
    %v2105 = vcosq.f32.pop %v2103
    %v2106 = vsinq.f32.pop %v2103
    %vm2107 = vweird.f32 %v289
    %v2108 = vand.u32 %v2104, 3
    %vm2109 = vcmp.lt.s32.totalorder %v2108, 2
    %vm2110 = vcmp.eq.s32.totalorder %v2108, 0
    %v2111 = vxor.u32 %v2106, 2147483648
    %v2112 = vsel %vm2110, %v2105, %v2111
    %vm2113 = vcmp.eq.s32.totalorder %v2108, 2
    %v2114 = vxor.u32 %v2105, 2147483648
    %v2115 = vsel %vm2113, %v2114, %v2106
    %v2116 = vsel %vm2109, %v2112, %v2115
    %v2117 = vsel %vm2107, nan, %v2116
    %v2118 = vand.u32 2147483647, %v294
    %vm2119 = vcmp.le.f32.partialorder %v2118, 0.7853982
    %vm2120 = vcmp.lt.s32.totalorder %v294, 0
    %v2121 = vand.u32 %v294, 2139095040
    %v2122 = vshrl.u32 %v2121, 23
    %v2123 = vsub.s32 %v2122, 127
    %v2124 = vand.u32 2147483647, %v294
    %v2125 = vand.u32 %v2124, 8388607
    %v2126 = vor.u32 %v2125, 8388608
    %v2127 = vsub.s32 0, %v2126
    %v2128 = vadd.s32 %v2123, 1
    %vm2129 = vcmp.gt.s32.totalorder %v2128, 0
    %v2130 = vsel %vm2129, %v2128, 0
    %v2131 = vshrl.u32 %v2130, 5
    %v2132 = vand.u32 %v2130, 31
    %v2133 = vsub.s32 32, %v2132
    %v2134 = vshrl.u32 683565275, %v2133
    %v2135 = vshll.u32 683565275, %v2132
    %v2136 = vshrl.u32 2475754826, %v2133
    %v2137 = vor.u32 %v2135, %v2136
    %v2138 = vshll.u32 2475754826, %v2132
    %v2139 = vshrl.u32 2131351028, %v2133
    %v2140 = vor.u32 %v2138, %v2139
    %v2141 = vshll.u32 2131351028, %v2132
    %v2142 = vshrl.u32 2102212464, %v2133
    %v2143 = vor.u32 %v2141, %v2142
    %v2144 = vshll.u32 2102212464, %v2132
    %v2145 = vshrl.u32 920167782, %v2133
    %v2146 = vor.u32 %v2144, %v2145
    %v2147 = vshll.u32 920167782, %v2132
    %v2148 = vshrl.u32 1326507024, %v2133
    %v2149 = vor.u32 %v2147, %v2148
    %vm2150 = vcmp.lt.s32.totalorder %v2131, 1
    %vm2151 = vcmp.lt.s32.totalorder %v2131, 2
    %vm2152 = vcmp.lt.s32.totalorder %v2131, 3
    %vm2153 = vcmp.lt.s32.totalorder %v2131, 4
    %v2154 = vsel %vm2150, %v2134, %v2137
    %v2155 = vsel %vm2153, %v2143, 2102212464
    %v2156 = vsel %vm2152, %v2140, %v2155
    %v2157 = vsel %vm2151, %v2154, %v2156
    %v2158 = vsel %vm2150, %v2137, %v2140
    %v2159 = vsel %vm2153, %v2146, 920167782
    %v2160 = vsel %vm2152, %v2143, %v2159
    %v2161 = vsel %vm2151, %v2158, %v2160
    %v2162 = vsel %vm2150, %v2140, %v2143
    %v2163 = vsel %vm2153, %v2149, 1326507024
    %v2164 = vsel %vm2152, %v2146, %v2163
    %v2165 = vsel %vm2151, %v2162, %v2164
    %v2166 = vshll.u32 %v2126, 8
    %v2167 = vmul.u32.u64.compose %v2166, %v2165
    %v2168 = vextract.low.u32 %v2167
    %v2169 = vextract.high.u32 %v2167
    %v2170 = vmul.u32.u64.compose %v2166, %v2161
    %v2171 = vextract.low.u32 %v2170
    %v2172 = vextract.high.u32 %v2170
    %v2173 = vmul.u32 %v2166, %v2157
    %v2174 = vadd.s32 %v2169, %v2171
    %vm2175 = vc.u32 %v2169, %v2171
    %v2176 = vadd.s32 %v2172, 1
    %v2177 = vsel %vm2175, %v2176, %v2172
    %v2178 = vadd.s32 %v2173, %v2177
    %v2179 = vadd.s32 %v2178, 536870912
    %v2180 = vshrl.u32 %v2179, 30
    %v2181 = vshll.u32 %v2180, 30
    %v2182 = vsub.s32 %v2178, %v2181
    %vm2183 = vcmp.lt.s32.totalorder %v2182, 0
    %v2184 = vsub.s32 0, %v2182
    %v2185 = vsel %vm2183, %v2184, %v2182
    %v2186 = vclz %v2185
    %v2187 = vsub.s32 %v2186, 2
    %vm2188 = vcmp.gt.s32.totalorder 0, %v2187
    %v2189 = vsel %vm2188, 0, %v2187
    %v2190 = vsub.s32 32, %v2189
    %v2191 = vshll.u32 %v2182, %v2189
    %v2192 = vshrl.u32 %v2174, %v2190
    %v2193 = vor.u32 %v2191, %v2192
    %v2194 = vsub.s32 4294967266, %v2189
    %v2195 = vadd.s32 %v2194, 127
    %v2196 = vshll.u32 %v2195, 23
    %v2197 = vor.u32 4788187, %v2196
    %v2198 = vand.u32 2147483647, %v2197
    %v2200 = vcvt.s32.f32 %v2193
    %v2201 = vmul.f32 %v2200, %v2198
    %v2202 = vxor.u32 %v2201, 2147483648
    %v2203 = vsel %vm2120, %v2202, %v2201
    %v2204 = vsub.s32 4, %v2180
    %v2205 = vsel %vm2120, %v2204, %v2180
    %v2206 = vsel %vm2119, %v294, %v2203
    %v2207 = vsel %vm2119, 0, %v2205
    %v2208 = vcosq.f32.pop %v2206
    %v2209 = vsinq.f32.pop %v2206
    %vm2210 = vweird.f32 %v294
    %v2211 = vand.u32 %v2207, 3
    %vm2212 = vcmp.lt.s32.totalorder %v2211, 2
    %vm2213 = vcmp.eq.s32.totalorder %v2211, 0
    %v2214 = vxor.u32 %v2209, 2147483648
    %v2215 = vsel %vm2213, %v2208, %v2214
    %vm2216 = vcmp.eq.s32.totalorder %v2211, 2
    %v2217 = vxor.u32 %v2208, 2147483648
    %v2218 = vsel %vm2216, %v2217, %v2209
    %v2219 = vsel %vm2212, %v2215, %v2218
    %v2220 = vsel %vm2210, nan, %v2219
    %v2221 = vand.u32 2147483647, %v299
    %vm2222 = vcmp.le.f32.partialorder %v2221, 0.7853982
    %vm2223 = vcmp.lt.s32.totalorder %v299, 0
    %v2224 = vand.u32 %v299, 2139095040
    %v2225 = vshrl.u32 %v2224, 23
    %v2226 = vsub.s32 %v2225, 127
    %v2227 = vand.u32 2147483647, %v299
    %v2228 = vand.u32 %v2227, 8388607
    %v2229 = vor.u32 %v2228, 8388608
    %v2230 = vsub.s32 0, %v2229
    %v2231 = vadd.s32 %v2226, 1
    %vm2232 = vcmp.gt.s32.totalorder %v2231, 0
    %v2233 = vsel %vm2232, %v2231, 0
    %v2234 = vshrl.u32 %v2233, 5
    %v2235 = vand.u32 %v2233, 31
    %v2236 = vsub.s32 32, %v2235
    %v2237 = vshrl.u32 683565275, %v2236
    %v2238 = vshll.u32 683565275, %v2235
    %v2239 = vshrl.u32 2475754826, %v2236
    %v2240 = vor.u32 %v2238, %v2239
    %v2241 = vshll.u32 2475754826, %v2235
    %v2242 = vshrl.u32 2131351028, %v2236
    %v2243 = vor.u32 %v2241, %v2242
    %v2244 = vshll.u32 2131351028, %v2235
    %v2245 = vshrl.u32 2102212464, %v2236
    %v2246 = vor.u32 %v2244, %v2245
    %v2247 = vshll.u32 2102212464, %v2235
    %v2248 = vshrl.u32 920167782, %v2236
    %v2249 = vor.u32 %v2247, %v2248
    %v2250 = vshll.u32 920167782, %v2235
    %v2251 = vshrl.u32 1326507024, %v2236
    %v2252 = vor.u32 %v2250, %v2251
    %vm2253 = vcmp.lt.s32.totalorder %v2234, 1
    %vm2254 = vcmp.lt.s32.totalorder %v2234, 2
    %vm2255 = vcmp.lt.s32.totalorder %v2234, 3
    %vm2256 = vcmp.lt.s32.totalorder %v2234, 4
    %v2257 = vsel %vm2253, %v2237, %v2240
    %v2258 = vsel %vm2256, %v2246, 2102212464
    %v2259 = vsel %vm2255, %v2243, %v2258
    %v2260 = vsel %vm2254, %v2257, %v2259
    %v2261 = vsel %vm2253, %v2240, %v2243
    %v2262 = vsel %vm2256, %v2249, 920167782
    %v2263 = vsel %vm2255, %v2246, %v2262
    %v2264 = vsel %vm2254, %v2261, %v2263
    %v2265 = vsel %vm2253, %v2243, %v2246
    %v2266 = vsel %vm2256, %v2252, 1326507024
    %v2267 = vsel %vm2255, %v2249, %v2266
    %v2268 = vsel %vm2254, %v2265, %v2267
    %v2269 = vshll.u32 %v2229, 8
    %v2270 = vmul.u32.u64.compose %v2269, %v2268
    %v2271 = vextract.low.u32 %v2270
    %v2272 = vextract.high.u32 %v2270
    %v2273 = vmul.u32.u64.compose %v2269, %v2264
    %v2274 = vextract.low.u32 %v2273
    %v2275 = vextract.high.u32 %v2273
    %v2276 = vmul.u32 %v2269, %v2260
    %v2277 = vadd.s32 %v2272, %v2274
    %vm2278 = vc.u32 %v2272, %v2274
    %v2279 = vadd.s32 %v2275, 1
    %v2280 = vsel %vm2278, %v2279, %v2275
    %v2281 = vadd.s32 %v2276, %v2280
    %v2282 = vadd.s32 %v2281, 536870912
    %v2283 = vshrl.u32 %v2282, 30
    %v2284 = vshll.u32 %v2283, 30
    %v2285 = vsub.s32 %v2281, %v2284
    %vm2286 = vcmp.lt.s32.totalorder %v2285, 0
    %v2287 = vsub.s32 0, %v2285
    %v2288 = vsel %vm2286, %v2287, %v2285
    %v2289 = vclz %v2288
    %v2290 = vsub.s32 %v2289, 2
    %vm2291 = vcmp.gt.s32.totalorder 0, %v2290
    %v2292 = vsel %vm2291, 0, %v2290
    %v2293 = vsub.s32 32, %v2292
    %v2294 = vshll.u32 %v2285, %v2292
    %v2295 = vshrl.u32 %v2277, %v2293
    %v2296 = vor.u32 %v2294, %v2295
    %v2297 = vsub.s32 4294967266, %v2292
    %v2298 = vadd.s32 %v2297, 127
    %v2299 = vshll.u32 %v2298, 23
    %v2300 = vor.u32 4788187, %v2299
    %v2301 = vand.u32 2147483647, %v2300
    %v2303 = vcvt.s32.f32 %v2296
    %v2304 = vmul.f32 %v2303, %v2301
    %v2305 = vxor.u32 %v2304, 2147483648
    %v2306 = vsel %vm2223, %v2305, %v2304
    %v2307 = vsub.s32 4, %v2283
    %v2308 = vsel %vm2223, %v2307, %v2283
    %v2309 = vsel %vm2222, %v299, %v2306
    %v2310 = vsel %vm2222, 0, %v2308
    %v2311 = vcosq.f32.pop %v2309
    %v2312 = vsinq.f32.pop %v2309
    %vm2313 = vweird.f32 %v299
    %v2314 = vand.u32 %v2310, 3
    %vm2315 = vcmp.lt.s32.totalorder %v2314, 2
    %vm2316 = vcmp.eq.s32.totalorder %v2314, 0
    %v2317 = vxor.u32 %v2312, 2147483648
    %v2318 = vsel %vm2316, %v2311, %v2317
    %vm2319 = vcmp.eq.s32.totalorder %v2314, 2
    %v2320 = vxor.u32 %v2311, 2147483648
    %v2321 = vsel %vm2319, %v2320, %v2312
    %v2322 = vsel %vm2315, %v2318, %v2321
    %v2323 = vsel %vm2313, nan, %v2322
    %v2324 = vand.u32 2147483647, %v304
    %vm2325 = vcmp.le.f32.partialorder %v2324, 0.7853982
    %vm2326 = vcmp.lt.s32.totalorder %v304, 0
    %v2327 = vand.u32 %v304, 2139095040
    %v2328 = vshrl.u32 %v2327, 23
    %v2329 = vsub.s32 %v2328, 127
    %v2330 = vand.u32 2147483647, %v304
    %v2331 = vand.u32 %v2330, 8388607
    %v2332 = vor.u32 %v2331, 8388608
    %v2333 = vsub.s32 0, %v2332
    %v2334 = vadd.s32 %v2329, 1
    %vm2335 = vcmp.gt.s32.totalorder %v2334, 0
    %v2336 = vsel %vm2335, %v2334, 0
    %v2337 = vshrl.u32 %v2336, 5
    %v2338 = vand.u32 %v2336, 31
    %v2339 = vsub.s32 32, %v2338
    %v2340 = vshrl.u32 683565275, %v2339
    %v2341 = vshll.u32 683565275, %v2338
    %v2342 = vshrl.u32 2475754826, %v2339
    %v2343 = vor.u32 %v2341, %v2342
    %v2344 = vshll.u32 2475754826, %v2338
    %v2345 = vshrl.u32 2131351028, %v2339
    %v2346 = vor.u32 %v2344, %v2345
    %v2347 = vshll.u32 2131351028, %v2338
    %v2348 = vshrl.u32 2102212464, %v2339
    %v2349 = vor.u32 %v2347, %v2348
    %v2350 = vshll.u32 2102212464, %v2338
    %v2351 = vshrl.u32 920167782, %v2339
    %v2352 = vor.u32 %v2350, %v2351
    %v2353 = vshll.u32 920167782, %v2338
    %v2354 = vshrl.u32 1326507024, %v2339
    %v2355 = vor.u32 %v2353, %v2354
    %vm2356 = vcmp.lt.s32.totalorder %v2337, 1
    %vm2357 = vcmp.lt.s32.totalorder %v2337, 2
    %vm2358 = vcmp.lt.s32.totalorder %v2337, 3
    %vm2359 = vcmp.lt.s32.totalorder %v2337, 4
    %v2360 = vsel %vm2356, %v2340, %v2343
    %v2361 = vsel %vm2359, %v2349, 2102212464
    %v2362 = vsel %vm2358, %v2346, %v2361
    %v2363 = vsel %vm2357, %v2360, %v2362
    %v2364 = vsel %vm2356, %v2343, %v2346
    %v2365 = vsel %vm2359, %v2352, 920167782
    %v2366 = vsel %vm2358, %v2349, %v2365
    %v2367 = vsel %vm2357, %v2364, %v2366
    %v2368 = vsel %vm2356, %v2346, %v2349
    %v2369 = vsel %vm2359, %v2355, 1326507024
    %v2370 = vsel %vm2358, %v2352, %v2369
    %v2371 = vsel %vm2357, %v2368, %v2370
    %v2372 = vshll.u32 %v2332, 8
    %v2373 = vmul.u32.u64.compose %v2372, %v2371
    %v2374 = vextract.low.u32 %v2373
    %v2375 = vextract.high.u32 %v2373
    %v2376 = vmul.u32.u64.compose %v2372, %v2367
    %v2377 = vextract.low.u32 %v2376
    %v2378 = vextract.high.u32 %v2376
    %v2379 = vmul.u32 %v2372, %v2363
    %v2380 = vadd.s32 %v2375, %v2377
    %vm2381 = vc.u32 %v2375, %v2377
    %v2382 = vadd.s32 %v2378, 1
    %v2383 = vsel %vm2381, %v2382, %v2378
    %v2384 = vadd.s32 %v2379, %v2383
    %v2385 = vadd.s32 %v2384, 536870912
    %v2386 = vshrl.u32 %v2385, 30
    %v2387 = vshll.u32 %v2386, 30
    %v2388 = vsub.s32 %v2384, %v2387
    %vm2389 = vcmp.lt.s32.totalorder %v2388, 0
    %v2390 = vsub.s32 0, %v2388
    %v2391 = vsel %vm2389, %v2390, %v2388
    %v2392 = vclz %v2391
    %v2393 = vsub.s32 %v2392, 2
    %vm2394 = vcmp.gt.s32.totalorder 0, %v2393
    %v2395 = vsel %vm2394, 0, %v2393
    %v2396 = vsub.s32 32, %v2395
    %v2397 = vshll.u32 %v2388, %v2395
    %v2398 = vshrl.u32 %v2380, %v2396
    %v2399 = vor.u32 %v2397, %v2398
    %v2400 = vsub.s32 4294967266, %v2395
    %v2401 = vadd.s32 %v2400, 127
    %v2402 = vshll.u32 %v2401, 23
    %v2403 = vor.u32 4788187, %v2402
    %v2404 = vand.u32 2147483647, %v2403
    %v2406 = vcvt.s32.f32 %v2399
    %v2407 = vmul.f32 %v2406, %v2404
    %v2408 = vxor.u32 %v2407, 2147483648
    %v2409 = vsel %vm2326, %v2408, %v2407
    %v2410 = vsub.s32 4, %v2386
    %v2411 = vsel %vm2326, %v2410, %v2386
    %v2412 = vsel %vm2325, %v304, %v2409
    %v2413 = vsel %vm2325, 0, %v2411
    %v2414 = vcosq.f32.pop %v2412
    %v2415 = vsinq.f32.pop %v2412
    %vm2416 = vweird.f32 %v304
    %v2417 = vand.u32 %v2413, 3
    %vm2418 = vcmp.lt.s32.totalorder %v2417, 2
    %vm2419 = vcmp.eq.s32.totalorder %v2417, 0
    %v2420 = vxor.u32 %v2415, 2147483648
    %v2421 = vsel %vm2419, %v2414, %v2420
    %vm2422 = vcmp.eq.s32.totalorder %v2417, 2
    %v2423 = vxor.u32 %v2414, 2147483648
    %v2424 = vsel %vm2422, %v2423, %v2415
    %v2425 = vsel %vm2418, %v2421, %v2424
    %v2426 = vsel %vm2416, nan, %v2425
    %v2427 = vand.u32 2147483647, %v309
    %vm2428 = vcmp.le.f32.partialorder %v2427, 0.7853982
    %vm2429 = vcmp.lt.s32.totalorder %v309, 0
    %v2430 = vand.u32 %v309, 2139095040
    %v2431 = vshrl.u32 %v2430, 23
    %v2432 = vsub.s32 %v2431, 127
    %v2433 = vand.u32 2147483647, %v309
    %v2434 = vand.u32 %v2433, 8388607
    %v2435 = vor.u32 %v2434, 8388608
    %v2436 = vsub.s32 0, %v2435
    %v2437 = vadd.s32 %v2432, 1
    %vm2438 = vcmp.gt.s32.totalorder %v2437, 0
    %v2439 = vsel %vm2438, %v2437, 0
    %v2440 = vshrl.u32 %v2439, 5
    %v2441 = vand.u32 %v2439, 31
    %v2442 = vsub.s32 32, %v2441
    %v2443 = vshrl.u32 683565275, %v2442
    %v2444 = vshll.u32 683565275, %v2441
    %v2445 = vshrl.u32 2475754826, %v2442
    %v2446 = vor.u32 %v2444, %v2445
    %v2447 = vshll.u32 2475754826, %v2441
    %v2448 = vshrl.u32 2131351028, %v2442
    %v2449 = vor.u32 %v2447, %v2448
    %v2450 = vshll.u32 2131351028, %v2441
    %v2451 = vshrl.u32 2102212464, %v2442
    %v2452 = vor.u32 %v2450, %v2451
    %v2453 = vshll.u32 2102212464, %v2441
    %v2454 = vshrl.u32 920167782, %v2442
    %v2455 = vor.u32 %v2453, %v2454
    %v2456 = vshll.u32 920167782, %v2441
    %v2457 = vshrl.u32 1326507024, %v2442
    %v2458 = vor.u32 %v2456, %v2457
    %vm2459 = vcmp.lt.s32.totalorder %v2440, 1
    %vm2460 = vcmp.lt.s32.totalorder %v2440, 2
    %vm2461 = vcmp.lt.s32.totalorder %v2440, 3
    %vm2462 = vcmp.lt.s32.totalorder %v2440, 4
    %v2463 = vsel %vm2459, %v2443, %v2446
    %v2464 = vsel %vm2462, %v2452, 2102212464
    %v2465 = vsel %vm2461, %v2449, %v2464
    %v2466 = vsel %vm2460, %v2463, %v2465
    %v2467 = vsel %vm2459, %v2446, %v2449
    %v2468 = vsel %vm2462, %v2455, 920167782
    %v2469 = vsel %vm2461, %v2452, %v2468
    %v2470 = vsel %vm2460, %v2467, %v2469
    %v2471 = vsel %vm2459, %v2449, %v2452
    %v2472 = vsel %vm2462, %v2458, 1326507024
    %v2473 = vsel %vm2461, %v2455, %v2472
    %v2474 = vsel %vm2460, %v2471, %v2473
    %v2475 = vshll.u32 %v2435, 8
    %v2476 = vmul.u32.u64.compose %v2475, %v2474
    %v2477 = vextract.low.u32 %v2476
    %v2478 = vextract.high.u32 %v2476
    %v2479 = vmul.u32.u64.compose %v2475, %v2470
    %v2480 = vextract.low.u32 %v2479
    %v2481 = vextract.high.u32 %v2479
    %v2482 = vmul.u32 %v2475, %v2466
    %v2483 = vadd.s32 %v2478, %v2480
    %vm2484 = vc.u32 %v2478, %v2480
    %v2485 = vadd.s32 %v2481, 1
    %v2486 = vsel %vm2484, %v2485, %v2481
    %v2487 = vadd.s32 %v2482, %v2486
    %v2488 = vadd.s32 %v2487, 536870912
    %v2489 = vshrl.u32 %v2488, 30
    %v2490 = vshll.u32 %v2489, 30
    %v2491 = vsub.s32 %v2487, %v2490
    %vm2492 = vcmp.lt.s32.totalorder %v2491, 0
    %v2493 = vsub.s32 0, %v2491
    %v2494 = vsel %vm2492, %v2493, %v2491
    %v2495 = vclz %v2494
    %v2496 = vsub.s32 %v2495, 2
    %vm2497 = vcmp.gt.s32.totalorder 0, %v2496
    %v2498 = vsel %vm2497, 0, %v2496
    %v2499 = vsub.s32 32, %v2498
    %v2500 = vshll.u32 %v2491, %v2498
    %v2501 = vshrl.u32 %v2483, %v2499
    %v2502 = vor.u32 %v2500, %v2501
    %v2503 = vsub.s32 4294967266, %v2498
    %v2504 = vadd.s32 %v2503, 127
    %v2505 = vshll.u32 %v2504, 23
    %v2506 = vor.u32 4788187, %v2505
    %v2507 = vand.u32 2147483647, %v2506
    %v2509 = vcvt.s32.f32 %v2502
    %v2510 = vmul.f32 %v2509, %v2507
    %v2511 = vxor.u32 %v2510, 2147483648
    %v2512 = vsel %vm2429, %v2511, %v2510
    %v2513 = vsub.s32 4, %v2489
    %v2514 = vsel %vm2429, %v2513, %v2489
    %v2515 = vsel %vm2428, %v309, %v2512
    %v2516 = vsel %vm2428, 0, %v2514
    %v2517 = vcosq.f32.pop %v2515
    %v2518 = vsinq.f32.pop %v2515
    %vm2519 = vweird.f32 %v309
    %v2520 = vand.u32 %v2516, 3
    %vm2521 = vcmp.lt.s32.totalorder %v2520, 2
    %vm2522 = vcmp.eq.s32.totalorder %v2520, 0
    %v2523 = vxor.u32 %v2518, 2147483648
    %v2524 = vsel %vm2522, %v2517, %v2523
    %vm2525 = vcmp.eq.s32.totalorder %v2520, 2
    %v2526 = vxor.u32 %v2517, 2147483648
    %v2527 = vsel %vm2525, %v2526, %v2518
    %v2528 = vsel %vm2521, %v2524, %v2527
    %v2529 = vsel %vm2519, nan, %v2528
    %v2530 = vand.u32 2147483647, %v314
    %vm2531 = vcmp.le.f32.partialorder %v2530, 0.7853982
    %vm2532 = vcmp.lt.s32.totalorder %v314, 0
    %v2533 = vand.u32 %v314, 2139095040
    %v2534 = vshrl.u32 %v2533, 23
    %v2535 = vsub.s32 %v2534, 127
    %v2536 = vand.u32 2147483647, %v314
    %v2537 = vand.u32 %v2536, 8388607
    %v2538 = vor.u32 %v2537, 8388608
    %v2539 = vsub.s32 0, %v2538
    %v2540 = vadd.s32 %v2535, 1
    %vm2541 = vcmp.gt.s32.totalorder %v2540, 0
    %v2542 = vsel %vm2541, %v2540, 0
    %v2543 = vshrl.u32 %v2542, 5
    %v2544 = vand.u32 %v2542, 31
    %v2545 = vsub.s32 32, %v2544
    %v2546 = vshrl.u32 683565275, %v2545
    %v2547 = vshll.u32 683565275, %v2544
    %v2548 = vshrl.u32 2475754826, %v2545
    %v2549 = vor.u32 %v2547, %v2548
    %v2550 = vshll.u32 2475754826, %v2544
    %v2551 = vshrl.u32 2131351028, %v2545
    %v2552 = vor.u32 %v2550, %v2551
    %v2553 = vshll.u32 2131351028, %v2544
    %v2554 = vshrl.u32 2102212464, %v2545
    %v2555 = vor.u32 %v2553, %v2554
    %v2556 = vshll.u32 2102212464, %v2544
    %v2557 = vshrl.u32 920167782, %v2545
    %v2558 = vor.u32 %v2556, %v2557
    %v2559 = vshll.u32 920167782, %v2544
    %v2560 = vshrl.u32 1326507024, %v2545
    %v2561 = vor.u32 %v2559, %v2560
    %vm2562 = vcmp.lt.s32.totalorder %v2543, 1
    %vm2563 = vcmp.lt.s32.totalorder %v2543, 2
    %vm2564 = vcmp.lt.s32.totalorder %v2543, 3
    %vm2565 = vcmp.lt.s32.totalorder %v2543, 4
    %v2566 = vsel %vm2562, %v2546, %v2549
    %v2567 = vsel %vm2565, %v2555, 2102212464
    %v2568 = vsel %vm2564, %v2552, %v2567
    %v2569 = vsel %vm2563, %v2566, %v2568
    %v2570 = vsel %vm2562, %v2549, %v2552
    %v2571 = vsel %vm2565, %v2558, 920167782
    %v2572 = vsel %vm2564, %v2555, %v2571
    %v2573 = vsel %vm2563, %v2570, %v2572
    %v2574 = vsel %vm2562, %v2552, %v2555
    %v2575 = vsel %vm2565, %v2561, 1326507024
    %v2576 = vsel %vm2564, %v2558, %v2575
    %v2577 = vsel %vm2563, %v2574, %v2576
    %v2578 = vshll.u32 %v2538, 8
    %v2579 = vmul.u32.u64.compose %v2578, %v2577
    %v2580 = vextract.low.u32 %v2579
    %v2581 = vextract.high.u32 %v2579
    %v2582 = vmul.u32.u64.compose %v2578, %v2573
    %v2583 = vextract.low.u32 %v2582
    %v2584 = vextract.high.u32 %v2582
    %v2585 = vmul.u32 %v2578, %v2569
    %v2586 = vadd.s32 %v2581, %v2583
    %vm2587 = vc.u32 %v2581, %v2583
    %v2588 = vadd.s32 %v2584, 1
    %v2589 = vsel %vm2587, %v2588, %v2584
    %v2590 = vadd.s32 %v2585, %v2589
    %v2591 = vadd.s32 %v2590, 536870912
    %v2592 = vshrl.u32 %v2591, 30
    %v2593 = vshll.u32 %v2592, 30
    %v2594 = vsub.s32 %v2590, %v2593
    %vm2595 = vcmp.lt.s32.totalorder %v2594, 0
    %v2596 = vsub.s32 0, %v2594
    %v2597 = vsel %vm2595, %v2596, %v2594
    %v2598 = vclz %v2597
    %v2599 = vsub.s32 %v2598, 2
    %vm2600 = vcmp.gt.s32.totalorder 0, %v2599
    %v2601 = vsel %vm2600, 0, %v2599
    %v2602 = vsub.s32 32, %v2601
    %v2603 = vshll.u32 %v2594, %v2601
    %v2604 = vshrl.u32 %v2586, %v2602
    %v2605 = vor.u32 %v2603, %v2604
    %v2606 = vsub.s32 4294967266, %v2601
    %v2607 = vadd.s32 %v2606, 127
    %v2608 = vshll.u32 %v2607, 23
    %v2609 = vor.u32 4788187, %v2608
    %v2610 = vand.u32 2147483647, %v2609
    %v2612 = vcvt.s32.f32 %v2605
    %v2613 = vmul.f32 %v2612, %v2610
    %v2614 = vxor.u32 %v2613, 2147483648
    %v2615 = vsel %vm2532, %v2614, %v2613
    %v2616 = vsub.s32 4, %v2592
    %v2617 = vsel %vm2532, %v2616, %v2592
    %v2618 = vsel %vm2531, %v314, %v2615
    %v2619 = vsel %vm2531, 0, %v2617
    %v2620 = vcosq.f32.pop %v2618
    %v2621 = vsinq.f32.pop %v2618
    %vm2622 = vweird.f32 %v314
    %v2623 = vand.u32 %v2619, 3
    %vm2624 = vcmp.lt.s32.totalorder %v2623, 2
    %vm2625 = vcmp.eq.s32.totalorder %v2623, 0
    %v2626 = vxor.u32 %v2621, 2147483648
    %v2627 = vsel %vm2625, %v2620, %v2626
    %vm2628 = vcmp.eq.s32.totalorder %v2623, 2
    %v2629 = vxor.u32 %v2620, 2147483648
    %v2630 = vsel %vm2628, %v2629, %v2621
    %v2631 = vsel %vm2624, %v2627, %v2630
    %v2632 = vsel %vm2622, nan, %v2631
    %v2633 = vand.u32 2147483647, %v319
    %vm2634 = vcmp.le.f32.partialorder %v2633, 0.7853982
    %vm2635 = vcmp.lt.s32.totalorder %v319, 0
    %v2636 = vand.u32 %v319, 2139095040
    %v2637 = vshrl.u32 %v2636, 23
    %v2638 = vsub.s32 %v2637, 127
    %v2639 = vand.u32 2147483647, %v319
    %v2640 = vand.u32 %v2639, 8388607
    %v2641 = vor.u32 %v2640, 8388608
    %v2642 = vsub.s32 0, %v2641
    %v2643 = vadd.s32 %v2638, 1
    %vm2644 = vcmp.gt.s32.totalorder %v2643, 0
    %v2645 = vsel %vm2644, %v2643, 0
    %v2646 = vshrl.u32 %v2645, 5
    %v2647 = vand.u32 %v2645, 31
    %v2648 = vsub.s32 32, %v2647
    %v2649 = vshrl.u32 683565275, %v2648
    %v2650 = vshll.u32 683565275, %v2647
    %v2651 = vshrl.u32 2475754826, %v2648
    %v2652 = vor.u32 %v2650, %v2651
    %v2653 = vshll.u32 2475754826, %v2647
    %v2654 = vshrl.u32 2131351028, %v2648
    %v2655 = vor.u32 %v2653, %v2654
    %v2656 = vshll.u32 2131351028, %v2647
    %v2657 = vshrl.u32 2102212464, %v2648
    %v2658 = vor.u32 %v2656, %v2657
    %v2659 = vshll.u32 2102212464, %v2647
    %v2660 = vshrl.u32 920167782, %v2648
    %v2661 = vor.u32 %v2659, %v2660
    %v2662 = vshll.u32 920167782, %v2647
    %v2663 = vshrl.u32 1326507024, %v2648
    %v2664 = vor.u32 %v2662, %v2663
    %vm2665 = vcmp.lt.s32.totalorder %v2646, 1
    %vm2666 = vcmp.lt.s32.totalorder %v2646, 2
    %vm2667 = vcmp.lt.s32.totalorder %v2646, 3
    %vm2668 = vcmp.lt.s32.totalorder %v2646, 4
    %v2669 = vsel %vm2665, %v2649, %v2652
    %v2670 = vsel %vm2668, %v2658, 2102212464
    %v2671 = vsel %vm2667, %v2655, %v2670
    %v2672 = vsel %vm2666, %v2669, %v2671
    %v2673 = vsel %vm2665, %v2652, %v2655
    %v2674 = vsel %vm2668, %v2661, 920167782
    %v2675 = vsel %vm2667, %v2658, %v2674
    %v2676 = vsel %vm2666, %v2673, %v2675
    %v2677 = vsel %vm2665, %v2655, %v2658
    %v2678 = vsel %vm2668, %v2664, 1326507024
    %v2679 = vsel %vm2667, %v2661, %v2678
    %v2680 = vsel %vm2666, %v2677, %v2679
    %v2681 = vshll.u32 %v2641, 8
    %v2682 = vmul.u32.u64.compose %v2681, %v2680
    %v2683 = vextract.low.u32 %v2682
    %v2684 = vextract.high.u32 %v2682
    %v2685 = vmul.u32.u64.compose %v2681, %v2676
    %v2686 = vextract.low.u32 %v2685
    %v2687 = vextract.high.u32 %v2685
    %v2688 = vmul.u32 %v2681, %v2672
    %v2689 = vadd.s32 %v2684, %v2686
    %vm2690 = vc.u32 %v2684, %v2686
    %v2691 = vadd.s32 %v2687, 1
    %v2692 = vsel %vm2690, %v2691, %v2687
    %v2693 = vadd.s32 %v2688, %v2692
    %v2694 = vadd.s32 %v2693, 536870912
    %v2695 = vshrl.u32 %v2694, 30
    %v2696 = vshll.u32 %v2695, 30
    %v2697 = vsub.s32 %v2693, %v2696
    %vm2698 = vcmp.lt.s32.totalorder %v2697, 0
    %v2699 = vsub.s32 0, %v2697
    %v2700 = vsel %vm2698, %v2699, %v2697
    %v2701 = vclz %v2700
    %v2702 = vsub.s32 %v2701, 2
    %vm2703 = vcmp.gt.s32.totalorder 0, %v2702
    %v2704 = vsel %vm2703, 0, %v2702
    %v2705 = vsub.s32 32, %v2704
    %v2706 = vshll.u32 %v2697, %v2704
    %v2707 = vshrl.u32 %v2689, %v2705
    %v2708 = vor.u32 %v2706, %v2707
    %v2709 = vsub.s32 4294967266, %v2704
    %v2710 = vadd.s32 %v2709, 127
    %v2711 = vshll.u32 %v2710, 23
    %v2712 = vor.u32 4788187, %v2711
    %v2713 = vand.u32 2147483647, %v2712
    %v2715 = vcvt.s32.f32 %v2708
    %v2716 = vmul.f32 %v2715, %v2713
    %v2717 = vxor.u32 %v2716, 2147483648
    %v2718 = vsel %vm2635, %v2717, %v2716
    %v2719 = vsub.s32 4, %v2695
    %v2720 = vsel %vm2635, %v2719, %v2695
    %v2721 = vsel %vm2634, %v319, %v2718
    %v2722 = vsel %vm2634, 0, %v2720
    %v2723 = vcosq.f32.pop %v2721
    %v2724 = vsinq.f32.pop %v2721
    %vm2725 = vweird.f32 %v319
    %v2726 = vand.u32 %v2722, 3
    %vm2727 = vcmp.lt.s32.totalorder %v2726, 2
    %vm2728 = vcmp.eq.s32.totalorder %v2726, 0
    %v2729 = vxor.u32 %v2724, 2147483648
    %v2730 = vsel %vm2728, %v2723, %v2729
    %vm2731 = vcmp.eq.s32.totalorder %v2726, 2
    %v2732 = vxor.u32 %v2723, 2147483648
    %v2733 = vsel %vm2731, %v2732, %v2724
    %v2734 = vsel %vm2727, %v2730, %v2733
    %v2735 = vsel %vm2725, nan, %v2734
    %v2736 = vand.u32 2147483647, %v324
    %vm2737 = vcmp.le.f32.partialorder %v2736, 0.7853982
    %vm2738 = vcmp.lt.s32.totalorder %v324, 0
    %v2739 = vand.u32 %v324, 2139095040
    %v2740 = vshrl.u32 %v2739, 23
    %v2741 = vsub.s32 %v2740, 127
    %v2742 = vand.u32 2147483647, %v324
    %v2743 = vand.u32 %v2742, 8388607
    %v2744 = vor.u32 %v2743, 8388608
    %v2745 = vsub.s32 0, %v2744
    %v2746 = vadd.s32 %v2741, 1
    %vm2747 = vcmp.gt.s32.totalorder %v2746, 0
    %v2748 = vsel %vm2747, %v2746, 0
    %v2749 = vshrl.u32 %v2748, 5
    %v2750 = vand.u32 %v2748, 31
    %v2751 = vsub.s32 32, %v2750
    %v2752 = vshrl.u32 683565275, %v2751
    %v2753 = vshll.u32 683565275, %v2750
    %v2754 = vshrl.u32 2475754826, %v2751
    %v2755 = vor.u32 %v2753, %v2754
    %v2756 = vshll.u32 2475754826, %v2750
    %v2757 = vshrl.u32 2131351028, %v2751
    %v2758 = vor.u32 %v2756, %v2757
    %v2759 = vshll.u32 2131351028, %v2750
    %v2760 = vshrl.u32 2102212464, %v2751
    %v2761 = vor.u32 %v2759, %v2760
    %v2762 = vshll.u32 2102212464, %v2750
    %v2763 = vshrl.u32 920167782, %v2751
    %v2764 = vor.u32 %v2762, %v2763
    %v2765 = vshll.u32 920167782, %v2750
    %v2766 = vshrl.u32 1326507024, %v2751
    %v2767 = vor.u32 %v2765, %v2766
    %vm2768 = vcmp.lt.s32.totalorder %v2749, 1
    %vm2769 = vcmp.lt.s32.totalorder %v2749, 2
    %vm2770 = vcmp.lt.s32.totalorder %v2749, 3
    %vm2771 = vcmp.lt.s32.totalorder %v2749, 4
    %v2772 = vsel %vm2768, %v2752, %v2755
    %v2773 = vsel %vm2771, %v2761, 2102212464
    %v2774 = vsel %vm2770, %v2758, %v2773
    %v2775 = vsel %vm2769, %v2772, %v2774
    %v2776 = vsel %vm2768, %v2755, %v2758
    %v2777 = vsel %vm2771, %v2764, 920167782
    %v2778 = vsel %vm2770, %v2761, %v2777
    %v2779 = vsel %vm2769, %v2776, %v2778
    %v2780 = vsel %vm2768, %v2758, %v2761
    %v2781 = vsel %vm2771, %v2767, 1326507024
    %v2782 = vsel %vm2770, %v2764, %v2781
    %v2783 = vsel %vm2769, %v2780, %v2782
    %v2784 = vshll.u32 %v2744, 8
    %v2785 = vmul.u32.u64.compose %v2784, %v2783
    %v2786 = vextract.low.u32 %v2785
    %v2787 = vextract.high.u32 %v2785
    %v2788 = vmul.u32.u64.compose %v2784, %v2779
    %v2789 = vextract.low.u32 %v2788
    %v2790 = vextract.high.u32 %v2788
    %v2791 = vmul.u32 %v2784, %v2775
    %v2792 = vadd.s32 %v2787, %v2789
    %vm2793 = vc.u32 %v2787, %v2789
    %v2794 = vadd.s32 %v2790, 1
    %v2795 = vsel %vm2793, %v2794, %v2790
    %v2796 = vadd.s32 %v2791, %v2795
    %v2797 = vadd.s32 %v2796, 536870912
    %v2798 = vshrl.u32 %v2797, 30
    %v2799 = vshll.u32 %v2798, 30
    %v2800 = vsub.s32 %v2796, %v2799
    %vm2801 = vcmp.lt.s32.totalorder %v2800, 0
    %v2802 = vsub.s32 0, %v2800
    %v2803 = vsel %vm2801, %v2802, %v2800
    %v2804 = vclz %v2803
    %v2805 = vsub.s32 %v2804, 2
    %vm2806 = vcmp.gt.s32.totalorder 0, %v2805
    %v2807 = vsel %vm2806, 0, %v2805
    %v2808 = vsub.s32 32, %v2807
    %v2809 = vshll.u32 %v2800, %v2807
    %v2810 = vshrl.u32 %v2792, %v2808
    %v2811 = vor.u32 %v2809, %v2810
    %v2812 = vsub.s32 4294967266, %v2807
    %v2813 = vadd.s32 %v2812, 127
    %v2814 = vshll.u32 %v2813, 23
    %v2815 = vor.u32 4788187, %v2814
    %v2816 = vand.u32 2147483647, %v2815
    %v2818 = vcvt.s32.f32 %v2811
    %v2819 = vmul.f32 %v2818, %v2816
    %v2820 = vxor.u32 %v2819, 2147483648
    %v2821 = vsel %vm2738, %v2820, %v2819
    %v2822 = vsub.s32 4, %v2798
    %v2823 = vsel %vm2738, %v2822, %v2798
    %v2824 = vsel %vm2737, %v324, %v2821
    %v2825 = vsel %vm2737, 0, %v2823
    %v2826 = vcosq.f32.pop %v2824
    %v2827 = vsinq.f32.pop %v2824
    %vm2828 = vweird.f32 %v324
    %v2829 = vand.u32 %v2825, 3
    %vm2830 = vcmp.lt.s32.totalorder %v2829, 2
    %vm2831 = vcmp.eq.s32.totalorder %v2829, 0
    %v2832 = vxor.u32 %v2827, 2147483648
    %v2833 = vsel %vm2831, %v2826, %v2832
    %vm2834 = vcmp.eq.s32.totalorder %v2829, 2
    %v2835 = vxor.u32 %v2826, 2147483648
    %v2836 = vsel %vm2834, %v2835, %v2827
    %v2837 = vsel %vm2830, %v2833, %v2836
    %v2838 = vsel %vm2828, nan, %v2837
    %v2839 = vand.u32 2147483647, %v329
    %vm2840 = vcmp.le.f32.partialorder %v2839, 0.7853982
    %vm2841 = vcmp.lt.s32.totalorder %v329, 0
    %v2842 = vand.u32 %v329, 2139095040
    %v2843 = vshrl.u32 %v2842, 23
    %v2844 = vsub.s32 %v2843, 127
    %v2845 = vand.u32 2147483647, %v329
    %v2846 = vand.u32 %v2845, 8388607
    %v2847 = vor.u32 %v2846, 8388608
    %v2848 = vsub.s32 0, %v2847
    %v2849 = vadd.s32 %v2844, 1
    %vm2850 = vcmp.gt.s32.totalorder %v2849, 0
    %v2851 = vsel %vm2850, %v2849, 0
    %v2852 = vshrl.u32 %v2851, 5
    %v2853 = vand.u32 %v2851, 31
    %v2854 = vsub.s32 32, %v2853
    %v2855 = vshrl.u32 683565275, %v2854
    %v2856 = vshll.u32 683565275, %v2853
    %v2857 = vshrl.u32 2475754826, %v2854
    %v2858 = vor.u32 %v2856, %v2857
    %v2859 = vshll.u32 2475754826, %v2853
    %v2860 = vshrl.u32 2131351028, %v2854
    %v2861 = vor.u32 %v2859, %v2860
    %v2862 = vshll.u32 2131351028, %v2853
    %v2863 = vshrl.u32 2102212464, %v2854
    %v2864 = vor.u32 %v2862, %v2863
    %v2865 = vshll.u32 2102212464, %v2853
    %v2866 = vshrl.u32 920167782, %v2854
    %v2867 = vor.u32 %v2865, %v2866
    %v2868 = vshll.u32 920167782, %v2853
    %v2869 = vshrl.u32 1326507024, %v2854
    %v2870 = vor.u32 %v2868, %v2869
    %vm2871 = vcmp.lt.s32.totalorder %v2852, 1
    %vm2872 = vcmp.lt.s32.totalorder %v2852, 2
    %vm2873 = vcmp.lt.s32.totalorder %v2852, 3
    %vm2874 = vcmp.lt.s32.totalorder %v2852, 4
    %v2875 = vsel %vm2871, %v2855, %v2858
    %v2876 = vsel %vm2874, %v2864, 2102212464
    %v2877 = vsel %vm2873, %v2861, %v2876
    %v2878 = vsel %vm2872, %v2875, %v2877
    %v2879 = vsel %vm2871, %v2858, %v2861
    %v2880 = vsel %vm2874, %v2867, 920167782
    %v2881 = vsel %vm2873, %v2864, %v2880
    %v2882 = vsel %vm2872, %v2879, %v2881
    %v2883 = vsel %vm2871, %v2861, %v2864
    %v2884 = vsel %vm2874, %v2870, 1326507024
    %v2885 = vsel %vm2873, %v2867, %v2884
    %v2886 = vsel %vm2872, %v2883, %v2885
    %v2887 = vshll.u32 %v2847, 8
    %v2888 = vmul.u32.u64.compose %v2887, %v2886
    %v2889 = vextract.low.u32 %v2888
    %v2890 = vextract.high.u32 %v2888
    %v2891 = vmul.u32.u64.compose %v2887, %v2882
    %v2892 = vextract.low.u32 %v2891
    %v2893 = vextract.high.u32 %v2891
    %v2894 = vmul.u32 %v2887, %v2878
    %v2895 = vadd.s32 %v2890, %v2892
    %vm2896 = vc.u32 %v2890, %v2892
    %v2897 = vadd.s32 %v2893, 1
    %v2898 = vsel %vm2896, %v2897, %v2893
    %v2899 = vadd.s32 %v2894, %v2898
    %v2900 = vadd.s32 %v2899, 536870912
    %v2901 = vshrl.u32 %v2900, 30
    %v2902 = vshll.u32 %v2901, 30
    %v2903 = vsub.s32 %v2899, %v2902
    %vm2904 = vcmp.lt.s32.totalorder %v2903, 0
    %v2905 = vsub.s32 0, %v2903
    %v2906 = vsel %vm2904, %v2905, %v2903
    %v2907 = vclz %v2906
    %v2908 = vsub.s32 %v2907, 2
    %vm2909 = vcmp.gt.s32.totalorder 0, %v2908
    %v2910 = vsel %vm2909, 0, %v2908
    %v2911 = vsub.s32 32, %v2910
    %v2912 = vshll.u32 %v2903, %v2910
    %v2913 = vshrl.u32 %v2895, %v2911
    %v2914 = vor.u32 %v2912, %v2913
    %v2915 = vsub.s32 4294967266, %v2910
    %v2916 = vadd.s32 %v2915, 127
    %v2917 = vshll.u32 %v2916, 23
    %v2918 = vor.u32 4788187, %v2917
    %v2919 = vand.u32 2147483647, %v2918
    %v2921 = vcvt.s32.f32 %v2914
    %v2922 = vmul.f32 %v2921, %v2919
    %v2923 = vxor.u32 %v2922, 2147483648
    %v2924 = vsel %vm2841, %v2923, %v2922
    %v2925 = vsub.s32 4, %v2901
    %v2926 = vsel %vm2841, %v2925, %v2901
    %v2927 = vsel %vm2840, %v329, %v2924
    %v2928 = vsel %vm2840, 0, %v2926
    %v2929 = vcosq.f32.pop %v2927
    %v2930 = vsinq.f32.pop %v2927
    %vm2931 = vweird.f32 %v329
    %v2932 = vand.u32 %v2928, 3
    %vm2933 = vcmp.lt.s32.totalorder %v2932, 2
    %vm2934 = vcmp.eq.s32.totalorder %v2932, 0
    %v2935 = vxor.u32 %v2930, 2147483648
    %v2936 = vsel %vm2934, %v2929, %v2935
    %vm2937 = vcmp.eq.s32.totalorder %v2932, 2
    %v2938 = vxor.u32 %v2929, 2147483648
    %v2939 = vsel %vm2937, %v2938, %v2930
    %v2940 = vsel %vm2933, %v2936, %v2939
    %v2941 = vsel %vm2931, nan, %v2940
    %v2942 = vand.u32 2147483647, %v334
    %vm2943 = vcmp.le.f32.partialorder %v2942, 0.7853982
    %vm2944 = vcmp.lt.s32.totalorder %v334, 0
    %v2945 = vand.u32 %v334, 2139095040
    %v2946 = vshrl.u32 %v2945, 23
    %v2947 = vsub.s32 %v2946, 127
    %v2948 = vand.u32 2147483647, %v334
    %v2949 = vand.u32 %v2948, 8388607
    %v2950 = vor.u32 %v2949, 8388608
    %v2951 = vsub.s32 0, %v2950
    %v2952 = vadd.s32 %v2947, 1
    %vm2953 = vcmp.gt.s32.totalorder %v2952, 0
    %v2954 = vsel %vm2953, %v2952, 0
    %v2955 = vshrl.u32 %v2954, 5
    %v2956 = vand.u32 %v2954, 31
    %v2957 = vsub.s32 32, %v2956
    %v2958 = vshrl.u32 683565275, %v2957
    %v2959 = vshll.u32 683565275, %v2956
    %v2960 = vshrl.u32 2475754826, %v2957
    %v2961 = vor.u32 %v2959, %v2960
    %v2962 = vshll.u32 2475754826, %v2956
    %v2963 = vshrl.u32 2131351028, %v2957
    %v2964 = vor.u32 %v2962, %v2963
    %v2965 = vshll.u32 2131351028, %v2956
    %v2966 = vshrl.u32 2102212464, %v2957
    %v2967 = vor.u32 %v2965, %v2966
    %v2968 = vshll.u32 2102212464, %v2956
    %v2969 = vshrl.u32 920167782, %v2957
    %v2970 = vor.u32 %v2968, %v2969
    %v2971 = vshll.u32 920167782, %v2956
    %v2972 = vshrl.u32 1326507024, %v2957
    %v2973 = vor.u32 %v2971, %v2972
    %vm2974 = vcmp.lt.s32.totalorder %v2955, 1
    %vm2975 = vcmp.lt.s32.totalorder %v2955, 2
    %vm2976 = vcmp.lt.s32.totalorder %v2955, 3
    %vm2977 = vcmp.lt.s32.totalorder %v2955, 4
    %v2978 = vsel %vm2974, %v2958, %v2961
    %v2979 = vsel %vm2977, %v2967, 2102212464
    %v2980 = vsel %vm2976, %v2964, %v2979
    %v2981 = vsel %vm2975, %v2978, %v2980
    %v2982 = vsel %vm2974, %v2961, %v2964
    %v2983 = vsel %vm2977, %v2970, 920167782
    %v2984 = vsel %vm2976, %v2967, %v2983
    %v2985 = vsel %vm2975, %v2982, %v2984
    %v2986 = vsel %vm2974, %v2964, %v2967
    %v2987 = vsel %vm2977, %v2973, 1326507024
    %v2988 = vsel %vm2976, %v2970, %v2987
    %v2989 = vsel %vm2975, %v2986, %v2988
    %v2990 = vshll.u32 %v2950, 8
    %v2991 = vmul.u32.u64.compose %v2990, %v2989
    %v2992 = vextract.low.u32 %v2991
    %v2993 = vextract.high.u32 %v2991
    %v2994 = vmul.u32.u64.compose %v2990, %v2985
    %v2995 = vextract.low.u32 %v2994
    %v2996 = vextract.high.u32 %v2994
    %v2997 = vmul.u32 %v2990, %v2981
    %v2998 = vadd.s32 %v2993, %v2995
    %vm2999 = vc.u32 %v2993, %v2995
    %v3000 = vadd.s32 %v2996, 1
    %v3001 = vsel %vm2999, %v3000, %v2996
    %v3002 = vadd.s32 %v2997, %v3001
    %v3003 = vadd.s32 %v3002, 536870912
    %v3004 = vshrl.u32 %v3003, 30
    %v3005 = vshll.u32 %v3004, 30
    %v3006 = vsub.s32 %v3002, %v3005
    %vm3007 = vcmp.lt.s32.totalorder %v3006, 0
    %v3008 = vsub.s32 0, %v3006
    %v3009 = vsel %vm3007, %v3008, %v3006
    %v3010 = vclz %v3009
    %v3011 = vsub.s32 %v3010, 2
    %vm3012 = vcmp.gt.s32.totalorder 0, %v3011
    %v3013 = vsel %vm3012, 0, %v3011
    %v3014 = vsub.s32 32, %v3013
    %v3015 = vshll.u32 %v3006, %v3013
    %v3016 = vshrl.u32 %v2998, %v3014
    %v3017 = vor.u32 %v3015, %v3016
    %v3018 = vsub.s32 4294967266, %v3013
    %v3019 = vadd.s32 %v3018, 127
    %v3020 = vshll.u32 %v3019, 23
    %v3021 = vor.u32 4788187, %v3020
    %v3022 = vand.u32 2147483647, %v3021
    %v3024 = vcvt.s32.f32 %v3017
    %v3025 = vmul.f32 %v3024, %v3022
    %v3026 = vxor.u32 %v3025, 2147483648
    %v3027 = vsel %vm2944, %v3026, %v3025
    %v3028 = vsub.s32 4, %v3004
    %v3029 = vsel %vm2944, %v3028, %v3004
    %v3030 = vsel %vm2943, %v334, %v3027
    %v3031 = vsel %vm2943, 0, %v3029
    %v3032 = vcosq.f32.pop %v3030
    %v3033 = vsinq.f32.pop %v3030
    %vm3034 = vweird.f32 %v334
    %v3035 = vand.u32 %v3031, 3
    %vm3036 = vcmp.lt.s32.totalorder %v3035, 2
    %vm3037 = vcmp.eq.s32.totalorder %v3035, 0
    %v3038 = vxor.u32 %v3033, 2147483648
    %v3039 = vsel %vm3037, %v3032, %v3038
    %vm3040 = vcmp.eq.s32.totalorder %v3035, 2
    %v3041 = vxor.u32 %v3032, 2147483648
    %v3042 = vsel %vm3040, %v3041, %v3033
    %v3043 = vsel %vm3036, %v3039, %v3042
    %v3044 = vsel %vm3034, nan, %v3043
    %v3045 = vand.u32 2147483647, %v339
    %vm3046 = vcmp.le.f32.partialorder %v3045, 0.7853982
    %vm3047 = vcmp.lt.s32.totalorder %v339, 0
    %v3048 = vand.u32 %v339, 2139095040
    %v3049 = vshrl.u32 %v3048, 23
    %v3050 = vsub.s32 %v3049, 127
    %v3051 = vand.u32 2147483647, %v339
    %v3052 = vand.u32 %v3051, 8388607
    %v3053 = vor.u32 %v3052, 8388608
    %v3054 = vsub.s32 0, %v3053
    %v3055 = vadd.s32 %v3050, 1
    %vm3056 = vcmp.gt.s32.totalorder %v3055, 0
    %v3057 = vsel %vm3056, %v3055, 0
    %v3058 = vshrl.u32 %v3057, 5
    %v3059 = vand.u32 %v3057, 31
    %v3060 = vsub.s32 32, %v3059
    %v3061 = vshrl.u32 683565275, %v3060
    %v3062 = vshll.u32 683565275, %v3059
    %v3063 = vshrl.u32 2475754826, %v3060
    %v3064 = vor.u32 %v3062, %v3063
    %v3065 = vshll.u32 2475754826, %v3059
    %v3066 = vshrl.u32 2131351028, %v3060
    %v3067 = vor.u32 %v3065, %v3066
    %v3068 = vshll.u32 2131351028, %v3059
    %v3069 = vshrl.u32 2102212464, %v3060
    %v3070 = vor.u32 %v3068, %v3069
    %v3071 = vshll.u32 2102212464, %v3059
    %v3072 = vshrl.u32 920167782, %v3060
    %v3073 = vor.u32 %v3071, %v3072
    %v3074 = vshll.u32 920167782, %v3059
    %v3075 = vshrl.u32 1326507024, %v3060
    %v3076 = vor.u32 %v3074, %v3075
    %vm3077 = vcmp.lt.s32.totalorder %v3058, 1
    %vm3078 = vcmp.lt.s32.totalorder %v3058, 2
    %vm3079 = vcmp.lt.s32.totalorder %v3058, 3
    %vm3080 = vcmp.lt.s32.totalorder %v3058, 4
    %v3081 = vsel %vm3077, %v3061, %v3064
    %v3082 = vsel %vm3080, %v3070, 2102212464
    %v3083 = vsel %vm3079, %v3067, %v3082
    %v3084 = vsel %vm3078, %v3081, %v3083
    %v3085 = vsel %vm3077, %v3064, %v3067
    %v3086 = vsel %vm3080, %v3073, 920167782
    %v3087 = vsel %vm3079, %v3070, %v3086
    %v3088 = vsel %vm3078, %v3085, %v3087
    %v3089 = vsel %vm3077, %v3067, %v3070
    %v3090 = vsel %vm3080, %v3076, 1326507024
    %v3091 = vsel %vm3079, %v3073, %v3090
    %v3092 = vsel %vm3078, %v3089, %v3091
    %v3093 = vshll.u32 %v3053, 8
    %v3094 = vmul.u32.u64.compose %v3093, %v3092
    %v3095 = vextract.low.u32 %v3094
    %v3096 = vextract.high.u32 %v3094
    %v3097 = vmul.u32.u64.compose %v3093, %v3088
    %v3098 = vextract.low.u32 %v3097
    %v3099 = vextract.high.u32 %v3097
    %v3100 = vmul.u32 %v3093, %v3084
    %v3101 = vadd.s32 %v3096, %v3098
    %vm3102 = vc.u32 %v3096, %v3098
    %v3103 = vadd.s32 %v3099, 1
    %v3104 = vsel %vm3102, %v3103, %v3099
    %v3105 = vadd.s32 %v3100, %v3104
    %v3106 = vadd.s32 %v3105, 536870912
    %v3107 = vshrl.u32 %v3106, 30
    %v3108 = vshll.u32 %v3107, 30
    %v3109 = vsub.s32 %v3105, %v3108
    %vm3110 = vcmp.lt.s32.totalorder %v3109, 0
    %v3111 = vsub.s32 0, %v3109
    %v3112 = vsel %vm3110, %v3111, %v3109
    %v3113 = vclz %v3112
    %v3114 = vsub.s32 %v3113, 2
    %vm3115 = vcmp.gt.s32.totalorder 0, %v3114
    %v3116 = vsel %vm3115, 0, %v3114
    %v3117 = vsub.s32 32, %v3116
    %v3118 = vshll.u32 %v3109, %v3116
    %v3119 = vshrl.u32 %v3101, %v3117
    %v3120 = vor.u32 %v3118, %v3119
    %v3121 = vsub.s32 4294967266, %v3116
    %v3122 = vadd.s32 %v3121, 127
    %v3123 = vshll.u32 %v3122, 23
    %v3124 = vor.u32 4788187, %v3123
    %v3125 = vand.u32 2147483647, %v3124
    %v3127 = vcvt.s32.f32 %v3120
    %v3128 = vmul.f32 %v3127, %v3125
    %v3129 = vxor.u32 %v3128, 2147483648
    %v3130 = vsel %vm3047, %v3129, %v3128
    %v3131 = vsub.s32 4, %v3107
    %v3132 = vsel %vm3047, %v3131, %v3107
    %v3133 = vsel %vm3046, %v339, %v3130
    %v3134 = vsel %vm3046, 0, %v3132
    %v3135 = vcosq.f32.pop %v3133
    %v3136 = vsinq.f32.pop %v3133
    %vm3137 = vweird.f32 %v339
    %v3138 = vand.u32 %v3134, 3
    %vm3139 = vcmp.lt.s32.totalorder %v3138, 2
    %vm3140 = vcmp.eq.s32.totalorder %v3138, 0
    %v3141 = vxor.u32 %v3136, 2147483648
    %v3142 = vsel %vm3140, %v3135, %v3141
    %vm3143 = vcmp.eq.s32.totalorder %v3138, 2
    %v3144 = vxor.u32 %v3135, 2147483648
    %v3145 = vsel %vm3143, %v3144, %v3136
    %v3146 = vsel %vm3139, %v3142, %v3145
    %v3147 = vsel %vm3137, nan, %v3146
    %v3148 = vand.u32 2147483647, %v344
    %vm3149 = vcmp.le.f32.partialorder %v3148, 0.7853982
    %vm3150 = vcmp.lt.s32.totalorder %v344, 0
    %v3151 = vand.u32 %v344, 2139095040
    %v3152 = vshrl.u32 %v3151, 23
    %v3153 = vsub.s32 %v3152, 127
    %v3154 = vand.u32 2147483647, %v344
    %v3155 = vand.u32 %v3154, 8388607
    %v3156 = vor.u32 %v3155, 8388608
    %v3157 = vsub.s32 0, %v3156
    %v3158 = vadd.s32 %v3153, 1
    %vm3159 = vcmp.gt.s32.totalorder %v3158, 0
    %v3160 = vsel %vm3159, %v3158, 0
    %v3161 = vshrl.u32 %v3160, 5
    %v3162 = vand.u32 %v3160, 31
    %v3163 = vsub.s32 32, %v3162
    %v3164 = vshrl.u32 683565275, %v3163
    %v3165 = vshll.u32 683565275, %v3162
    %v3166 = vshrl.u32 2475754826, %v3163
    %v3167 = vor.u32 %v3165, %v3166
    %v3168 = vshll.u32 2475754826, %v3162
    %v3169 = vshrl.u32 2131351028, %v3163
    %v3170 = vor.u32 %v3168, %v3169
    %v3171 = vshll.u32 2131351028, %v3162
    %v3172 = vshrl.u32 2102212464, %v3163
    %v3173 = vor.u32 %v3171, %v3172
    %v3174 = vshll.u32 2102212464, %v3162
    %v3175 = vshrl.u32 920167782, %v3163
    %v3176 = vor.u32 %v3174, %v3175
    %v3177 = vshll.u32 920167782, %v3162
    %v3178 = vshrl.u32 1326507024, %v3163
    %v3179 = vor.u32 %v3177, %v3178
    %vm3180 = vcmp.lt.s32.totalorder %v3161, 1
    %vm3181 = vcmp.lt.s32.totalorder %v3161, 2
    %vm3182 = vcmp.lt.s32.totalorder %v3161, 3
    %vm3183 = vcmp.lt.s32.totalorder %v3161, 4
    %v3184 = vsel %vm3180, %v3164, %v3167
    %v3185 = vsel %vm3183, %v3173, 2102212464
    %v3186 = vsel %vm3182, %v3170, %v3185
    %v3187 = vsel %vm3181, %v3184, %v3186
    %v3188 = vsel %vm3180, %v3167, %v3170
    %v3189 = vsel %vm3183, %v3176, 920167782
    %v3190 = vsel %vm3182, %v3173, %v3189
    %v3191 = vsel %vm3181, %v3188, %v3190
    %v3192 = vsel %vm3180, %v3170, %v3173
    %v3193 = vsel %vm3183, %v3179, 1326507024
    %v3194 = vsel %vm3182, %v3176, %v3193
    %v3195 = vsel %vm3181, %v3192, %v3194
    %v3196 = vshll.u32 %v3156, 8
    %v3197 = vmul.u32.u64.compose %v3196, %v3195
    %v3198 = vextract.low.u32 %v3197
    %v3199 = vextract.high.u32 %v3197
    %v3200 = vmul.u32.u64.compose %v3196, %v3191
    %v3201 = vextract.low.u32 %v3200
    %v3202 = vextract.high.u32 %v3200
    %v3203 = vmul.u32 %v3196, %v3187
    %v3204 = vadd.s32 %v3199, %v3201
    %vm3205 = vc.u32 %v3199, %v3201
    %v3206 = vadd.s32 %v3202, 1
    %v3207 = vsel %vm3205, %v3206, %v3202
    %v3208 = vadd.s32 %v3203, %v3207
    %v3209 = vadd.s32 %v3208, 536870912
    %v3210 = vshrl.u32 %v3209, 30
    %v3211 = vshll.u32 %v3210, 30
    %v3212 = vsub.s32 %v3208, %v3211
    %vm3213 = vcmp.lt.s32.totalorder %v3212, 0
    %v3214 = vsub.s32 0, %v3212
    %v3215 = vsel %vm3213, %v3214, %v3212
    %v3216 = vclz %v3215
    %v3217 = vsub.s32 %v3216, 2
    %vm3218 = vcmp.gt.s32.totalorder 0, %v3217
    %v3219 = vsel %vm3218, 0, %v3217
    %v3220 = vsub.s32 32, %v3219
    %v3221 = vshll.u32 %v3212, %v3219
    %v3222 = vshrl.u32 %v3204, %v3220
    %v3223 = vor.u32 %v3221, %v3222
    %v3224 = vsub.s32 4294967266, %v3219
    %v3225 = vadd.s32 %v3224, 127
    %v3226 = vshll.u32 %v3225, 23
    %v3227 = vor.u32 4788187, %v3226
    %v3228 = vand.u32 2147483647, %v3227
    %v3230 = vcvt.s32.f32 %v3223
    %v3231 = vmul.f32 %v3230, %v3228
    %v3232 = vxor.u32 %v3231, 2147483648
    %v3233 = vsel %vm3150, %v3232, %v3231
    %v3234 = vsub.s32 4, %v3210
    %v3235 = vsel %vm3150, %v3234, %v3210
    %v3236 = vsel %vm3149, %v344, %v3233
    %v3237 = vsel %vm3149, 0, %v3235
    %v3238 = vcosq.f32.pop %v3236
    %v3239 = vsinq.f32.pop %v3236
    %vm3240 = vweird.f32 %v344
    %v3241 = vand.u32 %v3237, 3
    %vm3242 = vcmp.lt.s32.totalorder %v3241, 2
    %vm3243 = vcmp.eq.s32.totalorder %v3241, 0
    %v3244 = vxor.u32 %v3239, 2147483648
    %v3245 = vsel %vm3243, %v3238, %v3244
    %vm3246 = vcmp.eq.s32.totalorder %v3241, 2
    %v3247 = vxor.u32 %v3238, 2147483648
    %v3248 = vsel %vm3246, %v3247, %v3239
    %v3249 = vsel %vm3242, %v3245, %v3248
    %v3250 = vsel %vm3240, nan, %v3249
    %v3251 = vand.u32 2147483647, %v349
    %vm3252 = vcmp.le.f32.partialorder %v3251, 0.7853982
    %vm3253 = vcmp.lt.s32.totalorder %v349, 0
    %v3254 = vand.u32 %v349, 2139095040
    %v3255 = vshrl.u32 %v3254, 23
    %v3256 = vsub.s32 %v3255, 127
    %v3257 = vand.u32 2147483647, %v349
    %v3258 = vand.u32 %v3257, 8388607
    %v3259 = vor.u32 %v3258, 8388608
    %v3260 = vsub.s32 0, %v3259
    %v3261 = vadd.s32 %v3256, 1
    %vm3262 = vcmp.gt.s32.totalorder %v3261, 0
    %v3263 = vsel %vm3262, %v3261, 0
    %v3264 = vshrl.u32 %v3263, 5
    %v3265 = vand.u32 %v3263, 31
    %v3266 = vsub.s32 32, %v3265
    %v3267 = vshrl.u32 683565275, %v3266
    %v3268 = vshll.u32 683565275, %v3265
    %v3269 = vshrl.u32 2475754826, %v3266
    %v3270 = vor.u32 %v3268, %v3269
    %v3271 = vshll.u32 2475754826, %v3265
    %v3272 = vshrl.u32 2131351028, %v3266
    %v3273 = vor.u32 %v3271, %v3272
    %v3274 = vshll.u32 2131351028, %v3265
    %v3275 = vshrl.u32 2102212464, %v3266
    %v3276 = vor.u32 %v3274, %v3275
    %v3277 = vshll.u32 2102212464, %v3265
    %v3278 = vshrl.u32 920167782, %v3266
    %v3279 = vor.u32 %v3277, %v3278
    %v3280 = vshll.u32 920167782, %v3265
    %v3281 = vshrl.u32 1326507024, %v3266
    %v3282 = vor.u32 %v3280, %v3281
    %vm3283 = vcmp.lt.s32.totalorder %v3264, 1
    %vm3284 = vcmp.lt.s32.totalorder %v3264, 2
    %vm3285 = vcmp.lt.s32.totalorder %v3264, 3
    %vm3286 = vcmp.lt.s32.totalorder %v3264, 4
    %v3287 = vsel %vm3283, %v3267, %v3270
    %v3288 = vsel %vm3286, %v3276, 2102212464
    %v3289 = vsel %vm3285, %v3273, %v3288
    %v3290 = vsel %vm3284, %v3287, %v3289
    %v3291 = vsel %vm3283, %v3270, %v3273
    %v3292 = vsel %vm3286, %v3279, 920167782
    %v3293 = vsel %vm3285, %v3276, %v3292
    %v3294 = vsel %vm3284, %v3291, %v3293
    %v3295 = vsel %vm3283, %v3273, %v3276
    %v3296 = vsel %vm3286, %v3282, 1326507024
    %v3297 = vsel %vm3285, %v3279, %v3296
    %v3298 = vsel %vm3284, %v3295, %v3297
    %v3299 = vshll.u32 %v3259, 8
    %v3300 = vmul.u32.u64.compose %v3299, %v3298
    %v3301 = vextract.low.u32 %v3300
    %v3302 = vextract.high.u32 %v3300
    %v3303 = vmul.u32.u64.compose %v3299, %v3294
    %v3304 = vextract.low.u32 %v3303
    %v3305 = vextract.high.u32 %v3303
    %v3306 = vmul.u32 %v3299, %v3290
    %v3307 = vadd.s32 %v3302, %v3304
    %vm3308 = vc.u32 %v3302, %v3304
    %v3309 = vadd.s32 %v3305, 1
    %v3310 = vsel %vm3308, %v3309, %v3305
    %v3311 = vadd.s32 %v3306, %v3310
    %v3312 = vadd.s32 %v3311, 536870912
    %v3313 = vshrl.u32 %v3312, 30
    %v3314 = vshll.u32 %v3313, 30
    %v3315 = vsub.s32 %v3311, %v3314
    %vm3316 = vcmp.lt.s32.totalorder %v3315, 0
    %v3317 = vsub.s32 0, %v3315
    %v3318 = vsel %vm3316, %v3317, %v3315
    %v3319 = vclz %v3318
    %v3320 = vsub.s32 %v3319, 2
    %vm3321 = vcmp.gt.s32.totalorder 0, %v3320
    %v3322 = vsel %vm3321, 0, %v3320
    %v3323 = vsub.s32 32, %v3322
    %v3324 = vshll.u32 %v3315, %v3322
    %v3325 = vshrl.u32 %v3307, %v3323
    %v3326 = vor.u32 %v3324, %v3325
    %v3327 = vsub.s32 4294967266, %v3322
    %v3328 = vadd.s32 %v3327, 127
    %v3329 = vshll.u32 %v3328, 23
    %v3330 = vor.u32 4788187, %v3329
    %v3331 = vand.u32 2147483647, %v3330
    %v3333 = vcvt.s32.f32 %v3326
    %v3334 = vmul.f32 %v3333, %v3331
    %v3335 = vxor.u32 %v3334, 2147483648
    %v3336 = vsel %vm3253, %v3335, %v3334
    %v3337 = vsub.s32 4, %v3313
    %v3338 = vsel %vm3253, %v3337, %v3313
    %v3339 = vsel %vm3252, %v349, %v3336
    %v3340 = vsel %vm3252, 0, %v3338
    %v3341 = vcosq.f32.pop %v3339
    %v3342 = vsinq.f32.pop %v3339
    %vm3343 = vweird.f32 %v349
    %v3344 = vand.u32 %v3340, 3
    %vm3345 = vcmp.lt.s32.totalorder %v3344, 2
    %vm3346 = vcmp.eq.s32.totalorder %v3344, 0
    %v3347 = vxor.u32 %v3342, 2147483648
    %v3348 = vsel %vm3346, %v3341, %v3347
    %vm3349 = vcmp.eq.s32.totalorder %v3344, 2
    %v3350 = vxor.u32 %v3341, 2147483648
    %v3351 = vsel %vm3349, %v3350, %v3342
    %v3352 = vsel %vm3345, %v3348, %v3351
    %v3353 = vsel %vm3343, nan, %v3352
    %v3354 = vand.u32 2147483647, %v354
    %vm3355 = vcmp.le.f32.partialorder %v3354, 0.7853982
    %vm3356 = vcmp.lt.s32.totalorder %v354, 0
    %v3357 = vand.u32 %v354, 2139095040
    %v3358 = vshrl.u32 %v3357, 23
    %v3359 = vsub.s32 %v3358, 127
    %v3360 = vand.u32 2147483647, %v354
    %v3361 = vand.u32 %v3360, 8388607
    %v3362 = vor.u32 %v3361, 8388608
    %v3363 = vsub.s32 0, %v3362
    %v3364 = vadd.s32 %v3359, 1
    %vm3365 = vcmp.gt.s32.totalorder %v3364, 0
    %v3366 = vsel %vm3365, %v3364, 0
    %v3367 = vshrl.u32 %v3366, 5
    %v3368 = vand.u32 %v3366, 31
    %v3369 = vsub.s32 32, %v3368
    %v3370 = vshrl.u32 683565275, %v3369
    %v3371 = vshll.u32 683565275, %v3368
    %v3372 = vshrl.u32 2475754826, %v3369
    %v3373 = vor.u32 %v3371, %v3372
    %v3374 = vshll.u32 2475754826, %v3368
    %v3375 = vshrl.u32 2131351028, %v3369
    %v3376 = vor.u32 %v3374, %v3375
    %v3377 = vshll.u32 2131351028, %v3368
    %v3378 = vshrl.u32 2102212464, %v3369
    %v3379 = vor.u32 %v3377, %v3378
    %v3380 = vshll.u32 2102212464, %v3368
    %v3381 = vshrl.u32 920167782, %v3369
    %v3382 = vor.u32 %v3380, %v3381
    %v3383 = vshll.u32 920167782, %v3368
    %v3384 = vshrl.u32 1326507024, %v3369
    %v3385 = vor.u32 %v3383, %v3384
    %vm3386 = vcmp.lt.s32.totalorder %v3367, 1
    %vm3387 = vcmp.lt.s32.totalorder %v3367, 2
    %vm3388 = vcmp.lt.s32.totalorder %v3367, 3
    %vm3389 = vcmp.lt.s32.totalorder %v3367, 4
    %v3390 = vsel %vm3386, %v3370, %v3373
    %v3391 = vsel %vm3389, %v3379, 2102212464
    %v3392 = vsel %vm3388, %v3376, %v3391
    %v3393 = vsel %vm3387, %v3390, %v3392
    %v3394 = vsel %vm3386, %v3373, %v3376
    %v3395 = vsel %vm3389, %v3382, 920167782
    %v3396 = vsel %vm3388, %v3379, %v3395
    %v3397 = vsel %vm3387, %v3394, %v3396
    %v3398 = vsel %vm3386, %v3376, %v3379
    %v3399 = vsel %vm3389, %v3385, 1326507024
    %v3400 = vsel %vm3388, %v3382, %v3399
    %v3401 = vsel %vm3387, %v3398, %v3400
    %v3402 = vshll.u32 %v3362, 8
    %v3403 = vmul.u32.u64.compose %v3402, %v3401
    %v3404 = vextract.low.u32 %v3403
    %v3405 = vextract.high.u32 %v3403
    %v3406 = vmul.u32.u64.compose %v3402, %v3397
    %v3407 = vextract.low.u32 %v3406
    %v3408 = vextract.high.u32 %v3406
    %v3409 = vmul.u32 %v3402, %v3393
    %v3410 = vadd.s32 %v3405, %v3407
    %vm3411 = vc.u32 %v3405, %v3407
    %v3412 = vadd.s32 %v3408, 1
    %v3413 = vsel %vm3411, %v3412, %v3408
    %v3414 = vadd.s32 %v3409, %v3413
    %v3415 = vadd.s32 %v3414, 536870912
    %v3416 = vshrl.u32 %v3415, 30
    %v3417 = vshll.u32 %v3416, 30
    %v3418 = vsub.s32 %v3414, %v3417
    %vm3419 = vcmp.lt.s32.totalorder %v3418, 0
    %v3420 = vsub.s32 0, %v3418
    %v3421 = vsel %vm3419, %v3420, %v3418
    %v3422 = vclz %v3421
    %v3423 = vsub.s32 %v3422, 2
    %vm3424 = vcmp.gt.s32.totalorder 0, %v3423
    %v3425 = vsel %vm3424, 0, %v3423
    %v3426 = vsub.s32 32, %v3425
    %v3427 = vshll.u32 %v3418, %v3425
    %v3428 = vshrl.u32 %v3410, %v3426
    %v3429 = vor.u32 %v3427, %v3428
    %v3430 = vsub.s32 4294967266, %v3425
    %v3431 = vadd.s32 %v3430, 127
    %v3432 = vshll.u32 %v3431, 23
    %v3433 = vor.u32 4788187, %v3432
    %v3434 = vand.u32 2147483647, %v3433
    %v3436 = vcvt.s32.f32 %v3429
    %v3437 = vmul.f32 %v3436, %v3434
    %v3438 = vxor.u32 %v3437, 2147483648
    %v3439 = vsel %vm3356, %v3438, %v3437
    %v3440 = vsub.s32 4, %v3416
    %v3441 = vsel %vm3356, %v3440, %v3416
    %v3442 = vsel %vm3355, %v354, %v3439
    %v3443 = vsel %vm3355, 0, %v3441
    %v3444 = vcosq.f32.pop %v3442
    %v3445 = vsinq.f32.pop %v3442
    %vm3446 = vweird.f32 %v354
    %v3447 = vand.u32 %v3443, 3
    %vm3448 = vcmp.lt.s32.totalorder %v3447, 2
    %vm3449 = vcmp.eq.s32.totalorder %v3447, 0
    %v3450 = vxor.u32 %v3445, 2147483648
    %v3451 = vsel %vm3449, %v3444, %v3450
    %vm3452 = vcmp.eq.s32.totalorder %v3447, 2
    %v3453 = vxor.u32 %v3444, 2147483648
    %v3454 = vsel %vm3452, %v3453, %v3445
    %v3455 = vsel %vm3448, %v3451, %v3454
    %v3456 = vsel %vm3446, nan, %v3455
    %v3457 = vand.u32 2147483647, %v359
    %vm3458 = vcmp.le.f32.partialorder %v3457, 0.7853982
    %vm3459 = vcmp.lt.s32.totalorder %v359, 0
    %v3460 = vand.u32 %v359, 2139095040
    %v3461 = vshrl.u32 %v3460, 23
    %v3462 = vsub.s32 %v3461, 127
    %v3463 = vand.u32 2147483647, %v359
    %v3464 = vand.u32 %v3463, 8388607
    %v3465 = vor.u32 %v3464, 8388608
    %v3466 = vsub.s32 0, %v3465
    %v3467 = vadd.s32 %v3462, 1
    %vm3468 = vcmp.gt.s32.totalorder %v3467, 0
    %v3469 = vsel %vm3468, %v3467, 0
    %v3470 = vshrl.u32 %v3469, 5
    %v3471 = vand.u32 %v3469, 31
    %v3472 = vsub.s32 32, %v3471
    %v3473 = vshrl.u32 683565275, %v3472
    %v3474 = vshll.u32 683565275, %v3471
    %v3475 = vshrl.u32 2475754826, %v3472
    %v3476 = vor.u32 %v3474, %v3475
    %v3477 = vshll.u32 2475754826, %v3471
    %v3478 = vshrl.u32 2131351028, %v3472
    %v3479 = vor.u32 %v3477, %v3478
    %v3480 = vshll.u32 2131351028, %v3471
    %v3481 = vshrl.u32 2102212464, %v3472
    %v3482 = vor.u32 %v3480, %v3481
    %v3483 = vshll.u32 2102212464, %v3471
    %v3484 = vshrl.u32 920167782, %v3472
    %v3485 = vor.u32 %v3483, %v3484
    %v3486 = vshll.u32 920167782, %v3471
    %v3487 = vshrl.u32 1326507024, %v3472
    %v3488 = vor.u32 %v3486, %v3487
    %vm3489 = vcmp.lt.s32.totalorder %v3470, 1
    %vm3490 = vcmp.lt.s32.totalorder %v3470, 2
    %vm3491 = vcmp.lt.s32.totalorder %v3470, 3
    %vm3492 = vcmp.lt.s32.totalorder %v3470, 4
    %v3493 = vsel %vm3489, %v3473, %v3476
    %v3494 = vsel %vm3492, %v3482, 2102212464
    %v3495 = vsel %vm3491, %v3479, %v3494
    %v3496 = vsel %vm3490, %v3493, %v3495
    %v3497 = vsel %vm3489, %v3476, %v3479
    %v3498 = vsel %vm3492, %v3485, 920167782
    %v3499 = vsel %vm3491, %v3482, %v3498
    %v3500 = vsel %vm3490, %v3497, %v3499
    %v3501 = vsel %vm3489, %v3479, %v3482
    %v3502 = vsel %vm3492, %v3488, 1326507024
    %v3503 = vsel %vm3491, %v3485, %v3502
    %v3504 = vsel %vm3490, %v3501, %v3503
    %v3505 = vshll.u32 %v3465, 8
    %v3506 = vmul.u32.u64.compose %v3505, %v3504
    %v3507 = vextract.low.u32 %v3506
    %v3508 = vextract.high.u32 %v3506
    %v3509 = vmul.u32.u64.compose %v3505, %v3500
    %v3510 = vextract.low.u32 %v3509
    %v3511 = vextract.high.u32 %v3509
    %v3512 = vmul.u32 %v3505, %v3496
    %v3513 = vadd.s32 %v3508, %v3510
    %vm3514 = vc.u32 %v3508, %v3510
    %v3515 = vadd.s32 %v3511, 1
    %v3516 = vsel %vm3514, %v3515, %v3511
    %v3517 = vadd.s32 %v3512, %v3516
    %v3518 = vadd.s32 %v3517, 536870912
    %v3519 = vshrl.u32 %v3518, 30
    %v3520 = vshll.u32 %v3519, 30
    %v3521 = vsub.s32 %v3517, %v3520
    %vm3522 = vcmp.lt.s32.totalorder %v3521, 0
    %v3523 = vsub.s32 0, %v3521
    %v3524 = vsel %vm3522, %v3523, %v3521
    %v3525 = vclz %v3524
    %v3526 = vsub.s32 %v3525, 2
    %vm3527 = vcmp.gt.s32.totalorder 0, %v3526
    %v3528 = vsel %vm3527, 0, %v3526
    %v3529 = vsub.s32 32, %v3528
    %v3530 = vshll.u32 %v3521, %v3528
    %v3531 = vshrl.u32 %v3513, %v3529
    %v3532 = vor.u32 %v3530, %v3531
    %v3533 = vsub.s32 4294967266, %v3528
    %v3534 = vadd.s32 %v3533, 127
    %v3535 = vshll.u32 %v3534, 23
    %v3536 = vor.u32 4788187, %v3535
    %v3537 = vand.u32 2147483647, %v3536
    %v3539 = vcvt.s32.f32 %v3532
    %v3540 = vmul.f32 %v3539, %v3537
    %v3541 = vxor.u32 %v3540, 2147483648
    %v3542 = vsel %vm3459, %v3541, %v3540
    %v3543 = vsub.s32 4, %v3519
    %v3544 = vsel %vm3459, %v3543, %v3519
    %v3545 = vsel %vm3458, %v359, %v3542
    %v3546 = vsel %vm3458, 0, %v3544
    %v3547 = vcosq.f32.pop %v3545
    %v3548 = vsinq.f32.pop %v3545
    %vm3549 = vweird.f32 %v359
    %v3550 = vand.u32 %v3546, 3
    %vm3551 = vcmp.lt.s32.totalorder %v3550, 2
    %vm3552 = vcmp.eq.s32.totalorder %v3550, 0
    %v3553 = vxor.u32 %v3548, 2147483648
    %v3554 = vsel %vm3552, %v3547, %v3553
    %vm3555 = vcmp.eq.s32.totalorder %v3550, 2
    %v3556 = vxor.u32 %v3547, 2147483648
    %v3557 = vsel %vm3555, %v3556, %v3548
    %v3558 = vsel %vm3551, %v3554, %v3557
    %v3559 = vsel %vm3549, nan, %v3558
    %v3560 = vand.u32 2147483647, %v364
    %vm3561 = vcmp.le.f32.partialorder %v3560, 0.7853982
    %vm3562 = vcmp.lt.s32.totalorder %v364, 0
    %v3563 = vand.u32 %v364, 2139095040
    %v3564 = vshrl.u32 %v3563, 23
    %v3565 = vsub.s32 %v3564, 127
    %v3566 = vand.u32 2147483647, %v364
    %v3567 = vand.u32 %v3566, 8388607
    %v3568 = vor.u32 %v3567, 8388608
    %v3569 = vsub.s32 0, %v3568
    %v3570 = vadd.s32 %v3565, 1
    %vm3571 = vcmp.gt.s32.totalorder %v3570, 0
    %v3572 = vsel %vm3571, %v3570, 0
    %v3573 = vshrl.u32 %v3572, 5
    %v3574 = vand.u32 %v3572, 31
    %v3575 = vsub.s32 32, %v3574
    %v3576 = vshrl.u32 683565275, %v3575
    %v3577 = vshll.u32 683565275, %v3574
    %v3578 = vshrl.u32 2475754826, %v3575
    %v3579 = vor.u32 %v3577, %v3578
    %v3580 = vshll.u32 2475754826, %v3574
    %v3581 = vshrl.u32 2131351028, %v3575
    %v3582 = vor.u32 %v3580, %v3581
    %v3583 = vshll.u32 2131351028, %v3574
    %v3584 = vshrl.u32 2102212464, %v3575
    %v3585 = vor.u32 %v3583, %v3584
    %v3586 = vshll.u32 2102212464, %v3574
    %v3587 = vshrl.u32 920167782, %v3575
    %v3588 = vor.u32 %v3586, %v3587
    %v3589 = vshll.u32 920167782, %v3574
    %v3590 = vshrl.u32 1326507024, %v3575
    %v3591 = vor.u32 %v3589, %v3590
    %vm3592 = vcmp.lt.s32.totalorder %v3573, 1
    %vm3593 = vcmp.lt.s32.totalorder %v3573, 2
    %vm3594 = vcmp.lt.s32.totalorder %v3573, 3
    %vm3595 = vcmp.lt.s32.totalorder %v3573, 4
    %v3596 = vsel %vm3592, %v3576, %v3579
    %v3597 = vsel %vm3595, %v3585, 2102212464
    %v3598 = vsel %vm3594, %v3582, %v3597
    %v3599 = vsel %vm3593, %v3596, %v3598
    %v3600 = vsel %vm3592, %v3579, %v3582
    %v3601 = vsel %vm3595, %v3588, 920167782
    %v3602 = vsel %vm3594, %v3585, %v3601
    %v3603 = vsel %vm3593, %v3600, %v3602
    %v3604 = vsel %vm3592, %v3582, %v3585
    %v3605 = vsel %vm3595, %v3591, 1326507024
    %v3606 = vsel %vm3594, %v3588, %v3605
    %v3607 = vsel %vm3593, %v3604, %v3606
    %v3608 = vshll.u32 %v3568, 8
    %v3609 = vmul.u32.u64.compose %v3608, %v3607
    %v3610 = vextract.low.u32 %v3609
    %v3611 = vextract.high.u32 %v3609
    %v3612 = vmul.u32.u64.compose %v3608, %v3603
    %v3613 = vextract.low.u32 %v3612
    %v3614 = vextract.high.u32 %v3612
    %v3615 = vmul.u32 %v3608, %v3599
    %v3616 = vadd.s32 %v3611, %v3613
    %vm3617 = vc.u32 %v3611, %v3613
    %v3618 = vadd.s32 %v3614, 1
    %v3619 = vsel %vm3617, %v3618, %v3614
    %v3620 = vadd.s32 %v3615, %v3619
    %v3621 = vadd.s32 %v3620, 536870912
    %v3622 = vshrl.u32 %v3621, 30
    %v3623 = vshll.u32 %v3622, 30
    %v3624 = vsub.s32 %v3620, %v3623
    %vm3625 = vcmp.lt.s32.totalorder %v3624, 0
    %v3626 = vsub.s32 0, %v3624
    %v3627 = vsel %vm3625, %v3626, %v3624
    %v3628 = vclz %v3627
    %v3629 = vsub.s32 %v3628, 2
    %vm3630 = vcmp.gt.s32.totalorder 0, %v3629
    %v3631 = vsel %vm3630, 0, %v3629
    %v3632 = vsub.s32 32, %v3631
    %v3633 = vshll.u32 %v3624, %v3631
    %v3634 = vshrl.u32 %v3616, %v3632
    %v3635 = vor.u32 %v3633, %v3634
    %v3636 = vsub.s32 4294967266, %v3631
    %v3637 = vadd.s32 %v3636, 127
    %v3638 = vshll.u32 %v3637, 23
    %v3639 = vor.u32 4788187, %v3638
    %v3640 = vand.u32 2147483647, %v3639
    %v3642 = vcvt.s32.f32 %v3635
    %v3643 = vmul.f32 %v3642, %v3640
    %v3644 = vxor.u32 %v3643, 2147483648
    %v3645 = vsel %vm3562, %v3644, %v3643
    %v3646 = vsub.s32 4, %v3622
    %v3647 = vsel %vm3562, %v3646, %v3622
    %v3648 = vsel %vm3561, %v364, %v3645
    %v3649 = vsel %vm3561, 0, %v3647
    %v3650 = vcosq.f32.pop %v3648
    %v3651 = vsinq.f32.pop %v3648
    %vm3652 = vweird.f32 %v364
    %v3653 = vand.u32 %v3649, 3
    %vm3654 = vcmp.lt.s32.totalorder %v3653, 2
    %vm3655 = vcmp.eq.s32.totalorder %v3653, 0
    %v3656 = vxor.u32 %v3651, 2147483648
    %v3657 = vsel %vm3655, %v3650, %v3656
    %vm3658 = vcmp.eq.s32.totalorder %v3653, 2
    %v3659 = vxor.u32 %v3650, 2147483648
    %v3660 = vsel %vm3658, %v3659, %v3651
    %v3661 = vsel %vm3654, %v3657, %v3660
    %v3662 = vsel %vm3652, nan, %v3661
    %v3663 = vmul.f32 %v469, 0.0625
    %v3664 = vmul.f32 %v572, 0.0625
    %v3665 = vmul.f32 %v675, 0.0625
    %v3666 = vmul.f32 %v778, 0.0625
    %v3667 = vmul.f32 %v881, 0.0625
    %v3668 = vmul.f32 %v984, 0.0625
    %v3669 = vmul.f32 %v1087, 0.0625
    %v3670 = vmul.f32 %v1190, 0.0625
    %v3671 = vmul.f32 %v1293, 0.0625
    %v3672 = vmul.f32 %v1396, 0.0625
    %v3673 = vmul.f32 %v1499, 0.0625
    %v3674 = vmul.f32 %v1602, 0.0625
    %v3675 = vmul.f32 %v1705, 0.0625
    %v3676 = vmul.f32 %v1808, 0.0625
    %v3677 = vmul.f32 %v1911, 0.0625
    %v3678 = vmul.f32 %v2014, 0.0625
    %v3679 = vmul.f32 %v2117, 0.0625
    %v3680 = vmul.f32 %v2220, 0.0625
    %v3681 = vmul.f32 %v2323, 0.0625
    %v3682 = vmul.f32 %v2426, 0.0625
    %v3683 = vmul.f32 %v2529, 0.0625
    %v3684 = vmul.f32 %v2632, 0.0625
    %v3685 = vmul.f32 %v2735, 0.0625
    %v3686 = vmul.f32 %v2838, 0.0625
    %v3687 = vmul.f32 %v2941, 0.0625
    %v3688 = vmul.f32 %v3044, 0.0625
    %v3689 = vmul.f32 %v3147, 0.0625
    %v3690 = vmul.f32 %v3250, 0.0625
    %v3691 = vmul.f32 %v3353, 0.0625
    %v3692 = vmul.f32 %v3456, 0.0625
    %v3693 = vmul.f32 %v3559, 0.0625
    %v3694 = vmul.f32 %v3662, 0.0625
    %3695 = vst [vmem:[#allocation2] sm:$0xff] %v3663
    %3696 = vst [vmem:[#allocation2 + $0x10] sm:$0xff] %v3664
    %3697 = vst [vmem:[#allocation2 + $0x20] sm:$0xff] %v3665
    %3698 = vst [vmem:[#allocation2 + $0x30] sm:$0xff] %v3666
    %3699 = vst [vmem:[#allocation2 + $0x40] sm:$0xff] %v3667
    %3700 = vst [vmem:[#allocation2 + $0x50] sm:$0xff] %v3668
    %3701 = vst [vmem:[#allocation2 + $0x60] sm:$0xff] %v3669
    %3702 = vst [vmem:[#allocation2 + $0x70] sm:$0xff] %v3670
    %3703 = vst [vmem:[#allocation2 + $0x80] sm:$0xff] %v3671
    %3704 = vst [vmem:[#allocation2 + $0x90] sm:$0xff] %v3672
    %3705 = vst [vmem:[#allocation2 + $0xa0] sm:$0xff] %v3673
    %3706 = vst [vmem:[#allocation2 + $0xb0] sm:$0xff] %v3674
    %3707 = vst [vmem:[#allocation2 + $0xc0] sm:$0xff] %v3675
    %3708 = vst [vmem:[#allocation2 + $0xd0] sm:$0xff] %v3676
    %3709 = vst [vmem:[#allocation2 + $0xe0] sm:$0xff] %v3677
    %3710 = vst [vmem:[#allocation2 + $0xf0] sm:$0xff] %v3678
    %3711 = vst [vmem:[#allocation2 + $0x100] sm:$0xff] %v3679
    %3712 = vst [vmem:[#allocation2 + $0x110] sm:$0xff] %v3680
    %3713 = vst [vmem:[#allocation2 + $0x120] sm:$0xff] %v3681
    %3714 = vst [vmem:[#allocation2 + $0x130] sm:$0xff] %v3682
    %3715 = vst [vmem:[#allocation2 + $0x140] sm:$0xff] %v3683
    %3716 = vst [vmem:[#allocation2 + $0x150] sm:$0xff] %v3684
    %3717 = vst [vmem:[#allocation2 + $0x160] sm:$0xff] %v3685
    %3718 = vst [vmem:[#allocation2 + $0x170] sm:$0xff] %v3686
    %3719 = vst [vmem:[#allocation2 + $0x180] sm:$0xff] %v3687
    %3720 = vst [vmem:[#allocation2 + $0x190] sm:$0xff] %v3688
    %3721 = vst [vmem:[#allocation2 + $0x1a0] sm:$0xff] %v3689
    %3722 = vst [vmem:[#allocation2 + $0x1b0] sm:$0xff] %v3690
    %3723 = vst [vmem:[#allocation2 + $0x1c0] sm:$0xff] %v3691
    %3724 = vst [vmem:[#allocation2 + $0x1d0] sm:$0xff] %v3692
    %3725 = vst [vmem:[#allocation2 + $0x1e0] sm:$0xff] %v3693
    %3726 = vst [vmem:[#allocation2 + $0x1f0] sm:$0xff] %v3694
    %v3727 = vand.u32 2147483647, %v209
    %vm3728 = vcmp.le.f32.partialorder %v3727, 0.7853982
    %vm3729 = vcmp.lt.s32.totalorder %v209, 0
    %v3730 = vand.u32 %v209, 2139095040
    %v3731 = vshrl.u32 %v3730, 23
    %v3732 = vsub.s32 %v3731, 127
    %v3733 = vand.u32 2147483647, %v209
    %v3734 = vand.u32 %v3733, 8388607
    %v3735 = vor.u32 %v3734, 8388608
    %v3736 = vsub.s32 0, %v3735
    %v3737 = vadd.s32 %v3732, 1
    %vm3738 = vcmp.gt.s32.totalorder %v3737, 0
    %v3739 = vsel %vm3738, %v3737, 0
    %v3740 = vshrl.u32 %v3739, 5
    %v3741 = vand.u32 %v3739, 31
    %v3742 = vsub.s32 32, %v3741
    %v3743 = vshrl.u32 683565275, %v3742
    %v3744 = vshll.u32 683565275, %v3741
    %v3745 = vshrl.u32 2475754826, %v3742
    %v3746 = vor.u32 %v3744, %v3745
    %v3747 = vshll.u32 2475754826, %v3741
    %v3748 = vshrl.u32 2131351028, %v3742
    %v3749 = vor.u32 %v3747, %v3748
    %v3750 = vshll.u32 2131351028, %v3741
    %v3751 = vshrl.u32 2102212464, %v3742
    %v3752 = vor.u32 %v3750, %v3751
    %v3753 = vshll.u32 2102212464, %v3741
    %v3754 = vshrl.u32 920167782, %v3742
    %v3755 = vor.u32 %v3753, %v3754
    %v3756 = vshll.u32 920167782, %v3741
    %v3757 = vshrl.u32 1326507024, %v3742
    %v3758 = vor.u32 %v3756, %v3757
    %vm3759 = vcmp.lt.s32.totalorder %v3740, 1
    %vm3760 = vcmp.lt.s32.totalorder %v3740, 2
    %vm3761 = vcmp.lt.s32.totalorder %v3740, 3
    %vm3762 = vcmp.lt.s32.totalorder %v3740, 4
    %v3763 = vsel %vm3759, %v3743, %v3746
    %v3764 = vsel %vm3762, %v3752, 2102212464
    %v3765 = vsel %vm3761, %v3749, %v3764
    %v3766 = vsel %vm3760, %v3763, %v3765
    %v3767 = vsel %vm3759, %v3746, %v3749
    %v3768 = vsel %vm3762, %v3755, 920167782
    %v3769 = vsel %vm3761, %v3752, %v3768
    %v3770 = vsel %vm3760, %v3767, %v3769
    %v3771 = vsel %vm3759, %v3749, %v3752
    %v3772 = vsel %vm3762, %v3758, 1326507024
    %v3773 = vsel %vm3761, %v3755, %v3772
    %v3774 = vsel %vm3760, %v3771, %v3773
    %v3775 = vshll.u32 %v3735, 8
    %v3776 = vmul.u32.u64.compose %v3775, %v3774
    %v3777 = vextract.low.u32 %v3776
    %v3778 = vextract.high.u32 %v3776
    %v3779 = vmul.u32.u64.compose %v3775, %v3770
    %v3780 = vextract.low.u32 %v3779
    %v3781 = vextract.high.u32 %v3779
    %v3782 = vmul.u32 %v3775, %v3766
    %v3783 = vadd.s32 %v3778, %v3780
    %vm3784 = vc.u32 %v3778, %v3780
    %v3785 = vadd.s32 %v3781, 1
    %v3786 = vsel %vm3784, %v3785, %v3781
    %v3787 = vadd.s32 %v3782, %v3786
    %v3788 = vadd.s32 %v3787, 536870912
    %v3789 = vshrl.u32 %v3788, 30
    %v3790 = vshll.u32 %v3789, 30
    %v3791 = vsub.s32 %v3787, %v3790
    %vm3792 = vcmp.lt.s32.totalorder %v3791, 0
    %v3793 = vsub.s32 0, %v3791
    %v3794 = vsel %vm3792, %v3793, %v3791
    %v3795 = vclz %v3794
    %v3796 = vsub.s32 %v3795, 2
    %vm3797 = vcmp.gt.s32.totalorder 0, %v3796
    %v3798 = vsel %vm3797, 0, %v3796
    %v3799 = vsub.s32 32, %v3798
    %v3800 = vshll.u32 %v3791, %v3798
    %v3801 = vshrl.u32 %v3783, %v3799
    %v3802 = vor.u32 %v3800, %v3801
    %v3803 = vsub.s32 4294967266, %v3798
    %v3804 = vadd.s32 %v3803, 127
    %v3805 = vshll.u32 %v3804, 23
    %v3806 = vor.u32 4788187, %v3805
    %v3807 = vand.u32 2147483647, %v3806
    %v3809 = vcvt.s32.f32 %v3802
    %v3810 = vmul.f32 %v3809, %v3807
    %v3811 = vxor.u32 %v3810, 2147483648
    %v3812 = vsel %vm3729, %v3811, %v3810
    %v3813 = vsub.s32 4, %v3789
    %v3814 = vsel %vm3729, %v3813, %v3789
    %v3815 = vsel %vm3728, %v209, %v3812
    %v3816 = vsel %vm3728, 0, %v3814
    %v3817 = vcosq.f32.pop %v3815
    %v3818 = vsinq.f32.pop %v3815
    %vm3819 = vweird.f32 %v209
    %v3820 = vadd.s32 %v3816, 3
    %v3821 = vand.u32 %v3820, 3
    %vm3822 = vcmp.lt.s32.totalorder %v3821, 2
    %vm3823 = vcmp.eq.s32.totalorder %v3821, 0
    %v3824 = vxor.u32 %v3818, 2147483648
    %v3825 = vsel %vm3823, %v3817, %v3824
    %vm3826 = vcmp.eq.s32.totalorder %v3821, 2
    %v3827 = vxor.u32 %v3817, 2147483648
    %v3828 = vsel %vm3826, %v3827, %v3818
    %v3829 = vsel %vm3822, %v3825, %v3828
    %v3830 = vsel %vm3819, nan, %v3829
    %v3831 = vand.u32 2147483647, %v214
    %vm3832 = vcmp.le.f32.partialorder %v3831, 0.7853982
    %vm3833 = vcmp.lt.s32.totalorder %v214, 0
    %v3834 = vand.u32 %v214, 2139095040
    %v3835 = vshrl.u32 %v3834, 23
    %v3836 = vsub.s32 %v3835, 127
    %v3837 = vand.u32 2147483647, %v214
    %v3838 = vand.u32 %v3837, 8388607
    %v3839 = vor.u32 %v3838, 8388608
    %v3840 = vsub.s32 0, %v3839
    %v3841 = vadd.s32 %v3836, 1
    %vm3842 = vcmp.gt.s32.totalorder %v3841, 0
    %v3843 = vsel %vm3842, %v3841, 0
    %v3844 = vshrl.u32 %v3843, 5
    %v3845 = vand.u32 %v3843, 31
    %v3846 = vsub.s32 32, %v3845
    %v3847 = vshrl.u32 683565275, %v3846
    %v3848 = vshll.u32 683565275, %v3845
    %v3849 = vshrl.u32 2475754826, %v3846
    %v3850 = vor.u32 %v3848, %v3849
    %v3851 = vshll.u32 2475754826, %v3845
    %v3852 = vshrl.u32 2131351028, %v3846
    %v3853 = vor.u32 %v3851, %v3852
    %v3854 = vshll.u32 2131351028, %v3845
    %v3855 = vshrl.u32 2102212464, %v3846
    %v3856 = vor.u32 %v3854, %v3855
    %v3857 = vshll.u32 2102212464, %v3845
    %v3858 = vshrl.u32 920167782, %v3846
    %v3859 = vor.u32 %v3857, %v3858
    %v3860 = vshll.u32 920167782, %v3845
    %v3861 = vshrl.u32 1326507024, %v3846
    %v3862 = vor.u32 %v3860, %v3861
    %vm3863 = vcmp.lt.s32.totalorder %v3844, 1
    %vm3864 = vcmp.lt.s32.totalorder %v3844, 2
    %vm3865 = vcmp.lt.s32.totalorder %v3844, 3
    %vm3866 = vcmp.lt.s32.totalorder %v3844, 4
    %v3867 = vsel %vm3863, %v3847, %v3850
    %v3868 = vsel %vm3866, %v3856, 2102212464
    %v3869 = vsel %vm3865, %v3853, %v3868
    %v3870 = vsel %vm3864, %v3867, %v3869
    %v3871 = vsel %vm3863, %v3850, %v3853
    %v3872 = vsel %vm3866, %v3859, 920167782
    %v3873 = vsel %vm3865, %v3856, %v3872
    %v3874 = vsel %vm3864, %v3871, %v3873
    %v3875 = vsel %vm3863, %v3853, %v3856
    %v3876 = vsel %vm3866, %v3862, 1326507024
    %v3877 = vsel %vm3865, %v3859, %v3876
    %v3878 = vsel %vm3864, %v3875, %v3877
    %v3879 = vshll.u32 %v3839, 8
    %v3880 = vmul.u32.u64.compose %v3879, %v3878
    %v3881 = vextract.low.u32 %v3880
    %v3882 = vextract.high.u32 %v3880
    %v3883 = vmul.u32.u64.compose %v3879, %v3874
    %v3884 = vextract.low.u32 %v3883
    %v3885 = vextract.high.u32 %v3883
    %v3886 = vmul.u32 %v3879, %v3870
    %v3887 = vadd.s32 %v3882, %v3884
    %vm3888 = vc.u32 %v3882, %v3884
    %v3889 = vadd.s32 %v3885, 1
    %v3890 = vsel %vm3888, %v3889, %v3885
    %v3891 = vadd.s32 %v3886, %v3890
    %v3892 = vadd.s32 %v3891, 536870912
    %v3893 = vshrl.u32 %v3892, 30
    %v3894 = vshll.u32 %v3893, 30
    %v3895 = vsub.s32 %v3891, %v3894
    %vm3896 = vcmp.lt.s32.totalorder %v3895, 0
    %v3897 = vsub.s32 0, %v3895
    %v3898 = vsel %vm3896, %v3897, %v3895
    %v3899 = vclz %v3898
    %v3900 = vsub.s32 %v3899, 2
    %vm3901 = vcmp.gt.s32.totalorder 0, %v3900
    %v3902 = vsel %vm3901, 0, %v3900
    %v3903 = vsub.s32 32, %v3902
    %v3904 = vshll.u32 %v3895, %v3902
    %v3905 = vshrl.u32 %v3887, %v3903
    %v3906 = vor.u32 %v3904, %v3905
    %v3907 = vsub.s32 4294967266, %v3902
    %v3908 = vadd.s32 %v3907, 127
    %v3909 = vshll.u32 %v3908, 23
    %v3910 = vor.u32 4788187, %v3909
    %v3911 = vand.u32 2147483647, %v3910
    %v3913 = vcvt.s32.f32 %v3906
    %v3914 = vmul.f32 %v3913, %v3911
    %v3915 = vxor.u32 %v3914, 2147483648
    %v3916 = vsel %vm3833, %v3915, %v3914
    %v3917 = vsub.s32 4, %v3893
    %v3918 = vsel %vm3833, %v3917, %v3893
    %v3919 = vsel %vm3832, %v214, %v3916
    %v3920 = vsel %vm3832, 0, %v3918
    %v3921 = vcosq.f32.pop %v3919
    %v3922 = vsinq.f32.pop %v3919
    %vm3923 = vweird.f32 %v214
    %v3924 = vadd.s32 %v3920, 3
    %v3925 = vand.u32 %v3924, 3
    %vm3926 = vcmp.lt.s32.totalorder %v3925, 2
    %vm3927 = vcmp.eq.s32.totalorder %v3925, 0
    %v3928 = vxor.u32 %v3922, 2147483648
    %v3929 = vsel %vm3927, %v3921, %v3928
    %vm3930 = vcmp.eq.s32.totalorder %v3925, 2
    %v3931 = vxor.u32 %v3921, 2147483648
    %v3932 = vsel %vm3930, %v3931, %v3922
    %v3933 = vsel %vm3926, %v3929, %v3932
    %v3934 = vsel %vm3923, nan, %v3933
    %v3935 = vand.u32 2147483647, %v219
    %vm3936 = vcmp.le.f32.partialorder %v3935, 0.7853982
    %vm3937 = vcmp.lt.s32.totalorder %v219, 0
    %v3938 = vand.u32 %v219, 2139095040
    %v3939 = vshrl.u32 %v3938, 23
    %v3940 = vsub.s32 %v3939, 127
    %v3941 = vand.u32 2147483647, %v219
    %v3942 = vand.u32 %v3941, 8388607
    %v3943 = vor.u32 %v3942, 8388608
    %v3944 = vsub.s32 0, %v3943
    %v3945 = vadd.s32 %v3940, 1
    %vm3946 = vcmp.gt.s32.totalorder %v3945, 0
    %v3947 = vsel %vm3946, %v3945, 0
    %v3948 = vshrl.u32 %v3947, 5
    %v3949 = vand.u32 %v3947, 31
    %v3950 = vsub.s32 32, %v3949
    %v3951 = vshrl.u32 683565275, %v3950
    %v3952 = vshll.u32 683565275, %v3949
    %v3953 = vshrl.u32 2475754826, %v3950
    %v3954 = vor.u32 %v3952, %v3953
    %v3955 = vshll.u32 2475754826, %v3949
    %v3956 = vshrl.u32 2131351028, %v3950
    %v3957 = vor.u32 %v3955, %v3956
    %v3958 = vshll.u32 2131351028, %v3949
    %v3959 = vshrl.u32 2102212464, %v3950
    %v3960 = vor.u32 %v3958, %v3959
    %v3961 = vshll.u32 2102212464, %v3949
    %v3962 = vshrl.u32 920167782, %v3950
    %v3963 = vor.u32 %v3961, %v3962
    %v3964 = vshll.u32 920167782, %v3949
    %v3965 = vshrl.u32 1326507024, %v3950
    %v3966 = vor.u32 %v3964, %v3965
    %vm3967 = vcmp.lt.s32.totalorder %v3948, 1
    %vm3968 = vcmp.lt.s32.totalorder %v3948, 2
    %vm3969 = vcmp.lt.s32.totalorder %v3948, 3
    %vm3970 = vcmp.lt.s32.totalorder %v3948, 4
    %v3971 = vsel %vm3967, %v3951, %v3954
    %v3972 = vsel %vm3970, %v3960, 2102212464
    %v3973 = vsel %vm3969, %v3957, %v3972
    %v3974 = vsel %vm3968, %v3971, %v3973
    %v3975 = vsel %vm3967, %v3954, %v3957
    %v3976 = vsel %vm3970, %v3963, 920167782
    %v3977 = vsel %vm3969, %v3960, %v3976
    %v3978 = vsel %vm3968, %v3975, %v3977
    %v3979 = vsel %vm3967, %v3957, %v3960
    %v3980 = vsel %vm3970, %v3966, 1326507024
    %v3981 = vsel %vm3969, %v3963, %v3980
    %v3982 = vsel %vm3968, %v3979, %v3981
    %v3983 = vshll.u32 %v3943, 8
    %v3984 = vmul.u32.u64.compose %v3983, %v3982
    %v3985 = vextract.low.u32 %v3984
    %v3986 = vextract.high.u32 %v3984
    %v3987 = vmul.u32.u64.compose %v3983, %v3978
    %v3988 = vextract.low.u32 %v3987
    %v3989 = vextract.high.u32 %v3987
    %v3990 = vmul.u32 %v3983, %v3974
    %v3991 = vadd.s32 %v3986, %v3988
    %vm3992 = vc.u32 %v3986, %v3988
    %v3993 = vadd.s32 %v3989, 1
    %v3994 = vsel %vm3992, %v3993, %v3989
    %v3995 = vadd.s32 %v3990, %v3994
    %v3996 = vadd.s32 %v3995, 536870912
    %v3997 = vshrl.u32 %v3996, 30
    %v3998 = vshll.u32 %v3997, 30
    %v3999 = vsub.s32 %v3995, %v3998
    %vm4000 = vcmp.lt.s32.totalorder %v3999, 0
    %v4001 = vsub.s32 0, %v3999
    %v4002 = vsel %vm4000, %v4001, %v3999
    %v4003 = vclz %v4002
    %v4004 = vsub.s32 %v4003, 2
    %vm4005 = vcmp.gt.s32.totalorder 0, %v4004
    %v4006 = vsel %vm4005, 0, %v4004
    %v4007 = vsub.s32 32, %v4006
    %v4008 = vshll.u32 %v3999, %v4006
    %v4009 = vshrl.u32 %v3991, %v4007
    %v4010 = vor.u32 %v4008, %v4009
    %v4011 = vsub.s32 4294967266, %v4006
    %v4012 = vadd.s32 %v4011, 127
    %v4013 = vshll.u32 %v4012, 23
    %v4014 = vor.u32 4788187, %v4013
    %v4015 = vand.u32 2147483647, %v4014
    %v4017 = vcvt.s32.f32 %v4010
    %v4018 = vmul.f32 %v4017, %v4015
    %v4019 = vxor.u32 %v4018, 2147483648
    %v4020 = vsel %vm3937, %v4019, %v4018
    %v4021 = vsub.s32 4, %v3997
    %v4022 = vsel %vm3937, %v4021, %v3997
    %v4023 = vsel %vm3936, %v219, %v4020
    %v4024 = vsel %vm3936, 0, %v4022
    %v4025 = vcosq.f32.pop %v4023
    %v4026 = vsinq.f32.pop %v4023
    %vm4027 = vweird.f32 %v219
    %v4028 = vadd.s32 %v4024, 3
    %v4029 = vand.u32 %v4028, 3
    %vm4030 = vcmp.lt.s32.totalorder %v4029, 2
    %vm4031 = vcmp.eq.s32.totalorder %v4029, 0
    %v4032 = vxor.u32 %v4026, 2147483648
    %v4033 = vsel %vm4031, %v4025, %v4032
    %vm4034 = vcmp.eq.s32.totalorder %v4029, 2
    %v4035 = vxor.u32 %v4025, 2147483648
    %v4036 = vsel %vm4034, %v4035, %v4026
    %v4037 = vsel %vm4030, %v4033, %v4036
    %v4038 = vsel %vm4027, nan, %v4037
    %v4039 = vand.u32 2147483647, %v224
    %vm4040 = vcmp.le.f32.partialorder %v4039, 0.7853982
    %vm4041 = vcmp.lt.s32.totalorder %v224, 0
    %v4042 = vand.u32 %v224, 2139095040
    %v4043 = vshrl.u32 %v4042, 23
    %v4044 = vsub.s32 %v4043, 127
    %v4045 = vand.u32 2147483647, %v224
    %v4046 = vand.u32 %v4045, 8388607
    %v4047 = vor.u32 %v4046, 8388608
    %v4048 = vsub.s32 0, %v4047
    %v4049 = vadd.s32 %v4044, 1
    %vm4050 = vcmp.gt.s32.totalorder %v4049, 0
    %v4051 = vsel %vm4050, %v4049, 0
    %v4052 = vshrl.u32 %v4051, 5
    %v4053 = vand.u32 %v4051, 31
    %v4054 = vsub.s32 32, %v4053
    %v4055 = vshrl.u32 683565275, %v4054
    %v4056 = vshll.u32 683565275, %v4053
    %v4057 = vshrl.u32 2475754826, %v4054
    %v4058 = vor.u32 %v4056, %v4057
    %v4059 = vshll.u32 2475754826, %v4053
    %v4060 = vshrl.u32 2131351028, %v4054
    %v4061 = vor.u32 %v4059, %v4060
    %v4062 = vshll.u32 2131351028, %v4053
    %v4063 = vshrl.u32 2102212464, %v4054
    %v4064 = vor.u32 %v4062, %v4063
    %v4065 = vshll.u32 2102212464, %v4053
    %v4066 = vshrl.u32 920167782, %v4054
    %v4067 = vor.u32 %v4065, %v4066
    %v4068 = vshll.u32 920167782, %v4053
    %v4069 = vshrl.u32 1326507024, %v4054
    %v4070 = vor.u32 %v4068, %v4069
    %vm4071 = vcmp.lt.s32.totalorder %v4052, 1
    %vm4072 = vcmp.lt.s32.totalorder %v4052, 2
    %vm4073 = vcmp.lt.s32.totalorder %v4052, 3
    %vm4074 = vcmp.lt.s32.totalorder %v4052, 4
    %v4075 = vsel %vm4071, %v4055, %v4058
    %v4076 = vsel %vm4074, %v4064, 2102212464
    %v4077 = vsel %vm4073, %v4061, %v4076
    %v4078 = vsel %vm4072, %v4075, %v4077
    %v4079 = vsel %vm4071, %v4058, %v4061
    %v4080 = vsel %vm4074, %v4067, 920167782
    %v4081 = vsel %vm4073, %v4064, %v4080
    %v4082 = vsel %vm4072, %v4079, %v4081
    %v4083 = vsel %vm4071, %v4061, %v4064
    %v4084 = vsel %vm4074, %v4070, 1326507024
    %v4085 = vsel %vm4073, %v4067, %v4084
    %v4086 = vsel %vm4072, %v4083, %v4085
    %v4087 = vshll.u32 %v4047, 8
    %v4088 = vmul.u32.u64.compose %v4087, %v4086
    %v4089 = vextract.low.u32 %v4088
    %v4090 = vextract.high.u32 %v4088
    %v4091 = vmul.u32.u64.compose %v4087, %v4082
    %v4092 = vextract.low.u32 %v4091
    %v4093 = vextract.high.u32 %v4091
    %v4094 = vmul.u32 %v4087, %v4078
    %v4095 = vadd.s32 %v4090, %v4092
    %vm4096 = vc.u32 %v4090, %v4092
    %v4097 = vadd.s32 %v4093, 1
    %v4098 = vsel %vm4096, %v4097, %v4093
    %v4099 = vadd.s32 %v4094, %v4098
    %v4100 = vadd.s32 %v4099, 536870912
    %v4101 = vshrl.u32 %v4100, 30
    %v4102 = vshll.u32 %v4101, 30
    %v4103 = vsub.s32 %v4099, %v4102
    %vm4104 = vcmp.lt.s32.totalorder %v4103, 0
    %v4105 = vsub.s32 0, %v4103
    %v4106 = vsel %vm4104, %v4105, %v4103
    %v4107 = vclz %v4106
    %v4108 = vsub.s32 %v4107, 2
    %vm4109 = vcmp.gt.s32.totalorder 0, %v4108
    %v4110 = vsel %vm4109, 0, %v4108
    %v4111 = vsub.s32 32, %v4110
    %v4112 = vshll.u32 %v4103, %v4110
    %v4113 = vshrl.u32 %v4095, %v4111
    %v4114 = vor.u32 %v4112, %v4113
    %v4115 = vsub.s32 4294967266, %v4110
    %v4116 = vadd.s32 %v4115, 127
    %v4117 = vshll.u32 %v4116, 23
    %v4118 = vor.u32 4788187, %v4117
    %v4119 = vand.u32 2147483647, %v4118
    %v4121 = vcvt.s32.f32 %v4114
    %v4122 = vmul.f32 %v4121, %v4119
    %v4123 = vxor.u32 %v4122, 2147483648
    %v4124 = vsel %vm4041, %v4123, %v4122
    %v4125 = vsub.s32 4, %v4101
    %v4126 = vsel %vm4041, %v4125, %v4101
    %v4127 = vsel %vm4040, %v224, %v4124
    %v4128 = vsel %vm4040, 0, %v4126
    %v4129 = vcosq.f32.pop %v4127
    %v4130 = vsinq.f32.pop %v4127
    %vm4131 = vweird.f32 %v224
    %v4132 = vadd.s32 %v4128, 3
    %v4133 = vand.u32 %v4132, 3
    %vm4134 = vcmp.lt.s32.totalorder %v4133, 2
    %vm4135 = vcmp.eq.s32.totalorder %v4133, 0
    %v4136 = vxor.u32 %v4130, 2147483648
    %v4137 = vsel %vm4135, %v4129, %v4136
    %vm4138 = vcmp.eq.s32.totalorder %v4133, 2
    %v4139 = vxor.u32 %v4129, 2147483648
    %v4140 = vsel %vm4138, %v4139, %v4130
    %v4141 = vsel %vm4134, %v4137, %v4140
    %v4142 = vsel %vm4131, nan, %v4141
    %v4143 = vand.u32 2147483647, %v229
    %vm4144 = vcmp.le.f32.partialorder %v4143, 0.7853982
    %vm4145 = vcmp.lt.s32.totalorder %v229, 0
    %v4146 = vand.u32 %v229, 2139095040
    %v4147 = vshrl.u32 %v4146, 23
    %v4148 = vsub.s32 %v4147, 127
    %v4149 = vand.u32 2147483647, %v229
    %v4150 = vand.u32 %v4149, 8388607
    %v4151 = vor.u32 %v4150, 8388608
    %v4152 = vsub.s32 0, %v4151
    %v4153 = vadd.s32 %v4148, 1
    %vm4154 = vcmp.gt.s32.totalorder %v4153, 0
    %v4155 = vsel %vm4154, %v4153, 0
    %v4156 = vshrl.u32 %v4155, 5
    %v4157 = vand.u32 %v4155, 31
    %v4158 = vsub.s32 32, %v4157
    %v4159 = vshrl.u32 683565275, %v4158
    %v4160 = vshll.u32 683565275, %v4157
    %v4161 = vshrl.u32 2475754826, %v4158
    %v4162 = vor.u32 %v4160, %v4161
    %v4163 = vshll.u32 2475754826, %v4157
    %v4164 = vshrl.u32 2131351028, %v4158
    %v4165 = vor.u32 %v4163, %v4164
    %v4166 = vshll.u32 2131351028, %v4157
    %v4167 = vshrl.u32 2102212464, %v4158
    %v4168 = vor.u32 %v4166, %v4167
    %v4169 = vshll.u32 2102212464, %v4157
    %v4170 = vshrl.u32 920167782, %v4158
    %v4171 = vor.u32 %v4169, %v4170
    %v4172 = vshll.u32 920167782, %v4157
    %v4173 = vshrl.u32 1326507024, %v4158
    %v4174 = vor.u32 %v4172, %v4173
    %vm4175 = vcmp.lt.s32.totalorder %v4156, 1
    %vm4176 = vcmp.lt.s32.totalorder %v4156, 2
    %vm4177 = vcmp.lt.s32.totalorder %v4156, 3
    %vm4178 = vcmp.lt.s32.totalorder %v4156, 4
    %v4179 = vsel %vm4175, %v4159, %v4162
    %v4180 = vsel %vm4178, %v4168, 2102212464
    %v4181 = vsel %vm4177, %v4165, %v4180
    %v4182 = vsel %vm4176, %v4179, %v4181
    %v4183 = vsel %vm4175, %v4162, %v4165
    %v4184 = vsel %vm4178, %v4171, 920167782
    %v4185 = vsel %vm4177, %v4168, %v4184
    %v4186 = vsel %vm4176, %v4183, %v4185
    %v4187 = vsel %vm4175, %v4165, %v4168
    %v4188 = vsel %vm4178, %v4174, 1326507024
    %v4189 = vsel %vm4177, %v4171, %v4188
    %v4190 = vsel %vm4176, %v4187, %v4189
    %v4191 = vshll.u32 %v4151, 8
    %v4192 = vmul.u32.u64.compose %v4191, %v4190
    %v4193 = vextract.low.u32 %v4192
    %v4194 = vextract.high.u32 %v4192
    %v4195 = vmul.u32.u64.compose %v4191, %v4186
    %v4196 = vextract.low.u32 %v4195
    %v4197 = vextract.high.u32 %v4195
    %v4198 = vmul.u32 %v4191, %v4182
    %v4199 = vadd.s32 %v4194, %v4196
    %vm4200 = vc.u32 %v4194, %v4196
    %v4201 = vadd.s32 %v4197, 1
    %v4202 = vsel %vm4200, %v4201, %v4197
    %v4203 = vadd.s32 %v4198, %v4202
    %v4204 = vadd.s32 %v4203, 536870912
    %v4205 = vshrl.u32 %v4204, 30
    %v4206 = vshll.u32 %v4205, 30
    %v4207 = vsub.s32 %v4203, %v4206
    %vm4208 = vcmp.lt.s32.totalorder %v4207, 0
    %v4209 = vsub.s32 0, %v4207
    %v4210 = vsel %vm4208, %v4209, %v4207
    %v4211 = vclz %v4210
    %v4212 = vsub.s32 %v4211, 2
    %vm4213 = vcmp.gt.s32.totalorder 0, %v4212
    %v4214 = vsel %vm4213, 0, %v4212
    %v4215 = vsub.s32 32, %v4214
    %v4216 = vshll.u32 %v4207, %v4214
    %v4217 = vshrl.u32 %v4199, %v4215
    %v4218 = vor.u32 %v4216, %v4217
    %v4219 = vsub.s32 4294967266, %v4214
    %v4220 = vadd.s32 %v4219, 127
    %v4221 = vshll.u32 %v4220, 23
    %v4222 = vor.u32 4788187, %v4221
    %v4223 = vand.u32 2147483647, %v4222
    %v4225 = vcvt.s32.f32 %v4218
    %v4226 = vmul.f32 %v4225, %v4223
    %v4227 = vxor.u32 %v4226, 2147483648
    %v4228 = vsel %vm4145, %v4227, %v4226
    %v4229 = vsub.s32 4, %v4205
    %v4230 = vsel %vm4145, %v4229, %v4205
    %v4231 = vsel %vm4144, %v229, %v4228
    %v4232 = vsel %vm4144, 0, %v4230
    %v4233 = vcosq.f32.pop %v4231
    %v4234 = vsinq.f32.pop %v4231
    %vm4235 = vweird.f32 %v229
    %v4236 = vadd.s32 %v4232, 3
    %v4237 = vand.u32 %v4236, 3
    %vm4238 = vcmp.lt.s32.totalorder %v4237, 2
    %vm4239 = vcmp.eq.s32.totalorder %v4237, 0
    %v4240 = vxor.u32 %v4234, 2147483648
    %v4241 = vsel %vm4239, %v4233, %v4240
    %vm4242 = vcmp.eq.s32.totalorder %v4237, 2
    %v4243 = vxor.u32 %v4233, 2147483648
    %v4244 = vsel %vm4242, %v4243, %v4234
    %v4245 = vsel %vm4238, %v4241, %v4244
    %v4246 = vsel %vm4235, nan, %v4245
    %v4247 = vand.u32 2147483647, %v234
    %vm4248 = vcmp.le.f32.partialorder %v4247, 0.7853982
    %vm4249 = vcmp.lt.s32.totalorder %v234, 0
    %v4250 = vand.u32 %v234, 2139095040
    %v4251 = vshrl.u32 %v4250, 23
    %v4252 = vsub.s32 %v4251, 127
    %v4253 = vand.u32 2147483647, %v234
    %v4254 = vand.u32 %v4253, 8388607
    %v4255 = vor.u32 %v4254, 8388608
    %v4256 = vsub.s32 0, %v4255
    %v4257 = vadd.s32 %v4252, 1
    %vm4258 = vcmp.gt.s32.totalorder %v4257, 0
    %v4259 = vsel %vm4258, %v4257, 0
    %v4260 = vshrl.u32 %v4259, 5
    %v4261 = vand.u32 %v4259, 31
    %v4262 = vsub.s32 32, %v4261
    %v4263 = vshrl.u32 683565275, %v4262
    %v4264 = vshll.u32 683565275, %v4261
    %v4265 = vshrl.u32 2475754826, %v4262
    %v4266 = vor.u32 %v4264, %v4265
    %v4267 = vshll.u32 2475754826, %v4261
    %v4268 = vshrl.u32 2131351028, %v4262
    %v4269 = vor.u32 %v4267, %v4268
    %v4270 = vshll.u32 2131351028, %v4261
    %v4271 = vshrl.u32 2102212464, %v4262
    %v4272 = vor.u32 %v4270, %v4271
    %v4273 = vshll.u32 2102212464, %v4261
    %v4274 = vshrl.u32 920167782, %v4262
    %v4275 = vor.u32 %v4273, %v4274
    %v4276 = vshll.u32 920167782, %v4261
    %v4277 = vshrl.u32 1326507024, %v4262
    %v4278 = vor.u32 %v4276, %v4277
    %vm4279 = vcmp.lt.s32.totalorder %v4260, 1
    %vm4280 = vcmp.lt.s32.totalorder %v4260, 2
    %vm4281 = vcmp.lt.s32.totalorder %v4260, 3
    %vm4282 = vcmp.lt.s32.totalorder %v4260, 4
    %v4283 = vsel %vm4279, %v4263, %v4266
    %v4284 = vsel %vm4282, %v4272, 2102212464
    %v4285 = vsel %vm4281, %v4269, %v4284
    %v4286 = vsel %vm4280, %v4283, %v4285
    %v4287 = vsel %vm4279, %v4266, %v4269
    %v4288 = vsel %vm4282, %v4275, 920167782
    %v4289 = vsel %vm4281, %v4272, %v4288
    %v4290 = vsel %vm4280, %v4287, %v4289
    %v4291 = vsel %vm4279, %v4269, %v4272
    %v4292 = vsel %vm4282, %v4278, 1326507024
    %v4293 = vsel %vm4281, %v4275, %v4292
    %v4294 = vsel %vm4280, %v4291, %v4293
    %v4295 = vshll.u32 %v4255, 8
    %v4296 = vmul.u32.u64.compose %v4295, %v4294
    %v4297 = vextract.low.u32 %v4296
    %v4298 = vextract.high.u32 %v4296
    %v4299 = vmul.u32.u64.compose %v4295, %v4290
    %v4300 = vextract.low.u32 %v4299
    %v4301 = vextract.high.u32 %v4299
    %v4302 = vmul.u32 %v4295, %v4286
    %v4303 = vadd.s32 %v4298, %v4300
    %vm4304 = vc.u32 %v4298, %v4300
    %v4305 = vadd.s32 %v4301, 1
    %v4306 = vsel %vm4304, %v4305, %v4301
    %v4307 = vadd.s32 %v4302, %v4306
    %v4308 = vadd.s32 %v4307, 536870912
    %v4309 = vshrl.u32 %v4308, 30
    %v4310 = vshll.u32 %v4309, 30
    %v4311 = vsub.s32 %v4307, %v4310
    %vm4312 = vcmp.lt.s32.totalorder %v4311, 0
    %v4313 = vsub.s32 0, %v4311
    %v4314 = vsel %vm4312, %v4313, %v4311
    %v4315 = vclz %v4314
    %v4316 = vsub.s32 %v4315, 2
    %vm4317 = vcmp.gt.s32.totalorder 0, %v4316
    %v4318 = vsel %vm4317, 0, %v4316
    %v4319 = vsub.s32 32, %v4318
    %v4320 = vshll.u32 %v4311, %v4318
    %v4321 = vshrl.u32 %v4303, %v4319
    %v4322 = vor.u32 %v4320, %v4321
    %v4323 = vsub.s32 4294967266, %v4318
    %v4324 = vadd.s32 %v4323, 127
    %v4325 = vshll.u32 %v4324, 23
    %v4326 = vor.u32 4788187, %v4325
    %v4327 = vand.u32 2147483647, %v4326
    %v4329 = vcvt.s32.f32 %v4322
    %v4330 = vmul.f32 %v4329, %v4327
    %v4331 = vxor.u32 %v4330, 2147483648
    %v4332 = vsel %vm4249, %v4331, %v4330
    %v4333 = vsub.s32 4, %v4309
    %v4334 = vsel %vm4249, %v4333, %v4309
    %v4335 = vsel %vm4248, %v234, %v4332
    %v4336 = vsel %vm4248, 0, %v4334
    %v4337 = vcosq.f32.pop %v4335
    %v4338 = vsinq.f32.pop %v4335
    %vm4339 = vweird.f32 %v234
    %v4340 = vadd.s32 %v4336, 3
    %v4341 = vand.u32 %v4340, 3
    %vm4342 = vcmp.lt.s32.totalorder %v4341, 2
    %vm4343 = vcmp.eq.s32.totalorder %v4341, 0
    %v4344 = vxor.u32 %v4338, 2147483648
    %v4345 = vsel %vm4343, %v4337, %v4344
    %vm4346 = vcmp.eq.s32.totalorder %v4341, 2
    %v4347 = vxor.u32 %v4337, 2147483648
    %v4348 = vsel %vm4346, %v4347, %v4338
    %v4349 = vsel %vm4342, %v4345, %v4348
    %v4350 = vsel %vm4339, nan, %v4349
    %v4351 = vand.u32 2147483647, %v239
    %vm4352 = vcmp.le.f32.partialorder %v4351, 0.7853982
    %vm4353 = vcmp.lt.s32.totalorder %v239, 0
    %v4354 = vand.u32 %v239, 2139095040
    %v4355 = vshrl.u32 %v4354, 23
    %v4356 = vsub.s32 %v4355, 127
    %v4357 = vand.u32 2147483647, %v239
    %v4358 = vand.u32 %v4357, 8388607
    %v4359 = vor.u32 %v4358, 8388608
    %v4360 = vsub.s32 0, %v4359
    %v4361 = vadd.s32 %v4356, 1
    %vm4362 = vcmp.gt.s32.totalorder %v4361, 0
    %v4363 = vsel %vm4362, %v4361, 0
    %v4364 = vshrl.u32 %v4363, 5
    %v4365 = vand.u32 %v4363, 31
    %v4366 = vsub.s32 32, %v4365
    %v4367 = vshrl.u32 683565275, %v4366
    %v4368 = vshll.u32 683565275, %v4365
    %v4369 = vshrl.u32 2475754826, %v4366
    %v4370 = vor.u32 %v4368, %v4369
    %v4371 = vshll.u32 2475754826, %v4365
    %v4372 = vshrl.u32 2131351028, %v4366
    %v4373 = vor.u32 %v4371, %v4372
    %v4374 = vshll.u32 2131351028, %v4365
    %v4375 = vshrl.u32 2102212464, %v4366
    %v4376 = vor.u32 %v4374, %v4375
    %v4377 = vshll.u32 2102212464, %v4365
    %v4378 = vshrl.u32 920167782, %v4366
    %v4379 = vor.u32 %v4377, %v4378
    %v4380 = vshll.u32 920167782, %v4365
    %v4381 = vshrl.u32 1326507024, %v4366
    %v4382 = vor.u32 %v4380, %v4381
    %vm4383 = vcmp.lt.s32.totalorder %v4364, 1
    %vm4384 = vcmp.lt.s32.totalorder %v4364, 2
    %vm4385 = vcmp.lt.s32.totalorder %v4364, 3
    %vm4386 = vcmp.lt.s32.totalorder %v4364, 4
    %v4387 = vsel %vm4383, %v4367, %v4370
    %v4388 = vsel %vm4386, %v4376, 2102212464
    %v4389 = vsel %vm4385, %v4373, %v4388
    %v4390 = vsel %vm4384, %v4387, %v4389
    %v4391 = vsel %vm4383, %v4370, %v4373
    %v4392 = vsel %vm4386, %v4379, 920167782
    %v4393 = vsel %vm4385, %v4376, %v4392
    %v4394 = vsel %vm4384, %v4391, %v4393
    %v4395 = vsel %vm4383, %v4373, %v4376
    %v4396 = vsel %vm4386, %v4382, 1326507024
    %v4397 = vsel %vm4385, %v4379, %v4396
    %v4398 = vsel %vm4384, %v4395, %v4397
    %v4399 = vshll.u32 %v4359, 8
    %v4400 = vmul.u32.u64.compose %v4399, %v4398
    %v4401 = vextract.low.u32 %v4400
    %v4402 = vextract.high.u32 %v4400
    %v4403 = vmul.u32.u64.compose %v4399, %v4394
    %v4404 = vextract.low.u32 %v4403
    %v4405 = vextract.high.u32 %v4403
    %v4406 = vmul.u32 %v4399, %v4390
    %v4407 = vadd.s32 %v4402, %v4404
    %vm4408 = vc.u32 %v4402, %v4404
    %v4409 = vadd.s32 %v4405, 1
    %v4410 = vsel %vm4408, %v4409, %v4405
    %v4411 = vadd.s32 %v4406, %v4410
    %v4412 = vadd.s32 %v4411, 536870912
    %v4413 = vshrl.u32 %v4412, 30
    %v4414 = vshll.u32 %v4413, 30
    %v4415 = vsub.s32 %v4411, %v4414
    %vm4416 = vcmp.lt.s32.totalorder %v4415, 0
    %v4417 = vsub.s32 0, %v4415
    %v4418 = vsel %vm4416, %v4417, %v4415
    %v4419 = vclz %v4418
    %v4420 = vsub.s32 %v4419, 2
    %vm4421 = vcmp.gt.s32.totalorder 0, %v4420
    %v4422 = vsel %vm4421, 0, %v4420
    %v4423 = vsub.s32 32, %v4422
    %v4424 = vshll.u32 %v4415, %v4422
    %v4425 = vshrl.u32 %v4407, %v4423
    %v4426 = vor.u32 %v4424, %v4425
    %v4427 = vsub.s32 4294967266, %v4422
    %v4428 = vadd.s32 %v4427, 127
    %v4429 = vshll.u32 %v4428, 23
    %v4430 = vor.u32 4788187, %v4429
    %v4431 = vand.u32 2147483647, %v4430
    %v4433 = vcvt.s32.f32 %v4426
    %v4434 = vmul.f32 %v4433, %v4431
    %v4435 = vxor.u32 %v4434, 2147483648
    %v4436 = vsel %vm4353, %v4435, %v4434
    %v4437 = vsub.s32 4, %v4413
    %v4438 = vsel %vm4353, %v4437, %v4413
    %v4439 = vsel %vm4352, %v239, %v4436
    %v4440 = vsel %vm4352, 0, %v4438
    %v4441 = vcosq.f32.pop %v4439
    %v4442 = vsinq.f32.pop %v4439
    %vm4443 = vweird.f32 %v239
    %v4444 = vadd.s32 %v4440, 3
    %v4445 = vand.u32 %v4444, 3
    %vm4446 = vcmp.lt.s32.totalorder %v4445, 2
    %vm4447 = vcmp.eq.s32.totalorder %v4445, 0
    %v4448 = vxor.u32 %v4442, 2147483648
    %v4449 = vsel %vm4447, %v4441, %v4448
    %vm4450 = vcmp.eq.s32.totalorder %v4445, 2
    %v4451 = vxor.u32 %v4441, 2147483648
    %v4452 = vsel %vm4450, %v4451, %v4442
    %v4453 = vsel %vm4446, %v4449, %v4452
    %v4454 = vsel %vm4443, nan, %v4453
    %v4455 = vand.u32 2147483647, %v244
    %vm4456 = vcmp.le.f32.partialorder %v4455, 0.7853982
    %vm4457 = vcmp.lt.s32.totalorder %v244, 0
    %v4458 = vand.u32 %v244, 2139095040
    %v4459 = vshrl.u32 %v4458, 23
    %v4460 = vsub.s32 %v4459, 127
    %v4461 = vand.u32 2147483647, %v244
    %v4462 = vand.u32 %v4461, 8388607
    %v4463 = vor.u32 %v4462, 8388608
    %v4464 = vsub.s32 0, %v4463
    %v4465 = vadd.s32 %v4460, 1
    %vm4466 = vcmp.gt.s32.totalorder %v4465, 0
    %v4467 = vsel %vm4466, %v4465, 0
    %v4468 = vshrl.u32 %v4467, 5
    %v4469 = vand.u32 %v4467, 31
    %v4470 = vsub.s32 32, %v4469
    %v4471 = vshrl.u32 683565275, %v4470
    %v4472 = vshll.u32 683565275, %v4469
    %v4473 = vshrl.u32 2475754826, %v4470
    %v4474 = vor.u32 %v4472, %v4473
    %v4475 = vshll.u32 2475754826, %v4469
    %v4476 = vshrl.u32 2131351028, %v4470
    %v4477 = vor.u32 %v4475, %v4476
    %v4478 = vshll.u32 2131351028, %v4469
    %v4479 = vshrl.u32 2102212464, %v4470
    %v4480 = vor.u32 %v4478, %v4479
    %v4481 = vshll.u32 2102212464, %v4469
    %v4482 = vshrl.u32 920167782, %v4470
    %v4483 = vor.u32 %v4481, %v4482
    %v4484 = vshll.u32 920167782, %v4469
    %v4485 = vshrl.u32 1326507024, %v4470
    %v4486 = vor.u32 %v4484, %v4485
    %vm4487 = vcmp.lt.s32.totalorder %v4468, 1
    %vm4488 = vcmp.lt.s32.totalorder %v4468, 2
    %vm4489 = vcmp.lt.s32.totalorder %v4468, 3
    %vm4490 = vcmp.lt.s32.totalorder %v4468, 4
    %v4491 = vsel %vm4487, %v4471, %v4474
    %v4492 = vsel %vm4490, %v4480, 2102212464
    %v4493 = vsel %vm4489, %v4477, %v4492
    %v4494 = vsel %vm4488, %v4491, %v4493
    %v4495 = vsel %vm4487, %v4474, %v4477
    %v4496 = vsel %vm4490, %v4483, 920167782
    %v4497 = vsel %vm4489, %v4480, %v4496
    %v4498 = vsel %vm4488, %v4495, %v4497
    %v4499 = vsel %vm4487, %v4477, %v4480
    %v4500 = vsel %vm4490, %v4486, 1326507024
    %v4501 = vsel %vm4489, %v4483, %v4500
    %v4502 = vsel %vm4488, %v4499, %v4501
    %v4503 = vshll.u32 %v4463, 8
    %v4504 = vmul.u32.u64.compose %v4503, %v4502
    %v4505 = vextract.low.u32 %v4504
    %v4506 = vextract.high.u32 %v4504
    %v4507 = vmul.u32.u64.compose %v4503, %v4498
    %v4508 = vextract.low.u32 %v4507
    %v4509 = vextract.high.u32 %v4507
    %v4510 = vmul.u32 %v4503, %v4494
    %v4511 = vadd.s32 %v4506, %v4508
    %vm4512 = vc.u32 %v4506, %v4508
    %v4513 = vadd.s32 %v4509, 1
    %v4514 = vsel %vm4512, %v4513, %v4509
    %v4515 = vadd.s32 %v4510, %v4514
    %v4516 = vadd.s32 %v4515, 536870912
    %v4517 = vshrl.u32 %v4516, 30
    %v4518 = vshll.u32 %v4517, 30
    %v4519 = vsub.s32 %v4515, %v4518
    %vm4520 = vcmp.lt.s32.totalorder %v4519, 0
    %v4521 = vsub.s32 0, %v4519
    %v4522 = vsel %vm4520, %v4521, %v4519
    %v4523 = vclz %v4522
    %v4524 = vsub.s32 %v4523, 2
    %vm4525 = vcmp.gt.s32.totalorder 0, %v4524
    %v4526 = vsel %vm4525, 0, %v4524
    %v4527 = vsub.s32 32, %v4526
    %v4528 = vshll.u32 %v4519, %v4526
    %v4529 = vshrl.u32 %v4511, %v4527
    %v4530 = vor.u32 %v4528, %v4529
    %v4531 = vsub.s32 4294967266, %v4526
    %v4532 = vadd.s32 %v4531, 127
    %v4533 = vshll.u32 %v4532, 23
    %v4534 = vor.u32 4788187, %v4533
    %v4535 = vand.u32 2147483647, %v4534
    %v4537 = vcvt.s32.f32 %v4530
    %v4538 = vmul.f32 %v4537, %v4535
    %v4539 = vxor.u32 %v4538, 2147483648
    %v4540 = vsel %vm4457, %v4539, %v4538
    %v4541 = vsub.s32 4, %v4517
    %v4542 = vsel %vm4457, %v4541, %v4517
    %v4543 = vsel %vm4456, %v244, %v4540
    %v4544 = vsel %vm4456, 0, %v4542
    %v4545 = vcosq.f32.pop %v4543
    %v4546 = vsinq.f32.pop %v4543
    %vm4547 = vweird.f32 %v244
    %v4548 = vadd.s32 %v4544, 3
    %v4549 = vand.u32 %v4548, 3
    %vm4550 = vcmp.lt.s32.totalorder %v4549, 2
    %vm4551 = vcmp.eq.s32.totalorder %v4549, 0
    %v4552 = vxor.u32 %v4546, 2147483648
    %v4553 = vsel %vm4551, %v4545, %v4552
    %vm4554 = vcmp.eq.s32.totalorder %v4549, 2
    %v4555 = vxor.u32 %v4545, 2147483648
    %v4556 = vsel %vm4554, %v4555, %v4546
    %v4557 = vsel %vm4550, %v4553, %v4556
    %v4558 = vsel %vm4547, nan, %v4557
    %v4559 = vand.u32 2147483647, %v249
    %vm4560 = vcmp.le.f32.partialorder %v4559, 0.7853982
    %vm4561 = vcmp.lt.s32.totalorder %v249, 0
    %v4562 = vand.u32 %v249, 2139095040
    %v4563 = vshrl.u32 %v4562, 23
    %v4564 = vsub.s32 %v4563, 127
    %v4565 = vand.u32 2147483647, %v249
    %v4566 = vand.u32 %v4565, 8388607
    %v4567 = vor.u32 %v4566, 8388608
    %v4568 = vsub.s32 0, %v4567
    %v4569 = vadd.s32 %v4564, 1
    %vm4570 = vcmp.gt.s32.totalorder %v4569, 0
    %v4571 = vsel %vm4570, %v4569, 0
    %v4572 = vshrl.u32 %v4571, 5
    %v4573 = vand.u32 %v4571, 31
    %v4574 = vsub.s32 32, %v4573
    %v4575 = vshrl.u32 683565275, %v4574
    %v4576 = vshll.u32 683565275, %v4573
    %v4577 = vshrl.u32 2475754826, %v4574
    %v4578 = vor.u32 %v4576, %v4577
    %v4579 = vshll.u32 2475754826, %v4573
    %v4580 = vshrl.u32 2131351028, %v4574
    %v4581 = vor.u32 %v4579, %v4580
    %v4582 = vshll.u32 2131351028, %v4573
    %v4583 = vshrl.u32 2102212464, %v4574
    %v4584 = vor.u32 %v4582, %v4583
    %v4585 = vshll.u32 2102212464, %v4573
    %v4586 = vshrl.u32 920167782, %v4574
    %v4587 = vor.u32 %v4585, %v4586
    %v4588 = vshll.u32 920167782, %v4573
    %v4589 = vshrl.u32 1326507024, %v4574
    %v4590 = vor.u32 %v4588, %v4589
    %vm4591 = vcmp.lt.s32.totalorder %v4572, 1
    %vm4592 = vcmp.lt.s32.totalorder %v4572, 2
    %vm4593 = vcmp.lt.s32.totalorder %v4572, 3
    %vm4594 = vcmp.lt.s32.totalorder %v4572, 4
    %v4595 = vsel %vm4591, %v4575, %v4578
    %v4596 = vsel %vm4594, %v4584, 2102212464
    %v4597 = vsel %vm4593, %v4581, %v4596
    %v4598 = vsel %vm4592, %v4595, %v4597
    %v4599 = vsel %vm4591, %v4578, %v4581
    %v4600 = vsel %vm4594, %v4587, 920167782
    %v4601 = vsel %vm4593, %v4584, %v4600
    %v4602 = vsel %vm4592, %v4599, %v4601
    %v4603 = vsel %vm4591, %v4581, %v4584
    %v4604 = vsel %vm4594, %v4590, 1326507024
    %v4605 = vsel %vm4593, %v4587, %v4604
    %v4606 = vsel %vm4592, %v4603, %v4605
    %v4607 = vshll.u32 %v4567, 8
    %v4608 = vmul.u32.u64.compose %v4607, %v4606
    %v4609 = vextract.low.u32 %v4608
    %v4610 = vextract.high.u32 %v4608
    %v4611 = vmul.u32.u64.compose %v4607, %v4602
    %v4612 = vextract.low.u32 %v4611
    %v4613 = vextract.high.u32 %v4611
    %v4614 = vmul.u32 %v4607, %v4598
    %v4615 = vadd.s32 %v4610, %v4612
    %vm4616 = vc.u32 %v4610, %v4612
    %v4617 = vadd.s32 %v4613, 1
    %v4618 = vsel %vm4616, %v4617, %v4613
    %v4619 = vadd.s32 %v4614, %v4618
    %v4620 = vadd.s32 %v4619, 536870912
    %v4621 = vshrl.u32 %v4620, 30
    %v4622 = vshll.u32 %v4621, 30
    %v4623 = vsub.s32 %v4619, %v4622
    %vm4624 = vcmp.lt.s32.totalorder %v4623, 0
    %v4625 = vsub.s32 0, %v4623
    %v4626 = vsel %vm4624, %v4625, %v4623
    %v4627 = vclz %v4626
    %v4628 = vsub.s32 %v4627, 2
    %vm4629 = vcmp.gt.s32.totalorder 0, %v4628
    %v4630 = vsel %vm4629, 0, %v4628
    %v4631 = vsub.s32 32, %v4630
    %v4632 = vshll.u32 %v4623, %v4630
    %v4633 = vshrl.u32 %v4615, %v4631
    %v4634 = vor.u32 %v4632, %v4633
    %v4635 = vsub.s32 4294967266, %v4630
    %v4636 = vadd.s32 %v4635, 127
    %v4637 = vshll.u32 %v4636, 23
    %v4638 = vor.u32 4788187, %v4637
    %v4639 = vand.u32 2147483647, %v4638
    %v4641 = vcvt.s32.f32 %v4634
    %v4642 = vmul.f32 %v4641, %v4639
    %v4643 = vxor.u32 %v4642, 2147483648
    %v4644 = vsel %vm4561, %v4643, %v4642
    %v4645 = vsub.s32 4, %v4621
    %v4646 = vsel %vm4561, %v4645, %v4621
    %v4647 = vsel %vm4560, %v249, %v4644
    %v4648 = vsel %vm4560, 0, %v4646
    %v4649 = vcosq.f32.pop %v4647
    %v4650 = vsinq.f32.pop %v4647
    %vm4651 = vweird.f32 %v249
    %v4652 = vadd.s32 %v4648, 3
    %v4653 = vand.u32 %v4652, 3
    %vm4654 = vcmp.lt.s32.totalorder %v4653, 2
    %vm4655 = vcmp.eq.s32.totalorder %v4653, 0
    %v4656 = vxor.u32 %v4650, 2147483648
    %v4657 = vsel %vm4655, %v4649, %v4656
    %vm4658 = vcmp.eq.s32.totalorder %v4653, 2
    %v4659 = vxor.u32 %v4649, 2147483648
    %v4660 = vsel %vm4658, %v4659, %v4650
    %v4661 = vsel %vm4654, %v4657, %v4660
    %v4662 = vsel %vm4651, nan, %v4661
    %v4663 = vand.u32 2147483647, %v254
    %vm4664 = vcmp.le.f32.partialorder %v4663, 0.7853982
    %vm4665 = vcmp.lt.s32.totalorder %v254, 0
    %v4666 = vand.u32 %v254, 2139095040
    %v4667 = vshrl.u32 %v4666, 23
    %v4668 = vsub.s32 %v4667, 127
    %v4669 = vand.u32 2147483647, %v254
    %v4670 = vand.u32 %v4669, 8388607
    %v4671 = vor.u32 %v4670, 8388608
    %v4672 = vsub.s32 0, %v4671
    %v4673 = vadd.s32 %v4668, 1
    %vm4674 = vcmp.gt.s32.totalorder %v4673, 0
    %v4675 = vsel %vm4674, %v4673, 0
    %v4676 = vshrl.u32 %v4675, 5
    %v4677 = vand.u32 %v4675, 31
    %v4678 = vsub.s32 32, %v4677
    %v4679 = vshrl.u32 683565275, %v4678
    %v4680 = vshll.u32 683565275, %v4677
    %v4681 = vshrl.u32 2475754826, %v4678
    %v4682 = vor.u32 %v4680, %v4681
    %v4683 = vshll.u32 2475754826, %v4677
    %v4684 = vshrl.u32 2131351028, %v4678
    %v4685 = vor.u32 %v4683, %v4684
    %v4686 = vshll.u32 2131351028, %v4677
    %v4687 = vshrl.u32 2102212464, %v4678
    %v4688 = vor.u32 %v4686, %v4687
    %v4689 = vshll.u32 2102212464, %v4677
    %v4690 = vshrl.u32 920167782, %v4678
    %v4691 = vor.u32 %v4689, %v4690
    %v4692 = vshll.u32 920167782, %v4677
    %v4693 = vshrl.u32 1326507024, %v4678
    %v4694 = vor.u32 %v4692, %v4693
    %vm4695 = vcmp.lt.s32.totalorder %v4676, 1
    %vm4696 = vcmp.lt.s32.totalorder %v4676, 2
    %vm4697 = vcmp.lt.s32.totalorder %v4676, 3
    %vm4698 = vcmp.lt.s32.totalorder %v4676, 4
    %v4699 = vsel %vm4695, %v4679, %v4682
    %v4700 = vsel %vm4698, %v4688, 2102212464
    %v4701 = vsel %vm4697, %v4685, %v4700
    %v4702 = vsel %vm4696, %v4699, %v4701
    %v4703 = vsel %vm4695, %v4682, %v4685
    %v4704 = vsel %vm4698, %v4691, 920167782
    %v4705 = vsel %vm4697, %v4688, %v4704
    %v4706 = vsel %vm4696, %v4703, %v4705
    %v4707 = vsel %vm4695, %v4685, %v4688
    %v4708 = vsel %vm4698, %v4694, 1326507024
    %v4709 = vsel %vm4697, %v4691, %v4708
    %v4710 = vsel %vm4696, %v4707, %v4709
    %v4711 = vshll.u32 %v4671, 8
    %v4712 = vmul.u32.u64.compose %v4711, %v4710
    %v4713 = vextract.low.u32 %v4712
    %v4714 = vextract.high.u32 %v4712
    %v4715 = vmul.u32.u64.compose %v4711, %v4706
    %v4716 = vextract.low.u32 %v4715
    %v4717 = vextract.high.u32 %v4715
    %v4718 = vmul.u32 %v4711, %v4702
    %v4719 = vadd.s32 %v4714, %v4716
    %vm4720 = vc.u32 %v4714, %v4716
    %v4721 = vadd.s32 %v4717, 1
    %v4722 = vsel %vm4720, %v4721, %v4717
    %v4723 = vadd.s32 %v4718, %v4722
    %v4724 = vadd.s32 %v4723, 536870912
    %v4725 = vshrl.u32 %v4724, 30
    %v4726 = vshll.u32 %v4725, 30
    %v4727 = vsub.s32 %v4723, %v4726
    %vm4728 = vcmp.lt.s32.totalorder %v4727, 0
    %v4729 = vsub.s32 0, %v4727
    %v4730 = vsel %vm4728, %v4729, %v4727
    %v4731 = vclz %v4730
    %v4732 = vsub.s32 %v4731, 2
    %vm4733 = vcmp.gt.s32.totalorder 0, %v4732
    %v4734 = vsel %vm4733, 0, %v4732
    %v4735 = vsub.s32 32, %v4734
    %v4736 = vshll.u32 %v4727, %v4734
    %v4737 = vshrl.u32 %v4719, %v4735
    %v4738 = vor.u32 %v4736, %v4737
    %v4739 = vsub.s32 4294967266, %v4734
    %v4740 = vadd.s32 %v4739, 127
    %v4741 = vshll.u32 %v4740, 23
    %v4742 = vor.u32 4788187, %v4741
    %v4743 = vand.u32 2147483647, %v4742
    %v4745 = vcvt.s32.f32 %v4738
    %v4746 = vmul.f32 %v4745, %v4743
    %v4747 = vxor.u32 %v4746, 2147483648
    %v4748 = vsel %vm4665, %v4747, %v4746
    %v4749 = vsub.s32 4, %v4725
    %v4750 = vsel %vm4665, %v4749, %v4725
    %v4751 = vsel %vm4664, %v254, %v4748
    %v4752 = vsel %vm4664, 0, %v4750
    %v4753 = vcosq.f32.pop %v4751
    %v4754 = vsinq.f32.pop %v4751
    %vm4755 = vweird.f32 %v254
    %v4756 = vadd.s32 %v4752, 3
    %v4757 = vand.u32 %v4756, 3
    %vm4758 = vcmp.lt.s32.totalorder %v4757, 2
    %vm4759 = vcmp.eq.s32.totalorder %v4757, 0
    %v4760 = vxor.u32 %v4754, 2147483648
    %v4761 = vsel %vm4759, %v4753, %v4760
    %vm4762 = vcmp.eq.s32.totalorder %v4757, 2
    %v4763 = vxor.u32 %v4753, 2147483648
    %v4764 = vsel %vm4762, %v4763, %v4754
    %v4765 = vsel %vm4758, %v4761, %v4764
    %v4766 = vsel %vm4755, nan, %v4765
    %v4767 = vand.u32 2147483647, %v259
    %vm4768 = vcmp.le.f32.partialorder %v4767, 0.7853982
    %vm4769 = vcmp.lt.s32.totalorder %v259, 0
    %v4770 = vand.u32 %v259, 2139095040
    %v4771 = vshrl.u32 %v4770, 23
    %v4772 = vsub.s32 %v4771, 127
    %v4773 = vand.u32 2147483647, %v259
    %v4774 = vand.u32 %v4773, 8388607
    %v4775 = vor.u32 %v4774, 8388608
    %v4776 = vsub.s32 0, %v4775
    %v4777 = vadd.s32 %v4772, 1
    %vm4778 = vcmp.gt.s32.totalorder %v4777, 0
    %v4779 = vsel %vm4778, %v4777, 0
    %v4780 = vshrl.u32 %v4779, 5
    %v4781 = vand.u32 %v4779, 31
    %v4782 = vsub.s32 32, %v4781
    %v4783 = vshrl.u32 683565275, %v4782
    %v4784 = vshll.u32 683565275, %v4781
    %v4785 = vshrl.u32 2475754826, %v4782
    %v4786 = vor.u32 %v4784, %v4785
    %v4787 = vshll.u32 2475754826, %v4781
    %v4788 = vshrl.u32 2131351028, %v4782
    %v4789 = vor.u32 %v4787, %v4788
    %v4790 = vshll.u32 2131351028, %v4781
    %v4791 = vshrl.u32 2102212464, %v4782
    %v4792 = vor.u32 %v4790, %v4791
    %v4793 = vshll.u32 2102212464, %v4781
    %v4794 = vshrl.u32 920167782, %v4782
    %v4795 = vor.u32 %v4793, %v4794
    %v4796 = vshll.u32 920167782, %v4781
    %v4797 = vshrl.u32 1326507024, %v4782
    %v4798 = vor.u32 %v4796, %v4797
    %vm4799 = vcmp.lt.s32.totalorder %v4780, 1
    %vm4800 = vcmp.lt.s32.totalorder %v4780, 2
    %vm4801 = vcmp.lt.s32.totalorder %v4780, 3
    %vm4802 = vcmp.lt.s32.totalorder %v4780, 4
    %v4803 = vsel %vm4799, %v4783, %v4786
    %v4804 = vsel %vm4802, %v4792, 2102212464
    %v4805 = vsel %vm4801, %v4789, %v4804
    %v4806 = vsel %vm4800, %v4803, %v4805
    %v4807 = vsel %vm4799, %v4786, %v4789
    %v4808 = vsel %vm4802, %v4795, 920167782
    %v4809 = vsel %vm4801, %v4792, %v4808
    %v4810 = vsel %vm4800, %v4807, %v4809
    %v4811 = vsel %vm4799, %v4789, %v4792
    %v4812 = vsel %vm4802, %v4798, 1326507024
    %v4813 = vsel %vm4801, %v4795, %v4812
    %v4814 = vsel %vm4800, %v4811, %v4813
    %v4815 = vshll.u32 %v4775, 8
    %v4816 = vmul.u32.u64.compose %v4815, %v4814
    %v4817 = vextract.low.u32 %v4816
    %v4818 = vextract.high.u32 %v4816
    %v4819 = vmul.u32.u64.compose %v4815, %v4810
    %v4820 = vextract.low.u32 %v4819
    %v4821 = vextract.high.u32 %v4819
    %v4822 = vmul.u32 %v4815, %v4806
    %v4823 = vadd.s32 %v4818, %v4820
    %vm4824 = vc.u32 %v4818, %v4820
    %v4825 = vadd.s32 %v4821, 1
    %v4826 = vsel %vm4824, %v4825, %v4821
    %v4827 = vadd.s32 %v4822, %v4826
    %v4828 = vadd.s32 %v4827, 536870912
    %v4829 = vshrl.u32 %v4828, 30
    %v4830 = vshll.u32 %v4829, 30
    %v4831 = vsub.s32 %v4827, %v4830
    %vm4832 = vcmp.lt.s32.totalorder %v4831, 0
    %v4833 = vsub.s32 0, %v4831
    %v4834 = vsel %vm4832, %v4833, %v4831
    %v4835 = vclz %v4834
    %v4836 = vsub.s32 %v4835, 2
    %vm4837 = vcmp.gt.s32.totalorder 0, %v4836
    %v4838 = vsel %vm4837, 0, %v4836
    %v4839 = vsub.s32 32, %v4838
    %v4840 = vshll.u32 %v4831, %v4838
    %v4841 = vshrl.u32 %v4823, %v4839
    %v4842 = vor.u32 %v4840, %v4841
    %v4843 = vsub.s32 4294967266, %v4838
    %v4844 = vadd.s32 %v4843, 127
    %v4845 = vshll.u32 %v4844, 23
    %v4846 = vor.u32 4788187, %v4845
    %v4847 = vand.u32 2147483647, %v4846
    %v4849 = vcvt.s32.f32 %v4842
    %v4850 = vmul.f32 %v4849, %v4847
    %v4851 = vxor.u32 %v4850, 2147483648
    %v4852 = vsel %vm4769, %v4851, %v4850
    %v4853 = vsub.s32 4, %v4829
    %v4854 = vsel %vm4769, %v4853, %v4829
    %v4855 = vsel %vm4768, %v259, %v4852
    %v4856 = vsel %vm4768, 0, %v4854
    %v4857 = vcosq.f32.pop %v4855
    %v4858 = vsinq.f32.pop %v4855
    %vm4859 = vweird.f32 %v259
    %v4860 = vadd.s32 %v4856, 3
    %v4861 = vand.u32 %v4860, 3
    %vm4862 = vcmp.lt.s32.totalorder %v4861, 2
    %vm4863 = vcmp.eq.s32.totalorder %v4861, 0
    %v4864 = vxor.u32 %v4858, 2147483648
    %v4865 = vsel %vm4863, %v4857, %v4864
    %vm4866 = vcmp.eq.s32.totalorder %v4861, 2
    %v4867 = vxor.u32 %v4857, 2147483648
    %v4868 = vsel %vm4866, %v4867, %v4858
    %v4869 = vsel %vm4862, %v4865, %v4868
    %v4870 = vsel %vm4859, nan, %v4869
    %v4871 = vand.u32 2147483647, %v264
    %vm4872 = vcmp.le.f32.partialorder %v4871, 0.7853982
    %vm4873 = vcmp.lt.s32.totalorder %v264, 0
    %v4874 = vand.u32 %v264, 2139095040
    %v4875 = vshrl.u32 %v4874, 23
    %v4876 = vsub.s32 %v4875, 127
    %v4877 = vand.u32 2147483647, %v264
    %v4878 = vand.u32 %v4877, 8388607
    %v4879 = vor.u32 %v4878, 8388608
    %v4880 = vsub.s32 0, %v4879
    %v4881 = vadd.s32 %v4876, 1
    %vm4882 = vcmp.gt.s32.totalorder %v4881, 0
    %v4883 = vsel %vm4882, %v4881, 0
    %v4884 = vshrl.u32 %v4883, 5
    %v4885 = vand.u32 %v4883, 31
    %v4886 = vsub.s32 32, %v4885
    %v4887 = vshrl.u32 683565275, %v4886
    %v4888 = vshll.u32 683565275, %v4885
    %v4889 = vshrl.u32 2475754826, %v4886
    %v4890 = vor.u32 %v4888, %v4889
    %v4891 = vshll.u32 2475754826, %v4885
    %v4892 = vshrl.u32 2131351028, %v4886
    %v4893 = vor.u32 %v4891, %v4892
    %v4894 = vshll.u32 2131351028, %v4885
    %v4895 = vshrl.u32 2102212464, %v4886
    %v4896 = vor.u32 %v4894, %v4895
    %v4897 = vshll.u32 2102212464, %v4885
    %v4898 = vshrl.u32 920167782, %v4886
    %v4899 = vor.u32 %v4897, %v4898
    %v4900 = vshll.u32 920167782, %v4885
    %v4901 = vshrl.u32 1326507024, %v4886
    %v4902 = vor.u32 %v4900, %v4901
    %vm4903 = vcmp.lt.s32.totalorder %v4884, 1
    %vm4904 = vcmp.lt.s32.totalorder %v4884, 2
    %vm4905 = vcmp.lt.s32.totalorder %v4884, 3
    %vm4906 = vcmp.lt.s32.totalorder %v4884, 4
    %v4907 = vsel %vm4903, %v4887, %v4890
    %v4908 = vsel %vm4906, %v4896, 2102212464
    %v4909 = vsel %vm4905, %v4893, %v4908
    %v4910 = vsel %vm4904, %v4907, %v4909
    %v4911 = vsel %vm4903, %v4890, %v4893
    %v4912 = vsel %vm4906, %v4899, 920167782
    %v4913 = vsel %vm4905, %v4896, %v4912
    %v4914 = vsel %vm4904, %v4911, %v4913
    %v4915 = vsel %vm4903, %v4893, %v4896
    %v4916 = vsel %vm4906, %v4902, 1326507024
    %v4917 = vsel %vm4905, %v4899, %v4916
    %v4918 = vsel %vm4904, %v4915, %v4917
    %v4919 = vshll.u32 %v4879, 8
    %v4920 = vmul.u32.u64.compose %v4919, %v4918
    %v4921 = vextract.low.u32 %v4920
    %v4922 = vextract.high.u32 %v4920
    %v4923 = vmul.u32.u64.compose %v4919, %v4914
    %v4924 = vextract.low.u32 %v4923
    %v4925 = vextract.high.u32 %v4923
    %v4926 = vmul.u32 %v4919, %v4910
    %v4927 = vadd.s32 %v4922, %v4924
    %vm4928 = vc.u32 %v4922, %v4924
    %v4929 = vadd.s32 %v4925, 1
    %v4930 = vsel %vm4928, %v4929, %v4925
    %v4931 = vadd.s32 %v4926, %v4930
    %v4932 = vadd.s32 %v4931, 536870912
    %v4933 = vshrl.u32 %v4932, 30
    %v4934 = vshll.u32 %v4933, 30
    %v4935 = vsub.s32 %v4931, %v4934
    %vm4936 = vcmp.lt.s32.totalorder %v4935, 0
    %v4937 = vsub.s32 0, %v4935
    %v4938 = vsel %vm4936, %v4937, %v4935
    %v4939 = vclz %v4938
    %v4940 = vsub.s32 %v4939, 2
    %vm4941 = vcmp.gt.s32.totalorder 0, %v4940
    %v4942 = vsel %vm4941, 0, %v4940
    %v4943 = vsub.s32 32, %v4942
    %v4944 = vshll.u32 %v4935, %v4942
    %v4945 = vshrl.u32 %v4927, %v4943
    %v4946 = vor.u32 %v4944, %v4945
    %v4947 = vsub.s32 4294967266, %v4942
    %v4948 = vadd.s32 %v4947, 127
    %v4949 = vshll.u32 %v4948, 23
    %v4950 = vor.u32 4788187, %v4949
    %v4951 = vand.u32 2147483647, %v4950
    %v4953 = vcvt.s32.f32 %v4946
    %v4954 = vmul.f32 %v4953, %v4951
    %v4955 = vxor.u32 %v4954, 2147483648
    %v4956 = vsel %vm4873, %v4955, %v4954
    %v4957 = vsub.s32 4, %v4933
    %v4958 = vsel %vm4873, %v4957, %v4933
    %v4959 = vsel %vm4872, %v264, %v4956
    %v4960 = vsel %vm4872, 0, %v4958
    %v4961 = vcosq.f32.pop %v4959
    %v4962 = vsinq.f32.pop %v4959
    %vm4963 = vweird.f32 %v264
    %v4964 = vadd.s32 %v4960, 3
    %v4965 = vand.u32 %v4964, 3
    %vm4966 = vcmp.lt.s32.totalorder %v4965, 2
    %vm4967 = vcmp.eq.s32.totalorder %v4965, 0
    %v4968 = vxor.u32 %v4962, 2147483648
    %v4969 = vsel %vm4967, %v4961, %v4968
    %vm4970 = vcmp.eq.s32.totalorder %v4965, 2
    %v4971 = vxor.u32 %v4961, 2147483648
    %v4972 = vsel %vm4970, %v4971, %v4962
    %v4973 = vsel %vm4966, %v4969, %v4972
    %v4974 = vsel %vm4963, nan, %v4973
    %v4975 = vand.u32 2147483647, %v269
    %vm4976 = vcmp.le.f32.partialorder %v4975, 0.7853982
    %vm4977 = vcmp.lt.s32.totalorder %v269, 0
    %v4978 = vand.u32 %v269, 2139095040
    %v4979 = vshrl.u32 %v4978, 23
    %v4980 = vsub.s32 %v4979, 127
    %v4981 = vand.u32 2147483647, %v269
    %v4982 = vand.u32 %v4981, 8388607
    %v4983 = vor.u32 %v4982, 8388608
    %v4984 = vsub.s32 0, %v4983
    %v4985 = vadd.s32 %v4980, 1
    %vm4986 = vcmp.gt.s32.totalorder %v4985, 0
    %v4987 = vsel %vm4986, %v4985, 0
    %v4988 = vshrl.u32 %v4987, 5
    %v4989 = vand.u32 %v4987, 31
    %v4990 = vsub.s32 32, %v4989
    %v4991 = vshrl.u32 683565275, %v4990
    %v4992 = vshll.u32 683565275, %v4989
    %v4993 = vshrl.u32 2475754826, %v4990
    %v4994 = vor.u32 %v4992, %v4993
    %v4995 = vshll.u32 2475754826, %v4989
    %v4996 = vshrl.u32 2131351028, %v4990
    %v4997 = vor.u32 %v4995, %v4996
    %v4998 = vshll.u32 2131351028, %v4989
    %v4999 = vshrl.u32 2102212464, %v4990
    %v5000 = vor.u32 %v4998, %v4999
    %v5001 = vshll.u32 2102212464, %v4989
    %v5002 = vshrl.u32 920167782, %v4990
    %v5003 = vor.u32 %v5001, %v5002
    %v5004 = vshll.u32 920167782, %v4989
    %v5005 = vshrl.u32 1326507024, %v4990
    %v5006 = vor.u32 %v5004, %v5005
    %vm5007 = vcmp.lt.s32.totalorder %v4988, 1
    %vm5008 = vcmp.lt.s32.totalorder %v4988, 2
    %vm5009 = vcmp.lt.s32.totalorder %v4988, 3
    %vm5010 = vcmp.lt.s32.totalorder %v4988, 4
    %v5011 = vsel %vm5007, %v4991, %v4994
    %v5012 = vsel %vm5010, %v5000, 2102212464
    %v5013 = vsel %vm5009, %v4997, %v5012
    %v5014 = vsel %vm5008, %v5011, %v5013
    %v5015 = vsel %vm5007, %v4994, %v4997
    %v5016 = vsel %vm5010, %v5003, 920167782
    %v5017 = vsel %vm5009, %v5000, %v5016
    %v5018 = vsel %vm5008, %v5015, %v5017
    %v5019 = vsel %vm5007, %v4997, %v5000
    %v5020 = vsel %vm5010, %v5006, 1326507024
    %v5021 = vsel %vm5009, %v5003, %v5020
    %v5022 = vsel %vm5008, %v5019, %v5021
    %v5023 = vshll.u32 %v4983, 8
    %v5024 = vmul.u32.u64.compose %v5023, %v5022
    %v5025 = vextract.low.u32 %v5024
    %v5026 = vextract.high.u32 %v5024
    %v5027 = vmul.u32.u64.compose %v5023, %v5018
    %v5028 = vextract.low.u32 %v5027
    %v5029 = vextract.high.u32 %v5027
    %v5030 = vmul.u32 %v5023, %v5014
    %v5031 = vadd.s32 %v5026, %v5028
    %vm5032 = vc.u32 %v5026, %v5028
    %v5033 = vadd.s32 %v5029, 1
    %v5034 = vsel %vm5032, %v5033, %v5029
    %v5035 = vadd.s32 %v5030, %v5034
    %v5036 = vadd.s32 %v5035, 536870912
    %v5037 = vshrl.u32 %v5036, 30
    %v5038 = vshll.u32 %v5037, 30
    %v5039 = vsub.s32 %v5035, %v5038
    %vm5040 = vcmp.lt.s32.totalorder %v5039, 0
    %v5041 = vsub.s32 0, %v5039
    %v5042 = vsel %vm5040, %v5041, %v5039
    %v5043 = vclz %v5042
    %v5044 = vsub.s32 %v5043, 2
    %vm5045 = vcmp.gt.s32.totalorder 0, %v5044
    %v5046 = vsel %vm5045, 0, %v5044
    %v5047 = vsub.s32 32, %v5046
    %v5048 = vshll.u32 %v5039, %v5046
    %v5049 = vshrl.u32 %v5031, %v5047
    %v5050 = vor.u32 %v5048, %v5049
    %v5051 = vsub.s32 4294967266, %v5046
    %v5052 = vadd.s32 %v5051, 127
    %v5053 = vshll.u32 %v5052, 23
    %v5054 = vor.u32 4788187, %v5053
    %v5055 = vand.u32 2147483647, %v5054
    %v5057 = vcvt.s32.f32 %v5050
    %v5058 = vmul.f32 %v5057, %v5055
    %v5059 = vxor.u32 %v5058, 2147483648
    %v5060 = vsel %vm4977, %v5059, %v5058
    %v5061 = vsub.s32 4, %v5037
    %v5062 = vsel %vm4977, %v5061, %v5037
    %v5063 = vsel %vm4976, %v269, %v5060
    %v5064 = vsel %vm4976, 0, %v5062
    %v5065 = vcosq.f32.pop %v5063
    %v5066 = vsinq.f32.pop %v5063
    %vm5067 = vweird.f32 %v269
    %v5068 = vadd.s32 %v5064, 3
    %v5069 = vand.u32 %v5068, 3
    %vm5070 = vcmp.lt.s32.totalorder %v5069, 2
    %vm5071 = vcmp.eq.s32.totalorder %v5069, 0
    %v5072 = vxor.u32 %v5066, 2147483648
    %v5073 = vsel %vm5071, %v5065, %v5072
    %vm5074 = vcmp.eq.s32.totalorder %v5069, 2
    %v5075 = vxor.u32 %v5065, 2147483648
    %v5076 = vsel %vm5074, %v5075, %v5066
    %v5077 = vsel %vm5070, %v5073, %v5076
    %v5078 = vsel %vm5067, nan, %v5077
    %v5079 = vand.u32 2147483647, %v274
    %vm5080 = vcmp.le.f32.partialorder %v5079, 0.7853982
    %vm5081 = vcmp.lt.s32.totalorder %v274, 0
    %v5082 = vand.u32 %v274, 2139095040
    %v5083 = vshrl.u32 %v5082, 23
    %v5084 = vsub.s32 %v5083, 127
    %v5085 = vand.u32 2147483647, %v274
    %v5086 = vand.u32 %v5085, 8388607
    %v5087 = vor.u32 %v5086, 8388608
    %v5088 = vsub.s32 0, %v5087
    %v5089 = vadd.s32 %v5084, 1
    %vm5090 = vcmp.gt.s32.totalorder %v5089, 0
    %v5091 = vsel %vm5090, %v5089, 0
    %v5092 = vshrl.u32 %v5091, 5
    %v5093 = vand.u32 %v5091, 31
    %v5094 = vsub.s32 32, %v5093
    %v5095 = vshrl.u32 683565275, %v5094
    %v5096 = vshll.u32 683565275, %v5093
    %v5097 = vshrl.u32 2475754826, %v5094
    %v5098 = vor.u32 %v5096, %v5097
    %v5099 = vshll.u32 2475754826, %v5093
    %v5100 = vshrl.u32 2131351028, %v5094
    %v5101 = vor.u32 %v5099, %v5100
    %v5102 = vshll.u32 2131351028, %v5093
    %v5103 = vshrl.u32 2102212464, %v5094
    %v5104 = vor.u32 %v5102, %v5103
    %v5105 = vshll.u32 2102212464, %v5093
    %v5106 = vshrl.u32 920167782, %v5094
    %v5107 = vor.u32 %v5105, %v5106
    %v5108 = vshll.u32 920167782, %v5093
    %v5109 = vshrl.u32 1326507024, %v5094
    %v5110 = vor.u32 %v5108, %v5109
    %vm5111 = vcmp.lt.s32.totalorder %v5092, 1
    %vm5112 = vcmp.lt.s32.totalorder %v5092, 2
    %vm5113 = vcmp.lt.s32.totalorder %v5092, 3
    %vm5114 = vcmp.lt.s32.totalorder %v5092, 4
    %v5115 = vsel %vm5111, %v5095, %v5098
    %v5116 = vsel %vm5114, %v5104, 2102212464
    %v5117 = vsel %vm5113, %v5101, %v5116
    %v5118 = vsel %vm5112, %v5115, %v5117
    %v5119 = vsel %vm5111, %v5098, %v5101
    %v5120 = vsel %vm5114, %v5107, 920167782
    %v5121 = vsel %vm5113, %v5104, %v5120
    %v5122 = vsel %vm5112, %v5119, %v5121
    %v5123 = vsel %vm5111, %v5101, %v5104
    %v5124 = vsel %vm5114, %v5110, 1326507024
    %v5125 = vsel %vm5113, %v5107, %v5124
    %v5126 = vsel %vm5112, %v5123, %v5125
    %v5127 = vshll.u32 %v5087, 8
    %v5128 = vmul.u32.u64.compose %v5127, %v5126
    %v5129 = vextract.low.u32 %v5128
    %v5130 = vextract.high.u32 %v5128
    %v5131 = vmul.u32.u64.compose %v5127, %v5122
    %v5132 = vextract.low.u32 %v5131
    %v5133 = vextract.high.u32 %v5131
    %v5134 = vmul.u32 %v5127, %v5118
    %v5135 = vadd.s32 %v5130, %v5132
    %vm5136 = vc.u32 %v5130, %v5132
    %v5137 = vadd.s32 %v5133, 1
    %v5138 = vsel %vm5136, %v5137, %v5133
    %v5139 = vadd.s32 %v5134, %v5138
    %v5140 = vadd.s32 %v5139, 536870912
    %v5141 = vshrl.u32 %v5140, 30
    %v5142 = vshll.u32 %v5141, 30
    %v5143 = vsub.s32 %v5139, %v5142
    %vm5144 = vcmp.lt.s32.totalorder %v5143, 0
    %v5145 = vsub.s32 0, %v5143
    %v5146 = vsel %vm5144, %v5145, %v5143
    %v5147 = vclz %v5146
    %v5148 = vsub.s32 %v5147, 2
    %vm5149 = vcmp.gt.s32.totalorder 0, %v5148
    %v5150 = vsel %vm5149, 0, %v5148
    %v5151 = vsub.s32 32, %v5150
    %v5152 = vshll.u32 %v5143, %v5150
    %v5153 = vshrl.u32 %v5135, %v5151
    %v5154 = vor.u32 %v5152, %v5153
    %v5155 = vsub.s32 4294967266, %v5150
    %v5156 = vadd.s32 %v5155, 127
    %v5157 = vshll.u32 %v5156, 23
    %v5158 = vor.u32 4788187, %v5157
    %v5159 = vand.u32 2147483647, %v5158
    %v5161 = vcvt.s32.f32 %v5154
    %v5162 = vmul.f32 %v5161, %v5159
    %v5163 = vxor.u32 %v5162, 2147483648
    %v5164 = vsel %vm5081, %v5163, %v5162
    %v5165 = vsub.s32 4, %v5141
    %v5166 = vsel %vm5081, %v5165, %v5141
    %v5167 = vsel %vm5080, %v274, %v5164
    %v5168 = vsel %vm5080, 0, %v5166
    %v5169 = vcosq.f32.pop %v5167
    %v5170 = vsinq.f32.pop %v5167
    %vm5171 = vweird.f32 %v274
    %v5172 = vadd.s32 %v5168, 3
    %v5173 = vand.u32 %v5172, 3
    %vm5174 = vcmp.lt.s32.totalorder %v5173, 2
    %vm5175 = vcmp.eq.s32.totalorder %v5173, 0
    %v5176 = vxor.u32 %v5170, 2147483648
    %v5177 = vsel %vm5175, %v5169, %v5176
    %vm5178 = vcmp.eq.s32.totalorder %v5173, 2
    %v5179 = vxor.u32 %v5169, 2147483648
    %v5180 = vsel %vm5178, %v5179, %v5170
    %v5181 = vsel %vm5174, %v5177, %v5180
    %v5182 = vsel %vm5171, nan, %v5181
    %v5183 = vand.u32 2147483647, %v279
    %vm5184 = vcmp.le.f32.partialorder %v5183, 0.7853982
    %vm5185 = vcmp.lt.s32.totalorder %v279, 0
    %v5186 = vand.u32 %v279, 2139095040
    %v5187 = vshrl.u32 %v5186, 23
    %v5188 = vsub.s32 %v5187, 127
    %v5189 = vand.u32 2147483647, %v279
    %v5190 = vand.u32 %v5189, 8388607
    %v5191 = vor.u32 %v5190, 8388608
    %v5192 = vsub.s32 0, %v5191
    %v5193 = vadd.s32 %v5188, 1
    %vm5194 = vcmp.gt.s32.totalorder %v5193, 0
    %v5195 = vsel %vm5194, %v5193, 0
    %v5196 = vshrl.u32 %v5195, 5
    %v5197 = vand.u32 %v5195, 31
    %v5198 = vsub.s32 32, %v5197
    %v5199 = vshrl.u32 683565275, %v5198
    %v5200 = vshll.u32 683565275, %v5197
    %v5201 = vshrl.u32 2475754826, %v5198
    %v5202 = vor.u32 %v5200, %v5201
    %v5203 = vshll.u32 2475754826, %v5197
    %v5204 = vshrl.u32 2131351028, %v5198
    %v5205 = vor.u32 %v5203, %v5204
    %v5206 = vshll.u32 2131351028, %v5197
    %v5207 = vshrl.u32 2102212464, %v5198
    %v5208 = vor.u32 %v5206, %v5207
    %v5209 = vshll.u32 2102212464, %v5197
    %v5210 = vshrl.u32 920167782, %v5198
    %v5211 = vor.u32 %v5209, %v5210
    %v5212 = vshll.u32 920167782, %v5197
    %v5213 = vshrl.u32 1326507024, %v5198
    %v5214 = vor.u32 %v5212, %v5213
    %vm5215 = vcmp.lt.s32.totalorder %v5196, 1
    %vm5216 = vcmp.lt.s32.totalorder %v5196, 2
    %vm5217 = vcmp.lt.s32.totalorder %v5196, 3
    %vm5218 = vcmp.lt.s32.totalorder %v5196, 4
    %v5219 = vsel %vm5215, %v5199, %v5202
    %v5220 = vsel %vm5218, %v5208, 2102212464
    %v5221 = vsel %vm5217, %v5205, %v5220
    %v5222 = vsel %vm5216, %v5219, %v5221
    %v5223 = vsel %vm5215, %v5202, %v5205
    %v5224 = vsel %vm5218, %v5211, 920167782
    %v5225 = vsel %vm5217, %v5208, %v5224
    %v5226 = vsel %vm5216, %v5223, %v5225
    %v5227 = vsel %vm5215, %v5205, %v5208
    %v5228 = vsel %vm5218, %v5214, 1326507024
    %v5229 = vsel %vm5217, %v5211, %v5228
    %v5230 = vsel %vm5216, %v5227, %v5229
    %v5231 = vshll.u32 %v5191, 8
    %v5232 = vmul.u32.u64.compose %v5231, %v5230
    %v5233 = vextract.low.u32 %v5232
    %v5234 = vextract.high.u32 %v5232
    %v5235 = vmul.u32.u64.compose %v5231, %v5226
    %v5236 = vextract.low.u32 %v5235
    %v5237 = vextract.high.u32 %v5235
    %v5238 = vmul.u32 %v5231, %v5222
    %v5239 = vadd.s32 %v5234, %v5236
    %vm5240 = vc.u32 %v5234, %v5236
    %v5241 = vadd.s32 %v5237, 1
    %v5242 = vsel %vm5240, %v5241, %v5237
    %v5243 = vadd.s32 %v5238, %v5242
    %v5244 = vadd.s32 %v5243, 536870912
    %v5245 = vshrl.u32 %v5244, 30
    %v5246 = vshll.u32 %v5245, 30
    %v5247 = vsub.s32 %v5243, %v5246
    %vm5248 = vcmp.lt.s32.totalorder %v5247, 0
    %v5249 = vsub.s32 0, %v5247
    %v5250 = vsel %vm5248, %v5249, %v5247
    %v5251 = vclz %v5250
    %v5252 = vsub.s32 %v5251, 2
    %vm5253 = vcmp.gt.s32.totalorder 0, %v5252
    %v5254 = vsel %vm5253, 0, %v5252
    %v5255 = vsub.s32 32, %v5254
    %v5256 = vshll.u32 %v5247, %v5254
    %v5257 = vshrl.u32 %v5239, %v5255
    %v5258 = vor.u32 %v5256, %v5257
    %v5259 = vsub.s32 4294967266, %v5254
    %v5260 = vadd.s32 %v5259, 127
    %v5261 = vshll.u32 %v5260, 23
    %v5262 = vor.u32 4788187, %v5261
    %v5263 = vand.u32 2147483647, %v5262
    %v5265 = vcvt.s32.f32 %v5258
    %v5266 = vmul.f32 %v5265, %v5263
    %v5267 = vxor.u32 %v5266, 2147483648
    %v5268 = vsel %vm5185, %v5267, %v5266
    %v5269 = vsub.s32 4, %v5245
    %v5270 = vsel %vm5185, %v5269, %v5245
    %v5271 = vsel %vm5184, %v279, %v5268
    %v5272 = vsel %vm5184, 0, %v5270
    %v5273 = vcosq.f32.pop %v5271
    %v5274 = vsinq.f32.pop %v5271
    %vm5275 = vweird.f32 %v279
    %v5276 = vadd.s32 %v5272, 3
    %v5277 = vand.u32 %v5276, 3
    %vm5278 = vcmp.lt.s32.totalorder %v5277, 2
    %vm5279 = vcmp.eq.s32.totalorder %v5277, 0
    %v5280 = vxor.u32 %v5274, 2147483648
    %v5281 = vsel %vm5279, %v5273, %v5280
    %vm5282 = vcmp.eq.s32.totalorder %v5277, 2
    %v5283 = vxor.u32 %v5273, 2147483648
    %v5284 = vsel %vm5282, %v5283, %v5274
    %v5285 = vsel %vm5278, %v5281, %v5284
    %v5286 = vsel %vm5275, nan, %v5285
    %v5287 = vand.u32 2147483647, %v284
    %vm5288 = vcmp.le.f32.partialorder %v5287, 0.7853982
    %vm5289 = vcmp.lt.s32.totalorder %v284, 0
    %v5290 = vand.u32 %v284, 2139095040
    %v5291 = vshrl.u32 %v5290, 23
    %v5292 = vsub.s32 %v5291, 127
    %v5293 = vand.u32 2147483647, %v284
    %v5294 = vand.u32 %v5293, 8388607
    %v5295 = vor.u32 %v5294, 8388608
    %v5296 = vsub.s32 0, %v5295
    %v5297 = vadd.s32 %v5292, 1
    %vm5298 = vcmp.gt.s32.totalorder %v5297, 0
    %v5299 = vsel %vm5298, %v5297, 0
    %v5300 = vshrl.u32 %v5299, 5
    %v5301 = vand.u32 %v5299, 31
    %v5302 = vsub.s32 32, %v5301
    %v5303 = vshrl.u32 683565275, %v5302
    %v5304 = vshll.u32 683565275, %v5301
    %v5305 = vshrl.u32 2475754826, %v5302
    %v5306 = vor.u32 %v5304, %v5305
    %v5307 = vshll.u32 2475754826, %v5301
    %v5308 = vshrl.u32 2131351028, %v5302
    %v5309 = vor.u32 %v5307, %v5308
    %v5310 = vshll.u32 2131351028, %v5301
    %v5311 = vshrl.u32 2102212464, %v5302
    %v5312 = vor.u32 %v5310, %v5311
    %v5313 = vshll.u32 2102212464, %v5301
    %v5314 = vshrl.u32 920167782, %v5302
    %v5315 = vor.u32 %v5313, %v5314
    %v5316 = vshll.u32 920167782, %v5301
    %v5317 = vshrl.u32 1326507024, %v5302
    %v5318 = vor.u32 %v5316, %v5317
    %vm5319 = vcmp.lt.s32.totalorder %v5300, 1
    %vm5320 = vcmp.lt.s32.totalorder %v5300, 2
    %vm5321 = vcmp.lt.s32.totalorder %v5300, 3
    %vm5322 = vcmp.lt.s32.totalorder %v5300, 4
    %v5323 = vsel %vm5319, %v5303, %v5306
    %v5324 = vsel %vm5322, %v5312, 2102212464
    %v5325 = vsel %vm5321, %v5309, %v5324
    %v5326 = vsel %vm5320, %v5323, %v5325
    %v5327 = vsel %vm5319, %v5306, %v5309
    %v5328 = vsel %vm5322, %v5315, 920167782
    %v5329 = vsel %vm5321, %v5312, %v5328
    %v5330 = vsel %vm5320, %v5327, %v5329
    %v5331 = vsel %vm5319, %v5309, %v5312
    %v5332 = vsel %vm5322, %v5318, 1326507024
    %v5333 = vsel %vm5321, %v5315, %v5332
    %v5334 = vsel %vm5320, %v5331, %v5333
    %v5335 = vshll.u32 %v5295, 8
    %v5336 = vmul.u32.u64.compose %v5335, %v5334
    %v5337 = vextract.low.u32 %v5336
    %v5338 = vextract.high.u32 %v5336
    %v5339 = vmul.u32.u64.compose %v5335, %v5330
    %v5340 = vextract.low.u32 %v5339
    %v5341 = vextract.high.u32 %v5339
    %v5342 = vmul.u32 %v5335, %v5326
    %v5343 = vadd.s32 %v5338, %v5340
    %vm5344 = vc.u32 %v5338, %v5340
    %v5345 = vadd.s32 %v5341, 1
    %v5346 = vsel %vm5344, %v5345, %v5341
    %v5347 = vadd.s32 %v5342, %v5346
    %v5348 = vadd.s32 %v5347, 536870912
    %v5349 = vshrl.u32 %v5348, 30
    %v5350 = vshll.u32 %v5349, 30
    %v5351 = vsub.s32 %v5347, %v5350
    %vm5352 = vcmp.lt.s32.totalorder %v5351, 0
    %v5353 = vsub.s32 0, %v5351
    %v5354 = vsel %vm5352, %v5353, %v5351
    %v5355 = vclz %v5354
    %v5356 = vsub.s32 %v5355, 2
    %vm5357 = vcmp.gt.s32.totalorder 0, %v5356
    %v5358 = vsel %vm5357, 0, %v5356
    %v5359 = vsub.s32 32, %v5358
    %v5360 = vshll.u32 %v5351, %v5358
    %v5361 = vshrl.u32 %v5343, %v5359
    %v5362 = vor.u32 %v5360, %v5361
    %v5363 = vsub.s32 4294967266, %v5358
    %v5364 = vadd.s32 %v5363, 127
    %v5365 = vshll.u32 %v5364, 23
    %v5366 = vor.u32 4788187, %v5365
    %v5367 = vand.u32 2147483647, %v5366
    %v5369 = vcvt.s32.f32 %v5362
    %v5370 = vmul.f32 %v5369, %v5367
    %v5371 = vxor.u32 %v5370, 2147483648
    %v5372 = vsel %vm5289, %v5371, %v5370
    %v5373 = vsub.s32 4, %v5349
    %v5374 = vsel %vm5289, %v5373, %v5349
    %v5375 = vsel %vm5288, %v284, %v5372
    %v5376 = vsel %vm5288, 0, %v5374
    %v5377 = vcosq.f32.pop %v5375
    %v5378 = vsinq.f32.pop %v5375
    %vm5379 = vweird.f32 %v284
    %v5380 = vadd.s32 %v5376, 3
    %v5381 = vand.u32 %v5380, 3
    %vm5382 = vcmp.lt.s32.totalorder %v5381, 2
    %vm5383 = vcmp.eq.s32.totalorder %v5381, 0
    %v5384 = vxor.u32 %v5378, 2147483648
    %v5385 = vsel %vm5383, %v5377, %v5384
    %vm5386 = vcmp.eq.s32.totalorder %v5381, 2
    %v5387 = vxor.u32 %v5377, 2147483648
    %v5388 = vsel %vm5386, %v5387, %v5378
    %v5389 = vsel %vm5382, %v5385, %v5388
    %v5390 = vsel %vm5379, nan, %v5389
    %v5391 = vand.u32 2147483647, %v289
    %vm5392 = vcmp.le.f32.partialorder %v5391, 0.7853982
    %vm5393 = vcmp.lt.s32.totalorder %v289, 0
    %v5394 = vand.u32 %v289, 2139095040
    %v5395 = vshrl.u32 %v5394, 23
    %v5396 = vsub.s32 %v5395, 127
    %v5397 = vand.u32 2147483647, %v289
    %v5398 = vand.u32 %v5397, 8388607
    %v5399 = vor.u32 %v5398, 8388608
    %v5400 = vsub.s32 0, %v5399
    %v5401 = vadd.s32 %v5396, 1
    %vm5402 = vcmp.gt.s32.totalorder %v5401, 0
    %v5403 = vsel %vm5402, %v5401, 0
    %v5404 = vshrl.u32 %v5403, 5
    %v5405 = vand.u32 %v5403, 31
    %v5406 = vsub.s32 32, %v5405
    %v5407 = vshrl.u32 683565275, %v5406
    %v5408 = vshll.u32 683565275, %v5405
    %v5409 = vshrl.u32 2475754826, %v5406
    %v5410 = vor.u32 %v5408, %v5409
    %v5411 = vshll.u32 2475754826, %v5405
    %v5412 = vshrl.u32 2131351028, %v5406
    %v5413 = vor.u32 %v5411, %v5412
    %v5414 = vshll.u32 2131351028, %v5405
    %v5415 = vshrl.u32 2102212464, %v5406
    %v5416 = vor.u32 %v5414, %v5415
    %v5417 = vshll.u32 2102212464, %v5405
    %v5418 = vshrl.u32 920167782, %v5406
    %v5419 = vor.u32 %v5417, %v5418
    %v5420 = vshll.u32 920167782, %v5405
    %v5421 = vshrl.u32 1326507024, %v5406
    %v5422 = vor.u32 %v5420, %v5421
    %vm5423 = vcmp.lt.s32.totalorder %v5404, 1
    %vm5424 = vcmp.lt.s32.totalorder %v5404, 2
    %vm5425 = vcmp.lt.s32.totalorder %v5404, 3
    %vm5426 = vcmp.lt.s32.totalorder %v5404, 4
    %v5427 = vsel %vm5423, %v5407, %v5410
    %v5428 = vsel %vm5426, %v5416, 2102212464
    %v5429 = vsel %vm5425, %v5413, %v5428
    %v5430 = vsel %vm5424, %v5427, %v5429
    %v5431 = vsel %vm5423, %v5410, %v5413
    %v5432 = vsel %vm5426, %v5419, 920167782
    %v5433 = vsel %vm5425, %v5416, %v5432
    %v5434 = vsel %vm5424, %v5431, %v5433
    %v5435 = vsel %vm5423, %v5413, %v5416
    %v5436 = vsel %vm5426, %v5422, 1326507024
    %v5437 = vsel %vm5425, %v5419, %v5436
    %v5438 = vsel %vm5424, %v5435, %v5437
    %v5439 = vshll.u32 %v5399, 8
    %v5440 = vmul.u32.u64.compose %v5439, %v5438
    %v5441 = vextract.low.u32 %v5440
    %v5442 = vextract.high.u32 %v5440
    %v5443 = vmul.u32.u64.compose %v5439, %v5434
    %v5444 = vextract.low.u32 %v5443
    %v5445 = vextract.high.u32 %v5443
    %v5446 = vmul.u32 %v5439, %v5430
    %v5447 = vadd.s32 %v5442, %v5444
    %vm5448 = vc.u32 %v5442, %v5444
    %v5449 = vadd.s32 %v5445, 1
    %v5450 = vsel %vm5448, %v5449, %v5445
    %v5451 = vadd.s32 %v5446, %v5450
    %v5452 = vadd.s32 %v5451, 536870912
    %v5453 = vshrl.u32 %v5452, 30
    %v5454 = vshll.u32 %v5453, 30
    %v5455 = vsub.s32 %v5451, %v5454
    %vm5456 = vcmp.lt.s32.totalorder %v5455, 0
    %v5457 = vsub.s32 0, %v5455
    %v5458 = vsel %vm5456, %v5457, %v5455
    %v5459 = vclz %v5458
    %v5460 = vsub.s32 %v5459, 2
    %vm5461 = vcmp.gt.s32.totalorder 0, %v5460
    %v5462 = vsel %vm5461, 0, %v5460
    %v5463 = vsub.s32 32, %v5462
    %v5464 = vshll.u32 %v5455, %v5462
    %v5465 = vshrl.u32 %v5447, %v5463
    %v5466 = vor.u32 %v5464, %v5465
    %v5467 = vsub.s32 4294967266, %v5462
    %v5468 = vadd.s32 %v5467, 127
    %v5469 = vshll.u32 %v5468, 23
    %v5470 = vor.u32 4788187, %v5469
    %v5471 = vand.u32 2147483647, %v5470
    %v5473 = vcvt.s32.f32 %v5466
    %v5474 = vmul.f32 %v5473, %v5471
    %v5475 = vxor.u32 %v5474, 2147483648
    %v5476 = vsel %vm5393, %v5475, %v5474
    %v5477 = vsub.s32 4, %v5453
    %v5478 = vsel %vm5393, %v5477, %v5453
    %v5479 = vsel %vm5392, %v289, %v5476
    %v5480 = vsel %vm5392, 0, %v5478
    %v5481 = vcosq.f32.pop %v5479
    %v5482 = vsinq.f32.pop %v5479
    %vm5483 = vweird.f32 %v289
    %v5484 = vadd.s32 %v5480, 3
    %v5485 = vand.u32 %v5484, 3
    %vm5486 = vcmp.lt.s32.totalorder %v5485, 2
    %vm5487 = vcmp.eq.s32.totalorder %v5485, 0
    %v5488 = vxor.u32 %v5482, 2147483648
    %v5489 = vsel %vm5487, %v5481, %v5488
    %vm5490 = vcmp.eq.s32.totalorder %v5485, 2
    %v5491 = vxor.u32 %v5481, 2147483648
    %v5492 = vsel %vm5490, %v5491, %v5482
    %v5493 = vsel %vm5486, %v5489, %v5492
    %v5494 = vsel %vm5483, nan, %v5493
    %v5495 = vand.u32 2147483647, %v294
    %vm5496 = vcmp.le.f32.partialorder %v5495, 0.7853982
    %vm5497 = vcmp.lt.s32.totalorder %v294, 0
    %v5498 = vand.u32 %v294, 2139095040
    %v5499 = vshrl.u32 %v5498, 23
    %v5500 = vsub.s32 %v5499, 127
    %v5501 = vand.u32 2147483647, %v294
    %v5502 = vand.u32 %v5501, 8388607
    %v5503 = vor.u32 %v5502, 8388608
    %v5504 = vsub.s32 0, %v5503
    %v5505 = vadd.s32 %v5500, 1
    %vm5506 = vcmp.gt.s32.totalorder %v5505, 0
    %v5507 = vsel %vm5506, %v5505, 0
    %v5508 = vshrl.u32 %v5507, 5
    %v5509 = vand.u32 %v5507, 31
    %v5510 = vsub.s32 32, %v5509
    %v5511 = vshrl.u32 683565275, %v5510
    %v5512 = vshll.u32 683565275, %v5509
    %v5513 = vshrl.u32 2475754826, %v5510
    %v5514 = vor.u32 %v5512, %v5513
    %v5515 = vshll.u32 2475754826, %v5509
    %v5516 = vshrl.u32 2131351028, %v5510
    %v5517 = vor.u32 %v5515, %v5516
    %v5518 = vshll.u32 2131351028, %v5509
    %v5519 = vshrl.u32 2102212464, %v5510
    %v5520 = vor.u32 %v5518, %v5519
    %v5521 = vshll.u32 2102212464, %v5509
    %v5522 = vshrl.u32 920167782, %v5510
    %v5523 = vor.u32 %v5521, %v5522
    %v5524 = vshll.u32 920167782, %v5509
    %v5525 = vshrl.u32 1326507024, %v5510
    %v5526 = vor.u32 %v5524, %v5525
    %vm5527 = vcmp.lt.s32.totalorder %v5508, 1
    %vm5528 = vcmp.lt.s32.totalorder %v5508, 2
    %vm5529 = vcmp.lt.s32.totalorder %v5508, 3
    %vm5530 = vcmp.lt.s32.totalorder %v5508, 4
    %v5531 = vsel %vm5527, %v5511, %v5514
    %v5532 = vsel %vm5530, %v5520, 2102212464
    %v5533 = vsel %vm5529, %v5517, %v5532
    %v5534 = vsel %vm5528, %v5531, %v5533
    %v5535 = vsel %vm5527, %v5514, %v5517
    %v5536 = vsel %vm5530, %v5523, 920167782
    %v5537 = vsel %vm5529, %v5520, %v5536
    %v5538 = vsel %vm5528, %v5535, %v5537
    %v5539 = vsel %vm5527, %v5517, %v5520
    %v5540 = vsel %vm5530, %v5526, 1326507024
    %v5541 = vsel %vm5529, %v5523, %v5540
    %v5542 = vsel %vm5528, %v5539, %v5541
    %v5543 = vshll.u32 %v5503, 8
    %v5544 = vmul.u32.u64.compose %v5543, %v5542
    %v5545 = vextract.low.u32 %v5544
    %v5546 = vextract.high.u32 %v5544
    %v5547 = vmul.u32.u64.compose %v5543, %v5538
    %v5548 = vextract.low.u32 %v5547
    %v5549 = vextract.high.u32 %v5547
    %v5550 = vmul.u32 %v5543, %v5534
    %v5551 = vadd.s32 %v5546, %v5548
    %vm5552 = vc.u32 %v5546, %v5548
    %v5553 = vadd.s32 %v5549, 1
    %v5554 = vsel %vm5552, %v5553, %v5549
    %v5555 = vadd.s32 %v5550, %v5554
    %v5556 = vadd.s32 %v5555, 536870912
    %v5557 = vshrl.u32 %v5556, 30
    %v5558 = vshll.u32 %v5557, 30
    %v5559 = vsub.s32 %v5555, %v5558
    %vm5560 = vcmp.lt.s32.totalorder %v5559, 0
    %v5561 = vsub.s32 0, %v5559
    %v5562 = vsel %vm5560, %v5561, %v5559
    %v5563 = vclz %v5562
    %v5564 = vsub.s32 %v5563, 2
    %vm5565 = vcmp.gt.s32.totalorder 0, %v5564
    %v5566 = vsel %vm5565, 0, %v5564
    %v5567 = vsub.s32 32, %v5566
    %v5568 = vshll.u32 %v5559, %v5566
    %v5569 = vshrl.u32 %v5551, %v5567
    %v5570 = vor.u32 %v5568, %v5569
    %v5571 = vsub.s32 4294967266, %v5566
    %v5572 = vadd.s32 %v5571, 127
    %v5573 = vshll.u32 %v5572, 23
    %v5574 = vor.u32 4788187, %v5573
    %v5575 = vand.u32 2147483647, %v5574
    %v5577 = vcvt.s32.f32 %v5570
    %v5578 = vmul.f32 %v5577, %v5575
    %v5579 = vxor.u32 %v5578, 2147483648
    %v5580 = vsel %vm5497, %v5579, %v5578
    %v5581 = vsub.s32 4, %v5557
    %v5582 = vsel %vm5497, %v5581, %v5557
    %v5583 = vsel %vm5496, %v294, %v5580
    %v5584 = vsel %vm5496, 0, %v5582
    %v5585 = vcosq.f32.pop %v5583
    %v5586 = vsinq.f32.pop %v5583
    %vm5587 = vweird.f32 %v294
    %v5588 = vadd.s32 %v5584, 3
    %v5589 = vand.u32 %v5588, 3
    %vm5590 = vcmp.lt.s32.totalorder %v5589, 2
    %vm5591 = vcmp.eq.s32.totalorder %v5589, 0
    %v5592 = vxor.u32 %v5586, 2147483648
    %v5593 = vsel %vm5591, %v5585, %v5592
    %vm5594 = vcmp.eq.s32.totalorder %v5589, 2
    %v5595 = vxor.u32 %v5585, 2147483648
    %v5596 = vsel %vm5594, %v5595, %v5586
    %v5597 = vsel %vm5590, %v5593, %v5596
    %v5598 = vsel %vm5587, nan, %v5597
    %v5599 = vand.u32 2147483647, %v299
    %vm5600 = vcmp.le.f32.partialorder %v5599, 0.7853982
    %vm5601 = vcmp.lt.s32.totalorder %v299, 0
    %v5602 = vand.u32 %v299, 2139095040
    %v5603 = vshrl.u32 %v5602, 23
    %v5604 = vsub.s32 %v5603, 127
    %v5605 = vand.u32 2147483647, %v299
    %v5606 = vand.u32 %v5605, 8388607
    %v5607 = vor.u32 %v5606, 8388608
    %v5608 = vsub.s32 0, %v5607
    %v5609 = vadd.s32 %v5604, 1
    %vm5610 = vcmp.gt.s32.totalorder %v5609, 0
    %v5611 = vsel %vm5610, %v5609, 0
    %v5612 = vshrl.u32 %v5611, 5
    %v5613 = vand.u32 %v5611, 31
    %v5614 = vsub.s32 32, %v5613
    %v5615 = vshrl.u32 683565275, %v5614
    %v5616 = vshll.u32 683565275, %v5613
    %v5617 = vshrl.u32 2475754826, %v5614
    %v5618 = vor.u32 %v5616, %v5617
    %v5619 = vshll.u32 2475754826, %v5613
    %v5620 = vshrl.u32 2131351028, %v5614
    %v5621 = vor.u32 %v5619, %v5620
    %v5622 = vshll.u32 2131351028, %v5613
    %v5623 = vshrl.u32 2102212464, %v5614
    %v5624 = vor.u32 %v5622, %v5623
    %v5625 = vshll.u32 2102212464, %v5613
    %v5626 = vshrl.u32 920167782, %v5614
    %v5627 = vor.u32 %v5625, %v5626
    %v5628 = vshll.u32 920167782, %v5613
    %v5629 = vshrl.u32 1326507024, %v5614
    %v5630 = vor.u32 %v5628, %v5629
    %vm5631 = vcmp.lt.s32.totalorder %v5612, 1
    %vm5632 = vcmp.lt.s32.totalorder %v5612, 2
    %vm5633 = vcmp.lt.s32.totalorder %v5612, 3
    %vm5634 = vcmp.lt.s32.totalorder %v5612, 4
    %v5635 = vsel %vm5631, %v5615, %v5618
    %v5636 = vsel %vm5634, %v5624, 2102212464
    %v5637 = vsel %vm5633, %v5621, %v5636
    %v5638 = vsel %vm5632, %v5635, %v5637
    %v5639 = vsel %vm5631, %v5618, %v5621
    %v5640 = vsel %vm5634, %v5627, 920167782
    %v5641 = vsel %vm5633, %v5624, %v5640
    %v5642 = vsel %vm5632, %v5639, %v5641
    %v5643 = vsel %vm5631, %v5621, %v5624
    %v5644 = vsel %vm5634, %v5630, 1326507024
    %v5645 = vsel %vm5633, %v5627, %v5644
    %v5646 = vsel %vm5632, %v5643, %v5645
    %v5647 = vshll.u32 %v5607, 8
    %v5648 = vmul.u32.u64.compose %v5647, %v5646
    %v5649 = vextract.low.u32 %v5648
    %v5650 = vextract.high.u32 %v5648
    %v5651 = vmul.u32.u64.compose %v5647, %v5642
    %v5652 = vextract.low.u32 %v5651
    %v5653 = vextract.high.u32 %v5651
    %v5654 = vmul.u32 %v5647, %v5638
    %v5655 = vadd.s32 %v5650, %v5652
    %vm5656 = vc.u32 %v5650, %v5652
    %v5657 = vadd.s32 %v5653, 1
    %v5658 = vsel %vm5656, %v5657, %v5653
    %v5659 = vadd.s32 %v5654, %v5658
    %v5660 = vadd.s32 %v5659, 536870912
    %v5661 = vshrl.u32 %v5660, 30
    %v5662 = vshll.u32 %v5661, 30
    %v5663 = vsub.s32 %v5659, %v5662
    %vm5664 = vcmp.lt.s32.totalorder %v5663, 0
    %v5665 = vsub.s32 0, %v5663
    %v5666 = vsel %vm5664, %v5665, %v5663
    %v5667 = vclz %v5666
    %v5668 = vsub.s32 %v5667, 2
    %vm5669 = vcmp.gt.s32.totalorder 0, %v5668
    %v5670 = vsel %vm5669, 0, %v5668
    %v5671 = vsub.s32 32, %v5670
    %v5672 = vshll.u32 %v5663, %v5670
    %v5673 = vshrl.u32 %v5655, %v5671
    %v5674 = vor.u32 %v5672, %v5673
    %v5675 = vsub.s32 4294967266, %v5670
    %v5676 = vadd.s32 %v5675, 127
    %v5677 = vshll.u32 %v5676, 23
    %v5678 = vor.u32 4788187, %v5677
    %v5679 = vand.u32 2147483647, %v5678
    %v5681 = vcvt.s32.f32 %v5674
    %v5682 = vmul.f32 %v5681, %v5679
    %v5683 = vxor.u32 %v5682, 2147483648
    %v5684 = vsel %vm5601, %v5683, %v5682
    %v5685 = vsub.s32 4, %v5661
    %v5686 = vsel %vm5601, %v5685, %v5661
    %v5687 = vsel %vm5600, %v299, %v5684
    %v5688 = vsel %vm5600, 0, %v5686
    %v5689 = vcosq.f32.pop %v5687
    %v5690 = vsinq.f32.pop %v5687
    %vm5691 = vweird.f32 %v299
    %v5692 = vadd.s32 %v5688, 3
    %v5693 = vand.u32 %v5692, 3
    %vm5694 = vcmp.lt.s32.totalorder %v5693, 2
    %vm5695 = vcmp.eq.s32.totalorder %v5693, 0
    %v5696 = vxor.u32 %v5690, 2147483648
    %v5697 = vsel %vm5695, %v5689, %v5696
    %vm5698 = vcmp.eq.s32.totalorder %v5693, 2
    %v5699 = vxor.u32 %v5689, 2147483648
    %v5700 = vsel %vm5698, %v5699, %v5690
    %v5701 = vsel %vm5694, %v5697, %v5700
    %v5702 = vsel %vm5691, nan, %v5701
    %v5703 = vand.u32 2147483647, %v304
    %vm5704 = vcmp.le.f32.partialorder %v5703, 0.7853982
    %vm5705 = vcmp.lt.s32.totalorder %v304, 0
    %v5706 = vand.u32 %v304, 2139095040
    %v5707 = vshrl.u32 %v5706, 23
    %v5708 = vsub.s32 %v5707, 127
    %v5709 = vand.u32 2147483647, %v304
    %v5710 = vand.u32 %v5709, 8388607
    %v5711 = vor.u32 %v5710, 8388608
    %v5712 = vsub.s32 0, %v5711
    %v5713 = vadd.s32 %v5708, 1
    %vm5714 = vcmp.gt.s32.totalorder %v5713, 0
    %v5715 = vsel %vm5714, %v5713, 0
    %v5716 = vshrl.u32 %v5715, 5
    %v5717 = vand.u32 %v5715, 31
    %v5718 = vsub.s32 32, %v5717
    %v5719 = vshrl.u32 683565275, %v5718
    %v5720 = vshll.u32 683565275, %v5717
    %v5721 = vshrl.u32 2475754826, %v5718
    %v5722 = vor.u32 %v5720, %v5721
    %v5723 = vshll.u32 2475754826, %v5717
    %v5724 = vshrl.u32 2131351028, %v5718
    %v5725 = vor.u32 %v5723, %v5724
    %v5726 = vshll.u32 2131351028, %v5717
    %v5727 = vshrl.u32 2102212464, %v5718
    %v5728 = vor.u32 %v5726, %v5727
    %v5729 = vshll.u32 2102212464, %v5717
    %v5730 = vshrl.u32 920167782, %v5718
    %v5731 = vor.u32 %v5729, %v5730
    %v5732 = vshll.u32 920167782, %v5717
    %v5733 = vshrl.u32 1326507024, %v5718
    %v5734 = vor.u32 %v5732, %v5733
    %vm5735 = vcmp.lt.s32.totalorder %v5716, 1
    %vm5736 = vcmp.lt.s32.totalorder %v5716, 2
    %vm5737 = vcmp.lt.s32.totalorder %v5716, 3
    %vm5738 = vcmp.lt.s32.totalorder %v5716, 4
    %v5739 = vsel %vm5735, %v5719, %v5722
    %v5740 = vsel %vm5738, %v5728, 2102212464
    %v5741 = vsel %vm5737, %v5725, %v5740
    %v5742 = vsel %vm5736, %v5739, %v5741
    %v5743 = vsel %vm5735, %v5722, %v5725
    %v5744 = vsel %vm5738, %v5731, 920167782
    %v5745 = vsel %vm5737, %v5728, %v5744
    %v5746 = vsel %vm5736, %v5743, %v5745
    %v5747 = vsel %vm5735, %v5725, %v5728
    %v5748 = vsel %vm5738, %v5734, 1326507024
    %v5749 = vsel %vm5737, %v5731, %v5748
    %v5750 = vsel %vm5736, %v5747, %v5749
    %v5751 = vshll.u32 %v5711, 8
    %v5752 = vmul.u32.u64.compose %v5751, %v5750
    %v5753 = vextract.low.u32 %v5752
    %v5754 = vextract.high.u32 %v5752
    %v5755 = vmul.u32.u64.compose %v5751, %v5746
    %v5756 = vextract.low.u32 %v5755
    %v5757 = vextract.high.u32 %v5755
    %v5758 = vmul.u32 %v5751, %v5742
    %v5759 = vadd.s32 %v5754, %v5756
    %vm5760 = vc.u32 %v5754, %v5756
    %v5761 = vadd.s32 %v5757, 1
    %v5762 = vsel %vm5760, %v5761, %v5757
    %v5763 = vadd.s32 %v5758, %v5762
    %v5764 = vadd.s32 %v5763, 536870912
    %v5765 = vshrl.u32 %v5764, 30
    %v5766 = vshll.u32 %v5765, 30
    %v5767 = vsub.s32 %v5763, %v5766
    %vm5768 = vcmp.lt.s32.totalorder %v5767, 0
    %v5769 = vsub.s32 0, %v5767
    %v5770 = vsel %vm5768, %v5769, %v5767
    %v5771 = vclz %v5770
    %v5772 = vsub.s32 %v5771, 2
    %vm5773 = vcmp.gt.s32.totalorder 0, %v5772
    %v5774 = vsel %vm5773, 0, %v5772
    %v5775 = vsub.s32 32, %v5774
    %v5776 = vshll.u32 %v5767, %v5774
    %v5777 = vshrl.u32 %v5759, %v5775
    %v5778 = vor.u32 %v5776, %v5777
    %v5779 = vsub.s32 4294967266, %v5774
    %v5780 = vadd.s32 %v5779, 127
    %v5781 = vshll.u32 %v5780, 23
    %v5782 = vor.u32 4788187, %v5781
    %v5783 = vand.u32 2147483647, %v5782
    %v5785 = vcvt.s32.f32 %v5778
    %v5786 = vmul.f32 %v5785, %v5783
    %v5787 = vxor.u32 %v5786, 2147483648
    %v5788 = vsel %vm5705, %v5787, %v5786
    %v5789 = vsub.s32 4, %v5765
    %v5790 = vsel %vm5705, %v5789, %v5765
    %v5791 = vsel %vm5704, %v304, %v5788
    %v5792 = vsel %vm5704, 0, %v5790
    %v5793 = vcosq.f32.pop %v5791
    %v5794 = vsinq.f32.pop %v5791
    %vm5795 = vweird.f32 %v304
    %v5796 = vadd.s32 %v5792, 3
    %v5797 = vand.u32 %v5796, 3
    %vm5798 = vcmp.lt.s32.totalorder %v5797, 2
    %vm5799 = vcmp.eq.s32.totalorder %v5797, 0
    %v5800 = vxor.u32 %v5794, 2147483648
    %v5801 = vsel %vm5799, %v5793, %v5800
    %vm5802 = vcmp.eq.s32.totalorder %v5797, 2
    %v5803 = vxor.u32 %v5793, 2147483648
    %v5804 = vsel %vm5802, %v5803, %v5794
    %v5805 = vsel %vm5798, %v5801, %v5804
    %v5806 = vsel %vm5795, nan, %v5805
    %v5807 = vand.u32 2147483647, %v309
    %vm5808 = vcmp.le.f32.partialorder %v5807, 0.7853982
    %vm5809 = vcmp.lt.s32.totalorder %v309, 0
    %v5810 = vand.u32 %v309, 2139095040
    %v5811 = vshrl.u32 %v5810, 23
    %v5812 = vsub.s32 %v5811, 127
    %v5813 = vand.u32 2147483647, %v309
    %v5814 = vand.u32 %v5813, 8388607
    %v5815 = vor.u32 %v5814, 8388608
    %v5816 = vsub.s32 0, %v5815
    %v5817 = vadd.s32 %v5812, 1
    %vm5818 = vcmp.gt.s32.totalorder %v5817, 0
    %v5819 = vsel %vm5818, %v5817, 0
    %v5820 = vshrl.u32 %v5819, 5
    %v5821 = vand.u32 %v5819, 31
    %v5822 = vsub.s32 32, %v5821
    %v5823 = vshrl.u32 683565275, %v5822
    %v5824 = vshll.u32 683565275, %v5821
    %v5825 = vshrl.u32 2475754826, %v5822
    %v5826 = vor.u32 %v5824, %v5825
    %v5827 = vshll.u32 2475754826, %v5821
    %v5828 = vshrl.u32 2131351028, %v5822
    %v5829 = vor.u32 %v5827, %v5828
    %v5830 = vshll.u32 2131351028, %v5821
    %v5831 = vshrl.u32 2102212464, %v5822
    %v5832 = vor.u32 %v5830, %v5831
    %v5833 = vshll.u32 2102212464, %v5821
    %v5834 = vshrl.u32 920167782, %v5822
    %v5835 = vor.u32 %v5833, %v5834
    %v5836 = vshll.u32 920167782, %v5821
    %v5837 = vshrl.u32 1326507024, %v5822
    %v5838 = vor.u32 %v5836, %v5837
    %vm5839 = vcmp.lt.s32.totalorder %v5820, 1
    %vm5840 = vcmp.lt.s32.totalorder %v5820, 2
    %vm5841 = vcmp.lt.s32.totalorder %v5820, 3
    %vm5842 = vcmp.lt.s32.totalorder %v5820, 4
    %v5843 = vsel %vm5839, %v5823, %v5826
    %v5844 = vsel %vm5842, %v5832, 2102212464
    %v5845 = vsel %vm5841, %v5829, %v5844
    %v5846 = vsel %vm5840, %v5843, %v5845
    %v5847 = vsel %vm5839, %v5826, %v5829
    %v5848 = vsel %vm5842, %v5835, 920167782
    %v5849 = vsel %vm5841, %v5832, %v5848
    %v5850 = vsel %vm5840, %v5847, %v5849
    %v5851 = vsel %vm5839, %v5829, %v5832
    %v5852 = vsel %vm5842, %v5838, 1326507024
    %v5853 = vsel %vm5841, %v5835, %v5852
    %v5854 = vsel %vm5840, %v5851, %v5853
    %v5855 = vshll.u32 %v5815, 8
    %v5856 = vmul.u32.u64.compose %v5855, %v5854
    %v5857 = vextract.low.u32 %v5856
    %v5858 = vextract.high.u32 %v5856
    %v5859 = vmul.u32.u64.compose %v5855, %v5850
    %v5860 = vextract.low.u32 %v5859
    %v5861 = vextract.high.u32 %v5859
    %v5862 = vmul.u32 %v5855, %v5846
    %v5863 = vadd.s32 %v5858, %v5860
    %vm5864 = vc.u32 %v5858, %v5860
    %v5865 = vadd.s32 %v5861, 1
    %v5866 = vsel %vm5864, %v5865, %v5861
    %v5867 = vadd.s32 %v5862, %v5866
    %v5868 = vadd.s32 %v5867, 536870912
    %v5869 = vshrl.u32 %v5868, 30
    %v5870 = vshll.u32 %v5869, 30
    %v5871 = vsub.s32 %v5867, %v5870
    %vm5872 = vcmp.lt.s32.totalorder %v5871, 0
    %v5873 = vsub.s32 0, %v5871
    %v5874 = vsel %vm5872, %v5873, %v5871
    %v5875 = vclz %v5874
    %v5876 = vsub.s32 %v5875, 2
    %vm5877 = vcmp.gt.s32.totalorder 0, %v5876
    %v5878 = vsel %vm5877, 0, %v5876
    %v5879 = vsub.s32 32, %v5878
    %v5880 = vshll.u32 %v5871, %v5878
    %v5881 = vshrl.u32 %v5863, %v5879
    %v5882 = vor.u32 %v5880, %v5881
    %v5883 = vsub.s32 4294967266, %v5878
    %v5884 = vadd.s32 %v5883, 127
    %v5885 = vshll.u32 %v5884, 23
    %v5886 = vor.u32 4788187, %v5885
    %v5887 = vand.u32 2147483647, %v5886
    %v5889 = vcvt.s32.f32 %v5882
    %v5890 = vmul.f32 %v5889, %v5887
    %v5891 = vxor.u32 %v5890, 2147483648
    %v5892 = vsel %vm5809, %v5891, %v5890
    %v5893 = vsub.s32 4, %v5869
    %v5894 = vsel %vm5809, %v5893, %v5869
    %v5895 = vsel %vm5808, %v309, %v5892
    %v5896 = vsel %vm5808, 0, %v5894
    %v5897 = vcosq.f32.pop %v5895
    %v5898 = vsinq.f32.pop %v5895
    %vm5899 = vweird.f32 %v309
    %v5900 = vadd.s32 %v5896, 3
    %v5901 = vand.u32 %v5900, 3
    %vm5902 = vcmp.lt.s32.totalorder %v5901, 2
    %vm5903 = vcmp.eq.s32.totalorder %v5901, 0
    %v5904 = vxor.u32 %v5898, 2147483648
    %v5905 = vsel %vm5903, %v5897, %v5904
    %vm5906 = vcmp.eq.s32.totalorder %v5901, 2
    %v5907 = vxor.u32 %v5897, 2147483648
    %v5908 = vsel %vm5906, %v5907, %v5898
    %v5909 = vsel %vm5902, %v5905, %v5908
    %v5910 = vsel %vm5899, nan, %v5909
    %v5911 = vand.u32 2147483647, %v314
    %vm5912 = vcmp.le.f32.partialorder %v5911, 0.7853982
    %vm5913 = vcmp.lt.s32.totalorder %v314, 0
    %v5914 = vand.u32 %v314, 2139095040
    %v5915 = vshrl.u32 %v5914, 23
    %v5916 = vsub.s32 %v5915, 127
    %v5917 = vand.u32 2147483647, %v314
    %v5918 = vand.u32 %v5917, 8388607
    %v5919 = vor.u32 %v5918, 8388608
    %v5920 = vsub.s32 0, %v5919
    %v5921 = vadd.s32 %v5916, 1
    %vm5922 = vcmp.gt.s32.totalorder %v5921, 0
    %v5923 = vsel %vm5922, %v5921, 0
    %v5924 = vshrl.u32 %v5923, 5
    %v5925 = vand.u32 %v5923, 31
    %v5926 = vsub.s32 32, %v5925
    %v5927 = vshrl.u32 683565275, %v5926
    %v5928 = vshll.u32 683565275, %v5925
    %v5929 = vshrl.u32 2475754826, %v5926
    %v5930 = vor.u32 %v5928, %v5929
    %v5931 = vshll.u32 2475754826, %v5925
    %v5932 = vshrl.u32 2131351028, %v5926
    %v5933 = vor.u32 %v5931, %v5932
    %v5934 = vshll.u32 2131351028, %v5925
    %v5935 = vshrl.u32 2102212464, %v5926
    %v5936 = vor.u32 %v5934, %v5935
    %v5937 = vshll.u32 2102212464, %v5925
    %v5938 = vshrl.u32 920167782, %v5926
    %v5939 = vor.u32 %v5937, %v5938
    %v5940 = vshll.u32 920167782, %v5925
    %v5941 = vshrl.u32 1326507024, %v5926
    %v5942 = vor.u32 %v5940, %v5941
    %vm5943 = vcmp.lt.s32.totalorder %v5924, 1
    %vm5944 = vcmp.lt.s32.totalorder %v5924, 2
    %vm5945 = vcmp.lt.s32.totalorder %v5924, 3
    %vm5946 = vcmp.lt.s32.totalorder %v5924, 4
    %v5947 = vsel %vm5943, %v5927, %v5930
    %v5948 = vsel %vm5946, %v5936, 2102212464
    %v5949 = vsel %vm5945, %v5933, %v5948
    %v5950 = vsel %vm5944, %v5947, %v5949
    %v5951 = vsel %vm5943, %v5930, %v5933
    %v5952 = vsel %vm5946, %v5939, 920167782
    %v5953 = vsel %vm5945, %v5936, %v5952
    %v5954 = vsel %vm5944, %v5951, %v5953
    %v5955 = vsel %vm5943, %v5933, %v5936
    %v5956 = vsel %vm5946, %v5942, 1326507024
    %v5957 = vsel %vm5945, %v5939, %v5956
    %v5958 = vsel %vm5944, %v5955, %v5957
    %v5959 = vshll.u32 %v5919, 8
    %v5960 = vmul.u32.u64.compose %v5959, %v5958
    %v5961 = vextract.low.u32 %v5960
    %v5962 = vextract.high.u32 %v5960
    %v5963 = vmul.u32.u64.compose %v5959, %v5954
    %v5964 = vextract.low.u32 %v5963
    %v5965 = vextract.high.u32 %v5963
    %v5966 = vmul.u32 %v5959, %v5950
    %v5967 = vadd.s32 %v5962, %v5964
    %vm5968 = vc.u32 %v5962, %v5964
    %v5969 = vadd.s32 %v5965, 1
    %v5970 = vsel %vm5968, %v5969, %v5965
    %v5971 = vadd.s32 %v5966, %v5970
    %v5972 = vadd.s32 %v5971, 536870912
    %v5973 = vshrl.u32 %v5972, 30
    %v5974 = vshll.u32 %v5973, 30
    %v5975 = vsub.s32 %v5971, %v5974
    %vm5976 = vcmp.lt.s32.totalorder %v5975, 0
    %v5977 = vsub.s32 0, %v5975
    %v5978 = vsel %vm5976, %v5977, %v5975
    %v5979 = vclz %v5978
    %v5980 = vsub.s32 %v5979, 2
    %vm5981 = vcmp.gt.s32.totalorder 0, %v5980
    %v5982 = vsel %vm5981, 0, %v5980
    %v5983 = vsub.s32 32, %v5982
    %v5984 = vshll.u32 %v5975, %v5982
    %v5985 = vshrl.u32 %v5967, %v5983
    %v5986 = vor.u32 %v5984, %v5985
    %v5987 = vsub.s32 4294967266, %v5982
    %v5988 = vadd.s32 %v5987, 127
    %v5989 = vshll.u32 %v5988, 23
    %v5990 = vor.u32 4788187, %v5989
    %v5991 = vand.u32 2147483647, %v5990
    %v5993 = vcvt.s32.f32 %v5986
    %v5994 = vmul.f32 %v5993, %v5991
    %v5995 = vxor.u32 %v5994, 2147483648
    %v5996 = vsel %vm5913, %v5995, %v5994
    %v5997 = vsub.s32 4, %v5973
    %v5998 = vsel %vm5913, %v5997, %v5973
    %v5999 = vsel %vm5912, %v314, %v5996
    %v6000 = vsel %vm5912, 0, %v5998
    %v6001 = vcosq.f32.pop %v5999
    %v6002 = vsinq.f32.pop %v5999
    %vm6003 = vweird.f32 %v314
    %v6004 = vadd.s32 %v6000, 3
    %v6005 = vand.u32 %v6004, 3
    %vm6006 = vcmp.lt.s32.totalorder %v6005, 2
    %vm6007 = vcmp.eq.s32.totalorder %v6005, 0
    %v6008 = vxor.u32 %v6002, 2147483648
    %v6009 = vsel %vm6007, %v6001, %v6008
    %vm6010 = vcmp.eq.s32.totalorder %v6005, 2
    %v6011 = vxor.u32 %v6001, 2147483648
    %v6012 = vsel %vm6010, %v6011, %v6002
    %v6013 = vsel %vm6006, %v6009, %v6012
    %v6014 = vsel %vm6003, nan, %v6013
    %v6015 = vand.u32 2147483647, %v319
    %vm6016 = vcmp.le.f32.partialorder %v6015, 0.7853982
    %vm6017 = vcmp.lt.s32.totalorder %v319, 0
    %v6018 = vand.u32 %v319, 2139095040
    %v6019 = vshrl.u32 %v6018, 23
    %v6020 = vsub.s32 %v6019, 127
    %v6021 = vand.u32 2147483647, %v319
    %v6022 = vand.u32 %v6021, 8388607
    %v6023 = vor.u32 %v6022, 8388608
    %v6024 = vsub.s32 0, %v6023
    %v6025 = vadd.s32 %v6020, 1
    %vm6026 = vcmp.gt.s32.totalorder %v6025, 0
    %v6027 = vsel %vm6026, %v6025, 0
    %v6028 = vshrl.u32 %v6027, 5
    %v6029 = vand.u32 %v6027, 31
    %v6030 = vsub.s32 32, %v6029
    %v6031 = vshrl.u32 683565275, %v6030
    %v6032 = vshll.u32 683565275, %v6029
    %v6033 = vshrl.u32 2475754826, %v6030
    %v6034 = vor.u32 %v6032, %v6033
    %v6035 = vshll.u32 2475754826, %v6029
    %v6036 = vshrl.u32 2131351028, %v6030
    %v6037 = vor.u32 %v6035, %v6036
    %v6038 = vshll.u32 2131351028, %v6029
    %v6039 = vshrl.u32 2102212464, %v6030
    %v6040 = vor.u32 %v6038, %v6039
    %v6041 = vshll.u32 2102212464, %v6029
    %v6042 = vshrl.u32 920167782, %v6030
    %v6043 = vor.u32 %v6041, %v6042
    %v6044 = vshll.u32 920167782, %v6029
    %v6045 = vshrl.u32 1326507024, %v6030
    %v6046 = vor.u32 %v6044, %v6045
    %vm6047 = vcmp.lt.s32.totalorder %v6028, 1
    %vm6048 = vcmp.lt.s32.totalorder %v6028, 2
    %vm6049 = vcmp.lt.s32.totalorder %v6028, 3
    %vm6050 = vcmp.lt.s32.totalorder %v6028, 4
    %v6051 = vsel %vm6047, %v6031, %v6034
    %v6052 = vsel %vm6050, %v6040, 2102212464
    %v6053 = vsel %vm6049, %v6037, %v6052
    %v6054 = vsel %vm6048, %v6051, %v6053
    %v6055 = vsel %vm6047, %v6034, %v6037
    %v6056 = vsel %vm6050, %v6043, 920167782
    %v6057 = vsel %vm6049, %v6040, %v6056
    %v6058 = vsel %vm6048, %v6055, %v6057
    %v6059 = vsel %vm6047, %v6037, %v6040
    %v6060 = vsel %vm6050, %v6046, 1326507024
    %v6061 = vsel %vm6049, %v6043, %v6060
    %v6062 = vsel %vm6048, %v6059, %v6061
    %v6063 = vshll.u32 %v6023, 8
    %v6064 = vmul.u32.u64.compose %v6063, %v6062
    %v6065 = vextract.low.u32 %v6064
    %v6066 = vextract.high.u32 %v6064
    %v6067 = vmul.u32.u64.compose %v6063, %v6058
    %v6068 = vextract.low.u32 %v6067
    %v6069 = vextract.high.u32 %v6067
    %v6070 = vmul.u32 %v6063, %v6054
    %v6071 = vadd.s32 %v6066, %v6068
    %vm6072 = vc.u32 %v6066, %v6068
    %v6073 = vadd.s32 %v6069, 1
    %v6074 = vsel %vm6072, %v6073, %v6069
    %v6075 = vadd.s32 %v6070, %v6074
    %v6076 = vadd.s32 %v6075, 536870912
    %v6077 = vshrl.u32 %v6076, 30
    %v6078 = vshll.u32 %v6077, 30
    %v6079 = vsub.s32 %v6075, %v6078
    %vm6080 = vcmp.lt.s32.totalorder %v6079, 0
    %v6081 = vsub.s32 0, %v6079
    %v6082 = vsel %vm6080, %v6081, %v6079
    %v6083 = vclz %v6082
    %v6084 = vsub.s32 %v6083, 2
    %vm6085 = vcmp.gt.s32.totalorder 0, %v6084
    %v6086 = vsel %vm6085, 0, %v6084
    %v6087 = vsub.s32 32, %v6086
    %v6088 = vshll.u32 %v6079, %v6086
    %v6089 = vshrl.u32 %v6071, %v6087
    %v6090 = vor.u32 %v6088, %v6089
    %v6091 = vsub.s32 4294967266, %v6086
    %v6092 = vadd.s32 %v6091, 127
    %v6093 = vshll.u32 %v6092, 23
    %v6094 = vor.u32 4788187, %v6093
    %v6095 = vand.u32 2147483647, %v6094
    %v6097 = vcvt.s32.f32 %v6090
    %v6098 = vmul.f32 %v6097, %v6095
    %v6099 = vxor.u32 %v6098, 2147483648
    %v6100 = vsel %vm6017, %v6099, %v6098
    %v6101 = vsub.s32 4, %v6077
    %v6102 = vsel %vm6017, %v6101, %v6077
    %v6103 = vsel %vm6016, %v319, %v6100
    %v6104 = vsel %vm6016, 0, %v6102
    %v6105 = vcosq.f32.pop %v6103
    %v6106 = vsinq.f32.pop %v6103
    %vm6107 = vweird.f32 %v319
    %v6108 = vadd.s32 %v6104, 3
    %v6109 = vand.u32 %v6108, 3
    %vm6110 = vcmp.lt.s32.totalorder %v6109, 2
    %vm6111 = vcmp.eq.s32.totalorder %v6109, 0
    %v6112 = vxor.u32 %v6106, 2147483648
    %v6113 = vsel %vm6111, %v6105, %v6112
    %vm6114 = vcmp.eq.s32.totalorder %v6109, 2
    %v6115 = vxor.u32 %v6105, 2147483648
    %v6116 = vsel %vm6114, %v6115, %v6106
    %v6117 = vsel %vm6110, %v6113, %v6116
    %v6118 = vsel %vm6107, nan, %v6117
    %v6119 = vand.u32 2147483647, %v324
    %vm6120 = vcmp.le.f32.partialorder %v6119, 0.7853982
    %vm6121 = vcmp.lt.s32.totalorder %v324, 0
    %v6122 = vand.u32 %v324, 2139095040
    %v6123 = vshrl.u32 %v6122, 23
    %v6124 = vsub.s32 %v6123, 127
    %v6125 = vand.u32 2147483647, %v324
    %v6126 = vand.u32 %v6125, 8388607
    %v6127 = vor.u32 %v6126, 8388608
    %v6128 = vsub.s32 0, %v6127
    %v6129 = vadd.s32 %v6124, 1
    %vm6130 = vcmp.gt.s32.totalorder %v6129, 0
    %v6131 = vsel %vm6130, %v6129, 0
    %v6132 = vshrl.u32 %v6131, 5
    %v6133 = vand.u32 %v6131, 31
    %v6134 = vsub.s32 32, %v6133
    %v6135 = vshrl.u32 683565275, %v6134
    %v6136 = vshll.u32 683565275, %v6133
    %v6137 = vshrl.u32 2475754826, %v6134
    %v6138 = vor.u32 %v6136, %v6137
    %v6139 = vshll.u32 2475754826, %v6133
    %v6140 = vshrl.u32 2131351028, %v6134
    %v6141 = vor.u32 %v6139, %v6140
    %v6142 = vshll.u32 2131351028, %v6133
    %v6143 = vshrl.u32 2102212464, %v6134
    %v6144 = vor.u32 %v6142, %v6143
    %v6145 = vshll.u32 2102212464, %v6133
    %v6146 = vshrl.u32 920167782, %v6134
    %v6147 = vor.u32 %v6145, %v6146
    %v6148 = vshll.u32 920167782, %v6133
    %v6149 = vshrl.u32 1326507024, %v6134
    %v6150 = vor.u32 %v6148, %v6149
    %vm6151 = vcmp.lt.s32.totalorder %v6132, 1
    %vm6152 = vcmp.lt.s32.totalorder %v6132, 2
    %vm6153 = vcmp.lt.s32.totalorder %v6132, 3
    %vm6154 = vcmp.lt.s32.totalorder %v6132, 4
    %v6155 = vsel %vm6151, %v6135, %v6138
    %v6156 = vsel %vm6154, %v6144, 2102212464
    %v6157 = vsel %vm6153, %v6141, %v6156
    %v6158 = vsel %vm6152, %v6155, %v6157
    %v6159 = vsel %vm6151, %v6138, %v6141
    %v6160 = vsel %vm6154, %v6147, 920167782
    %v6161 = vsel %vm6153, %v6144, %v6160
    %v6162 = vsel %vm6152, %v6159, %v6161
    %v6163 = vsel %vm6151, %v6141, %v6144
    %v6164 = vsel %vm6154, %v6150, 1326507024
    %v6165 = vsel %vm6153, %v6147, %v6164
    %v6166 = vsel %vm6152, %v6163, %v6165
    %v6167 = vshll.u32 %v6127, 8
    %v6168 = vmul.u32.u64.compose %v6167, %v6166
    %v6169 = vextract.low.u32 %v6168
    %v6170 = vextract.high.u32 %v6168
    %v6171 = vmul.u32.u64.compose %v6167, %v6162
    %v6172 = vextract.low.u32 %v6171
    %v6173 = vextract.high.u32 %v6171
    %v6174 = vmul.u32 %v6167, %v6158
    %v6175 = vadd.s32 %v6170, %v6172
    %vm6176 = vc.u32 %v6170, %v6172
    %v6177 = vadd.s32 %v6173, 1
    %v6178 = vsel %vm6176, %v6177, %v6173
    %v6179 = vadd.s32 %v6174, %v6178
    %v6180 = vadd.s32 %v6179, 536870912
    %v6181 = vshrl.u32 %v6180, 30
    %v6182 = vshll.u32 %v6181, 30
    %v6183 = vsub.s32 %v6179, %v6182
    %vm6184 = vcmp.lt.s32.totalorder %v6183, 0
    %v6185 = vsub.s32 0, %v6183
    %v6186 = vsel %vm6184, %v6185, %v6183
    %v6187 = vclz %v6186
    %v6188 = vsub.s32 %v6187, 2
    %vm6189 = vcmp.gt.s32.totalorder 0, %v6188
    %v6190 = vsel %vm6189, 0, %v6188
    %v6191 = vsub.s32 32, %v6190
    %v6192 = vshll.u32 %v6183, %v6190
    %v6193 = vshrl.u32 %v6175, %v6191
    %v6194 = vor.u32 %v6192, %v6193
    %v6195 = vsub.s32 4294967266, %v6190
    %v6196 = vadd.s32 %v6195, 127
    %v6197 = vshll.u32 %v6196, 23
    %v6198 = vor.u32 4788187, %v6197
    %v6199 = vand.u32 2147483647, %v6198
    %v6201 = vcvt.s32.f32 %v6194
    %v6202 = vmul.f32 %v6201, %v6199
    %v6203 = vxor.u32 %v6202, 2147483648
    %v6204 = vsel %vm6121, %v6203, %v6202
    %v6205 = vsub.s32 4, %v6181
    %v6206 = vsel %vm6121, %v6205, %v6181
    %v6207 = vsel %vm6120, %v324, %v6204
    %v6208 = vsel %vm6120, 0, %v6206
    %v6209 = vcosq.f32.pop %v6207
    %v6210 = vsinq.f32.pop %v6207
    %vm6211 = vweird.f32 %v324
    %v6212 = vadd.s32 %v6208, 3
    %v6213 = vand.u32 %v6212, 3
    %vm6214 = vcmp.lt.s32.totalorder %v6213, 2
    %vm6215 = vcmp.eq.s32.totalorder %v6213, 0
    %v6216 = vxor.u32 %v6210, 2147483648
    %v6217 = vsel %vm6215, %v6209, %v6216
    %vm6218 = vcmp.eq.s32.totalorder %v6213, 2
    %v6219 = vxor.u32 %v6209, 2147483648
    %v6220 = vsel %vm6218, %v6219, %v6210
    %v6221 = vsel %vm6214, %v6217, %v6220
    %v6222 = vsel %vm6211, nan, %v6221
    %v6223 = vand.u32 2147483647, %v329
    %vm6224 = vcmp.le.f32.partialorder %v6223, 0.7853982
    %vm6225 = vcmp.lt.s32.totalorder %v329, 0
    %v6226 = vand.u32 %v329, 2139095040
    %v6227 = vshrl.u32 %v6226, 23
    %v6228 = vsub.s32 %v6227, 127
    %v6229 = vand.u32 2147483647, %v329
    %v6230 = vand.u32 %v6229, 8388607
    %v6231 = vor.u32 %v6230, 8388608
    %v6232 = vsub.s32 0, %v6231
    %v6233 = vadd.s32 %v6228, 1
    %vm6234 = vcmp.gt.s32.totalorder %v6233, 0
    %v6235 = vsel %vm6234, %v6233, 0
    %v6236 = vshrl.u32 %v6235, 5
    %v6237 = vand.u32 %v6235, 31
    %v6238 = vsub.s32 32, %v6237
    %v6239 = vshrl.u32 683565275, %v6238
    %v6240 = vshll.u32 683565275, %v6237
    %v6241 = vshrl.u32 2475754826, %v6238
    %v6242 = vor.u32 %v6240, %v6241
    %v6243 = vshll.u32 2475754826, %v6237
    %v6244 = vshrl.u32 2131351028, %v6238
    %v6245 = vor.u32 %v6243, %v6244
    %v6246 = vshll.u32 2131351028, %v6237
    %v6247 = vshrl.u32 2102212464, %v6238
    %v6248 = vor.u32 %v6246, %v6247
    %v6249 = vshll.u32 2102212464, %v6237
    %v6250 = vshrl.u32 920167782, %v6238
    %v6251 = vor.u32 %v6249, %v6250
    %v6252 = vshll.u32 920167782, %v6237
    %v6253 = vshrl.u32 1326507024, %v6238
    %v6254 = vor.u32 %v6252, %v6253
    %vm6255 = vcmp.lt.s32.totalorder %v6236, 1
    %vm6256 = vcmp.lt.s32.totalorder %v6236, 2
    %vm6257 = vcmp.lt.s32.totalorder %v6236, 3
    %vm6258 = vcmp.lt.s32.totalorder %v6236, 4
    %v6259 = vsel %vm6255, %v6239, %v6242
    %v6260 = vsel %vm6258, %v6248, 2102212464
    %v6261 = vsel %vm6257, %v6245, %v6260
    %v6262 = vsel %vm6256, %v6259, %v6261
    %v6263 = vsel %vm6255, %v6242, %v6245
    %v6264 = vsel %vm6258, %v6251, 920167782
    %v6265 = vsel %vm6257, %v6248, %v6264
    %v6266 = vsel %vm6256, %v6263, %v6265
    %v6267 = vsel %vm6255, %v6245, %v6248
    %v6268 = vsel %vm6258, %v6254, 1326507024
    %v6269 = vsel %vm6257, %v6251, %v6268
    %v6270 = vsel %vm6256, %v6267, %v6269
    %v6271 = vshll.u32 %v6231, 8
    %v6272 = vmul.u32.u64.compose %v6271, %v6270
    %v6273 = vextract.low.u32 %v6272
    %v6274 = vextract.high.u32 %v6272
    %v6275 = vmul.u32.u64.compose %v6271, %v6266
    %v6276 = vextract.low.u32 %v6275
    %v6277 = vextract.high.u32 %v6275
    %v6278 = vmul.u32 %v6271, %v6262
    %v6279 = vadd.s32 %v6274, %v6276
    %vm6280 = vc.u32 %v6274, %v6276
    %v6281 = vadd.s32 %v6277, 1
    %v6282 = vsel %vm6280, %v6281, %v6277
    %v6283 = vadd.s32 %v6278, %v6282
    %v6284 = vadd.s32 %v6283, 536870912
    %v6285 = vshrl.u32 %v6284, 30
    %v6286 = vshll.u32 %v6285, 30
    %v6287 = vsub.s32 %v6283, %v6286
    %vm6288 = vcmp.lt.s32.totalorder %v6287, 0
    %v6289 = vsub.s32 0, %v6287
    %v6290 = vsel %vm6288, %v6289, %v6287
    %v6291 = vclz %v6290
    %v6292 = vsub.s32 %v6291, 2
    %vm6293 = vcmp.gt.s32.totalorder 0, %v6292
    %v6294 = vsel %vm6293, 0, %v6292
    %v6295 = vsub.s32 32, %v6294
    %v6296 = vshll.u32 %v6287, %v6294
    %v6297 = vshrl.u32 %v6279, %v6295
    %v6298 = vor.u32 %v6296, %v6297
    %v6299 = vsub.s32 4294967266, %v6294
    %v6300 = vadd.s32 %v6299, 127
    %v6301 = vshll.u32 %v6300, 23
    %v6302 = vor.u32 4788187, %v6301
    %v6303 = vand.u32 2147483647, %v6302
    %v6305 = vcvt.s32.f32 %v6298
    %v6306 = vmul.f32 %v6305, %v6303
    %v6307 = vxor.u32 %v6306, 2147483648
    %v6308 = vsel %vm6225, %v6307, %v6306
    %v6309 = vsub.s32 4, %v6285
    %v6310 = vsel %vm6225, %v6309, %v6285
    %v6311 = vsel %vm6224, %v329, %v6308
    %v6312 = vsel %vm6224, 0, %v6310
    %v6313 = vcosq.f32.pop %v6311
    %v6314 = vsinq.f32.pop %v6311
    %vm6315 = vweird.f32 %v329
    %v6316 = vadd.s32 %v6312, 3
    %v6317 = vand.u32 %v6316, 3
    %vm6318 = vcmp.lt.s32.totalorder %v6317, 2
    %vm6319 = vcmp.eq.s32.totalorder %v6317, 0
    %v6320 = vxor.u32 %v6314, 2147483648
    %v6321 = vsel %vm6319, %v6313, %v6320
    %vm6322 = vcmp.eq.s32.totalorder %v6317, 2
    %v6323 = vxor.u32 %v6313, 2147483648
    %v6324 = vsel %vm6322, %v6323, %v6314
    %v6325 = vsel %vm6318, %v6321, %v6324
    %v6326 = vsel %vm6315, nan, %v6325
    %v6327 = vand.u32 2147483647, %v334
    %vm6328 = vcmp.le.f32.partialorder %v6327, 0.7853982
    %vm6329 = vcmp.lt.s32.totalorder %v334, 0
    %v6330 = vand.u32 %v334, 2139095040
    %v6331 = vshrl.u32 %v6330, 23
    %v6332 = vsub.s32 %v6331, 127
    %v6333 = vand.u32 2147483647, %v334
    %v6334 = vand.u32 %v6333, 8388607
    %v6335 = vor.u32 %v6334, 8388608
    %v6336 = vsub.s32 0, %v6335
    %v6337 = vadd.s32 %v6332, 1
    %vm6338 = vcmp.gt.s32.totalorder %v6337, 0
    %v6339 = vsel %vm6338, %v6337, 0
    %v6340 = vshrl.u32 %v6339, 5
    %v6341 = vand.u32 %v6339, 31
    %v6342 = vsub.s32 32, %v6341
    %v6343 = vshrl.u32 683565275, %v6342
    %v6344 = vshll.u32 683565275, %v6341
    %v6345 = vshrl.u32 2475754826, %v6342
    %v6346 = vor.u32 %v6344, %v6345
    %v6347 = vshll.u32 2475754826, %v6341
    %v6348 = vshrl.u32 2131351028, %v6342
    %v6349 = vor.u32 %v6347, %v6348
    %v6350 = vshll.u32 2131351028, %v6341
    %v6351 = vshrl.u32 2102212464, %v6342
    %v6352 = vor.u32 %v6350, %v6351
    %v6353 = vshll.u32 2102212464, %v6341
    %v6354 = vshrl.u32 920167782, %v6342
    %v6355 = vor.u32 %v6353, %v6354
    %v6356 = vshll.u32 920167782, %v6341
    %v6357 = vshrl.u32 1326507024, %v6342
    %v6358 = vor.u32 %v6356, %v6357
    %vm6359 = vcmp.lt.s32.totalorder %v6340, 1
    %vm6360 = vcmp.lt.s32.totalorder %v6340, 2
    %vm6361 = vcmp.lt.s32.totalorder %v6340, 3
    %vm6362 = vcmp.lt.s32.totalorder %v6340, 4
    %v6363 = vsel %vm6359, %v6343, %v6346
    %v6364 = vsel %vm6362, %v6352, 2102212464
    %v6365 = vsel %vm6361, %v6349, %v6364
    %v6366 = vsel %vm6360, %v6363, %v6365
    %v6367 = vsel %vm6359, %v6346, %v6349
    %v6368 = vsel %vm6362, %v6355, 920167782
    %v6369 = vsel %vm6361, %v6352, %v6368
    %v6370 = vsel %vm6360, %v6367, %v6369
    %v6371 = vsel %vm6359, %v6349, %v6352
    %v6372 = vsel %vm6362, %v6358, 1326507024
    %v6373 = vsel %vm6361, %v6355, %v6372
    %v6374 = vsel %vm6360, %v6371, %v6373
    %v6375 = vshll.u32 %v6335, 8
    %v6376 = vmul.u32.u64.compose %v6375, %v6374
    %v6377 = vextract.low.u32 %v6376
    %v6378 = vextract.high.u32 %v6376
    %v6379 = vmul.u32.u64.compose %v6375, %v6370
    %v6380 = vextract.low.u32 %v6379
    %v6381 = vextract.high.u32 %v6379
    %v6382 = vmul.u32 %v6375, %v6366
    %v6383 = vadd.s32 %v6378, %v6380
    %vm6384 = vc.u32 %v6378, %v6380
    %v6385 = vadd.s32 %v6381, 1
    %v6386 = vsel %vm6384, %v6385, %v6381
    %v6387 = vadd.s32 %v6382, %v6386
    %v6388 = vadd.s32 %v6387, 536870912
    %v6389 = vshrl.u32 %v6388, 30
    %v6390 = vshll.u32 %v6389, 30
    %v6391 = vsub.s32 %v6387, %v6390
    %vm6392 = vcmp.lt.s32.totalorder %v6391, 0
    %v6393 = vsub.s32 0, %v6391
    %v6394 = vsel %vm6392, %v6393, %v6391
    %v6395 = vclz %v6394
    %v6396 = vsub.s32 %v6395, 2
    %vm6397 = vcmp.gt.s32.totalorder 0, %v6396
    %v6398 = vsel %vm6397, 0, %v6396
    %v6399 = vsub.s32 32, %v6398
    %v6400 = vshll.u32 %v6391, %v6398
    %v6401 = vshrl.u32 %v6383, %v6399
    %v6402 = vor.u32 %v6400, %v6401
    %v6403 = vsub.s32 4294967266, %v6398
    %v6404 = vadd.s32 %v6403, 127
    %v6405 = vshll.u32 %v6404, 23
    %v6406 = vor.u32 4788187, %v6405
    %v6407 = vand.u32 2147483647, %v6406
    %v6409 = vcvt.s32.f32 %v6402
    %v6410 = vmul.f32 %v6409, %v6407
    %v6411 = vxor.u32 %v6410, 2147483648
    %v6412 = vsel %vm6329, %v6411, %v6410
    %v6413 = vsub.s32 4, %v6389
    %v6414 = vsel %vm6329, %v6413, %v6389
    %v6415 = vsel %vm6328, %v334, %v6412
    %v6416 = vsel %vm6328, 0, %v6414
    %v6417 = vcosq.f32.pop %v6415
    %v6418 = vsinq.f32.pop %v6415
    %vm6419 = vweird.f32 %v334
    %v6420 = vadd.s32 %v6416, 3
    %v6421 = vand.u32 %v6420, 3
    %vm6422 = vcmp.lt.s32.totalorder %v6421, 2
    %vm6423 = vcmp.eq.s32.totalorder %v6421, 0
    %v6424 = vxor.u32 %v6418, 2147483648
    %v6425 = vsel %vm6423, %v6417, %v6424
    %vm6426 = vcmp.eq.s32.totalorder %v6421, 2
    %v6427 = vxor.u32 %v6417, 2147483648
    %v6428 = vsel %vm6426, %v6427, %v6418
    %v6429 = vsel %vm6422, %v6425, %v6428
    %v6430 = vsel %vm6419, nan, %v6429
    %v6431 = vand.u32 2147483647, %v339
    %vm6432 = vcmp.le.f32.partialorder %v6431, 0.7853982
    %vm6433 = vcmp.lt.s32.totalorder %v339, 0
    %v6434 = vand.u32 %v339, 2139095040
    %v6435 = vshrl.u32 %v6434, 23
    %v6436 = vsub.s32 %v6435, 127
    %v6437 = vand.u32 2147483647, %v339
    %v6438 = vand.u32 %v6437, 8388607
    %v6439 = vor.u32 %v6438, 8388608
    %v6440 = vsub.s32 0, %v6439
    %v6441 = vadd.s32 %v6436, 1
    %vm6442 = vcmp.gt.s32.totalorder %v6441, 0
    %v6443 = vsel %vm6442, %v6441, 0
    %v6444 = vshrl.u32 %v6443, 5
    %v6445 = vand.u32 %v6443, 31
    %v6446 = vsub.s32 32, %v6445
    %v6447 = vshrl.u32 683565275, %v6446
    %v6448 = vshll.u32 683565275, %v6445
    %v6449 = vshrl.u32 2475754826, %v6446
    %v6450 = vor.u32 %v6448, %v6449
    %v6451 = vshll.u32 2475754826, %v6445
    %v6452 = vshrl.u32 2131351028, %v6446
    %v6453 = vor.u32 %v6451, %v6452
    %v6454 = vshll.u32 2131351028, %v6445
    %v6455 = vshrl.u32 2102212464, %v6446
    %v6456 = vor.u32 %v6454, %v6455
    %v6457 = vshll.u32 2102212464, %v6445
    %v6458 = vshrl.u32 920167782, %v6446
    %v6459 = vor.u32 %v6457, %v6458
    %v6460 = vshll.u32 920167782, %v6445
    %v6461 = vshrl.u32 1326507024, %v6446
    %v6462 = vor.u32 %v6460, %v6461
    %vm6463 = vcmp.lt.s32.totalorder %v6444, 1
    %vm6464 = vcmp.lt.s32.totalorder %v6444, 2
    %vm6465 = vcmp.lt.s32.totalorder %v6444, 3
    %vm6466 = vcmp.lt.s32.totalorder %v6444, 4
    %v6467 = vsel %vm6463, %v6447, %v6450
    %v6468 = vsel %vm6466, %v6456, 2102212464
    %v6469 = vsel %vm6465, %v6453, %v6468
    %v6470 = vsel %vm6464, %v6467, %v6469
    %v6471 = vsel %vm6463, %v6450, %v6453
    %v6472 = vsel %vm6466, %v6459, 920167782
    %v6473 = vsel %vm6465, %v6456, %v6472
    %v6474 = vsel %vm6464, %v6471, %v6473
    %v6475 = vsel %vm6463, %v6453, %v6456
    %v6476 = vsel %vm6466, %v6462, 1326507024
    %v6477 = vsel %vm6465, %v6459, %v6476
    %v6478 = vsel %vm6464, %v6475, %v6477
    %v6479 = vshll.u32 %v6439, 8
    %v6480 = vmul.u32.u64.compose %v6479, %v6478
    %v6481 = vextract.low.u32 %v6480
    %v6482 = vextract.high.u32 %v6480
    %v6483 = vmul.u32.u64.compose %v6479, %v6474
    %v6484 = vextract.low.u32 %v6483
    %v6485 = vextract.high.u32 %v6483
    %v6486 = vmul.u32 %v6479, %v6470
    %v6487 = vadd.s32 %v6482, %v6484
    %vm6488 = vc.u32 %v6482, %v6484
    %v6489 = vadd.s32 %v6485, 1
    %v6490 = vsel %vm6488, %v6489, %v6485
    %v6491 = vadd.s32 %v6486, %v6490
    %v6492 = vadd.s32 %v6491, 536870912
    %v6493 = vshrl.u32 %v6492, 30
    %v6494 = vshll.u32 %v6493, 30
    %v6495 = vsub.s32 %v6491, %v6494
    %vm6496 = vcmp.lt.s32.totalorder %v6495, 0
    %v6497 = vsub.s32 0, %v6495
    %v6498 = vsel %vm6496, %v6497, %v6495
    %v6499 = vclz %v6498
    %v6500 = vsub.s32 %v6499, 2
    %vm6501 = vcmp.gt.s32.totalorder 0, %v6500
    %v6502 = vsel %vm6501, 0, %v6500
    %v6503 = vsub.s32 32, %v6502
    %v6504 = vshll.u32 %v6495, %v6502
    %v6505 = vshrl.u32 %v6487, %v6503
    %v6506 = vor.u32 %v6504, %v6505
    %v6507 = vsub.s32 4294967266, %v6502
    %v6508 = vadd.s32 %v6507, 127
    %v6509 = vshll.u32 %v6508, 23
    %v6510 = vor.u32 4788187, %v6509
    %v6511 = vand.u32 2147483647, %v6510
    %v6513 = vcvt.s32.f32 %v6506
    %v6514 = vmul.f32 %v6513, %v6511
    %v6515 = vxor.u32 %v6514, 2147483648
    %v6516 = vsel %vm6433, %v6515, %v6514
    %v6517 = vsub.s32 4, %v6493
    %v6518 = vsel %vm6433, %v6517, %v6493
    %v6519 = vsel %vm6432, %v339, %v6516
    %v6520 = vsel %vm6432, 0, %v6518
    %v6521 = vcosq.f32.pop %v6519
    %v6522 = vsinq.f32.pop %v6519
    %vm6523 = vweird.f32 %v339
    %v6524 = vadd.s32 %v6520, 3
    %v6525 = vand.u32 %v6524, 3
    %vm6526 = vcmp.lt.s32.totalorder %v6525, 2
    %vm6527 = vcmp.eq.s32.totalorder %v6525, 0
    %v6528 = vxor.u32 %v6522, 2147483648
    %v6529 = vsel %vm6527, %v6521, %v6528
    %vm6530 = vcmp.eq.s32.totalorder %v6525, 2
    %v6531 = vxor.u32 %v6521, 2147483648
    %v6532 = vsel %vm6530, %v6531, %v6522
    %v6533 = vsel %vm6526, %v6529, %v6532
    %v6534 = vsel %vm6523, nan, %v6533
    %v6535 = vand.u32 2147483647, %v344
    %vm6536 = vcmp.le.f32.partialorder %v6535, 0.7853982
    %vm6537 = vcmp.lt.s32.totalorder %v344, 0
    %v6538 = vand.u32 %v344, 2139095040
    %v6539 = vshrl.u32 %v6538, 23
    %v6540 = vsub.s32 %v6539, 127
    %v6541 = vand.u32 2147483647, %v344
    %v6542 = vand.u32 %v6541, 8388607
    %v6543 = vor.u32 %v6542, 8388608
    %v6544 = vsub.s32 0, %v6543
    %v6545 = vadd.s32 %v6540, 1
    %vm6546 = vcmp.gt.s32.totalorder %v6545, 0
    %v6547 = vsel %vm6546, %v6545, 0
    %v6548 = vshrl.u32 %v6547, 5
    %v6549 = vand.u32 %v6547, 31
    %v6550 = vsub.s32 32, %v6549
    %v6551 = vshrl.u32 683565275, %v6550
    %v6552 = vshll.u32 683565275, %v6549
    %v6553 = vshrl.u32 2475754826, %v6550
    %v6554 = vor.u32 %v6552, %v6553
    %v6555 = vshll.u32 2475754826, %v6549
    %v6556 = vshrl.u32 2131351028, %v6550
    %v6557 = vor.u32 %v6555, %v6556
    %v6558 = vshll.u32 2131351028, %v6549
    %v6559 = vshrl.u32 2102212464, %v6550
    %v6560 = vor.u32 %v6558, %v6559
    %v6561 = vshll.u32 2102212464, %v6549
    %v6562 = vshrl.u32 920167782, %v6550
    %v6563 = vor.u32 %v6561, %v6562
    %v6564 = vshll.u32 920167782, %v6549
    %v6565 = vshrl.u32 1326507024, %v6550
    %v6566 = vor.u32 %v6564, %v6565
    %vm6567 = vcmp.lt.s32.totalorder %v6548, 1
    %vm6568 = vcmp.lt.s32.totalorder %v6548, 2
    %vm6569 = vcmp.lt.s32.totalorder %v6548, 3
    %vm6570 = vcmp.lt.s32.totalorder %v6548, 4
    %v6571 = vsel %vm6567, %v6551, %v6554
    %v6572 = vsel %vm6570, %v6560, 2102212464
    %v6573 = vsel %vm6569, %v6557, %v6572
    %v6574 = vsel %vm6568, %v6571, %v6573
    %v6575 = vsel %vm6567, %v6554, %v6557
    %v6576 = vsel %vm6570, %v6563, 920167782
    %v6577 = vsel %vm6569, %v6560, %v6576
    %v6578 = vsel %vm6568, %v6575, %v6577
    %v6579 = vsel %vm6567, %v6557, %v6560
    %v6580 = vsel %vm6570, %v6566, 1326507024
    %v6581 = vsel %vm6569, %v6563, %v6580
    %v6582 = vsel %vm6568, %v6579, %v6581
    %v6583 = vshll.u32 %v6543, 8
    %v6584 = vmul.u32.u64.compose %v6583, %v6582
    %v6585 = vextract.low.u32 %v6584
    %v6586 = vextract.high.u32 %v6584
    %v6587 = vmul.u32.u64.compose %v6583, %v6578
    %v6588 = vextract.low.u32 %v6587
    %v6589 = vextract.high.u32 %v6587
    %v6590 = vmul.u32 %v6583, %v6574
    %v6591 = vadd.s32 %v6586, %v6588
    %vm6592 = vc.u32 %v6586, %v6588
    %v6593 = vadd.s32 %v6589, 1
    %v6594 = vsel %vm6592, %v6593, %v6589
    %v6595 = vadd.s32 %v6590, %v6594
    %v6596 = vadd.s32 %v6595, 536870912
    %v6597 = vshrl.u32 %v6596, 30
    %v6598 = vshll.u32 %v6597, 30
    %v6599 = vsub.s32 %v6595, %v6598
    %vm6600 = vcmp.lt.s32.totalorder %v6599, 0
    %v6601 = vsub.s32 0, %v6599
    %v6602 = vsel %vm6600, %v6601, %v6599
    %v6603 = vclz %v6602
    %v6604 = vsub.s32 %v6603, 2
    %vm6605 = vcmp.gt.s32.totalorder 0, %v6604
    %v6606 = vsel %vm6605, 0, %v6604
    %v6607 = vsub.s32 32, %v6606
    %v6608 = vshll.u32 %v6599, %v6606
    %v6609 = vshrl.u32 %v6591, %v6607
    %v6610 = vor.u32 %v6608, %v6609
    %v6611 = vsub.s32 4294967266, %v6606
    %v6612 = vadd.s32 %v6611, 127
    %v6613 = vshll.u32 %v6612, 23
    %v6614 = vor.u32 4788187, %v6613
    %v6615 = vand.u32 2147483647, %v6614
    %v6617 = vcvt.s32.f32 %v6610
    %v6618 = vmul.f32 %v6617, %v6615
    %v6619 = vxor.u32 %v6618, 2147483648
    %v6620 = vsel %vm6537, %v6619, %v6618
    %v6621 = vsub.s32 4, %v6597
    %v6622 = vsel %vm6537, %v6621, %v6597
    %v6623 = vsel %vm6536, %v344, %v6620
    %v6624 = vsel %vm6536, 0, %v6622
    %v6625 = vcosq.f32.pop %v6623
    %v6626 = vsinq.f32.pop %v6623
    %vm6627 = vweird.f32 %v344
    %v6628 = vadd.s32 %v6624, 3
    %v6629 = vand.u32 %v6628, 3
    %vm6630 = vcmp.lt.s32.totalorder %v6629, 2
    %vm6631 = vcmp.eq.s32.totalorder %v6629, 0
    %v6632 = vxor.u32 %v6626, 2147483648
    %v6633 = vsel %vm6631, %v6625, %v6632
    %vm6634 = vcmp.eq.s32.totalorder %v6629, 2
    %v6635 = vxor.u32 %v6625, 2147483648
    %v6636 = vsel %vm6634, %v6635, %v6626
    %v6637 = vsel %vm6630, %v6633, %v6636
    %v6638 = vsel %vm6627, nan, %v6637
    %v6639 = vand.u32 2147483647, %v349
    %vm6640 = vcmp.le.f32.partialorder %v6639, 0.7853982
    %vm6641 = vcmp.lt.s32.totalorder %v349, 0
    %v6642 = vand.u32 %v349, 2139095040
    %v6643 = vshrl.u32 %v6642, 23
    %v6644 = vsub.s32 %v6643, 127
    %v6645 = vand.u32 2147483647, %v349
    %v6646 = vand.u32 %v6645, 8388607
    %v6647 = vor.u32 %v6646, 8388608
    %v6648 = vsub.s32 0, %v6647
    %v6649 = vadd.s32 %v6644, 1
    %vm6650 = vcmp.gt.s32.totalorder %v6649, 0
    %v6651 = vsel %vm6650, %v6649, 0
    %v6652 = vshrl.u32 %v6651, 5
    %v6653 = vand.u32 %v6651, 31
    %v6654 = vsub.s32 32, %v6653
    %v6655 = vshrl.u32 683565275, %v6654
    %v6656 = vshll.u32 683565275, %v6653
    %v6657 = vshrl.u32 2475754826, %v6654
    %v6658 = vor.u32 %v6656, %v6657
    %v6659 = vshll.u32 2475754826, %v6653
    %v6660 = vshrl.u32 2131351028, %v6654
    %v6661 = vor.u32 %v6659, %v6660
    %v6662 = vshll.u32 2131351028, %v6653
    %v6663 = vshrl.u32 2102212464, %v6654
    %v6664 = vor.u32 %v6662, %v6663
    %v6665 = vshll.u32 2102212464, %v6653
    %v6666 = vshrl.u32 920167782, %v6654
    %v6667 = vor.u32 %v6665, %v6666
    %v6668 = vshll.u32 920167782, %v6653
    %v6669 = vshrl.u32 1326507024, %v6654
    %v6670 = vor.u32 %v6668, %v6669
    %vm6671 = vcmp.lt.s32.totalorder %v6652, 1
    %vm6672 = vcmp.lt.s32.totalorder %v6652, 2
    %vm6673 = vcmp.lt.s32.totalorder %v6652, 3
    %vm6674 = vcmp.lt.s32.totalorder %v6652, 4
    %v6675 = vsel %vm6671, %v6655, %v6658
    %v6676 = vsel %vm6674, %v6664, 2102212464
    %v6677 = vsel %vm6673, %v6661, %v6676
    %v6678 = vsel %vm6672, %v6675, %v6677
    %v6679 = vsel %vm6671, %v6658, %v6661
    %v6680 = vsel %vm6674, %v6667, 920167782
    %v6681 = vsel %vm6673, %v6664, %v6680
    %v6682 = vsel %vm6672, %v6679, %v6681
    %v6683 = vsel %vm6671, %v6661, %v6664
    %v6684 = vsel %vm6674, %v6670, 1326507024
    %v6685 = vsel %vm6673, %v6667, %v6684
    %v6686 = vsel %vm6672, %v6683, %v6685
    %v6687 = vshll.u32 %v6647, 8
    %v6688 = vmul.u32.u64.compose %v6687, %v6686
    %v6689 = vextract.low.u32 %v6688
    %v6690 = vextract.high.u32 %v6688
    %v6691 = vmul.u32.u64.compose %v6687, %v6682
    %v6692 = vextract.low.u32 %v6691
    %v6693 = vextract.high.u32 %v6691
    %v6694 = vmul.u32 %v6687, %v6678
    %v6695 = vadd.s32 %v6690, %v6692
    %vm6696 = vc.u32 %v6690, %v6692
    %v6697 = vadd.s32 %v6693, 1
    %v6698 = vsel %vm6696, %v6697, %v6693
    %v6699 = vadd.s32 %v6694, %v6698
    %v6700 = vadd.s32 %v6699, 536870912
    %v6701 = vshrl.u32 %v6700, 30
    %v6702 = vshll.u32 %v6701, 30
    %v6703 = vsub.s32 %v6699, %v6702
    %vm6704 = vcmp.lt.s32.totalorder %v6703, 0
    %v6705 = vsub.s32 0, %v6703
    %v6706 = vsel %vm6704, %v6705, %v6703
    %v6707 = vclz %v6706
    %v6708 = vsub.s32 %v6707, 2
    %vm6709 = vcmp.gt.s32.totalorder 0, %v6708
    %v6710 = vsel %vm6709, 0, %v6708
    %v6711 = vsub.s32 32, %v6710
    %v6712 = vshll.u32 %v6703, %v6710
    %v6713 = vshrl.u32 %v6695, %v6711
    %v6714 = vor.u32 %v6712, %v6713
    %v6715 = vsub.s32 4294967266, %v6710
    %v6716 = vadd.s32 %v6715, 127
    %v6717 = vshll.u32 %v6716, 23
    %v6718 = vor.u32 4788187, %v6717
    %v6719 = vand.u32 2147483647, %v6718
    %v6721 = vcvt.s32.f32 %v6714
    %v6722 = vmul.f32 %v6721, %v6719
    %v6723 = vxor.u32 %v6722, 2147483648
    %v6724 = vsel %vm6641, %v6723, %v6722
    %v6725 = vsub.s32 4, %v6701
    %v6726 = vsel %vm6641, %v6725, %v6701
    %v6727 = vsel %vm6640, %v349, %v6724
    %v6728 = vsel %vm6640, 0, %v6726
    %v6729 = vcosq.f32.pop %v6727
    %v6730 = vsinq.f32.pop %v6727
    %vm6731 = vweird.f32 %v349
    %v6732 = vadd.s32 %v6728, 3
    %v6733 = vand.u32 %v6732, 3
    %vm6734 = vcmp.lt.s32.totalorder %v6733, 2
    %vm6735 = vcmp.eq.s32.totalorder %v6733, 0
    %v6736 = vxor.u32 %v6730, 2147483648
    %v6737 = vsel %vm6735, %v6729, %v6736
    %vm6738 = vcmp.eq.s32.totalorder %v6733, 2
    %v6739 = vxor.u32 %v6729, 2147483648
    %v6740 = vsel %vm6738, %v6739, %v6730
    %v6741 = vsel %vm6734, %v6737, %v6740
    %v6742 = vsel %vm6731, nan, %v6741
    %v6743 = vand.u32 2147483647, %v354
    %vm6744 = vcmp.le.f32.partialorder %v6743, 0.7853982
    %vm6745 = vcmp.lt.s32.totalorder %v354, 0
    %v6746 = vand.u32 %v354, 2139095040
    %v6747 = vshrl.u32 %v6746, 23
    %v6748 = vsub.s32 %v6747, 127
    %v6749 = vand.u32 2147483647, %v354
    %v6750 = vand.u32 %v6749, 8388607
    %v6751 = vor.u32 %v6750, 8388608
    %v6752 = vsub.s32 0, %v6751
    %v6753 = vadd.s32 %v6748, 1
    %vm6754 = vcmp.gt.s32.totalorder %v6753, 0
    %v6755 = vsel %vm6754, %v6753, 0
    %v6756 = vshrl.u32 %v6755, 5
    %v6757 = vand.u32 %v6755, 31
    %v6758 = vsub.s32 32, %v6757
    %v6759 = vshrl.u32 683565275, %v6758
    %v6760 = vshll.u32 683565275, %v6757
    %v6761 = vshrl.u32 2475754826, %v6758
    %v6762 = vor.u32 %v6760, %v6761
    %v6763 = vshll.u32 2475754826, %v6757
    %v6764 = vshrl.u32 2131351028, %v6758
    %v6765 = vor.u32 %v6763, %v6764
    %v6766 = vshll.u32 2131351028, %v6757
    %v6767 = vshrl.u32 2102212464, %v6758
    %v6768 = vor.u32 %v6766, %v6767
    %v6769 = vshll.u32 2102212464, %v6757
    %v6770 = vshrl.u32 920167782, %v6758
    %v6771 = vor.u32 %v6769, %v6770
    %v6772 = vshll.u32 920167782, %v6757
    %v6773 = vshrl.u32 1326507024, %v6758
    %v6774 = vor.u32 %v6772, %v6773
    %vm6775 = vcmp.lt.s32.totalorder %v6756, 1
    %vm6776 = vcmp.lt.s32.totalorder %v6756, 2
    %vm6777 = vcmp.lt.s32.totalorder %v6756, 3
    %vm6778 = vcmp.lt.s32.totalorder %v6756, 4
    %v6779 = vsel %vm6775, %v6759, %v6762
    %v6780 = vsel %vm6778, %v6768, 2102212464
    %v6781 = vsel %vm6777, %v6765, %v6780
    %v6782 = vsel %vm6776, %v6779, %v6781
    %v6783 = vsel %vm6775, %v6762, %v6765
    %v6784 = vsel %vm6778, %v6771, 920167782
    %v6785 = vsel %vm6777, %v6768, %v6784
    %v6786 = vsel %vm6776, %v6783, %v6785
    %v6787 = vsel %vm6775, %v6765, %v6768
    %v6788 = vsel %vm6778, %v6774, 1326507024
    %v6789 = vsel %vm6777, %v6771, %v6788
    %v6790 = vsel %vm6776, %v6787, %v6789
    %v6791 = vshll.u32 %v6751, 8
    %v6792 = vmul.u32.u64.compose %v6791, %v6790
    %v6793 = vextract.low.u32 %v6792
    %v6794 = vextract.high.u32 %v6792
    %v6795 = vmul.u32.u64.compose %v6791, %v6786
    %v6796 = vextract.low.u32 %v6795
    %v6797 = vextract.high.u32 %v6795
    %v6798 = vmul.u32 %v6791, %v6782
    %v6799 = vadd.s32 %v6794, %v6796
    %vm6800 = vc.u32 %v6794, %v6796
    %v6801 = vadd.s32 %v6797, 1
    %v6802 = vsel %vm6800, %v6801, %v6797
    %v6803 = vadd.s32 %v6798, %v6802
    %v6804 = vadd.s32 %v6803, 536870912
    %v6805 = vshrl.u32 %v6804, 30
    %v6806 = vshll.u32 %v6805, 30
    %v6807 = vsub.s32 %v6803, %v6806
    %vm6808 = vcmp.lt.s32.totalorder %v6807, 0
    %v6809 = vsub.s32 0, %v6807
    %v6810 = vsel %vm6808, %v6809, %v6807
    %v6811 = vclz %v6810
    %v6812 = vsub.s32 %v6811, 2
    %vm6813 = vcmp.gt.s32.totalorder 0, %v6812
    %v6814 = vsel %vm6813, 0, %v6812
    %v6815 = vsub.s32 32, %v6814
    %v6816 = vshll.u32 %v6807, %v6814
    %v6817 = vshrl.u32 %v6799, %v6815
    %v6818 = vor.u32 %v6816, %v6817
    %v6819 = vsub.s32 4294967266, %v6814
    %v6820 = vadd.s32 %v6819, 127
    %v6821 = vshll.u32 %v6820, 23
    %v6822 = vor.u32 4788187, %v6821
    %v6823 = vand.u32 2147483647, %v6822
    %v6825 = vcvt.s32.f32 %v6818
    %v6826 = vmul.f32 %v6825, %v6823
    %v6827 = vxor.u32 %v6826, 2147483648
    %v6828 = vsel %vm6745, %v6827, %v6826
    %v6829 = vsub.s32 4, %v6805
    %v6830 = vsel %vm6745, %v6829, %v6805
    %v6831 = vsel %vm6744, %v354, %v6828
    %v6832 = vsel %vm6744, 0, %v6830
    %v6833 = vcosq.f32.pop %v6831
    %v6834 = vsinq.f32.pop %v6831
    %vm6835 = vweird.f32 %v354
    %v6836 = vadd.s32 %v6832, 3
    %v6837 = vand.u32 %v6836, 3
    %vm6838 = vcmp.lt.s32.totalorder %v6837, 2
    %vm6839 = vcmp.eq.s32.totalorder %v6837, 0
    %v6840 = vxor.u32 %v6834, 2147483648
    %v6841 = vsel %vm6839, %v6833, %v6840
    %vm6842 = vcmp.eq.s32.totalorder %v6837, 2
    %v6843 = vxor.u32 %v6833, 2147483648
    %v6844 = vsel %vm6842, %v6843, %v6834
    %v6845 = vsel %vm6838, %v6841, %v6844
    %v6846 = vsel %vm6835, nan, %v6845
    %v6847 = vand.u32 2147483647, %v359
    %vm6848 = vcmp.le.f32.partialorder %v6847, 0.7853982
    %vm6849 = vcmp.lt.s32.totalorder %v359, 0
    %v6850 = vand.u32 %v359, 2139095040
    %v6851 = vshrl.u32 %v6850, 23
    %v6852 = vsub.s32 %v6851, 127
    %v6853 = vand.u32 2147483647, %v359
    %v6854 = vand.u32 %v6853, 8388607
    %v6855 = vor.u32 %v6854, 8388608
    %v6856 = vsub.s32 0, %v6855
    %v6857 = vadd.s32 %v6852, 1
    %vm6858 = vcmp.gt.s32.totalorder %v6857, 0
    %v6859 = vsel %vm6858, %v6857, 0
    %v6860 = vshrl.u32 %v6859, 5
    %v6861 = vand.u32 %v6859, 31
    %v6862 = vsub.s32 32, %v6861
    %v6863 = vshrl.u32 683565275, %v6862
    %v6864 = vshll.u32 683565275, %v6861
    %v6865 = vshrl.u32 2475754826, %v6862
    %v6866 = vor.u32 %v6864, %v6865
    %v6867 = vshll.u32 2475754826, %v6861
    %v6868 = vshrl.u32 2131351028, %v6862
    %v6869 = vor.u32 %v6867, %v6868
    %v6870 = vshll.u32 2131351028, %v6861
    %v6871 = vshrl.u32 2102212464, %v6862
    %v6872 = vor.u32 %v6870, %v6871
    %v6873 = vshll.u32 2102212464, %v6861
    %v6874 = vshrl.u32 920167782, %v6862
    %v6875 = vor.u32 %v6873, %v6874
    %v6876 = vshll.u32 920167782, %v6861
    %v6877 = vshrl.u32 1326507024, %v6862
    %v6878 = vor.u32 %v6876, %v6877
    %vm6879 = vcmp.lt.s32.totalorder %v6860, 1
    %vm6880 = vcmp.lt.s32.totalorder %v6860, 2
    %vm6881 = vcmp.lt.s32.totalorder %v6860, 3
    %vm6882 = vcmp.lt.s32.totalorder %v6860, 4
    %v6883 = vsel %vm6879, %v6863, %v6866
    %v6884 = vsel %vm6882, %v6872, 2102212464
    %v6885 = vsel %vm6881, %v6869, %v6884
    %v6886 = vsel %vm6880, %v6883, %v6885
    %v6887 = vsel %vm6879, %v6866, %v6869
    %v6888 = vsel %vm6882, %v6875, 920167782
    %v6889 = vsel %vm6881, %v6872, %v6888
    %v6890 = vsel %vm6880, %v6887, %v6889
    %v6891 = vsel %vm6879, %v6869, %v6872
    %v6892 = vsel %vm6882, %v6878, 1326507024
    %v6893 = vsel %vm6881, %v6875, %v6892
    %v6894 = vsel %vm6880, %v6891, %v6893
    %v6895 = vshll.u32 %v6855, 8
    %v6896 = vmul.u32.u64.compose %v6895, %v6894
    %v6897 = vextract.low.u32 %v6896
    %v6898 = vextract.high.u32 %v6896
    %v6899 = vmul.u32.u64.compose %v6895, %v6890
    %v6900 = vextract.low.u32 %v6899
    %v6901 = vextract.high.u32 %v6899
    %v6902 = vmul.u32 %v6895, %v6886
    %v6903 = vadd.s32 %v6898, %v6900
    %vm6904 = vc.u32 %v6898, %v6900
    %v6905 = vadd.s32 %v6901, 1
    %v6906 = vsel %vm6904, %v6905, %v6901
    %v6907 = vadd.s32 %v6902, %v6906
    %v6908 = vadd.s32 %v6907, 536870912
    %v6909 = vshrl.u32 %v6908, 30
    %v6910 = vshll.u32 %v6909, 30
    %v6911 = vsub.s32 %v6907, %v6910
    %vm6912 = vcmp.lt.s32.totalorder %v6911, 0
    %v6913 = vsub.s32 0, %v6911
    %v6914 = vsel %vm6912, %v6913, %v6911
    %v6915 = vclz %v6914
    %v6916 = vsub.s32 %v6915, 2
    %vm6917 = vcmp.gt.s32.totalorder 0, %v6916
    %v6918 = vsel %vm6917, 0, %v6916
    %v6919 = vsub.s32 32, %v6918
    %v6920 = vshll.u32 %v6911, %v6918
    %v6921 = vshrl.u32 %v6903, %v6919
    %v6922 = vor.u32 %v6920, %v6921
    %v6923 = vsub.s32 4294967266, %v6918
    %v6924 = vadd.s32 %v6923, 127
    %v6925 = vshll.u32 %v6924, 23
    %v6926 = vor.u32 4788187, %v6925
    %v6927 = vand.u32 2147483647, %v6926
    %v6929 = vcvt.s32.f32 %v6922
    %v6930 = vmul.f32 %v6929, %v6927
    %v6931 = vxor.u32 %v6930, 2147483648
    %v6932 = vsel %vm6849, %v6931, %v6930
    %v6933 = vsub.s32 4, %v6909
    %v6934 = vsel %vm6849, %v6933, %v6909
    %v6935 = vsel %vm6848, %v359, %v6932
    %v6936 = vsel %vm6848, 0, %v6934
    %v6937 = vcosq.f32.pop %v6935
    %v6938 = vsinq.f32.pop %v6935
    %vm6939 = vweird.f32 %v359
    %v6940 = vadd.s32 %v6936, 3
    %v6941 = vand.u32 %v6940, 3
    %vm6942 = vcmp.lt.s32.totalorder %v6941, 2
    %vm6943 = vcmp.eq.s32.totalorder %v6941, 0
    %v6944 = vxor.u32 %v6938, 2147483648
    %v6945 = vsel %vm6943, %v6937, %v6944
    %vm6946 = vcmp.eq.s32.totalorder %v6941, 2
    %v6947 = vxor.u32 %v6937, 2147483648
    %v6948 = vsel %vm6946, %v6947, %v6938
    %v6949 = vsel %vm6942, %v6945, %v6948
    %v6950 = vsel %vm6939, nan, %v6949
    %v6951 = vand.u32 2147483647, %v364
    %vm6952 = vcmp.le.f32.partialorder %v6951, 0.7853982
    %vm6953 = vcmp.lt.s32.totalorder %v364, 0
    %v6954 = vand.u32 %v364, 2139095040
    %v6955 = vshrl.u32 %v6954, 23
    %v6956 = vsub.s32 %v6955, 127
    %v6957 = vand.u32 2147483647, %v364
    %v6958 = vand.u32 %v6957, 8388607
    %v6959 = vor.u32 %v6958, 8388608
    %v6960 = vsub.s32 0, %v6959
    %v6961 = vadd.s32 %v6956, 1
    %vm6962 = vcmp.gt.s32.totalorder %v6961, 0
    %v6963 = vsel %vm6962, %v6961, 0
    %v6964 = vshrl.u32 %v6963, 5
    %v6965 = vand.u32 %v6963, 31
    %v6966 = vsub.s32 32, %v6965
    %v6967 = vshrl.u32 683565275, %v6966
    %v6968 = vshll.u32 683565275, %v6965
    %v6969 = vshrl.u32 2475754826, %v6966
    %v6970 = vor.u32 %v6968, %v6969
    %v6971 = vshll.u32 2475754826, %v6965
    %v6972 = vshrl.u32 2131351028, %v6966
    %v6973 = vor.u32 %v6971, %v6972
    %v6974 = vshll.u32 2131351028, %v6965
    %v6975 = vshrl.u32 2102212464, %v6966
    %v6976 = vor.u32 %v6974, %v6975
    %v6977 = vshll.u32 2102212464, %v6965
    %v6978 = vshrl.u32 920167782, %v6966
    %v6979 = vor.u32 %v6977, %v6978
    %v6980 = vshll.u32 920167782, %v6965
    %v6981 = vshrl.u32 1326507024, %v6966
    %v6982 = vor.u32 %v6980, %v6981
    %vm6983 = vcmp.lt.s32.totalorder %v6964, 1
    %vm6984 = vcmp.lt.s32.totalorder %v6964, 2
    %vm6985 = vcmp.lt.s32.totalorder %v6964, 3
    %vm6986 = vcmp.lt.s32.totalorder %v6964, 4
    %v6987 = vsel %vm6983, %v6967, %v6970
    %v6988 = vsel %vm6986, %v6976, 2102212464
    %v6989 = vsel %vm6985, %v6973, %v6988
    %v6990 = vsel %vm6984, %v6987, %v6989
    %v6991 = vsel %vm6983, %v6970, %v6973
    %v6992 = vsel %vm6986, %v6979, 920167782
    %v6993 = vsel %vm6985, %v6976, %v6992
    %v6994 = vsel %vm6984, %v6991, %v6993
    %v6995 = vsel %vm6983, %v6973, %v6976
    %v6996 = vsel %vm6986, %v6982, 1326507024
    %v6997 = vsel %vm6985, %v6979, %v6996
    %v6998 = vsel %vm6984, %v6995, %v6997
    %v6999 = vshll.u32 %v6959, 8
    %v7000 = vmul.u32.u64.compose %v6999, %v6998
    %v7001 = vextract.low.u32 %v7000
    %v7002 = vextract.high.u32 %v7000
    %v7003 = vmul.u32.u64.compose %v6999, %v6994
    %v7004 = vextract.low.u32 %v7003
    %v7005 = vextract.high.u32 %v7003
    %v7006 = vmul.u32 %v6999, %v6990
    %v7007 = vadd.s32 %v7002, %v7004
    %vm7008 = vc.u32 %v7002, %v7004
    %v7009 = vadd.s32 %v7005, 1
    %v7010 = vsel %vm7008, %v7009, %v7005
    %v7011 = vadd.s32 %v7006, %v7010
    %v7012 = vadd.s32 %v7011, 536870912
    %v7013 = vshrl.u32 %v7012, 30
    %v7014 = vshll.u32 %v7013, 30
    %v7015 = vsub.s32 %v7011, %v7014
    %vm7016 = vcmp.lt.s32.totalorder %v7015, 0
    %v7017 = vsub.s32 0, %v7015
    %v7018 = vsel %vm7016, %v7017, %v7015
    %v7019 = vclz %v7018
    %v7020 = vsub.s32 %v7019, 2
    %vm7021 = vcmp.gt.s32.totalorder 0, %v7020
    %v7022 = vsel %vm7021, 0, %v7020
    %v7023 = vsub.s32 32, %v7022
    %v7024 = vshll.u32 %v7015, %v7022
    %v7025 = vshrl.u32 %v7007, %v7023
    %v7026 = vor.u32 %v7024, %v7025
    %v7027 = vsub.s32 4294967266, %v7022
    %v7028 = vadd.s32 %v7027, 127
    %v7029 = vshll.u32 %v7028, 23
    %v7030 = vor.u32 4788187, %v7029
    %v7031 = vand.u32 2147483647, %v7030
    %v7033 = vcvt.s32.f32 %v7026
    %v7034 = vmul.f32 %v7033, %v7031
    %v7035 = vxor.u32 %v7034, 2147483648
    %v7036 = vsel %vm6953, %v7035, %v7034
    %v7037 = vsub.s32 4, %v7013
    %v7038 = vsel %vm6953, %v7037, %v7013
    %v7039 = vsel %vm6952, %v364, %v7036
    %v7040 = vsel %vm6952, 0, %v7038
    %v7041 = vcosq.f32.pop %v7039
    %v7042 = vsinq.f32.pop %v7039
    %vm7043 = vweird.f32 %v364
    %v7044 = vadd.s32 %v7040, 3
    %v7045 = vand.u32 %v7044, 3
    %vm7046 = vcmp.lt.s32.totalorder %v7045, 2
    %vm7047 = vcmp.eq.s32.totalorder %v7045, 0
    %v7048 = vxor.u32 %v7042, 2147483648
    %v7049 = vsel %vm7047, %v7041, %v7048
    %vm7050 = vcmp.eq.s32.totalorder %v7045, 2
    %v7051 = vxor.u32 %v7041, 2147483648
    %v7052 = vsel %vm7050, %v7051, %v7042
    %v7053 = vsel %vm7046, %v7049, %v7052
    %v7054 = vsel %vm7043, nan, %v7053
    %v7055 = vmul.f32 %v3830, 0.0625
    %v7056 = vmul.f32 %v3934, 0.0625
    %v7057 = vmul.f32 %v4038, 0.0625
    %v7058 = vmul.f32 %v4142, 0.0625
    %v7059 = vmul.f32 %v4246, 0.0625
    %v7060 = vmul.f32 %v4350, 0.0625
    %v7061 = vmul.f32 %v4454, 0.0625
    %v7062 = vmul.f32 %v4558, 0.0625
    %v7063 = vmul.f32 %v4662, 0.0625
    %v7064 = vmul.f32 %v4766, 0.0625
    %v7065 = vmul.f32 %v4870, 0.0625
    %v7066 = vmul.f32 %v4974, 0.0625
    %v7067 = vmul.f32 %v5078, 0.0625
    %v7068 = vmul.f32 %v5182, 0.0625
    %v7069 = vmul.f32 %v5286, 0.0625
    %v7070 = vmul.f32 %v5390, 0.0625
    %v7071 = vmul.f32 %v5494, 0.0625
    %v7072 = vmul.f32 %v5598, 0.0625
    %v7073 = vmul.f32 %v5702, 0.0625
    %v7074 = vmul.f32 %v5806, 0.0625
    %v7075 = vmul.f32 %v5910, 0.0625
    %v7076 = vmul.f32 %v6014, 0.0625
    %v7077 = vmul.f32 %v6118, 0.0625
    %v7078 = vmul.f32 %v6222, 0.0625
    %v7079 = vmul.f32 %v6326, 0.0625
    %v7080 = vmul.f32 %v6430, 0.0625
    %v7081 = vmul.f32 %v6534, 0.0625
    %v7082 = vmul.f32 %v6638, 0.0625
    %v7083 = vmul.f32 %v6742, 0.0625
    %v7084 = vmul.f32 %v6846, 0.0625
    %v7085 = vmul.f32 %v6950, 0.0625
    %v7086 = vmul.f32 %v7054, 0.0625
    %7087 = vst [vmem:[#allocation2 + $0x8] sm:$0xff] %v7055
    %7088 = vst [vmem:[#allocation2 + $0x18] sm:$0xff] %v7056
    %7089 = vst [vmem:[#allocation2 + $0x28] sm:$0xff] %v7057
    %7090 = vst [vmem:[#allocation2 + $0x38] sm:$0xff] %v7058
    %7091 = vst [vmem:[#allocation2 + $0x48] sm:$0xff] %v7059
    %7092 = vst [vmem:[#allocation2 + $0x58] sm:$0xff] %v7060
    %7093 = vst [vmem:[#allocation2 + $0x68] sm:$0xff] %v7061
    %7094 = vst [vmem:[#allocation2 + $0x78] sm:$0xff] %v7062
    %7095 = vst [vmem:[#allocation2 + $0x88] sm:$0xff] %v7063
    %7096 = vst [vmem:[#allocation2 + $0x98] sm:$0xff] %v7064
    %7097 = vst [vmem:[#allocation2 + $0xa8] sm:$0xff] %v7065
    %7098 = vst [vmem:[#allocation2 + $0xb8] sm:$0xff] %v7066
    %7099 = vst [vmem:[#allocation2 + $0xc8] sm:$0xff] %v7067
    %7100 = vst [vmem:[#allocation2 + $0xd8] sm:$0xff] %v7068
    %7101 = vst [vmem:[#allocation2 + $0xe8] sm:$0xff] %v7069
    %7102 = vst [vmem:[#allocation2 + $0xf8] sm:$0xff] %v7070
    %7103 = vst [vmem:[#allocation2 + $0x108] sm:$0xff] %v7071
    %7104 = vst [vmem:[#allocation2 + $0x118] sm:$0xff] %v7072
    %7105 = vst [vmem:[#allocation2 + $0x128] sm:$0xff] %v7073
    %7106 = vst [vmem:[#allocation2 + $0x138] sm:$0xff] %v7074
    %7107 = vst [vmem:[#allocation2 + $0x148] sm:$0xff] %v7075
    %7108 = vst [vmem:[#allocation2 + $0x158] sm:$0xff] %v7076
    %7109 = vst [vmem:[#allocation2 + $0x168] sm:$0xff] %v7077
    %7110 = vst [vmem:[#allocation2 + $0x178] sm:$0xff] %v7078
    %7111 = vst [vmem:[#allocation2 + $0x188] sm:$0xff] %v7079
    %7112 = vst [vmem:[#allocation2 + $0x198] sm:$0xff] %v7080
    %7113 = vst [vmem:[#allocation2 + $0x1a8] sm:$0xff] %v7081
    %7114 = vst [vmem:[#allocation2 + $0x1b8] sm:$0xff] %v7082
    %7115 = vst [vmem:[#allocation2 + $0x1c8] sm:$0xff] %v7083
    %7116 = vst [vmem:[#allocation2 + $0x1d8] sm:$0xff] %v7084
    %7117 = vst [vmem:[#allocation2 + $0x1e8] sm:$0xff] %v7085
    %7118 = vst [vmem:[#allocation2 + $0x1f8] sm:$0xff] %v7086
    // Predicated region
    $region10: #{tpu_custom_call.1} parent=1 // pred_check
      _
    $region11: #{tpu_custom_call.1} parent=1 // pred_check_branch
      %7120 = sbr.rel (0) target = $region13
    $region12: #{tpu_custom_call.1} parent=1 // pred_region
      %s7122 = ssub.s32 8192, 8192
      %7123 = vsyncadd [#allocation3], %s7122
      %s7124 = sshll.u32 [#allocation2], 4
      %s7125 = int_to_ptr.vmem [resolvable:$true] %s7124
      %7130 = dma.vmem_to_hbm [thread:$0]  %s7125, 8192, %s2, [#allocation3], 256, 256, 16
    $region13: #{tpu_custom_call.1} parent=1 // pred_fallthru
      _
    // Predicated region
    $region14: #{tpu_custom_call.1} parent=1 // pred_check
      _
    $region15: #{tpu_custom_call.1} parent=1 // pred_check_branch
      %7132 = sbr.rel (0) target = $region17
    $region16: #{tpu_custom_call.1} parent=1 // pred_region
      %7133 = dma.done [#allocation3], 8192
    $region17: #{tpu_custom_call.1} parent=1 // pred_fallthru
      _
    %7134 = vsyncpa [#allocation3], 1

</llo_original>
